<compile_context>
chip_gen: v7x
topology: tpu7x:2x2x1
jax: 0.10.0
libtpu: 0.0.40
codegen_flags: <defaults>
</compile_context>

<pallas_src>
import functools

import jax
import jax.numpy as jnp
from jax import lax
from jax.experimental import pallas as pl
from jax.experimental.pallas import tpu as pltpu

MAX_TILE_ROWS = 1024     # row tile for the plain fused MLP kernels
MAX_TILE_GROUPS = 256    # group (point) tile for the fused SA kernels


def _round_up(x, m):
    return ((x + m - 1) // m) * m


# ----------------------------- Pallas kernels ------------------------------

def _make_mlp_kernel(relu_flags):
    """Fused multi-layer pointwise MLP: x -> relu?(x @ W_l + b_l) chained, all in VMEM."""
    n_layers = len(relu_flags)

    def kernel(x_ref, *refs):
        o_ref = refs[-1]
        h = x_ref[...]
        for l in range(n_layers):
            w = refs[2 * l][...]          # bf16 [Cin_l, Cout_l] (BN scale pre-folded)
            b = refs[2 * l + 1][...]      # f32  [1, Cout_l]
            z = jnp.dot(h.astype(jnp.bfloat16), w,
                        preferred_element_type=jnp.float32) + b
            h = jnp.maximum(z, 0.0) if relu_flags[l] else z
        o_ref[...] = h.astype(o_ref.dtype)

    return kernel


def _make_sa_kernel(relu_flags, group_size):
    """Fused SA level: for each of the G group slots run the full MLP stack, then
    max-accumulate across slots (unrolled jnp.maximum chain, stays on the VPU)."""
    n_layers = len(relu_flags)

    def kernel(x_ref, *refs):
        o_ref = refs[-1]
        wbs = [(refs[2 * l][...], refs[2 * l + 1][...]) for l in range(n_layers)]
        acc = None
        for g in range(group_size):
            h = x_ref[g]                  # [tp, Cin] (leading-axis static index)
            for l in range(n_layers):
                w, b = wbs[l]
                z = jnp.dot(h.astype(jnp.bfloat16), w,
                            preferred_element_type=jnp.float32) + b
                h = jnp.maximum(z, 0.0) if relu_flags[l] else z
            acc = h if acc is None else jnp.maximum(acc, h)
        o_ref[...] = acc.astype(o_ref.dtype)

    return kernel


def fused_pointwise_mlp(x, layers, max_tile=MAX_TILE_ROWS):
    """x: [M, Cin] f32; layers: list of (w_bf16 [Ci,Co], shift_f32 [Co], relu: bool).
    Returns [M, Co_last] f32.  One pallas_call for the whole stack."""
    M, Cin = x.shape
    c_last = layers[-1][0].shape[1]
    tile_m = min(_round_up(M, 8), _round_up(max_tile, 8))
    grid = (pl.cdiv(M, tile_m),)

    in_specs = [pl.BlockSpec((tile_m, Cin), lambda i: (i, 0))]
    args = [x]
    for (w, b, _) in layers:
        ci, co = w.shape
        in_specs.append(pl.BlockSpec((ci, co), lambda i: (0, 0)))
        in_specs.append(pl.BlockSpec((1, co), lambda i: (0, 0)))
        args += [w, b.reshape(1, co)]

    return pl.pallas_call(
        _make_mlp_kernel(tuple(l[2] for l in layers)),
        out_shape=jax.ShapeDtypeStruct((M, c_last), jnp.float32),
        grid=grid,
        in_specs=in_specs,
        out_specs=pl.BlockSpec((tile_m, c_last), lambda i: (i, 0)),
        compiler_params=pltpu.CompilerParams(dimension_semantics=("parallel",)),
    )(*args)


def sa_mlp_groupmax(grouped, layers, max_tp=MAX_TILE_GROUPS):
    """grouped: [G, P, Cin] f32 (G = neighbors per group, P = B*n_samples groups).
    layers: list of (w_bf16, shift_f32, relu).  Returns [P, Co_last] f32 = max over G."""
    G, P, Cin = grouped.shape
    c_last = layers[-1][0].shape[1]
    tp = min(_round_up(P, 8), _round_up(max_tp, 8))
    grid = (pl.cdiv(P, tp),)

    in_specs = [pl.BlockSpec((G, tp, Cin), lambda i: (0, i, 0))]
    args = [grouped]
    for (w, b, _) in layers:
        ci, co = w.shape
        in_specs.append(pl.BlockSpec((ci, co), lambda i: (0, 0)))
        in_specs.append(pl.BlockSpec((1, co), lambda i: (0, 0)))
        args += [w, b.reshape(1, co)]

    return pl.pallas_call(
        _make_sa_kernel(tuple(l[2] for l in layers), G),
        out_shape=jax.ShapeDtypeStruct((P, c_last), jnp.float32),
        grid=grid,
        in_specs=in_specs,
        out_specs=pl.BlockSpec((tp, c_last), lambda i: (i, 0)),
        compiler_params=pltpu.CompilerParams(dimension_semantics=("parallel",)),
    )(*args)


# ------------------------------- JAX glue ----------------------------------

def square_distance(src, dst):
    # src [B,N,C], dst [B,M,C] -> [B,N,M]
    return (jnp.sum(src ** 2, -1)[:, :, None]
            + jnp.sum(dst ** 2, -1)[:, None, :]
            - 2.0 * jnp.einsum('bnc,bmc->bnm', src, dst))


def index_points(points, idx):
    # points [B, N, C], idx [B, ...] -> [B, ..., C]
    B = points.shape[0]
    flat = idx.reshape(B, -1)
    gathered = jnp.take_along_axis(points, flat[..., None], axis=1)
    return gathered.reshape(*idx.shape, points.shape[-1])


def farthest_point_sample(xyz, n_samples):
    # TODO(synk): serial, data-dependent loop; deterministic start at index 0
    # (reference uses a random start) — stays in plain JAX.
    B, N, _ = xyz.shape

    def body(i, carry):
        centroids, distance, farthest = carry
        centroids = centroids.at[:, i].set(farthest)
        centroid = jnp.take_along_axis(xyz, farthest[:, None, None], axis=1)  # [B,1,3]
        dist = jnp.sum((xyz - centroid) ** 2, -1)                             # [B,N]
        distance = jnp.minimum(distance, dist)
        farthest = jnp.argmax(distance, -1).astype(jnp.int32)
        return centroids, distance, farthest

    centroids = jnp.zeros((B, n_samples), jnp.int32)
    distance = jnp.full((B, N), 1e10, jnp.float32)
    farthest = jnp.zeros((B,), jnp.int32)
    centroids, _, _ = lax.fori_loop(0, n_samples, body, (centroids, distance, farthest))
    return centroids


def ball_query(radius, n_group, xyz, new_xyz):
    B, N, _ = xyz.shape
    S = new_xyz.shape[1]
    sqrdists = square_distance(new_xyz, xyz)                       # [B,S,N]
    group_idx = jnp.broadcast_to(jnp.arange(N, dtype=jnp.int32), (B, S, N))
    group_idx = jnp.where(sqrdists > radius ** 2, jnp.int32(N), group_idx)
    # n_group smallest valid indices == top_k of negated indices (cheaper than full sort)
    neg_top, _ = lax.top_k(-group_idx, n_group)
    group_idx = -neg_top                                           # ascending, [B,S,G]
    group_first = jnp.broadcast_to(group_idx[:, :, :1], group_idx.shape)
    group_idx = jnp.where(group_idx == N, group_first, group_idx)
    return group_idx


def set_abstraction(xyz, feats, mlp_params, n_samples, radius, n_group):
    # xyz [B,N,3], feats [B,N,C]
    B, N, _ = xyz.shape
    fps_idx = farthest_point_sample(xyz, n_samples)                # [B,S]
    new_xyz = index_points(xyz, fps_idx)                           # [B,S,3]
    idx = ball_query(radius, n_group, xyz, new_xyz)                # [B,S,G]
    grouped_xyz = index_points(xyz, idx) - new_xyz[:, :, None, :]  # [B,S,G,3]
    grouped = jnp.concatenate([grouped_xyz, index_points(feats, idx)], axis=-1)  # [B,S,G,C]

    # layout for the fused kernel: [G, B*S, C]; G is the leading, statically indexed axis
    grouped = jnp.transpose(grouped, (2, 0, 1, 3)).reshape(n_group, B * n_samples, -1)
    layers = [(w, b, True) for (w, b) in mlp_params]
    new_feats = sa_mlp_groupmax(grouped, layers)                   # [B*S, C_out]
    return new_xyz, new_feats.reshape(B, n_samples, -1)


def feature_propagation(xyz1, feats1, xyz2, feats2, mlp_params, k=3, extra_layers=()):
    # xyz1 sparse [B,S,3] w/ feats1 [B,S,C1]; xyz2 dense [B,N,3] w/ skip feats2 [B,N,C2]
    B, N, _ = xyz2.shape
    S = xyz1.shape[1]
    if S == 1:
        interpolated = jnp.broadcast_to(feats1, (B, N, feats1.shape[-1]))
    else:
        dists = square_distance(xyz2, xyz1)                        # [B,N,S]
        neg_d, idx = lax.top_k(-dists, k)                          # k nearest
        d = -neg_d
        w = 1.0 / (d + 1e-8)
        w = w / jnp.sum(w, axis=-1, keepdims=True)
        gathered = index_points(feats1, idx)                       # [B,N,k,C1]
        interpolated = jnp.sum(gathered * w[..., None], axis=2)    # [B,N,C1]
    new = jnp.concatenate([feats2, interpolated], axis=-1) if feats2 is not None else interpolated

    layers = [(w_, b_, True) for (w_, b_) in mlp_params] + list(extra_layers)
    out = fused_pointwise_mlp(new.reshape(B * N, -1), layers)
    return out.reshape(B, N, -1)


# ----------------------------- parameters -----------------------------------

def _fold_bn(bias, c_out, eps=1e-5):
    # eval-mode BN with identity running stats; real stats would be folded identically.
    gamma = jnp.ones((c_out,), jnp.float32)
    beta = jnp.zeros((c_out,), jnp.float32)
    mean = jnp.zeros((c_out,), jnp.float32)
    var = jnp.ones((c_out,), jnp.float32)
    s = gamma / jnp.sqrt(var + eps)
    return s, beta + (bias - mean) * s


def make_mlp_params(key, c_in, out_channels):
    params = []
    for c_out in out_channels:
        key, kw, kb = jax.random.split(key, 3)
        w = jax.random.normal(kw, (c_in, c_out), jnp.float32) * 0.1
        b = jax.random.normal(kb, (c_out,), jnp.float32) * 0.01
        scale, shift = _fold_bn(b, c_out)
        # fold BN scale into the weight so the kernel epilogue is add-shift only
        params.append(((w * scale[None, :]).astype(jnp.bfloat16), shift))
        c_in = c_out
    return params, key, c_in


def build_params(class_num, n_feats, cfg, seed=0):
    key = jax.random.PRNGKey(seed)
    params = {}
    sa_out = []
    c_in = 3 + n_feats
    for i, mlp in enumerate(cfg['sa_mlp_out_channels_list']):
        p, key, c_out = make_mlp_params(key, c_in, mlp)
        params[f'sa{i + 1}'] = p
        sa_out.append(c_out)
        c_in = 3 + c_out

    fp_out_prev = None
    for i, mlp in enumerate(cfg['fp_mlp_out_channels_list']):
        if i == 0:
            cin = sa_out[3] + sa_out[2]
        elif i == 1:
            cin = fp_out_prev + sa_out[1]
        elif i == 2:
            cin = fp_out_prev + sa_out[0]
        else:
            cin = fp_out_prev + n_feats
        p, key, fp_out_prev = make_mlp_params(key, cin, mlp)
        params[f'fp{i + 1}'] = p

    # seg head (Conv1d 1x1): pad output channels to 128 so the fused store is lane-dense
    key, kw, kb = jax.random.split(key, 3)
    w = jax.random.normal(kw, (fp_out_prev, class_num), jnp.float32) * 0.1
    b = jax.random.normal(kb, (class_num,), jnp.float32) * 0.01
    c_pad = _round_up(class_num, 128)
    w_pad = jnp.zeros((fp_out_prev, c_pad), jnp.float32).at[:, :class_num].set(w)
    b_pad = jnp.zeros((c_pad,), jnp.float32).at[:class_num].set(b)
    params['seg_head'] = (w_pad.astype(jnp.bfloat16), b_pad, class_num)
    return params


# ------------------------------ full forward --------------------------------

def pointnet_plus_semseg_forward(x, params, cfg):
    # x: [B, 3 + n_feats, N] (same as the PyTorch module's input)
    xyz = jnp.transpose(x[:, :3, :], (0, 2, 1))      # [B,N,3]
    feats = jnp.transpose(x[:, 3:, :], (0, 2, 1))    # [B,N,n_feats]

    ns = cfg['n_samples_list']
    rs = cfg['radius_list']
    gs = cfg['n_points_per_group_list']

    sa1_xyz, sa1_feats = set_abstraction(xyz, feats, params['sa1'], ns[0], rs[0], gs[0])
    sa2_xyz, sa2_feats = set_abstraction(sa1_xyz, sa1_feats, params['sa2'], ns[1], rs[1], gs[1])
    sa3_xyz, sa3_feats = set_abstraction(sa2_xyz, sa2_feats, params['sa3'], ns[2], rs[2], gs[2])
    sa4_xyz, sa4_feats = set_abstraction(sa3_xyz, sa3_feats, params['sa4'], ns[3], rs[3], gs[3])

    f1_feats = feature_propagation(sa4_xyz, sa4_feats, sa3_xyz, sa3_feats, params['fp1'], k=3)
    f2_feats = feature_propagation(sa3_xyz, f1_feats, sa2_xyz, sa2_feats, params['fp2'], k=3)
    f3_feats = feature_propagation(sa2_xyz, f2_feats, sa1_xyz, sa1_feats, params['fp3'], k=3)

    # final FP level + seg head fused into one kernel (lane-dense 128-wide output)
    w_seg, b_seg, class_num = params['seg_head']
    f4_and_seg = feature_propagation(sa1_xyz, f3_feats, xyz, feats, params['fp4'], k=3,
                                     extra_layers=[(w_seg, b_seg, False)])   # [B,N,128]
    seg = f4_and_seg[:, :, :class_num]                                       # [B,N,classes]
    seg_outs = jnp.transpose(seg, (0, 2, 1))                                 # [B,classes,N]
    return seg_outs, None


# --------------------------------- main --------------------------------------

if __name__ == "__main__":
    cfg = {
        'n_samples_list': [32, 16, 8, 4],
        'radius_list': [0.2, 0.4, 0.8, 1.6],
        'n_points_per_group_list': [8, 8, 8, 8],
        'sa_mlp_out_channels_list': [[16, 32], [32, 64], [64, 128], [128, 128]],
        'fp_mlp_out_channels_list': [[128, 64], [64, 64], [64, 32], [32, 32]],
    }
    class_num = 5
    n_feats = 3
    B, N = 2, 64

    params = build_params(class_num, n_feats, cfg, seed=0)

    key = jax.random.PRNGKey(0)
    x = jax.random.normal(key, (B, 3 + n_feats, N), jnp.float32)

    fwd = jax.jit(functools.partial(pointnet_plus_semseg_forward, params=params, cfg=cfg))
    seg_outs, _ = fwd(x)
    seg_outs = jax.block_until_ready(seg_outs)
    assert seg_outs.shape == (B, class_num, N), seg_outs.shape
    print("KERNEL_OK")
</pallas_src>

<mosaic_0001>
module attributes {stable_mosaic.version = 11 : i64} {
  func.func @kernel(%arg0: i32, %arg1: memref<8x64x6xf32, #tpu.memory_space<vmem>>, %arg2: memref<6x16xbf16, #tpu.memory_space<vmem>>, %arg3: memref<1x16xf32, #tpu.memory_space<vmem>>, %arg4: memref<16x32xbf16, #tpu.memory_space<vmem>>, %arg5: memref<1x32xf32, #tpu.memory_space<vmem>>, %arg6: memref<64x32xf32, #tpu.memory_space<vmem>>) attributes {dimension_semantics = [#tpu.dimension_semantics<parallel>], iteration_bounds = array<i64: 1>, scalar_prefetch = 0 : i64, scratch_operands = 0 : i64, tpu.core_type = #tpu.core_type<tc>, window_params = [{transform_indices = @transform_0, window_bounds = array<i64: 8, 64, 6>}, {pipeline_mode = #tpu.pipeline_mode<synchronous>, transform_indices = @transform_1, window_bounds = array<i64: 6, 16>}, {pipeline_mode = #tpu.pipeline_mode<synchronous>, transform_indices = @transform_2, window_bounds = array<i64: 1, 16>}, {pipeline_mode = #tpu.pipeline_mode<synchronous>, transform_indices = @transform_3, window_bounds = array<i64: 16, 32>}, {pipeline_mode = #tpu.pipeline_mode<synchronous>, transform_indices = @transform_4, window_bounds = array<i64: 1, 32>}, {transform_indices = @transform_5, window_bounds = array<i64: 64, 32>}]} {
    %c0 = arith.constant 0 : index
    %c0_0 = arith.constant 0 : index
    %0 = vector.load %arg2[%c0, %c0_0] : memref<6x16xbf16, #tpu.memory_space<vmem>>, vector<6x16xbf16>
    %c0_1 = arith.constant 0 : index
    %c0_2 = arith.constant 0 : index
    %1 = vector.load %arg3[%c0_1, %c0_2] : memref<1x16xf32, #tpu.memory_space<vmem>>, vector<1x16xf32>
    %c0_3 = arith.constant 0 : index
    %c0_4 = arith.constant 0 : index
    %2 = vector.load %arg4[%c0_3, %c0_4] : memref<16x32xbf16, #tpu.memory_space<vmem>>, vector<16x32xbf16>
    %c0_5 = arith.constant 0 : index
    %c0_6 = arith.constant 0 : index
    %3 = vector.load %arg5[%c0_5, %c0_6] : memref<1x32xf32, #tpu.memory_space<vmem>>, vector<1x32xf32>
    %c0_7 = arith.constant 0 : index
    %c0_8 = arith.constant 0 : index
    %c0_9 = arith.constant 0 : index
    %4 = vector.load %arg1[%c0_7, %c0_8, %c0_9] : memref<8x64x6xf32, #tpu.memory_space<vmem>>, vector<1x64x6xf32>
    %5 = vector.shape_cast %4 : vector<1x64x6xf32> to vector<64x6xf32>
    %6 = arith.truncf %5 : vector<64x6xf32> to vector<64x6xbf16>
    %cst = arith.constant dense<0.000000e+00> : vector<64x16xf32>
    %7 = tpu.matmul %6, %0, %cst {dimension_numbers = #tpu.dot_dimension_numbers<[1], [0], [0], [1], [0, 0, 1, 1], [], []>} : vector<64x6xbf16>, vector<6x16xbf16>, vector<64x16xf32> -> vector<64x16xf32>
    %8 = vector.broadcast %1 : vector<1x16xf32> to vector<64x16xf32>
    %9 = arith.addf %7, %8 : vector<64x16xf32>
    %cst_10 = arith.constant 0.000000e+00 : f32
    %10 = vector.broadcast %cst_10 : f32 to vector<64x16xf32>
    %11 = arith.maximumf %9, %10 : vector<64x16xf32>
    %12 = arith.truncf %11 : vector<64x16xf32> to vector<64x16xbf16>
    %cst_11 = arith.constant dense<0.000000e+00> : vector<64x32xf32>
    %13 = tpu.matmul %12, %2, %cst_11 {dimension_numbers = #tpu.dot_dimension_numbers<[1], [0], [0], [1], [0, 0, 1, 1], [], []>} : vector<64x16xbf16>, vector<16x32xbf16>, vector<64x32xf32> -> vector<64x32xf32>
    %14 = vector.broadcast %3 : vector<1x32xf32> to vector<64x32xf32>
    %15 = arith.addf %13, %14 : vector<64x32xf32>
    %cst_12 = arith.constant 0.000000e+00 : f32
    %16 = vector.broadcast %cst_12 : f32 to vector<64x32xf32>
    %17 = arith.maximumf %15, %16 : vector<64x32xf32>
    %c1 = arith.constant 1 : index
    %c0_13 = arith.constant 0 : index
    %c0_14 = arith.constant 0 : index
    %18 = vector.load %arg1[%c1, %c0_13, %c0_14] : memref<8x64x6xf32, #tpu.memory_space<vmem>>, vector<1x64x6xf32>
    %19 = vector.shape_cast %18 : vector<1x64x6xf32> to vector<64x6xf32>
    %20 = arith.truncf %19 : vector<64x6xf32> to vector<64x6xbf16>
    %cst_15 = arith.constant dense<0.000000e+00> : vector<64x16xf32>
    %21 = tpu.matmul %20, %0, %cst_15 {dimension_numbers = #tpu.dot_dimension_numbers<[1], [0], [0], [1], [0, 0, 1, 1], [], []>} : vector<64x6xbf16>, vector<6x16xbf16>, vector<64x16xf32> -> vector<64x16xf32>
    %22 = vector.broadcast %1 : vector<1x16xf32> to vector<64x16xf32>
    %23 = arith.addf %21, %22 : vector<64x16xf32>
    %cst_16 = arith.constant 0.000000e+00 : f32
    %24 = vector.broadcast %cst_16 : f32 to vector<64x16xf32>
    %25 = arith.maximumf %23, %24 : vector<64x16xf32>
    %26 = arith.truncf %25 : vector<64x16xf32> to vector<64x16xbf16>
    %cst_17 = arith.constant dense<0.000000e+00> : vector<64x32xf32>
    %27 = tpu.matmul %26, %2, %cst_17 {dimension_numbers = #tpu.dot_dimension_numbers<[1], [0], [0], [1], [0, 0, 1, 1], [], []>} : vector<64x16xbf16>, vector<16x32xbf16>, vector<64x32xf32> -> vector<64x32xf32>
    %28 = vector.broadcast %3 : vector<1x32xf32> to vector<64x32xf32>
    %29 = arith.addf %27, %28 : vector<64x32xf32>
    %cst_18 = arith.constant 0.000000e+00 : f32
    %30 = vector.broadcast %cst_18 : f32 to vector<64x32xf32>
    %31 = arith.maximumf %29, %30 : vector<64x32xf32>
    %32 = arith.maximumf %17, %31 : vector<64x32xf32>
    %c2 = arith.constant 2 : index
    %c0_19 = arith.constant 0 : index
    %c0_20 = arith.constant 0 : index
    %33 = vector.load %arg1[%c2, %c0_19, %c0_20] : memref<8x64x6xf32, #tpu.memory_space<vmem>>, vector<1x64x6xf32>
    %34 = vector.shape_cast %33 : vector<1x64x6xf32> to vector<64x6xf32>
    %35 = arith.truncf %34 : vector<64x6xf32> to vector<64x6xbf16>
    %cst_21 = arith.constant dense<0.000000e+00> : vector<64x16xf32>
    %36 = tpu.matmul %35, %0, %cst_21 {dimension_numbers = #tpu.dot_dimension_numbers<[1], [0], [0], [1], [0, 0, 1, 1], [], []>} : vector<64x6xbf16>, vector<6x16xbf16>, vector<64x16xf32> -> vector<64x16xf32>
    %37 = vector.broadcast %1 : vector<1x16xf32> to vector<64x16xf32>
    %38 = arith.addf %36, %37 : vector<64x16xf32>
    %cst_22 = arith.constant 0.000000e+00 : f32
    %39 = vector.broadcast %cst_22 : f32 to vector<64x16xf32>
    %40 = arith.maximumf %38, %39 : vector<64x16xf32>
    %41 = arith.truncf %40 : vector<64x16xf32> to vector<64x16xbf16>
    %cst_23 = arith.constant dense<0.000000e+00> : vector<64x32xf32>
    %42 = tpu.matmul %41, %2, %cst_23 {dimension_numbers = #tpu.dot_dimension_numbers<[1], [0], [0], [1], [0, 0, 1, 1], [], []>} : vector<64x16xbf16>, vector<16x32xbf16>, vector<64x32xf32> -> vector<64x32xf32>
    %43 = vector.broadcast %3 : vector<1x32xf32> to vector<64x32xf32>
    %44 = arith.addf %42, %43 : vector<64x32xf32>
    %cst_24 = arith.constant 0.000000e+00 : f32
    %45 = vector.broadcast %cst_24 : f32 to vector<64x32xf32>
    %46 = arith.maximumf %44, %45 : vector<64x32xf32>
    %47 = arith.maximumf %32, %46 : vector<64x32xf32>
    %c3 = arith.constant 3 : index
    %c0_25 = arith.constant 0 : index
    %c0_26 = arith.constant 0 : index
    %48 = vector.load %arg1[%c3, %c0_25, %c0_26] : memref<8x64x6xf32, #tpu.memory_space<vmem>>, vector<1x64x6xf32>
    %49 = vector.shape_cast %48 : vector<1x64x6xf32> to vector<64x6xf32>
    %50 = arith.truncf %49 : vector<64x6xf32> to vector<64x6xbf16>
    %cst_27 = arith.constant dense<0.000000e+00> : vector<64x16xf32>
    %51 = tpu.matmul %50, %0, %cst_27 {dimension_numbers = #tpu.dot_dimension_numbers<[1], [0], [0], [1], [0, 0, 1, 1], [], []>} : vector<64x6xbf16>, vector<6x16xbf16>, vector<64x16xf32> -> vector<64x16xf32>
    %52 = vector.broadcast %1 : vector<1x16xf32> to vector<64x16xf32>
    %53 = arith.addf %51, %52 : vector<64x16xf32>
    %cst_28 = arith.constant 0.000000e+00 : f32
    %54 = vector.broadcast %cst_28 : f32 to vector<64x16xf32>
    %55 = arith.maximumf %53, %54 : vector<64x16xf32>
    %56 = arith.truncf %55 : vector<64x16xf32> to vector<64x16xbf16>
    %cst_29 = arith.constant dense<0.000000e+00> : vector<64x32xf32>
    %57 = tpu.matmul %56, %2, %cst_29 {dimension_numbers = #tpu.dot_dimension_numbers<[1], [0], [0], [1], [0, 0, 1, 1], [], []>} : vector<64x16xbf16>, vector<16x32xbf16>, vector<64x32xf32> -> vector<64x32xf32>
    %58 = vector.broadcast %3 : vector<1x32xf32> to vector<64x32xf32>
    %59 = arith.addf %57, %58 : vector<64x32xf32>
    %cst_30 = arith.constant 0.000000e+00 : f32
    %60 = vector.broadcast %cst_30 : f32 to vector<64x32xf32>
    %61 = arith.maximumf %59, %60 : vector<64x32xf32>
    %62 = arith.maximumf %47, %61 : vector<64x32xf32>
    %c4 = arith.constant 4 : index
    %c0_31 = arith.constant 0 : index
    %c0_32 = arith.constant 0 : index
    %63 = vector.load %arg1[%c4, %c0_31, %c0_32] : memref<8x64x6xf32, #tpu.memory_space<vmem>>, vector<1x64x6xf32>
    %64 = vector.shape_cast %63 : vector<1x64x6xf32> to vector<64x6xf32>
    %65 = arith.truncf %64 : vector<64x6xf32> to vector<64x6xbf16>
    %cst_33 = arith.constant dense<0.000000e+00> : vector<64x16xf32>
    %66 = tpu.matmul %65, %0, %cst_33 {dimension_numbers = #tpu.dot_dimension_numbers<[1], [0], [0], [1], [0, 0, 1, 1], [], []>} : vector<64x6xbf16>, vector<6x16xbf16>, vector<64x16xf32> -> vector<64x16xf32>
    %67 = vector.broadcast %1 : vector<1x16xf32> to vector<64x16xf32>
    %68 = arith.addf %66, %67 : vector<64x16xf32>
    %cst_34 = arith.constant 0.000000e+00 : f32
    %69 = vector.broadcast %cst_34 : f32 to vector<64x16xf32>
    %70 = arith.maximumf %68, %69 : vector<64x16xf32>
    %71 = arith.truncf %70 : vector<64x16xf32> to vector<64x16xbf16>
    %cst_35 = arith.constant dense<0.000000e+00> : vector<64x32xf32>
    %72 = tpu.matmul %71, %2, %cst_35 {dimension_numbers = #tpu.dot_dimension_numbers<[1], [0], [0], [1], [0, 0, 1, 1], [], []>} : vector<64x16xbf16>, vector<16x32xbf16>, vector<64x32xf32> -> vector<64x32xf32>
    %73 = vector.broadcast %3 : vector<1x32xf32> to vector<64x32xf32>
    %74 = arith.addf %72, %73 : vector<64x32xf32>
    %cst_36 = arith.constant 0.000000e+00 : f32
    %75 = vector.broadcast %cst_36 : f32 to vector<64x32xf32>
    %76 = arith.maximumf %74, %75 : vector<64x32xf32>
    %77 = arith.maximumf %62, %76 : vector<64x32xf32>
    %c5 = arith.constant 5 : index
    %c0_37 = arith.constant 0 : index
    %c0_38 = arith.constant 0 : index
    %78 = vector.load %arg1[%c5, %c0_37, %c0_38] : memref<8x64x6xf32, #tpu.memory_space<vmem>>, vector<1x64x6xf32>
    %79 = vector.shape_cast %78 : vector<1x64x6xf32> to vector<64x6xf32>
    %80 = arith.truncf %79 : vector<64x6xf32> to vector<64x6xbf16>
    %cst_39 = arith.constant dense<0.000000e+00> : vector<64x16xf32>
    %81 = tpu.matmul %80, %0, %cst_39 {dimension_numbers = #tpu.dot_dimension_numbers<[1], [0], [0], [1], [0, 0, 1, 1], [], []>} : vector<64x6xbf16>, vector<6x16xbf16>, vector<64x16xf32> -> vector<64x16xf32>
    %82 = vector.broadcast %1 : vector<1x16xf32> to vector<64x16xf32>
    %83 = arith.addf %81, %82 : vector<64x16xf32>
    %cst_40 = arith.constant 0.000000e+00 : f32
    %84 = vector.broadcast %cst_40 : f32 to vector<64x16xf32>
    %85 = arith.maximumf %83, %84 : vector<64x16xf32>
    %86 = arith.truncf %85 : vector<64x16xf32> to vector<64x16xbf16>
    %cst_41 = arith.constant dense<0.000000e+00> : vector<64x32xf32>
    %87 = tpu.matmul %86, %2, %cst_41 {dimension_numbers = #tpu.dot_dimension_numbers<[1], [0], [0], [1], [0, 0, 1, 1], [], []>} : vector<64x16xbf16>, vector<16x32xbf16>, vector<64x32xf32> -> vector<64x32xf32>
    %88 = vector.broadcast %3 : vector<1x32xf32> to vector<64x32xf32>
    %89 = arith.addf %87, %88 : vector<64x32xf32>
    %cst_42 = arith.constant 0.000000e+00 : f32
    %90 = vector.broadcast %cst_42 : f32 to vector<64x32xf32>
    %91 = arith.maximumf %89, %90 : vector<64x32xf32>
    %92 = arith.maximumf %77, %91 : vector<64x32xf32>
    %c6 = arith.constant 6 : index
    %c0_43 = arith.constant 0 : index
    %c0_44 = arith.constant 0 : index
    %93 = vector.load %arg1[%c6, %c0_43, %c0_44] : memref<8x64x6xf32, #tpu.memory_space<vmem>>, vector<1x64x6xf32>
    %94 = vector.shape_cast %93 : vector<1x64x6xf32> to vector<64x6xf32>
    %95 = arith.truncf %94 : vector<64x6xf32> to vector<64x6xbf16>
    %cst_45 = arith.constant dense<0.000000e+00> : vector<64x16xf32>
    %96 = tpu.matmul %95, %0, %cst_45 {dimension_numbers = #tpu.dot_dimension_numbers<[1], [0], [0], [1], [0, 0, 1, 1], [], []>} : vector<64x6xbf16>, vector<6x16xbf16>, vector<64x16xf32> -> vector<64x16xf32>
    %97 = vector.broadcast %1 : vector<1x16xf32> to vector<64x16xf32>
    %98 = arith.addf %96, %97 : vector<64x16xf32>
    %cst_46 = arith.constant 0.000000e+00 : f32
    %99 = vector.broadcast %cst_46 : f32 to vector<64x16xf32>
    %100 = arith.maximumf %98, %99 : vector<64x16xf32>
    %101 = arith.truncf %100 : vector<64x16xf32> to vector<64x16xbf16>
    %cst_47 = arith.constant dense<0.000000e+00> : vector<64x32xf32>
    %102 = tpu.matmul %101, %2, %cst_47 {dimension_numbers = #tpu.dot_dimension_numbers<[1], [0], [0], [1], [0, 0, 1, 1], [], []>} : vector<64x16xbf16>, vector<16x32xbf16>, vector<64x32xf32> -> vector<64x32xf32>
    %103 = vector.broadcast %3 : vector<1x32xf32> to vector<64x32xf32>
    %104 = arith.addf %102, %103 : vector<64x32xf32>
    %cst_48 = arith.constant 0.000000e+00 : f32
    %105 = vector.broadcast %cst_48 : f32 to vector<64x32xf32>
    %106 = arith.maximumf %104, %105 : vector<64x32xf32>
    %107 = arith.maximumf %92, %106 : vector<64x32xf32>
    %c7 = arith.constant 7 : index
    %c0_49 = arith.constant 0 : index
    %c0_50 = arith.constant 0 : index
    %108 = vector.load %arg1[%c7, %c0_49, %c0_50] : memref<8x64x6xf32, #tpu.memory_space<vmem>>, vector<1x64x6xf32>
    %109 = vector.shape_cast %108 : vector<1x64x6xf32> to vector<64x6xf32>
    %110 = arith.truncf %109 : vector<64x6xf32> to vector<64x6xbf16>
    %cst_51 = arith.constant dense<0.000000e+00> : vector<64x16xf32>
    %111 = tpu.matmul %110, %0, %cst_51 {dimension_numbers = #tpu.dot_dimension_numbers<[1], [0], [0], [1], [0, 0, 1, 1], [], []>} : vector<64x6xbf16>, vector<6x16xbf16>, vector<64x16xf32> -> vector<64x16xf32>
    %112 = vector.broadcast %1 : vector<1x16xf32> to vector<64x16xf32>
    %113 = arith.addf %111, %112 : vector<64x16xf32>
    %cst_52 = arith.constant 0.000000e+00 : f32
    %114 = vector.broadcast %cst_52 : f32 to vector<64x16xf32>
    %115 = arith.maximumf %113, %114 : vector<64x16xf32>
    %116 = arith.truncf %115 : vector<64x16xf32> to vector<64x16xbf16>
    %cst_53 = arith.constant dense<0.000000e+00> : vector<64x32xf32>
    %117 = tpu.matmul %116, %2, %cst_53 {dimension_numbers = #tpu.dot_dimension_numbers<[1], [0], [0], [1], [0, 0, 1, 1], [], []>} : vector<64x16xbf16>, vector<16x32xbf16>, vector<64x32xf32> -> vector<64x32xf32>
    %118 = vector.broadcast %3 : vector<1x32xf32> to vector<64x32xf32>
    %119 = arith.addf %117, %118 : vector<64x32xf32>
    %cst_54 = arith.constant 0.000000e+00 : f32
    %120 = vector.broadcast %cst_54 : f32 to vector<64x32xf32>
    %121 = arith.maximumf %119, %120 : vector<64x32xf32>
    %122 = arith.maximumf %107, %121 : vector<64x32xf32>
    %c0_55 = arith.constant 0 : index
    %c0_56 = arith.constant 0 : index
    %123 = vector.load %arg6[%c0_55, %c0_56] : memref<64x32xf32, #tpu.memory_space<vmem>>, vector<64x32xf32>
    tpu.vector_store %arg6[%c0_55, %c0_56], %122 {strides = array<i32>} : memref<64x32xf32, #tpu.memory_space<vmem>>, vector<64x32xf32>,
    return
  }
  func.func @transform_0(%arg0: i32) -> (i32, i32, i32) {
    %c0_i32 = arith.constant 0 : i32
    %c0_i32_0 = arith.constant 0 : i32
    %c0_i32_1 = arith.constant 0 : i32
    return %c0_i32, %arg0, %c0_i32_0 : i32, i32, i32
  }
  func.func @transform_1(%arg0: i32) -> (i32, i32) {
    %c0_i32 = arith.constant 0 : i32
    %c0_i32_0 = arith.constant 0 : i32
    %c0_i32_1 = arith.constant 0 : i32
    return %c0_i32, %c0_i32_0 : i32, i32
  }
  func.func @transform_2(%arg0: i32) -> (i32, i32) {
    %c0_i32 = arith.constant 0 : i32
    %c0_i32_0 = arith.constant 0 : i32
    %c0_i32_1 = arith.constant 0 : i32
    return %c0_i32, %c0_i32_0 : i32, i32
  }
  func.func @transform_3(%arg0: i32) -> (i32, i32) {
    %c0_i32 = arith.constant 0 : i32
    %c0_i32_0 = arith.constant 0 : i32
    %c0_i32_1 = arith.constant 0 : i32
    return %c0_i32, %c0_i32_0 : i32, i32
  }
  func.func @transform_4(%arg0: i32) -> (i32, i32) {
    %c0_i32 = arith.constant 0 : i32
    %c0_i32_0 = arith.constant 0 : i32
    %c0_i32_1 = arith.constant 0 : i32
    return %c0_i32, %c0_i32_0 : i32, i32
  }
  func.func @transform_5(%arg0: i32) -> (i32, i32) {
    %c0_i32 = arith.constant 0 : i32
    %c0_i32_0 = arith.constant 0 : i32
    return %arg0, %c0_i32 : i32, i32
  }
}

module attributes {stable_mosaic.version = 11 : i64} {
  func.func @kernel(%arg0: i32, %arg1: memref<8x32x35xf32, #tpu.memory_space<vmem>>, %arg2: memref<35x32xbf16, #tpu.memory_space<vmem>>, %arg3: memref<1x32xf32, #tpu.memory_space<vmem>>, %arg4: memref<32x64xbf16, #tpu.memory_space<vmem>>, %arg5: memref<1x64xf32, #tpu.memory_space<vmem>>, %arg6: memref<32x64xf32, #tpu.memory_space<vmem>>) attributes {dimension_semantics = [#tpu.dimension_semantics<parallel>], iteration_bounds = array<i64: 1>, scalar_prefetch = 0 : i64, scratch_operands = 0 : i64, tpu.core_type = #tpu.core_type<tc>, window_params = [{transform_indices = @transform_0, window_bounds = array<i64: 8, 32, 35>}, {pipeline_mode = #tpu.pipeline_mode<synchronous>, transform_indices = @transform_1, window_bounds = array<i64: 35, 32>}, {pipeline_mode = #tpu.pipeline_mode<synchronous>, transform_indices = @transform_2, window_bounds = array<i64: 1, 32>}, {pipeline_mode = #tpu.pipeline_mode<synchronous>, transform_indices = @transform_3, window_bounds = array<i64: 32, 64>}, {pipeline_mode = #tpu.pipeline_mode<synchronous>, transform_indices = @transform_4, window_bounds = array<i64: 1, 64>}, {transform_indices = @transform_5, window_bounds = array<i64: 32, 64>}]} {
    %c0 = arith.constant 0 : index
    %c0_0 = arith.constant 0 : index
    %0 = vector.load %arg2[%c0, %c0_0] : memref<35x32xbf16, #tpu.memory_space<vmem>>, vector<35x32xbf16>
    %c0_1 = arith.constant 0 : index
    %c0_2 = arith.constant 0 : index
    %1 = vector.load %arg3[%c0_1, %c0_2] : memref<1x32xf32, #tpu.memory_space<vmem>>, vector<1x32xf32>
    %c0_3 = arith.constant 0 : index
    %c0_4 = arith.constant 0 : index
    %2 = vector.load %arg4[%c0_3, %c0_4] : memref<32x64xbf16, #tpu.memory_space<vmem>>, vector<32x64xbf16>
    %c0_5 = arith.constant 0 : index
    %c0_6 = arith.constant 0 : index
    %3 = vector.load %arg5[%c0_5, %c0_6] : memref<1x64xf32, #tpu.memory_space<vmem>>, vector<1x64xf32>
    %c0_7 = arith.constant 0 : index
    %c0_8 = arith.constant 0 : index
    %c0_9 = arith.constant 0 : index
    %4 = vector.load %arg1[%c0_7, %c0_8, %c0_9] : memref<8x32x35xf32, #tpu.memory_space<vmem>>, vector<1x32x35xf32>
    %5 = vector.shape_cast %4 : vector<1x32x35xf32> to vector<32x35xf32>
    %6 = arith.truncf %5 : vector<32x35xf32> to vector<32x35xbf16>
    %cst = arith.constant dense<0.000000e+00> : vector<32x32xf32>
    %7 = tpu.matmul %6, %0, %cst {dimension_numbers = #tpu.dot_dimension_numbers<[1], [0], [0], [1], [0, 0, 1, 1], [], []>} : vector<32x35xbf16>, vector<35x32xbf16>, vector<32x32xf32> -> vector<32x32xf32>
    %8 = vector.broadcast %1 : vector<1x32xf32> to vector<32x32xf32>
    %9 = arith.addf %7, %8 : vector<32x32xf32>
    %cst_10 = arith.constant 0.000000e+00 : f32
    %10 = vector.broadcast %cst_10 : f32 to vector<32x32xf32>
    %11 = arith.maximumf %9, %10 : vector<32x32xf32>
    %12 = arith.truncf %11 : vector<32x32xf32> to vector<32x32xbf16>
    %cst_11 = arith.constant dense<0.000000e+00> : vector<32x64xf32>
    %13 = tpu.matmul %12, %2, %cst_11 {dimension_numbers = #tpu.dot_dimension_numbers<[1], [0], [0], [1], [0, 0, 1, 1], [], []>} : vector<32x32xbf16>, vector<32x64xbf16>, vector<32x64xf32> -> vector<32x64xf32>
    %14 = vector.broadcast %3 : vector<1x64xf32> to vector<32x64xf32>
    %15 = arith.addf %13, %14 : vector<32x64xf32>
    %cst_12 = arith.constant 0.000000e+00 : f32
    %16 = vector.broadcast %cst_12 : f32 to vector<32x64xf32>
    %17 = arith.maximumf %15, %16 : vector<32x64xf32>
    %c1 = arith.constant 1 : index
    %c0_13 = arith.constant 0 : index
    %c0_14 = arith.constant 0 : index
    %18 = vector.load %arg1[%c1, %c0_13, %c0_14] : memref<8x32x35xf32, #tpu.memory_space<vmem>>, vector<1x32x35xf32>
    %19 = vector.shape_cast %18 : vector<1x32x35xf32> to vector<32x35xf32>
    %20 = arith.truncf %19 : vector<32x35xf32> to vector<32x35xbf16>
    %cst_15 = arith.constant dense<0.000000e+00> : vector<32x32xf32>
    %21 = tpu.matmul %20, %0, %cst_15 {dimension_numbers = #tpu.dot_dimension_numbers<[1], [0], [0], [1], [0, 0, 1, 1], [], []>} : vector<32x35xbf16>, vector<35x32xbf16>, vector<32x32xf32> -> vector<32x32xf32>
    %22 = vector.broadcast %1 : vector<1x32xf32> to vector<32x32xf32>
    %23 = arith.addf %21, %22 : vector<32x32xf32>
    %cst_16 = arith.constant 0.000000e+00 : f32
    %24 = vector.broadcast %cst_16 : f32 to vector<32x32xf32>
    %25 = arith.maximumf %23, %24 : vector<32x32xf32>
    %26 = arith.truncf %25 : vector<32x32xf32> to vector<32x32xbf16>
    %cst_17 = arith.constant dense<0.000000e+00> : vector<32x64xf32>
    %27 = tpu.matmul %26, %2, %cst_17 {dimension_numbers = #tpu.dot_dimension_numbers<[1], [0], [0], [1], [0, 0, 1, 1], [], []>} : vector<32x32xbf16>, vector<32x64xbf16>, vector<32x64xf32> -> vector<32x64xf32>
    %28 = vector.broadcast %3 : vector<1x64xf32> to vector<32x64xf32>
    %29 = arith.addf %27, %28 : vector<32x64xf32>
    %cst_18 = arith.constant 0.000000e+00 : f32
    %30 = vector.broadcast %cst_18 : f32 to vector<32x64xf32>
    %31 = arith.maximumf %29, %30 : vector<32x64xf32>
    %32 = arith.maximumf %17, %31 : vector<32x64xf32>
    %c2 = arith.constant 2 : index
    %c0_19 = arith.constant 0 : index
    %c0_20 = arith.constant 0 : index
    %33 = vector.load %arg1[%c2, %c0_19, %c0_20] : memref<8x32x35xf32, #tpu.memory_space<vmem>>, vector<1x32x35xf32>
    %34 = vector.shape_cast %33 : vector<1x32x35xf32> to vector<32x35xf32>
    %35 = arith.truncf %34 : vector<32x35xf32> to vector<32x35xbf16>
    %cst_21 = arith.constant dense<0.000000e+00> : vector<32x32xf32>
    %36 = tpu.matmul %35, %0, %cst_21 {dimension_numbers = #tpu.dot_dimension_numbers<[1], [0], [0], [1], [0, 0, 1, 1], [], []>} : vector<32x35xbf16>, vector<35x32xbf16>, vector<32x32xf32> -> vector<32x32xf32>
    %37 = vector.broadcast %1 : vector<1x32xf32> to vector<32x32xf32>
    %38 = arith.addf %36, %37 : vector<32x32xf32>
    %cst_22 = arith.constant 0.000000e+00 : f32
    %39 = vector.broadcast %cst_22 : f32 to vector<32x32xf32>
    %40 = arith.maximumf %38, %39 : vector<32x32xf32>
    %41 = arith.truncf %40 : vector<32x32xf32> to vector<32x32xbf16>
    %cst_23 = arith.constant dense<0.000000e+00> : vector<32x64xf32>
    %42 = tpu.matmul %41, %2, %cst_23 {dimension_numbers = #tpu.dot_dimension_numbers<[1], [0], [0], [1], [0, 0, 1, 1], [], []>} : vector<32x32xbf16>, vector<32x64xbf16>, vector<32x64xf32> -> vector<32x64xf32>
    %43 = vector.broadcast %3 : vector<1x64xf32> to vector<32x64xf32>
    %44 = arith.addf %42, %43 : vector<32x64xf32>
    %cst_24 = arith.constant 0.000000e+00 : f32
    %45 = vector.broadcast %cst_24 : f32 to vector<32x64xf32>
    %46 = arith.maximumf %44, %45 : vector<32x64xf32>
    %47 = arith.maximumf %32, %46 : vector<32x64xf32>
    %c3 = arith.constant 3 : index
    %c0_25 = arith.constant 0 : index
    %c0_26 = arith.constant 0 : index
    %48 = vector.load %arg1[%c3, %c0_25, %c0_26] : memref<8x32x35xf32, #tpu.memory_space<vmem>>, vector<1x32x35xf32>
    %49 = vector.shape_cast %48 : vector<1x32x35xf32> to vector<32x35xf32>
    %50 = arith.truncf %49 : vector<32x35xf32> to vector<32x35xbf16>
    %cst_27 = arith.constant dense<0.000000e+00> : vector<32x32xf32>
    %51 = tpu.matmul %50, %0, %cst_27 {dimension_numbers = #tpu.dot_dimension_numbers<[1], [0], [0], [1], [0, 0, 1, 1], [], []>} : vector<32x35xbf16>, vector<35x32xbf16>, vector<32x32xf32> -> vector<32x32xf32>
    %52 = vector.broadcast %1 : vector<1x32xf32> to vector<32x32xf32>
    %53 = arith.addf %51, %52 : vector<32x32xf32>
    %cst_28 = arith.constant 0.000000e+00 : f32
    %54 = vector.broadcast %cst_28 : f32 to vector<32x32xf32>
    %55 = arith.maximumf %53, %54 : vector<32x32xf32>
    %56 = arith.truncf %55 : vector<32x32xf32> to vector<32x32xbf16>
    %cst_29 = arith.constant dense<0.000000e+00> : vector<32x64xf32>
    %57 = tpu.matmul %56, %2, %cst_29 {dimension_numbers = #tpu.dot_dimension_numbers<[1], [0], [0], [1], [0, 0, 1, 1], [], []>} : vector<32x32xbf16>, vector<32x64xbf16>, vector<32x64xf32> -> vector<32x64xf32>
    %58 = vector.broadcast %3 : vector<1x64xf32> to vector<32x64xf32>
    %59 = arith.addf %57, %58 : vector<32x64xf32>
    %cst_30 = arith.constant 0.000000e+00 : f32
    %60 = vector.broadcast %cst_30 : f32 to vector<32x64xf32>
    %61 = arith.maximumf %59, %60 : vector<32x64xf32>
    %62 = arith.maximumf %47, %61 : vector<32x64xf32>
    %c4 = arith.constant 4 : index
    %c0_31 = arith.constant 0 : index
    %c0_32 = arith.constant 0 : index
    %63 = vector.load %arg1[%c4, %c0_31, %c0_32] : memref<8x32x35xf32, #tpu.memory_space<vmem>>, vector<1x32x35xf32>
    %64 = vector.shape_cast %63 : vector<1x32x35xf32> to vector<32x35xf32>
    %65 = arith.truncf %64 : vector<32x35xf32> to vector<32x35xbf16>
    %cst_33 = arith.constant dense<0.000000e+00> : vector<32x32xf32>
    %66 = tpu.matmul %65, %0, %cst_33 {dimension_numbers = #tpu.dot_dimension_numbers<[1], [0], [0], [1], [0, 0, 1, 1], [], []>} : vector<32x35xbf16>, vector<35x32xbf16>, vector<32x32xf32> -> vector<32x32xf32>
    %67 = vector.broadcast %1 : vector<1x32xf32> to vector<32x32xf32>
    %68 = arith.addf %66, %67 : vector<32x32xf32>
    %cst_34 = arith.constant 0.000000e+00 : f32
    %69 = vector.broadcast %cst_34 : f32 to vector<32x32xf32>
    %70 = arith.maximumf %68, %69 : vector<32x32xf32>
    %71 = arith.truncf %70 : vector<32x32xf32> to vector<32x32xbf16>
    %cst_35 = arith.constant dense<0.000000e+00> : vector<32x64xf32>
    %72 = tpu.matmul %71, %2, %cst_35 {dimension_numbers = #tpu.dot_dimension_numbers<[1], [0], [0], [1], [0, 0, 1, 1], [], []>} : vector<32x32xbf16>, vector<32x64xbf16>, vector<32x64xf32> -> vector<32x64xf32>
    %73 = vector.broadcast %3 : vector<1x64xf32> to vector<32x64xf32>
    %74 = arith.addf %72, %73 : vector<32x64xf32>
    %cst_36 = arith.constant 0.000000e+00 : f32
    %75 = vector.broadcast %cst_36 : f32 to vector<32x64xf32>
    %76 = arith.maximumf %74, %75 : vector<32x64xf32>
    %77 = arith.maximumf %62, %76 : vector<32x64xf32>
    %c5 = arith.constant 5 : index
    %c0_37 = arith.constant 0 : index
    %c0_38 = arith.constant 0 : index
    %78 = vector.load %arg1[%c5, %c0_37, %c0_38] : memref<8x32x35xf32, #tpu.memory_space<vmem>>, vector<1x32x35xf32>
    %79 = vector.shape_cast %78 : vector<1x32x35xf32> to vector<32x35xf32>
    %80 = arith.truncf %79 : vector<32x35xf32> to vector<32x35xbf16>
    %cst_39 = arith.constant dense<0.000000e+00> : vector<32x32xf32>
    %81 = tpu.matmul %80, %0, %cst_39 {dimension_numbers = #tpu.dot_dimension_numbers<[1], [0], [0], [1], [0, 0, 1, 1], [], []>} : vector<32x35xbf16>, vector<35x32xbf16>, vector<32x32xf32> -> vector<32x32xf32>
    %82 = vector.broadcast %1 : vector<1x32xf32> to vector<32x32xf32>
    %83 = arith.addf %81, %82 : vector<32x32xf32>
    %cst_40 = arith.constant 0.000000e+00 : f32
    %84 = vector.broadcast %cst_40 : f32 to vector<32x32xf32>
    %85 = arith.maximumf %83, %84 : vector<32x32xf32>
    %86 = arith.truncf %85 : vector<32x32xf32> to vector<32x32xbf16>
    %cst_41 = arith.constant dense<0.000000e+00> : vector<32x64xf32>
    %87 = tpu.matmul %86, %2, %cst_41 {dimension_numbers = #tpu.dot_dimension_numbers<[1], [0], [0], [1], [0, 0, 1, 1], [], []>} : vector<32x32xbf16>, vector<32x64xbf16>, vector<32x64xf32> -> vector<32x64xf32>
    %88 = vector.broadcast %3 : vector<1x64xf32> to vector<32x64xf32>
    %89 = arith.addf %87, %88 : vector<32x64xf32>
    %cst_42 = arith.constant 0.000000e+00 : f32
    %90 = vector.broadcast %cst_42 : f32 to vector<32x64xf32>
    %91 = arith.maximumf %89, %90 : vector<32x64xf32>
    %92 = arith.maximumf %77, %91 : vector<32x64xf32>
    %c6 = arith.constant 6 : index
    %c0_43 = arith.constant 0 : index
    %c0_44 = arith.constant 0 : index
    %93 = vector.load %arg1[%c6, %c0_43, %c0_44] : memref<8x32x35xf32, #tpu.memory_space<vmem>>, vector<1x32x35xf32>
    %94 = vector.shape_cast %93 : vector<1x32x35xf32> to vector<32x35xf32>
    %95 = arith.truncf %94 : vector<32x35xf32> to vector<32x35xbf16>
    %cst_45 = arith.constant dense<0.000000e+00> : vector<32x32xf32>
    %96 = tpu.matmul %95, %0, %cst_45 {dimension_numbers = #tpu.dot_dimension_numbers<[1], [0], [0], [1], [0, 0, 1, 1], [], []>} : vector<32x35xbf16>, vector<35x32xbf16>, vector<32x32xf32> -> vector<32x32xf32>
    %97 = vector.broadcast %1 : vector<1x32xf32> to vector<32x32xf32>
    %98 = arith.addf %96, %97 : vector<32x32xf32>
    %cst_46 = arith.constant 0.000000e+00 : f32
    %99 = vector.broadcast %cst_46 : f32 to vector<32x32xf32>
    %100 = arith.maximumf %98, %99 : vector<32x32xf32>
    %101 = arith.truncf %100 : vector<32x32xf32> to vector<32x32xbf16>
    %cst_47 = arith.constant dense<0.000000e+00> : vector<32x64xf32>
    %102 = tpu.matmul %101, %2, %cst_47 {dimension_numbers = #tpu.dot_dimension_numbers<[1], [0], [0], [1], [0, 0, 1, 1], [], []>} : vector<32x32xbf16>, vector<32x64xbf16>, vector<32x64xf32> -> vector<32x64xf32>
    %103 = vector.broadcast %3 : vector<1x64xf32> to vector<32x64xf32>
    %104 = arith.addf %102, %103 : vector<32x64xf32>
    %cst_48 = arith.constant 0.000000e+00 : f32
    %105 = vector.broadcast %cst_48 : f32 to vector<32x64xf32>
    %106 = arith.maximumf %104, %105 : vector<32x64xf32>
    %107 = arith.maximumf %92, %106 : vector<32x64xf32>
    %c7 = arith.constant 7 : index
    %c0_49 = arith.constant 0 : index
    %c0_50 = arith.constant 0 : index
    %108 = vector.load %arg1[%c7, %c0_49, %c0_50] : memref<8x32x35xf32, #tpu.memory_space<vmem>>, vector<1x32x35xf32>
    %109 = vector.shape_cast %108 : vector<1x32x35xf32> to vector<32x35xf32>
    %110 = arith.truncf %109 : vector<32x35xf32> to vector<32x35xbf16>
    %cst_51 = arith.constant dense<0.000000e+00> : vector<32x32xf32>
    %111 = tpu.matmul %110, %0, %cst_51 {dimension_numbers = #tpu.dot_dimension_numbers<[1], [0], [0], [1], [0, 0, 1, 1], [], []>} : vector<32x35xbf16>, vector<35x32xbf16>, vector<32x32xf32> -> vector<32x32xf32>
    %112 = vector.broadcast %1 : vector<1x32xf32> to vector<32x32xf32>
    %113 = arith.addf %111, %112 : vector<32x32xf32>
    %cst_52 = arith.constant 0.000000e+00 : f32
    %114 = vector.broadcast %cst_52 : f32 to vector<32x32xf32>
    %115 = arith.maximumf %113, %114 : vector<32x32xf32>
    %116 = arith.truncf %115 : vector<32x32xf32> to vector<32x32xbf16>
    %cst_53 = arith.constant dense<0.000000e+00> : vector<32x64xf32>
    %117 = tpu.matmul %116, %2, %cst_53 {dimension_numbers = #tpu.dot_dimension_numbers<[1], [0], [0], [1], [0, 0, 1, 1], [], []>} : vector<32x32xbf16>, vector<32x64xbf16>, vector<32x64xf32> -> vector<32x64xf32>
    %118 = vector.broadcast %3 : vector<1x64xf32> to vector<32x64xf32>
    %119 = arith.addf %117, %118 : vector<32x64xf32>
    %cst_54 = arith.constant 0.000000e+00 : f32
    %120 = vector.broadcast %cst_54 : f32 to vector<32x64xf32>
    %121 = arith.maximumf %119, %120 : vector<32x64xf32>
    %122 = arith.maximumf %107, %121 : vector<32x64xf32>
    %c0_55 = arith.constant 0 : index
    %c0_56 = arith.constant 0 : index
    %123 = vector.load %arg6[%c0_55, %c0_56] : memref<32x64xf32, #tpu.memory_space<vmem>>, vector<32x64xf32>
    tpu.vector_store %arg6[%c0_55, %c0_56], %122 {strides = array<i32>} : memref<32x64xf32, #tpu.memory_space<vmem>>, vector<32x64xf32>,
    return
  }
  func.func @transform_0(%arg0: i32) -> (i32, i32, i32) {
    %c0_i32 = arith.constant 0 : i32
    %c0_i32_0 = arith.constant 0 : i32
    %c0_i32_1 = arith.constant 0 : i32
    return %c0_i32, %arg0, %c0_i32_0 : i32, i32, i32
  }
  func.func @transform_1(%arg0: i32) -> (i32, i32) {
    %c0_i32 = arith.constant 0 : i32
    %c0_i32_0 = arith.constant 0 : i32
    %c0_i32_1 = arith.constant 0 : i32
    return %c0_i32, %c0_i32_0 : i32, i32
  }
  func.func @transform_2(%arg0: i32) -> (i32, i32) {
    %c0_i32 = arith.constant 0 : i32
    %c0_i32_0 = arith.constant 0 : i32
    %c0_i32_1 = arith.constant 0 : i32
    return %c0_i32, %c0_i32_0 : i32, i32
  }
  func.func @transform_3(%arg0: i32) -> (i32, i32) {
    %c0_i32 = arith.constant 0 : i32
    %c0_i32_0 = arith.constant 0 : i32
    %c0_i32_1 = arith.constant 0 : i32
    return %c0_i32, %c0_i32_0 : i32, i32
  }
  func.func @transform_4(%arg0: i32) -> (i32, i32) {
    %c0_i32 = arith.constant 0 : i32
    %c0_i32_0 = arith.constant 0 : i32
    %c0_i32_1 = arith.constant 0 : i32
    return %c0_i32, %c0_i32_0 : i32, i32
  }
  func.func @transform_5(%arg0: i32) -> (i32, i32) {
    %c0_i32 = arith.constant 0 : i32
    %c0_i32_0 = arith.constant 0 : i32
    return %arg0, %c0_i32 : i32, i32
  }
}

module attributes {stable_mosaic.version = 11 : i64} {
  func.func @kernel(%arg0: i32, %arg1: memref<8x16x67xf32, #tpu.memory_space<vmem>>, %arg2: memref<67x64xbf16, #tpu.memory_space<vmem>>, %arg3: memref<1x64xf32, #tpu.memory_space<vmem>>, %arg4: memref<64x128xbf16, #tpu.memory_space<vmem>>, %arg5: memref<1x128xf32, #tpu.memory_space<vmem>>, %arg6: memref<16x128xf32, #tpu.memory_space<vmem>>) attributes {dimension_semantics = [#tpu.dimension_semantics<parallel>], iteration_bounds = array<i64: 1>, scalar_prefetch = 0 : i64, scratch_operands = 0 : i64, tpu.core_type = #tpu.core_type<tc>, window_params = [{transform_indices = @transform_0, window_bounds = array<i64: 8, 16, 67>}, {pipeline_mode = #tpu.pipeline_mode<synchronous>, transform_indices = @transform_1, window_bounds = array<i64: 67, 64>}, {pipeline_mode = #tpu.pipeline_mode<synchronous>, transform_indices = @transform_2, window_bounds = array<i64: 1, 64>}, {pipeline_mode = #tpu.pipeline_mode<synchronous>, transform_indices = @transform_3, window_bounds = array<i64: 64, 128>}, {pipeline_mode = #tpu.pipeline_mode<synchronous>, transform_indices = @transform_4, window_bounds = array<i64: 1, 128>}, {transform_indices = @transform_5, window_bounds = array<i64: 16, 128>}]} {
    %c0 = arith.constant 0 : index
    %c0_0 = arith.constant 0 : index
    %0 = vector.load %arg2[%c0, %c0_0] : memref<67x64xbf16, #tpu.memory_space<vmem>>, vector<67x64xbf16>
    %c0_1 = arith.constant 0 : index
    %c0_2 = arith.constant 0 : index
    %1 = vector.load %arg3[%c0_1, %c0_2] : memref<1x64xf32, #tpu.memory_space<vmem>>, vector<1x64xf32>
    %c0_3 = arith.constant 0 : index
    %c0_4 = arith.constant 0 : index
    %2 = vector.load %arg4[%c0_3, %c0_4] : memref<64x128xbf16, #tpu.memory_space<vmem>>, vector<64x128xbf16>
    %c0_5 = arith.constant 0 : index
    %c0_6 = arith.constant 0 : index
    %3 = vector.load %arg5[%c0_5, %c0_6] : memref<1x128xf32, #tpu.memory_space<vmem>>, vector<1x128xf32>
    %c0_7 = arith.constant 0 : index
    %c0_8 = arith.constant 0 : index
    %c0_9 = arith.constant 0 : index
    %4 = vector.load %arg1[%c0_7, %c0_8, %c0_9] : memref<8x16x67xf32, #tpu.memory_space<vmem>>, vector<1x16x67xf32>
    %5 = vector.shape_cast %4 : vector<1x16x67xf32> to vector<16x67xf32>
    %6 = arith.truncf %5 : vector<16x67xf32> to vector<16x67xbf16>
    %cst = arith.constant dense<0.000000e+00> : vector<16x64xf32>
    %7 = tpu.matmul %6, %0, %cst {dimension_numbers = #tpu.dot_dimension_numbers<[1], [0], [0], [1], [0, 0, 1, 1], [], []>} : vector<16x67xbf16>, vector<67x64xbf16>, vector<16x64xf32> -> vector<16x64xf32>
    %8 = vector.broadcast %1 : vector<1x64xf32> to vector<16x64xf32>
    %9 = arith.addf %7, %8 : vector<16x64xf32>
    %cst_10 = arith.constant 0.000000e+00 : f32
    %10 = vector.broadcast %cst_10 : f32 to vector<16x64xf32>
    %11 = arith.maximumf %9, %10 : vector<16x64xf32>
    %12 = arith.truncf %11 : vector<16x64xf32> to vector<16x64xbf16>
    %cst_11 = arith.constant dense<0.000000e+00> : vector<16x128xf32>
    %13 = tpu.matmul %12, %2, %cst_11 {dimension_numbers = #tpu.dot_dimension_numbers<[1], [0], [0], [1], [0, 0, 1, 1], [], []>} : vector<16x64xbf16>, vector<64x128xbf16>, vector<16x128xf32> -> vector<16x128xf32>
    %14 = vector.broadcast %3 : vector<1x128xf32> to vector<16x128xf32>
    %15 = arith.addf %13, %14 : vector<16x128xf32>
    %cst_12 = arith.constant 0.000000e+00 : f32
    %16 = vector.broadcast %cst_12 : f32 to vector<16x128xf32>
    %17 = arith.maximumf %15, %16 : vector<16x128xf32>
    %c1 = arith.constant 1 : index
    %c0_13 = arith.constant 0 : index
    %c0_14 = arith.constant 0 : index
    %18 = vector.load %arg1[%c1, %c0_13, %c0_14] : memref<8x16x67xf32, #tpu.memory_space<vmem>>, vector<1x16x67xf32>
    %19 = vector.shape_cast %18 : vector<1x16x67xf32> to vector<16x67xf32>
    %20 = arith.truncf %19 : vector<16x67xf32> to vector<16x67xbf16>
    %cst_15 = arith.constant dense<0.000000e+00> : vector<16x64xf32>
    %21 = tpu.matmul %20, %0, %cst_15 {dimension_numbers = #tpu.dot_dimension_numbers<[1], [0], [0], [1], [0, 0, 1, 1], [], []>} : vector<16x67xbf16>, vector<67x64xbf16>, vector<16x64xf32> -> vector<16x64xf32>
    %22 = vector.broadcast %1 : vector<1x64xf32> to vector<16x64xf32>
    %23 = arith.addf %21, %22 : vector<16x64xf32>
    %cst_16 = arith.constant 0.000000e+00 : f32
    %24 = vector.broadcast %cst_16 : f32 to vector<16x64xf32>
    %25 = arith.maximumf %23, %24 : vector<16x64xf32>
    %26 = arith.truncf %25 : vector<16x64xf32> to vector<16x64xbf16>
    %cst_17 = arith.constant dense<0.000000e+00> : vector<16x128xf32>
    %27 = tpu.matmul %26, %2, %cst_17 {dimension_numbers = #tpu.dot_dimension_numbers<[1], [0], [0], [1], [0, 0, 1, 1], [], []>} : vector<16x64xbf16>, vector<64x128xbf16>, vector<16x128xf32> -> vector<16x128xf32>
    %28 = vector.broadcast %3 : vector<1x128xf32> to vector<16x128xf32>
    %29 = arith.addf %27, %28 : vector<16x128xf32>
    %cst_18 = arith.constant 0.000000e+00 : f32
    %30 = vector.broadcast %cst_18 : f32 to vector<16x128xf32>
    %31 = arith.maximumf %29, %30 : vector<16x128xf32>
    %32 = arith.maximumf %17, %31 : vector<16x128xf32>
    %c2 = arith.constant 2 : index
    %c0_19 = arith.constant 0 : index
    %c0_20 = arith.constant 0 : index
    %33 = vector.load %arg1[%c2, %c0_19, %c0_20] : memref<8x16x67xf32, #tpu.memory_space<vmem>>, vector<1x16x67xf32>
    %34 = vector.shape_cast %33 : vector<1x16x67xf32> to vector<16x67xf32>
    %35 = arith.truncf %34 : vector<16x67xf32> to vector<16x67xbf16>
    %cst_21 = arith.constant dense<0.000000e+00> : vector<16x64xf32>
    %36 = tpu.matmul %35, %0, %cst_21 {dimension_numbers = #tpu.dot_dimension_numbers<[1], [0], [0], [1], [0, 0, 1, 1], [], []>} : vector<16x67xbf16>, vector<67x64xbf16>, vector<16x64xf32> -> vector<16x64xf32>
    %37 = vector.broadcast %1 : vector<1x64xf32> to vector<16x64xf32>
    %38 = arith.addf %36, %37 : vector<16x64xf32>
    %cst_22 = arith.constant 0.000000e+00 : f32
    %39 = vector.broadcast %cst_22 : f32 to vector<16x64xf32>
    %40 = arith.maximumf %38, %39 : vector<16x64xf32>
    %41 = arith.truncf %40 : vector<16x64xf32> to vector<16x64xbf16>
    %cst_23 = arith.constant dense<0.000000e+00> : vector<16x128xf32>
    %42 = tpu.matmul %41, %2, %cst_23 {dimension_numbers = #tpu.dot_dimension_numbers<[1], [0], [0], [1], [0, 0, 1, 1], [], []>} : vector<16x64xbf16>, vector<64x128xbf16>, vector<16x128xf32> -> vector<16x128xf32>
    %43 = vector.broadcast %3 : vector<1x128xf32> to vector<16x128xf32>
    %44 = arith.addf %42, %43 : vector<16x128xf32>
    %cst_24 = arith.constant 0.000000e+00 : f32
    %45 = vector.broadcast %cst_24 : f32 to vector<16x128xf32>
    %46 = arith.maximumf %44, %45 : vector<16x128xf32>
    %47 = arith.maximumf %32, %46 : vector<16x128xf32>
    %c3 = arith.constant 3 : index
    %c0_25 = arith.constant 0 : index
    %c0_26 = arith.constant 0 : index
    %48 = vector.load %arg1[%c3, %c0_25, %c0_26] : memref<8x16x67xf32, #tpu.memory_space<vmem>>, vector<1x16x67xf32>
    %49 = vector.shape_cast %48 : vector<1x16x67xf32> to vector<16x67xf32>
    %50 = arith.truncf %49 : vector<16x67xf32> to vector<16x67xbf16>
    %cst_27 = arith.constant dense<0.000000e+00> : vector<16x64xf32>
    %51 = tpu.matmul %50, %0, %cst_27 {dimension_numbers = #tpu.dot_dimension_numbers<[1], [0], [0], [1], [0, 0, 1, 1], [], []>} : vector<16x67xbf16>, vector<67x64xbf16>, vector<16x64xf32> -> vector<16x64xf32>
    %52 = vector.broadcast %1 : vector<1x64xf32> to vector<16x64xf32>
    %53 = arith.addf %51, %52 : vector<16x64xf32>
    %cst_28 = arith.constant 0.000000e+00 : f32
    %54 = vector.broadcast %cst_28 : f32 to vector<16x64xf32>
    %55 = arith.maximumf %53, %54 : vector<16x64xf32>
    %56 = arith.truncf %55 : vector<16x64xf32> to vector<16x64xbf16>
    %cst_29 = arith.constant dense<0.000000e+00> : vector<16x128xf32>
    %57 = tpu.matmul %56, %2, %cst_29 {dimension_numbers = #tpu.dot_dimension_numbers<[1], [0], [0], [1], [0, 0, 1, 1], [], []>} : vector<16x64xbf16>, vector<64x128xbf16>, vector<16x128xf32> -> vector<16x128xf32>
    %58 = vector.broadcast %3 : vector<1x128xf32> to vector<16x128xf32>
    %59 = arith.addf %57, %58 : vector<16x128xf32>
    %cst_30 = arith.constant 0.000000e+00 : f32
    %60 = vector.broadcast %cst_30 : f32 to vector<16x128xf32>
    %61 = arith.maximumf %59, %60 : vector<16x128xf32>
    %62 = arith.maximumf %47, %61 : vector<16x128xf32>
    %c4 = arith.constant 4 : index
    %c0_31 = arith.constant 0 : index
    %c0_32 = arith.constant 0 : index
    %63 = vector.load %arg1[%c4, %c0_31, %c0_32] : memref<8x16x67xf32, #tpu.memory_space<vmem>>, vector<1x16x67xf32>
    %64 = vector.shape_cast %63 : vector<1x16x67xf32> to vector<16x67xf32>
    %65 = arith.truncf %64 : vector<16x67xf32> to vector<16x67xbf16>
    %cst_33 = arith.constant dense<0.000000e+00> : vector<16x64xf32>
    %66 = tpu.matmul %65, %0, %cst_33 {dimension_numbers = #tpu.dot_dimension_numbers<[1], [0], [0], [1], [0, 0, 1, 1], [], []>} : vector<16x67xbf16>, vector<67x64xbf16>, vector<16x64xf32> -> vector<16x64xf32>
    %67 = vector.broadcast %1 : vector<1x64xf32> to vector<16x64xf32>
    %68 = arith.addf %66, %67 : vector<16x64xf32>
    %cst_34 = arith.constant 0.000000e+00 : f32
    %69 = vector.broadcast %cst_34 : f32 to vector<16x64xf32>
    %70 = arith.maximumf %68, %69 : vector<16x64xf32>
    %71 = arith.truncf %70 : vector<16x64xf32> to vector<16x64xbf16>
    %cst_35 = arith.constant dense<0.000000e+00> : vector<16x128xf32>
    %72 = tpu.matmul %71, %2, %cst_35 {dimension_numbers = #tpu.dot_dimension_numbers<[1], [0], [0], [1], [0, 0, 1, 1], [], []>} : vector<16x64xbf16>, vector<64x128xbf16>, vector<16x128xf32> -> vector<16x128xf32>
    %73 = vector.broadcast %3 : vector<1x128xf32> to vector<16x128xf32>
    %74 = arith.addf %72, %73 : vector<16x128xf32>
    %cst_36 = arith.constant 0.000000e+00 : f32
    %75 = vector.broadcast %cst_36 : f32 to vector<16x128xf32>
    %76 = arith.maximumf %74, %75 : vector<16x128xf32>
    %77 = arith.maximumf %62, %76 : vector<16x128xf32>
    %c5 = arith.constant 5 : index
    %c0_37 = arith.constant 0 : index
    %c0_38 = arith.constant 0 : index
    %78 = vector.load %arg1[%c5, %c0_37, %c0_38] : memref<8x16x67xf32, #tpu.memory_space<vmem>>, vector<1x16x67xf32>
    %79 = vector.shape_cast %78 : vector<1x16x67xf32> to vector<16x67xf32>
    %80 = arith.truncf %79 : vector<16x67xf32> to vector<16x67xbf16>
    %cst_39 = arith.constant dense<0.000000e+00> : vector<16x64xf32>
    %81 = tpu.matmul %80, %0, %cst_39 {dimension_numbers = #tpu.dot_dimension_numbers<[1], [0], [0], [1], [0, 0, 1, 1], [], []>} : vector<16x67xbf16>, vector<67x64xbf16>, vector<16x64xf32> -> vector<16x64xf32>
    %82 = vector.broadcast %1 : vector<1x64xf32> to vector<16x64xf32>
    %83 = arith.addf %81, %82 : vector<16x64xf32>
    %cst_40 = arith.constant 0.000000e+00 : f32
    %84 = vector.broadcast %cst_40 : f32 to vector<16x64xf32>
    %85 = arith.maximumf %83, %84 : vector<16x64xf32>
    %86 = arith.truncf %85 : vector<16x64xf32> to vector<16x64xbf16>
    %cst_41 = arith.constant dense<0.000000e+00> : vector<16x128xf32>
    %87 = tpu.matmul %86, %2, %cst_41 {dimension_numbers = #tpu.dot_dimension_numbers<[1], [0], [0], [1], [0, 0, 1, 1], [], []>} : vector<16x64xbf16>, vector<64x128xbf16>, vector<16x128xf32> -> vector<16x128xf32>
    %88 = vector.broadcast %3 : vector<1x128xf32> to vector<16x128xf32>
    %89 = arith.addf %87, %88 : vector<16x128xf32>
    %cst_42 = arith.constant 0.000000e+00 : f32
    %90 = vector.broadcast %cst_42 : f32 to vector<16x128xf32>
    %91 = arith.maximumf %89, %90 : vector<16x128xf32>
    %92 = arith.maximumf %77, %91 : vector<16x128xf32>
    %c6 = arith.constant 6 : index
    %c0_43 = arith.constant 0 : index
    %c0_44 = arith.constant 0 : index
    %93 = vector.load %arg1[%c6, %c0_43, %c0_44] : memref<8x16x67xf32, #tpu.memory_space<vmem>>, vector<1x16x67xf32>
    %94 = vector.shape_cast %93 : vector<1x16x67xf32> to vector<16x67xf32>
    %95 = arith.truncf %94 : vector<16x67xf32> to vector<16x67xbf16>
    %cst_45 = arith.constant dense<0.000000e+00> : vector<16x64xf32>
    %96 = tpu.matmul %95, %0, %cst_45 {dimension_numbers = #tpu.dot_dimension_numbers<[1], [0], [0], [1], [0, 0, 1, 1], [], []>} : vector<16x67xbf16>, vector<67x64xbf16>, vector<16x64xf32> -> vector<16x64xf32>
    %97 = vector.broadcast %1 : vector<1x64xf32> to vector<16x64xf32>
    %98 = arith.addf %96, %97 : vector<16x64xf32>
    %cst_46 = arith.constant 0.000000e+00 : f32
    %99 = vector.broadcast %cst_46 : f32 to vector<16x64xf32>
    %100 = arith.maximumf %98, %99 : vector<16x64xf32>
    %101 = arith.truncf %100 : vector<16x64xf32> to vector<16x64xbf16>
    %cst_47 = arith.constant dense<0.000000e+00> : vector<16x128xf32>
    %102 = tpu.matmul %101, %2, %cst_47 {dimension_numbers = #tpu.dot_dimension_numbers<[1], [0], [0], [1], [0, 0, 1, 1], [], []>} : vector<16x64xbf16>, vector<64x128xbf16>, vector<16x128xf32> -> vector<16x128xf32>
    %103 = vector.broadcast %3 : vector<1x128xf32> to vector<16x128xf32>
    %104 = arith.addf %102, %103 : vector<16x128xf32>
    %cst_48 = arith.constant 0.000000e+00 : f32
    %105 = vector.broadcast %cst_48 : f32 to vector<16x128xf32>
    %106 = arith.maximumf %104, %105 : vector<16x128xf32>
    %107 = arith.maximumf %92, %106 : vector<16x128xf32>
    %c7 = arith.constant 7 : index
    %c0_49 = arith.constant 0 : index
    %c0_50 = arith.constant 0 : index
    %108 = vector.load %arg1[%c7, %c0_49, %c0_50] : memref<8x16x67xf32, #tpu.memory_space<vmem>>, vector<1x16x67xf32>
    %109 = vector.shape_cast %108 : vector<1x16x67xf32> to vector<16x67xf32>
    %110 = arith.truncf %109 : vector<16x67xf32> to vector<16x67xbf16>
    %cst_51 = arith.constant dense<0.000000e+00> : vector<16x64xf32>
    %111 = tpu.matmul %110, %0, %cst_51 {dimension_numbers = #tpu.dot_dimension_numbers<[1], [0], [0], [1], [0, 0, 1, 1], [], []>} : vector<16x67xbf16>, vector<67x64xbf16>, vector<16x64xf32> -> vector<16x64xf32>
    %112 = vector.broadcast %1 : vector<1x64xf32> to vector<16x64xf32>
    %113 = arith.addf %111, %112 : vector<16x64xf32>
    %cst_52 = arith.constant 0.000000e+00 : f32
    %114 = vector.broadcast %cst_52 : f32 to vector<16x64xf32>
    %115 = arith.maximumf %113, %114 : vector<16x64xf32>
    %116 = arith.truncf %115 : vector<16x64xf32> to vector<16x64xbf16>
    %cst_53 = arith.constant dense<0.000000e+00> : vector<16x128xf32>
    %117 = tpu.matmul %116, %2, %cst_53 {dimension_numbers = #tpu.dot_dimension_numbers<[1], [0], [0], [1], [0, 0, 1, 1], [], []>} : vector<16x64xbf16>, vector<64x128xbf16>, vector<16x128xf32> -> vector<16x128xf32>
    %118 = vector.broadcast %3 : vector<1x128xf32> to vector<16x128xf32>
    %119 = arith.addf %117, %118 : vector<16x128xf32>
    %cst_54 = arith.constant 0.000000e+00 : f32
    %120 = vector.broadcast %cst_54 : f32 to vector<16x128xf32>
    %121 = arith.maximumf %119, %120 : vector<16x128xf32>
    %122 = arith.maximumf %107, %121 : vector<16x128xf32>
    %c0_55 = arith.constant 0 : index
    %c0_56 = arith.constant 0 : index
    %123 = vector.load %arg6[%c0_55, %c0_56] : memref<16x128xf32, #tpu.memory_space<vmem>>, vector<16x128xf32>
    tpu.vector_store %arg6[%c0_55, %c0_56], %122 {strides = array<i32>} : memref<16x128xf32, #tpu.memory_space<vmem>>, vector<16x128xf32>,
    return
  }
  func.func @transform_0(%arg0: i32) -> (i32, i32, i32) {
    %c0_i32 = arith.constant 0 : i32
    %c0_i32_0 = arith.constant 0 : i32
    %c0_i32_1 = arith.constant 0 : i32
    return %c0_i32, %arg0, %c0_i32_0 : i32, i32, i32
  }
  func.func @transform_1(%arg0: i32) -> (i32, i32) {
    %c0_i32 = arith.constant 0 : i32
    %c0_i32_0 = arith.constant 0 : i32
    %c0_i32_1 = arith.constant 0 : i32
    return %c0_i32, %c0_i32_0 : i32, i32
  }
  func.func @transform_2(%arg0: i32) -> (i32, i32) {
    %c0_i32 = arith.constant 0 : i32
    %c0_i32_0 = arith.constant 0 : i32
    %c0_i32_1 = arith.constant 0 : i32
    return %c0_i32, %c0_i32_0 : i32, i32
  }
  func.func @transform_3(%arg0: i32) -> (i32, i32) {
    %c0_i32 = arith.constant 0 : i32
    %c0_i32_0 = arith.constant 0 : i32
    %c0_i32_1 = arith.constant 0 : i32
    return %c0_i32, %c0_i32_0 : i32, i32
  }
  func.func @transform_4(%arg0: i32) -> (i32, i32) {
    %c0_i32 = arith.constant 0 : i32
    %c0_i32_0 = arith.constant 0 : i32
    %c0_i32_1 = arith.constant 0 : i32
    return %c0_i32, %c0_i32_0 : i32, i32
  }
  func.func @transform_5(%arg0: i32) -> (i32, i32) {
    %c0_i32 = arith.constant 0 : i32
    %c0_i32_0 = arith.constant 0 : i32
    return %arg0, %c0_i32 : i32, i32
  }
}

module attributes {stable_mosaic.version = 11 : i64} {
  func.func @kernel(%arg0: i32, %arg1: memref<8x8x131xf32, #tpu.memory_space<vmem>>, %arg2: memref<131x128xbf16, #tpu.memory_space<vmem>>, %arg3: memref<1x128xf32, #tpu.memory_space<vmem>>, %arg4: memref<128x128xbf16, #tpu.memory_space<vmem>>, %arg5: memref<1x128xf32, #tpu.memory_space<vmem>>, %arg6: memref<8x128xf32, #tpu.memory_space<vmem>>) attributes {dimension_semantics = [#tpu.dimension_semantics<parallel>], iteration_bounds = array<i64: 1>, scalar_prefetch = 0 : i64, scratch_operands = 0 : i64, tpu.core_type = #tpu.core_type<tc>, window_params = [{transform_indices = @transform_0, window_bounds = array<i64: 8, 8, 131>}, {pipeline_mode = #tpu.pipeline_mode<synchronous>, transform_indices = @transform_1, window_bounds = array<i64: 131, 128>}, {pipeline_mode = #tpu.pipeline_mode<synchronous>, transform_indices = @transform_2, window_bounds = array<i64: 1, 128>}, {pipeline_mode = #tpu.pipeline_mode<synchronous>, transform_indices = @transform_3, window_bounds = array<i64: 128, 128>}, {pipeline_mode = #tpu.pipeline_mode<synchronous>, transform_indices = @transform_4, window_bounds = array<i64: 1, 128>}, {transform_indices = @transform_5, window_bounds = array<i64: 8, 128>}]} {
    %c0 = arith.constant 0 : index
    %c0_0 = arith.constant 0 : index
    %0 = vector.load %arg2[%c0, %c0_0] : memref<131x128xbf16, #tpu.memory_space<vmem>>, vector<131x128xbf16>
    %c0_1 = arith.constant 0 : index
    %c0_2 = arith.constant 0 : index
    %1 = vector.load %arg3[%c0_1, %c0_2] : memref<1x128xf32, #tpu.memory_space<vmem>>, vector<1x128xf32>
    %c0_3 = arith.constant 0 : index
    %c0_4 = arith.constant 0 : index
    %2 = vector.load %arg4[%c0_3, %c0_4] : memref<128x128xbf16, #tpu.memory_space<vmem>>, vector<128x128xbf16>
    %c0_5 = arith.constant 0 : index
    %c0_6 = arith.constant 0 : index
    %3 = vector.load %arg5[%c0_5, %c0_6] : memref<1x128xf32, #tpu.memory_space<vmem>>, vector<1x128xf32>
    %c0_7 = arith.constant 0 : index
    %c0_8 = arith.constant 0 : index
    %c0_9 = arith.constant 0 : index
    %4 = vector.load %arg1[%c0_7, %c0_8, %c0_9] : memref<8x8x131xf32, #tpu.memory_space<vmem>>, vector<1x8x131xf32>
    %5 = vector.shape_cast %4 : vector<1x8x131xf32> to vector<8x131xf32>
    %6 = arith.truncf %5 : vector<8x131xf32> to vector<8x131xbf16>
    %cst = arith.constant dense<0.000000e+00> : vector<8x128xf32>
    %7 = tpu.matmul %6, %0, %cst {dimension_numbers = #tpu.dot_dimension_numbers<[1], [0], [0], [1], [0, 0, 1, 1], [], []>} : vector<8x131xbf16>, vector<131x128xbf16>, vector<8x128xf32> -> vector<8x128xf32>
    %8 = vector.broadcast %1 : vector<1x128xf32> to vector<8x128xf32>
    %9 = arith.addf %7, %8 : vector<8x128xf32>
    %cst_10 = arith.constant 0.000000e+00 : f32
    %10 = vector.broadcast %cst_10 : f32 to vector<8x128xf32>
    %11 = arith.maximumf %9, %10 : vector<8x128xf32>
    %12 = arith.truncf %11 : vector<8x128xf32> to vector<8x128xbf16>
    %cst_11 = arith.constant dense<0.000000e+00> : vector<8x128xf32>
    %13 = tpu.matmul %12, %2, %cst_11 {dimension_numbers = #tpu.dot_dimension_numbers<[1], [0], [0], [1], [0, 0, 1, 1], [], []>} : vector<8x128xbf16>, vector<128x128xbf16>, vector<8x128xf32> -> vector<8x128xf32>
    %14 = vector.broadcast %3 : vector<1x128xf32> to vector<8x128xf32>
    %15 = arith.addf %13, %14 : vector<8x128xf32>
    %cst_12 = arith.constant 0.000000e+00 : f32
    %16 = vector.broadcast %cst_12 : f32 to vector<8x128xf32>
    %17 = arith.maximumf %15, %16 : vector<8x128xf32>
    %c1 = arith.constant 1 : index
    %c0_13 = arith.constant 0 : index
    %c0_14 = arith.constant 0 : index
    %18 = vector.load %arg1[%c1, %c0_13, %c0_14] : memref<8x8x131xf32, #tpu.memory_space<vmem>>, vector<1x8x131xf32>
    %19 = vector.shape_cast %18 : vector<1x8x131xf32> to vector<8x131xf32>
    %20 = arith.truncf %19 : vector<8x131xf32> to vector<8x131xbf16>
    %cst_15 = arith.constant dense<0.000000e+00> : vector<8x128xf32>
    %21 = tpu.matmul %20, %0, %cst_15 {dimension_numbers = #tpu.dot_dimension_numbers<[1], [0], [0], [1], [0, 0, 1, 1], [], []>} : vector<8x131xbf16>, vector<131x128xbf16>, vector<8x128xf32> -> vector<8x128xf32>
    %22 = vector.broadcast %1 : vector<1x128xf32> to vector<8x128xf32>
    %23 = arith.addf %21, %22 : vector<8x128xf32>
    %cst_16 = arith.constant 0.000000e+00 : f32
    %24 = vector.broadcast %cst_16 : f32 to vector<8x128xf32>
    %25 = arith.maximumf %23, %24 : vector<8x128xf32>
    %26 = arith.truncf %25 : vector<8x128xf32> to vector<8x128xbf16>
    %cst_17 = arith.constant dense<0.000000e+00> : vector<8x128xf32>
    %27 = tpu.matmul %26, %2, %cst_17 {dimension_numbers = #tpu.dot_dimension_numbers<[1], [0], [0], [1], [0, 0, 1, 1], [], []>} : vector<8x128xbf16>, vector<128x128xbf16>, vector<8x128xf32> -> vector<8x128xf32>
    %28 = vector.broadcast %3 : vector<1x128xf32> to vector<8x128xf32>
    %29 = arith.addf %27, %28 : vector<8x128xf32>
    %cst_18 = arith.constant 0.000000e+00 : f32
    %30 = vector.broadcast %cst_18 : f32 to vector<8x128xf32>
    %31 = arith.maximumf %29, %30 : vector<8x128xf32>
    %32 = arith.maximumf %17, %31 : vector<8x128xf32>
    %c2 = arith.constant 2 : index
    %c0_19 = arith.constant 0 : index
    %c0_20 = arith.constant 0 : index
    %33 = vector.load %arg1[%c2, %c0_19, %c0_20] : memref<8x8x131xf32, #tpu.memory_space<vmem>>, vector<1x8x131xf32>
    %34 = vector.shape_cast %33 : vector<1x8x131xf32> to vector<8x131xf32>
    %35 = arith.truncf %34 : vector<8x131xf32> to vector<8x131xbf16>
    %cst_21 = arith.constant dense<0.000000e+00> : vector<8x128xf32>
    %36 = tpu.matmul %35, %0, %cst_21 {dimension_numbers = #tpu.dot_dimension_numbers<[1], [0], [0], [1], [0, 0, 1, 1], [], []>} : vector<8x131xbf16>, vector<131x128xbf16>, vector<8x128xf32> -> vector<8x128xf32>
    %37 = vector.broadcast %1 : vector<1x128xf32> to vector<8x128xf32>
    %38 = arith.addf %36, %37 : vector<8x128xf32>
    %cst_22 = arith.constant 0.000000e+00 : f32
    %39 = vector.broadcast %cst_22 : f32 to vector<8x128xf32>
    %40 = arith.maximumf %38, %39 : vector<8x128xf32>
    %41 = arith.truncf %40 : vector<8x128xf32> to vector<8x128xbf16>
    %cst_23 = arith.constant dense<0.000000e+00> : vector<8x128xf32>
    %42 = tpu.matmul %41, %2, %cst_23 {dimension_numbers = #tpu.dot_dimension_numbers<[1], [0], [0], [1], [0, 0, 1, 1], [], []>} : vector<8x128xbf16>, vector<128x128xbf16>, vector<8x128xf32> -> vector<8x128xf32>
    %43 = vector.broadcast %3 : vector<1x128xf32> to vector<8x128xf32>
    %44 = arith.addf %42, %43 : vector<8x128xf32>
    %cst_24 = arith.constant 0.000000e+00 : f32
    %45 = vector.broadcast %cst_24 : f32 to vector<8x128xf32>
    %46 = arith.maximumf %44, %45 : vector<8x128xf32>
    %47 = arith.maximumf %32, %46 : vector<8x128xf32>
    %c3 = arith.constant 3 : index
    %c0_25 = arith.constant 0 : index
    %c0_26 = arith.constant 0 : index
    %48 = vector.load %arg1[%c3, %c0_25, %c0_26] : memref<8x8x131xf32, #tpu.memory_space<vmem>>, vector<1x8x131xf32>
    %49 = vector.shape_cast %48 : vector<1x8x131xf32> to vector<8x131xf32>
    %50 = arith.truncf %49 : vector<8x131xf32> to vector<8x131xbf16>
    %cst_27 = arith.constant dense<0.000000e+00> : vector<8x128xf32>
    %51 = tpu.matmul %50, %0, %cst_27 {dimension_numbers = #tpu.dot_dimension_numbers<[1], [0], [0], [1], [0, 0, 1, 1], [], []>} : vector<8x131xbf16>, vector<131x128xbf16>, vector<8x128xf32> -> vector<8x128xf32>
    %52 = vector.broadcast %1 : vector<1x128xf32> to vector<8x128xf32>
    %53 = arith.addf %51, %52 : vector<8x128xf32>
    %cst_28 = arith.constant 0.000000e+00 : f32
    %54 = vector.broadcast %cst_28 : f32 to vector<8x128xf32>
    %55 = arith.maximumf %53, %54 : vector<8x128xf32>
    %56 = arith.truncf %55 : vector<8x128xf32> to vector<8x128xbf16>
    %cst_29 = arith.constant dense<0.000000e+00> : vector<8x128xf32>
    %57 = tpu.matmul %56, %2, %cst_29 {dimension_numbers = #tpu.dot_dimension_numbers<[1], [0], [0], [1], [0, 0, 1, 1], [], []>} : vector<8x128xbf16>, vector<128x128xbf16>, vector<8x128xf32> -> vector<8x128xf32>
    %58 = vector.broadcast %3 : vector<1x128xf32> to vector<8x128xf32>
    %59 = arith.addf %57, %58 : vector<8x128xf32>
    %cst_30 = arith.constant 0.000000e+00 : f32
    %60 = vector.broadcast %cst_30 : f32 to vector<8x128xf32>
    %61 = arith.maximumf %59, %60 : vector<8x128xf32>
    %62 = arith.maximumf %47, %61 : vector<8x128xf32>
    %c4 = arith.constant 4 : index
    %c0_31 = arith.constant 0 : index
    %c0_32 = arith.constant 0 : index
    %63 = vector.load %arg1[%c4, %c0_31, %c0_32] : memref<8x8x131xf32, #tpu.memory_space<vmem>>, vector<1x8x131xf32>
    %64 = vector.shape_cast %63 : vector<1x8x131xf32> to vector<8x131xf32>
    %65 = arith.truncf %64 : vector<8x131xf32> to vector<8x131xbf16>
    %cst_33 = arith.constant dense<0.000000e+00> : vector<8x128xf32>
    %66 = tpu.matmul %65, %0, %cst_33 {dimension_numbers = #tpu.dot_dimension_numbers<[1], [0], [0], [1], [0, 0, 1, 1], [], []>} : vector<8x131xbf16>, vector<131x128xbf16>, vector<8x128xf32> -> vector<8x128xf32>
    %67 = vector.broadcast %1 : vector<1x128xf32> to vector<8x128xf32>
    %68 = arith.addf %66, %67 : vector<8x128xf32>
    %cst_34 = arith.constant 0.000000e+00 : f32
    %69 = vector.broadcast %cst_34 : f32 to vector<8x128xf32>
    %70 = arith.maximumf %68, %69 : vector<8x128xf32>
    %71 = arith.truncf %70 : vector<8x128xf32> to vector<8x128xbf16>
    %cst_35 = arith.constant dense<0.000000e+00> : vector<8x128xf32>
    %72 = tpu.matmul %71, %2, %cst_35 {dimension_numbers = #tpu.dot_dimension_numbers<[1], [0], [0], [1], [0, 0, 1, 1], [], []>} : vector<8x128xbf16>, vector<128x128xbf16>, vector<8x128xf32> -> vector<8x128xf32>
    %73 = vector.broadcast %3 : vector<1x128xf32> to vector<8x128xf32>
    %74 = arith.addf %72, %73 : vector<8x128xf32>
    %cst_36 = arith.constant 0.000000e+00 : f32
    %75 = vector.broadcast %cst_36 : f32 to vector<8x128xf32>
    %76 = arith.maximumf %74, %75 : vector<8x128xf32>
    %77 = arith.maximumf %62, %76 : vector<8x128xf32>
    %c5 = arith.constant 5 : index
    %c0_37 = arith.constant 0 : index
    %c0_38 = arith.constant 0 : index
    %78 = vector.load %arg1[%c5, %c0_37, %c0_38] : memref<8x8x131xf32, #tpu.memory_space<vmem>>, vector<1x8x131xf32>
    %79 = vector.shape_cast %78 : vector<1x8x131xf32> to vector<8x131xf32>
    %80 = arith.truncf %79 : vector<8x131xf32> to vector<8x131xbf16>
    %cst_39 = arith.constant dense<0.000000e+00> : vector<8x128xf32>
    %81 = tpu.matmul %80, %0, %cst_39 {dimension_numbers = #tpu.dot_dimension_numbers<[1], [0], [0], [1], [0, 0, 1, 1], [], []>} : vector<8x131xbf16>, vector<131x128xbf16>, vector<8x128xf32> -> vector<8x128xf32>
    %82 = vector.broadcast %1 : vector<1x128xf32> to vector<8x128xf32>
    %83 = arith.addf %81, %82 : vector<8x128xf32>
    %cst_40 = arith.constant 0.000000e+00 : f32
    %84 = vector.broadcast %cst_40 : f32 to vector<8x128xf32>
    %85 = arith.maximumf %83, %84 : vector<8x128xf32>
    %86 = arith.truncf %85 : vector<8x128xf32> to vector<8x128xbf16>
    %cst_41 = arith.constant dense<0.000000e+00> : vector<8x128xf32>
    %87 = tpu.matmul %86, %2, %cst_41 {dimension_numbers = #tpu.dot_dimension_numbers<[1], [0], [0], [1], [0, 0, 1, 1], [], []>} : vector<8x128xbf16>, vector<128x128xbf16>, vector<8x128xf32> -> vector<8x128xf32>
    %88 = vector.broadcast %3 : vector<1x128xf32> to vector<8x128xf32>
    %89 = arith.addf %87, %88 : vector<8x128xf32>
    %cst_42 = arith.constant 0.000000e+00 : f32
    %90 = vector.broadcast %cst_42 : f32 to vector<8x128xf32>
    %91 = arith.maximumf %89, %90 : vector<8x128xf32>
    %92 = arith.maximumf %77, %91 : vector<8x128xf32>
    %c6 = arith.constant 6 : index
    %c0_43 = arith.constant 0 : index
    %c0_44 = arith.constant 0 : index
    %93 = vector.load %arg1[%c6, %c0_43, %c0_44] : memref<8x8x131xf32, #tpu.memory_space<vmem>>, vector<1x8x131xf32>
    %94 = vector.shape_cast %93 : vector<1x8x131xf32> to vector<8x131xf32>
    %95 = arith.truncf %94 : vector<8x131xf32> to vector<8x131xbf16>
    %cst_45 = arith.constant dense<0.000000e+00> : vector<8x128xf32>
    %96 = tpu.matmul %95, %0, %cst_45 {dimension_numbers = #tpu.dot_dimension_numbers<[1], [0], [0], [1], [0, 0, 1, 1], [], []>} : vector<8x131xbf16>, vector<131x128xbf16>, vector<8x128xf32> -> vector<8x128xf32>
    %97 = vector.broadcast %1 : vector<1x128xf32> to vector<8x128xf32>
    %98 = arith.addf %96, %97 : vector<8x128xf32>
    %cst_46 = arith.constant 0.000000e+00 : f32
    %99 = vector.broadcast %cst_46 : f32 to vector<8x128xf32>
    %100 = arith.maximumf %98, %99 : vector<8x128xf32>
    %101 = arith.truncf %100 : vector<8x128xf32> to vector<8x128xbf16>
    %cst_47 = arith.constant dense<0.000000e+00> : vector<8x128xf32>
    %102 = tpu.matmul %101, %2, %cst_47 {dimension_numbers = #tpu.dot_dimension_numbers<[1], [0], [0], [1], [0, 0, 1, 1], [], []>} : vector<8x128xbf16>, vector<128x128xbf16>, vector<8x128xf32> -> vector<8x128xf32>
    %103 = vector.broadcast %3 : vector<1x128xf32> to vector<8x128xf32>
    %104 = arith.addf %102, %103 : vector<8x128xf32>
    %cst_48 = arith.constant 0.000000e+00 : f32
    %105 = vector.broadcast %cst_48 : f32 to vector<8x128xf32>
    %106 = arith.maximumf %104, %105 : vector<8x128xf32>
    %107 = arith.maximumf %92, %106 : vector<8x128xf32>
    %c7 = arith.constant 7 : index
    %c0_49 = arith.constant 0 : index
    %c0_50 = arith.constant 0 : index
    %108 = vector.load %arg1[%c7, %c0_49, %c0_50] : memref<8x8x131xf32, #tpu.memory_space<vmem>>, vector<1x8x131xf32>
    %109 = vector.shape_cast %108 : vector<1x8x131xf32> to vector<8x131xf32>
    %110 = arith.truncf %109 : vector<8x131xf32> to vector<8x131xbf16>
    %cst_51 = arith.constant dense<0.000000e+00> : vector<8x128xf32>
    %111 = tpu.matmul %110, %0, %cst_51 {dimension_numbers = #tpu.dot_dimension_numbers<[1], [0], [0], [1], [0, 0, 1, 1], [], []>} : vector<8x131xbf16>, vector<131x128xbf16>, vector<8x128xf32> -> vector<8x128xf32>
    %112 = vector.broadcast %1 : vector<1x128xf32> to vector<8x128xf32>
    %113 = arith.addf %111, %112 : vector<8x128xf32>
    %cst_52 = arith.constant 0.000000e+00 : f32
    %114 = vector.broadcast %cst_52 : f32 to vector<8x128xf32>
    %115 = arith.maximumf %113, %114 : vector<8x128xf32>
    %116 = arith.truncf %115 : vector<8x128xf32> to vector<8x128xbf16>
    %cst_53 = arith.constant dense<0.000000e+00> : vector<8x128xf32>
    %117 = tpu.matmul %116, %2, %cst_53 {dimension_numbers = #tpu.dot_dimension_numbers<[1], [0], [0], [1], [0, 0, 1, 1], [], []>} : vector<8x128xbf16>, vector<128x128xbf16>, vector<8x128xf32> -> vector<8x128xf32>
    %118 = vector.broadcast %3 : vector<1x128xf32> to vector<8x128xf32>
    %119 = arith.addf %117, %118 : vector<8x128xf32>
    %cst_54 = arith.constant 0.000000e+00 : f32
    %120 = vector.broadcast %cst_54 : f32 to vector<8x128xf32>
    %121 = arith.maximumf %119, %120 : vector<8x128xf32>
    %122 = arith.maximumf %107, %121 : vector<8x128xf32>
    %c0_55 = arith.constant 0 : index
    %c0_56 = arith.constant 0 : index
    %123 = vector.load %arg6[%c0_55, %c0_56] : memref<8x128xf32, #tpu.memory_space<vmem>>, vector<8x128xf32>
    tpu.vector_store %arg6[%c0_55, %c0_56], %122 {strides = array<i32>} : memref<8x128xf32, #tpu.memory_space<vmem>>, vector<8x128xf32>,
    return
  }
  func.func @transform_0(%arg0: i32) -> (i32, i32, i32) {
    %c0_i32 = arith.constant 0 : i32
    %c0_i32_0 = arith.constant 0 : i32
    %c0_i32_1 = arith.constant 0 : i32
    return %c0_i32, %arg0, %c0_i32_0 : i32, i32, i32
  }
  func.func @transform_1(%arg0: i32) -> (i32, i32) {
    %c0_i32 = arith.constant 0 : i32
    %c0_i32_0 = arith.constant 0 : i32
    %c0_i32_1 = arith.constant 0 : i32
    return %c0_i32, %c0_i32_0 : i32, i32
  }
  func.func @transform_2(%arg0: i32) -> (i32, i32) {
    %c0_i32 = arith.constant 0 : i32
    %c0_i32_0 = arith.constant 0 : i32
    %c0_i32_1 = arith.constant 0 : i32
    return %c0_i32, %c0_i32_0 : i32, i32
  }
  func.func @transform_3(%arg0: i32) -> (i32, i32) {
    %c0_i32 = arith.constant 0 : i32
    %c0_i32_0 = arith.constant 0 : i32
    %c0_i32_1 = arith.constant 0 : i32
    return %c0_i32, %c0_i32_0 : i32, i32
  }
  func.func @transform_4(%arg0: i32) -> (i32, i32) {
    %c0_i32 = arith.constant 0 : i32
    %c0_i32_0 = arith.constant 0 : i32
    %c0_i32_1 = arith.constant 0 : i32
    return %c0_i32, %c0_i32_0 : i32, i32
  }
  func.func @transform_5(%arg0: i32) -> (i32, i32) {
    %c0_i32 = arith.constant 0 : i32
    %c0_i32_0 = arith.constant 0 : i32
    return %arg0, %c0_i32 : i32, i32
  }
}

module attributes {stable_mosaic.version = 11 : i64} {
  func.func @kernel(%arg0: i32, %arg1: memref<16x256xf32, #tpu.memory_space<vmem>>, %arg2: memref<256x128xbf16, #tpu.memory_space<vmem>>, %arg3: memref<1x128xf32, #tpu.memory_space<vmem>>, %arg4: memref<128x64xbf16, #tpu.memory_space<vmem>>, %arg5: memref<1x64xf32, #tpu.memory_space<vmem>>, %arg6: memref<16x64xf32, #tpu.memory_space<vmem>>) attributes {dimension_semantics = [#tpu.dimension_semantics<parallel>], iteration_bounds = array<i64: 1>, scalar_prefetch = 0 : i64, scratch_operands = 0 : i64, tpu.core_type = #tpu.core_type<tc>, window_params = [{transform_indices = @transform_0, window_bounds = array<i64: 16, 256>}, {pipeline_mode = #tpu.pipeline_mode<synchronous>, transform_indices = @transform_1, window_bounds = array<i64: 256, 128>}, {pipeline_mode = #tpu.pipeline_mode<synchronous>, transform_indices = @transform_2, window_bounds = array<i64: 1, 128>}, {pipeline_mode = #tpu.pipeline_mode<synchronous>, transform_indices = @transform_3, window_bounds = array<i64: 128, 64>}, {pipeline_mode = #tpu.pipeline_mode<synchronous>, transform_indices = @transform_4, window_bounds = array<i64: 1, 64>}, {transform_indices = @transform_5, window_bounds = array<i64: 16, 64>}]} {
    %c0 = arith.constant 0 : index
    %c0_0 = arith.constant 0 : index
    %0 = vector.load %arg1[%c0, %c0_0] : memref<16x256xf32, #tpu.memory_space<vmem>>, vector<16x256xf32>
    %c0_1 = arith.constant 0 : index
    %c0_2 = arith.constant 0 : index
    %1 = vector.load %arg2[%c0_1, %c0_2] : memref<256x128xbf16, #tpu.memory_space<vmem>>, vector<256x128xbf16>
    %c0_3 = arith.constant 0 : index
    %c0_4 = arith.constant 0 : index
    %2 = vector.load %arg3[%c0_3, %c0_4] : memref<1x128xf32, #tpu.memory_space<vmem>>, vector<1x128xf32>
    %3 = arith.truncf %0 : vector<16x256xf32> to vector<16x256xbf16>
    %cst = arith.constant dense<0.000000e+00> : vector<16x128xf32>
    %4 = tpu.matmul %3, %1, %cst {dimension_numbers = #tpu.dot_dimension_numbers<[1], [0], [0], [1], [0, 0, 1, 1], [], []>} : vector<16x256xbf16>, vector<256x128xbf16>, vector<16x128xf32> -> vector<16x128xf32>
    %5 = vector.broadcast %2 : vector<1x128xf32> to vector<16x128xf32>
    %6 = arith.addf %4, %5 : vector<16x128xf32>
    %cst_5 = arith.constant 0.000000e+00 : f32
    %7 = vector.broadcast %cst_5 : f32 to vector<16x128xf32>
    %8 = arith.maximumf %6, %7 : vector<16x128xf32>
    %c0_6 = arith.constant 0 : index
    %c0_7 = arith.constant 0 : index
    %9 = vector.load %arg4[%c0_6, %c0_7] : memref<128x64xbf16, #tpu.memory_space<vmem>>, vector<128x64xbf16>
    %c0_8 = arith.constant 0 : index
    %c0_9 = arith.constant 0 : index
    %10 = vector.load %arg5[%c0_8, %c0_9] : memref<1x64xf32, #tpu.memory_space<vmem>>, vector<1x64xf32>
    %11 = arith.truncf %8 : vector<16x128xf32> to vector<16x128xbf16>
    %cst_10 = arith.constant dense<0.000000e+00> : vector<16x64xf32>
    %12 = tpu.matmul %11, %9, %cst_10 {dimension_numbers = #tpu.dot_dimension_numbers<[1], [0], [0], [1], [0, 0, 1, 1], [], []>} : vector<16x128xbf16>, vector<128x64xbf16>, vector<16x64xf32> -> vector<16x64xf32>
    %13 = vector.broadcast %10 : vector<1x64xf32> to vector<16x64xf32>
    %14 = arith.addf %12, %13 : vector<16x64xf32>
    %cst_11 = arith.constant 0.000000e+00 : f32
    %15 = vector.broadcast %cst_11 : f32 to vector<16x64xf32>
    %16 = arith.maximumf %14, %15 : vector<16x64xf32>
    %c0_12 = arith.constant 0 : index
    %c0_13 = arith.constant 0 : index
    %17 = vector.load %arg6[%c0_12, %c0_13] : memref<16x64xf32, #tpu.memory_space<vmem>>, vector<16x64xf32>
    tpu.vector_store %arg6[%c0_12, %c0_13], %16 {strides = array<i32>} : memref<16x64xf32, #tpu.memory_space<vmem>>, vector<16x64xf32>,
    return
  }
  func.func @transform_0(%arg0: i32) -> (i32, i32) {
    %c0_i32 = arith.constant 0 : i32
    %c0_i32_0 = arith.constant 0 : i32
    return %arg0, %c0_i32 : i32, i32
  }
  func.func @transform_1(%arg0: i32) -> (i32, i32) {
    %c0_i32 = arith.constant 0 : i32
    %c0_i32_0 = arith.constant 0 : i32
    %c0_i32_1 = arith.constant 0 : i32
    return %c0_i32, %c0_i32_0 : i32, i32
  }
  func.func @transform_2(%arg0: i32) -> (i32, i32) {
    %c0_i32 = arith.constant 0 : i32
    %c0_i32_0 = arith.constant 0 : i32
    %c0_i32_1 = arith.constant 0 : i32
    return %c0_i32, %c0_i32_0 : i32, i32
  }
  func.func @transform_3(%arg0: i32) -> (i32, i32) {
    %c0_i32 = arith.constant 0 : i32
    %c0_i32_0 = arith.constant 0 : i32
    %c0_i32_1 = arith.constant 0 : i32
    return %c0_i32, %c0_i32_0 : i32, i32
  }
  func.func @transform_4(%arg0: i32) -> (i32, i32) {
    %c0_i32 = arith.constant 0 : i32
    %c0_i32_0 = arith.constant 0 : i32
    %c0_i32_1 = arith.constant 0 : i32
    return %c0_i32, %c0_i32_0 : i32, i32
  }
  func.func @transform_5(%arg0: i32) -> (i32, i32) {
    %c0_i32 = arith.constant 0 : i32
    %c0_i32_0 = arith.constant 0 : i32
    return %arg0, %c0_i32 : i32, i32
  }
}

module attributes {stable_mosaic.version = 11 : i64} {
  func.func @kernel(%arg0: i32, %arg1: memref<32x128xf32, #tpu.memory_space<vmem>>, %arg2: memref<128x64xbf16, #tpu.memory_space<vmem>>, %arg3: memref<1x64xf32, #tpu.memory_space<vmem>>, %arg4: memref<64x64xbf16, #tpu.memory_space<vmem>>, %arg5: memref<1x64xf32, #tpu.memory_space<vmem>>, %arg6: memref<32x64xf32, #tpu.memory_space<vmem>>) attributes {dimension_semantics = [#tpu.dimension_semantics<parallel>], iteration_bounds = array<i64: 1>, scalar_prefetch = 0 : i64, scratch_operands = 0 : i64, tpu.core_type = #tpu.core_type<tc>, window_params = [{transform_indices = @transform_0, window_bounds = array<i64: 32, 128>}, {pipeline_mode = #tpu.pipeline_mode<synchronous>, transform_indices = @transform_1, window_bounds = array<i64: 128, 64>}, {pipeline_mode = #tpu.pipeline_mode<synchronous>, transform_indices = @transform_2, window_bounds = array<i64: 1, 64>}, {pipeline_mode = #tpu.pipeline_mode<synchronous>, transform_indices = @transform_3, window_bounds = array<i64: 64, 64>}, {pipeline_mode = #tpu.pipeline_mode<synchronous>, transform_indices = @transform_4, window_bounds = array<i64: 1, 64>}, {transform_indices = @transform_5, window_bounds = array<i64: 32, 64>}]} {
    %c0 = arith.constant 0 : index
    %c0_0 = arith.constant 0 : index
    %0 = vector.load %arg1[%c0, %c0_0] : memref<32x128xf32, #tpu.memory_space<vmem>>, vector<32x128xf32>
    %c0_1 = arith.constant 0 : index
    %c0_2 = arith.constant 0 : index
    %1 = vector.load %arg2[%c0_1, %c0_2] : memref<128x64xbf16, #tpu.memory_space<vmem>>, vector<128x64xbf16>
    %c0_3 = arith.constant 0 : index
    %c0_4 = arith.constant 0 : index
    %2 = vector.load %arg3[%c0_3, %c0_4] : memref<1x64xf32, #tpu.memory_space<vmem>>, vector<1x64xf32>
    %3 = arith.truncf %0 : vector<32x128xf32> to vector<32x128xbf16>
    %cst = arith.constant dense<0.000000e+00> : vector<32x64xf32>
    %4 = tpu.matmul %3, %1, %cst {dimension_numbers = #tpu.dot_dimension_numbers<[1], [0], [0], [1], [0, 0, 1, 1], [], []>} : vector<32x128xbf16>, vector<128x64xbf16>, vector<32x64xf32> -> vector<32x64xf32>
    %5 = vector.broadcast %2 : vector<1x64xf32> to vector<32x64xf32>
    %6 = arith.addf %4, %5 : vector<32x64xf32>
    %cst_5 = arith.constant 0.000000e+00 : f32
    %7 = vector.broadcast %cst_5 : f32 to vector<32x64xf32>
    %8 = arith.maximumf %6, %7 : vector<32x64xf32>
    %c0_6 = arith.constant 0 : index
    %c0_7 = arith.constant 0 : index
    %9 = vector.load %arg4[%c0_6, %c0_7] : memref<64x64xbf16, #tpu.memory_space<vmem>>, vector<64x64xbf16>
    %c0_8 = arith.constant 0 : index
    %c0_9 = arith.constant 0 : index
    %10 = vector.load %arg5[%c0_8, %c0_9] : memref<1x64xf32, #tpu.memory_space<vmem>>, vector<1x64xf32>
    %11 = arith.truncf %8 : vector<32x64xf32> to vector<32x64xbf16>
    %cst_10 = arith.constant dense<0.000000e+00> : vector<32x64xf32>
    %12 = tpu.matmul %11, %9, %cst_10 {dimension_numbers = #tpu.dot_dimension_numbers<[1], [0], [0], [1], [0, 0, 1, 1], [], []>} : vector<32x64xbf16>, vector<64x64xbf16>, vector<32x64xf32> -> vector<32x64xf32>
    %13 = vector.broadcast %10 : vector<1x64xf32> to vector<32x64xf32>
    %14 = arith.addf %12, %13 : vector<32x64xf32>
    %cst_11 = arith.constant 0.000000e+00 : f32
    %15 = vector.broadcast %cst_11 : f32 to vector<32x64xf32>
    %16 = arith.maximumf %14, %15 : vector<32x64xf32>
    %c0_12 = arith.constant 0 : index
    %c0_13 = arith.constant 0 : index
    %17 = vector.load %arg6[%c0_12, %c0_13] : memref<32x64xf32, #tpu.memory_space<vmem>>, vector<32x64xf32>
    tpu.vector_store %arg6[%c0_12, %c0_13], %16 {strides = array<i32>} : memref<32x64xf32, #tpu.memory_space<vmem>>, vector<32x64xf32>,
    return
  }
  func.func @transform_0(%arg0: i32) -> (i32, i32) {
    %c0_i32 = arith.constant 0 : i32
    %c0_i32_0 = arith.constant 0 : i32
    return %arg0, %c0_i32 : i32, i32
  }
  func.func @transform_1(%arg0: i32) -> (i32, i32) {
    %c0_i32 = arith.constant 0 : i32
    %c0_i32_0 = arith.constant 0 : i32
    %c0_i32_1 = arith.constant 0 : i32
    return %c0_i32, %c0_i32_0 : i32, i32
  }
  func.func @transform_2(%arg0: i32) -> (i32, i32) {
    %c0_i32 = arith.constant 0 : i32
    %c0_i32_0 = arith.constant 0 : i32
    %c0_i32_1 = arith.constant 0 : i32
    return %c0_i32, %c0_i32_0 : i32, i32
  }
  func.func @transform_3(%arg0: i32) -> (i32, i32) {
    %c0_i32 = arith.constant 0 : i32
    %c0_i32_0 = arith.constant 0 : i32
    %c0_i32_1 = arith.constant 0 : i32
    return %c0_i32, %c0_i32_0 : i32, i32
  }
  func.func @transform_4(%arg0: i32) -> (i32, i32) {
    %c0_i32 = arith.constant 0 : i32
    %c0_i32_0 = arith.constant 0 : i32
    %c0_i32_1 = arith.constant 0 : i32
    return %c0_i32, %c0_i32_0 : i32, i32
  }
  func.func @transform_5(%arg0: i32) -> (i32, i32) {
    %c0_i32 = arith.constant 0 : i32
    %c0_i32_0 = arith.constant 0 : i32
    return %arg0, %c0_i32 : i32, i32
  }
}

module attributes {stable_mosaic.version = 11 : i64} {
  func.func @kernel(%arg0: i32, %arg1: memref<64x96xf32, #tpu.memory_space<vmem>>, %arg2: memref<96x64xbf16, #tpu.memory_space<vmem>>, %arg3: memref<1x64xf32, #tpu.memory_space<vmem>>, %arg4: memref<64x32xbf16, #tpu.memory_space<vmem>>, %arg5: memref<1x32xf32, #tpu.memory_space<vmem>>, %arg6: memref<64x32xf32, #tpu.memory_space<vmem>>) attributes {dimension_semantics = [#tpu.dimension_semantics<parallel>], iteration_bounds = array<i64: 1>, scalar_prefetch = 0 : i64, scratch_operands = 0 : i64, tpu.core_type = #tpu.core_type<tc>, window_params = [{transform_indices = @transform_0, window_bounds = array<i64: 64, 96>}, {pipeline_mode = #tpu.pipeline_mode<synchronous>, transform_indices = @transform_1, window_bounds = array<i64: 96, 64>}, {pipeline_mode = #tpu.pipeline_mode<synchronous>, transform_indices = @transform_2, window_bounds = array<i64: 1, 64>}, {pipeline_mode = #tpu.pipeline_mode<synchronous>, transform_indices = @transform_3, window_bounds = array<i64: 64, 32>}, {pipeline_mode = #tpu.pipeline_mode<synchronous>, transform_indices = @transform_4, window_bounds = array<i64: 1, 32>}, {transform_indices = @transform_5, window_bounds = array<i64: 64, 32>}]} {
    %c0 = arith.constant 0 : index
    %c0_0 = arith.constant 0 : index
    %0 = vector.load %arg1[%c0, %c0_0] : memref<64x96xf32, #tpu.memory_space<vmem>>, vector<64x96xf32>
    %c0_1 = arith.constant 0 : index
    %c0_2 = arith.constant 0 : index
    %1 = vector.load %arg2[%c0_1, %c0_2] : memref<96x64xbf16, #tpu.memory_space<vmem>>, vector<96x64xbf16>
    %c0_3 = arith.constant 0 : index
    %c0_4 = arith.constant 0 : index
    %2 = vector.load %arg3[%c0_3, %c0_4] : memref<1x64xf32, #tpu.memory_space<vmem>>, vector<1x64xf32>
    %3 = arith.truncf %0 : vector<64x96xf32> to vector<64x96xbf16>
    %cst = arith.constant dense<0.000000e+00> : vector<64x64xf32>
    %4 = tpu.matmul %3, %1, %cst {dimension_numbers = #tpu.dot_dimension_numbers<[1], [0], [0], [1], [0, 0, 1, 1], [], []>} : vector<64x96xbf16>, vector<96x64xbf16>, vector<64x64xf32> -> vector<64x64xf32>
    %5 = vector.broadcast %2 : vector<1x64xf32> to vector<64x64xf32>
    %6 = arith.addf %4, %5 : vector<64x64xf32>
    %cst_5 = arith.constant 0.000000e+00 : f32
    %7 = vector.broadcast %cst_5 : f32 to vector<64x64xf32>
    %8 = arith.maximumf %6, %7 : vector<64x64xf32>
    %c0_6 = arith.constant 0 : index
    %c0_7 = arith.constant 0 : index
    %9 = vector.load %arg4[%c0_6, %c0_7] : memref<64x32xbf16, #tpu.memory_space<vmem>>, vector<64x32xbf16>
    %c0_8 = arith.constant 0 : index
    %c0_9 = arith.constant 0 : index
    %10 = vector.load %arg5[%c0_8, %c0_9] : memref<1x32xf32, #tpu.memory_space<vmem>>, vector<1x32xf32>
    %11 = arith.truncf %8 : vector<64x64xf32> to vector<64x64xbf16>
    %cst_10 = arith.constant dense<0.000000e+00> : vector<64x32xf32>
    %12 = tpu.matmul %11, %9, %cst_10 {dimension_numbers = #tpu.dot_dimension_numbers<[1], [0], [0], [1], [0, 0, 1, 1], [], []>} : vector<64x64xbf16>, vector<64x32xbf16>, vector<64x32xf32> -> vector<64x32xf32>
    %13 = vector.broadcast %10 : vector<1x32xf32> to vector<64x32xf32>
    %14 = arith.addf %12, %13 : vector<64x32xf32>
    %cst_11 = arith.constant 0.000000e+00 : f32
    %15 = vector.broadcast %cst_11 : f32 to vector<64x32xf32>
    %16 = arith.maximumf %14, %15 : vector<64x32xf32>
    %c0_12 = arith.constant 0 : index
    %c0_13 = arith.constant 0 : index
    %17 = vector.load %arg6[%c0_12, %c0_13] : memref<64x32xf32, #tpu.memory_space<vmem>>, vector<64x32xf32>
    tpu.vector_store %arg6[%c0_12, %c0_13], %16 {strides = array<i32>} : memref<64x32xf32, #tpu.memory_space<vmem>>, vector<64x32xf32>,
    return
  }
  func.func @transform_0(%arg0: i32) -> (i32, i32) {
    %c0_i32 = arith.constant 0 : i32
    %c0_i32_0 = arith.constant 0 : i32
    return %arg0, %c0_i32 : i32, i32
  }
  func.func @transform_1(%arg0: i32) -> (i32, i32) {
    %c0_i32 = arith.constant 0 : i32
    %c0_i32_0 = arith.constant 0 : i32
    %c0_i32_1 = arith.constant 0 : i32
    return %c0_i32, %c0_i32_0 : i32, i32
  }
  func.func @transform_2(%arg0: i32) -> (i32, i32) {
    %c0_i32 = arith.constant 0 : i32
    %c0_i32_0 = arith.constant 0 : i32
    %c0_i32_1 = arith.constant 0 : i32
    return %c0_i32, %c0_i32_0 : i32, i32
  }
  func.func @transform_3(%arg0: i32) -> (i32, i32) {
    %c0_i32 = arith.constant 0 : i32
    %c0_i32_0 = arith.constant 0 : i32
    %c0_i32_1 = arith.constant 0 : i32
    return %c0_i32, %c0_i32_0 : i32, i32
  }
  func.func @transform_4(%arg0: i32) -> (i32, i32) {
    %c0_i32 = arith.constant 0 : i32
    %c0_i32_0 = arith.constant 0 : i32
    %c0_i32_1 = arith.constant 0 : i32
    return %c0_i32, %c0_i32_0 : i32, i32
  }
  func.func @transform_5(%arg0: i32) -> (i32, i32) {
    %c0_i32 = arith.constant 0 : i32
    %c0_i32_0 = arith.constant 0 : i32
    return %arg0, %c0_i32 : i32, i32
  }
}

module attributes {stable_mosaic.version = 11 : i64} {
  func.func @kernel(%arg0: i32, %arg1: memref<128x35xf32, #tpu.memory_space<vmem>>, %arg2: memref<35x32xbf16, #tpu.memory_space<vmem>>, %arg3: memref<1x32xf32, #tpu.memory_space<vmem>>, %arg4: memref<32x32xbf16, #tpu.memory_space<vmem>>, %arg5: memref<1x32xf32, #tpu.memory_space<vmem>>, %arg6: memref<32x128xbf16, #tpu.memory_space<vmem>>, %arg7: memref<1x128xf32, #tpu.memory_space<vmem>>, %arg8: memref<128x128xf32, #tpu.memory_space<vmem>>) attributes {dimension_semantics = [#tpu.dimension_semantics<parallel>], iteration_bounds = array<i64: 1>, scalar_prefetch = 0 : i64, scratch_operands = 0 : i64, tpu.core_type = #tpu.core_type<tc>, window_params = [{transform_indices = @transform_0, window_bounds = array<i64: 128, 35>}, {pipeline_mode = #tpu.pipeline_mode<synchronous>, transform_indices = @transform_1, window_bounds = array<i64: 35, 32>}, {pipeline_mode = #tpu.pipeline_mode<synchronous>, transform_indices = @transform_2, window_bounds = array<i64: 1, 32>}, {pipeline_mode = #tpu.pipeline_mode<synchronous>, transform_indices = @transform_3, window_bounds = array<i64: 32, 32>}, {pipeline_mode = #tpu.pipeline_mode<synchronous>, transform_indices = @transform_4, window_bounds = array<i64: 1, 32>}, {pipeline_mode = #tpu.pipeline_mode<synchronous>, transform_indices = @transform_5, window_bounds = array<i64: 32, 128>}, {pipeline_mode = #tpu.pipeline_mode<synchronous>, transform_indices = @transform_6, window_bounds = array<i64: 1, 128>}, {transform_indices = @transform_7, window_bounds = array<i64: 128, 128>}]} {
    %c0 = arith.constant 0 : index
    %c0_0 = arith.constant 0 : index
    %0 = vector.load %arg1[%c0, %c0_0] : memref<128x35xf32, #tpu.memory_space<vmem>>, vector<128x35xf32>
    %c0_1 = arith.constant 0 : index
    %c0_2 = arith.constant 0 : index
    %1 = vector.load %arg2[%c0_1, %c0_2] : memref<35x32xbf16, #tpu.memory_space<vmem>>, vector<35x32xbf16>
    %c0_3 = arith.constant 0 : index
    %c0_4 = arith.constant 0 : index
    %2 = vector.load %arg3[%c0_3, %c0_4] : memref<1x32xf32, #tpu.memory_space<vmem>>, vector<1x32xf32>
    %3 = arith.truncf %0 : vector<128x35xf32> to vector<128x35xbf16>
    %cst = arith.constant dense<0.000000e+00> : vector<128x32xf32>
    %4 = tpu.matmul %3, %1, %cst {dimension_numbers = #tpu.dot_dimension_numbers<[1], [0], [0], [1], [0, 0, 1, 1], [], []>} : vector<128x35xbf16>, vector<35x32xbf16>, vector<128x32xf32> -> vector<128x32xf32>
    %5 = vector.broadcast %2 : vector<1x32xf32> to vector<128x32xf32>
    %6 = arith.addf %4, %5 : vector<128x32xf32>
    %cst_5 = arith.constant 0.000000e+00 : f32
    %7 = vector.broadcast %cst_5 : f32 to vector<128x32xf32>
    %8 = arith.maximumf %6, %7 : vector<128x32xf32>
    %c0_6 = arith.constant 0 : index
    %c0_7 = arith.constant 0 : index
    %9 = vector.load %arg4[%c0_6, %c0_7] : memref<32x32xbf16, #tpu.memory_space<vmem>>, vector<32x32xbf16>
    %c0_8 = arith.constant 0 : index
    %c0_9 = arith.constant 0 : index
    %10 = vector.load %arg5[%c0_8, %c0_9] : memref<1x32xf32, #tpu.memory_space<vmem>>, vector<1x32xf32>
    %11 = arith.truncf %8 : vector<128x32xf32> to vector<128x32xbf16>
    %cst_10 = arith.constant dense<0.000000e+00> : vector<128x32xf32>
    %12 = tpu.matmul %11, %9, %cst_10 {dimension_numbers = #tpu.dot_dimension_numbers<[1], [0], [0], [1], [0, 0, 1, 1], [], []>} : vector<128x32xbf16>, vector<32x32xbf16>, vector<128x32xf32> -> vector<128x32xf32>
    %13 = vector.broadcast %10 : vector<1x32xf32> to vector<128x32xf32>
    %14 = arith.addf %12, %13 : vector<128x32xf32>
    %cst_11 = arith.constant 0.000000e+00 : f32
    %15 = vector.broadcast %cst_11 : f32 to vector<128x32xf32>
    %16 = arith.maximumf %14, %15 : vector<128x32xf32>
    %c0_12 = arith.constant 0 : index
    %c0_13 = arith.constant 0 : index
    %17 = vector.load %arg6[%c0_12, %c0_13] : memref<32x128xbf16, #tpu.memory_space<vmem>>, vector<32x128xbf16>
    %c0_14 = arith.constant 0 : index
    %c0_15 = arith.constant 0 : index
    %18 = vector.load %arg7[%c0_14, %c0_15] : memref<1x128xf32, #tpu.memory_space<vmem>>, vector<1x128xf32>
    %19 = arith.truncf %16 : vector<128x32xf32> to vector<128x32xbf16>
    %cst_16 = arith.constant dense<0.000000e+00> : vector<128x128xf32>
    %20 = tpu.matmul %19, %17, %cst_16 {dimension_numbers = #tpu.dot_dimension_numbers<[1], [0], [0], [1], [0, 0, 1, 1], [], []>} : vector<128x32xbf16>, vector<32x128xbf16>, vector<128x128xf32> -> vector<128x128xf32>
    %21 = vector.broadcast %18 : vector<1x128xf32> to vector<128x128xf32>
    %22 = arith.addf %20, %21 : vector<128x128xf32>
    %c0_17 = arith.constant 0 : index
    %c0_18 = arith.constant 0 : index
    %23 = vector.load %arg8[%c0_17, %c0_18] : memref<128x128xf32, #tpu.memory_space<vmem>>, vector<128x128xf32>
    tpu.vector_store %arg8[%c0_17, %c0_18], %22 {strides = array<i32>} : memref<128x128xf32, #tpu.memory_space<vmem>>, vector<128x128xf32>,
    return
  }
  func.func @transform_0(%arg0: i32) -> (i32, i32) {
    %c0_i32 = arith.constant 0 : i32
    %c0_i32_0 = arith.constant 0 : i32
    return %arg0, %c0_i32 : i32, i32
  }
  func.func @transform_1(%arg0: i32) -> (i32, i32) {
    %c0_i32 = arith.constant 0 : i32
    %c0_i32_0 = arith.constant 0 : i32
    %c0_i32_1 = arith.constant 0 : i32
    return %c0_i32, %c0_i32_0 : i32, i32
  }
  func.func @transform_2(%arg0: i32) -> (i32, i32) {
    %c0_i32 = arith.constant 0 : i32
    %c0_i32_0 = arith.constant 0 : i32
    %c0_i32_1 = arith.constant 0 : i32
    return %c0_i32, %c0_i32_0 : i32, i32
  }
  func.func @transform_3(%arg0: i32) -> (i32, i32) {
    %c0_i32 = arith.constant 0 : i32
    %c0_i32_0 = arith.constant 0 : i32
    %c0_i32_1 = arith.constant 0 : i32
    return %c0_i32, %c0_i32_0 : i32, i32
  }
  func.func @transform_4(%arg0: i32) -> (i32, i32) {
    %c0_i32 = arith.constant 0 : i32
    %c0_i32_0 = arith.constant 0 : i32
    %c0_i32_1 = arith.constant 0 : i32
    return %c0_i32, %c0_i32_0 : i32, i32
  }
  func.func @transform_5(%arg0: i32) -> (i32, i32) {
    %c0_i32 = arith.constant 0 : i32
    %c0_i32_0 = arith.constant 0 : i32
    %c0_i32_1 = arith.constant 0 : i32
    return %c0_i32, %c0_i32_0 : i32, i32
  }
  func.func @transform_6(%arg0: i32) -> (i32, i32) {
    %c0_i32 = arith.constant 0 : i32
    %c0_i32_0 = arith.constant 0 : i32
    %c0_i32_1 = arith.constant 0 : i32
    return %c0_i32, %c0_i32_0 : i32, i32
  }
  func.func @transform_7(%arg0: i32) -> (i32, i32) {
    %c0_i32 = arith.constant 0 : i32
    %c0_i32_0 = arith.constant 0 : i32
    return %arg0, %c0_i32 : i32, i32
  }
}

</mosaic_0001>

<llo_original>
// kernel: custom-call.40
$region0: #{custom-call.40}
  %s0 = inlined_call_operand.vmem [shape: f32[2,64], index: 0, kind: output, shape index: {}]

// kernel: custom-call.41
$region0: #{custom-call.41}
  %s0 = inlined_call_operand.vmem [shape: f32[2,32], index: 0, kind: output, shape index: {}]

// kernel: pointnet_plus_semseg_forward.8
$region0: #{pointnet_plus_semseg_forward.8}
  #allocation0 [shape = 'u32[]', space=smem, size = 0x4, offset = 0x4, fixed_abs, tag = 'smem constant byte address 0x4 - core index']
  #allocation1 [shape = 'u32[144,128]{1,0:T(1,128)}', space=vmem, size = 0x12000, scoped, tag = 'internal scratch']
  %s0 = inlined_call_operand.vmem [shape: f32[8,64,6], index: 0, kind: input, shape index: {}]
  %s1 = inlined_call_operand.vmem [shape: bf16[6,16], index: 1, kind: input, shape index: {}]
  %s2 = inlined_call_operand.vmem [shape: f32[1,16], index: 2, kind: input, shape index: {}]
  %s3 = inlined_call_operand.vmem [shape: bf16[16,32], index: 3, kind: input, shape index: {}]
  %s4 = inlined_call_operand.vmem [shape: f32[1,32], index: 4, kind: input, shape index: {}]
  %s5 = inlined_call_operand.vmem [shape: f32[64,32], index: 5, kind: output, shape index: {}]
  %s6 = sld [smem:[#allocation0]]
  $region30: #{pointnet_plus_semseg_forward.8} parent=0
    _
  %s8 = ssub.s32 1, %s6
  %s9 = scalar_select 0, %s8, %s6
  // Predicated region
  $region2: #{pointnet_plus_semseg_forward.8} parent=0 // pred_check
    _
  $region3: #{pointnet_plus_semseg_forward.8} parent=0 // pred_check_branch
    %11 = sbr.rel (0) target = $region5
  $region4: #{pointnet_plus_semseg_forward.8} parent=0 // pred_region
    _
  $region5: #{pointnet_plus_semseg_forward.8} parent=0 // pred_fallthru
    _
  // Predicated region
  $region6: #{pointnet_plus_semseg_forward.8} parent=0 // pred_check
    _
  $region7: #{pointnet_plus_semseg_forward.8} parent=0 // pred_check_branch
    %13 = sbr.rel (0) target = $region9
  $region8: #{pointnet_plus_semseg_forward.8} parent=0 // pred_region
    _
  $region9: #{pointnet_plus_semseg_forward.8} parent=0 // pred_fallthru
    _
  // Predicated region
  $region10: #{pointnet_plus_semseg_forward.8} parent=0 // pred_check
    _
  $region11: #{pointnet_plus_semseg_forward.8} parent=0 // pred_check_branch
    %15 = sbr.rel (0) target = $region13
  $region12: #{pointnet_plus_semseg_forward.8} parent=0 // pred_region
    _
  $region13: #{pointnet_plus_semseg_forward.8} parent=0 // pred_fallthru
    _
  // Predicated region
  $region14: #{pointnet_plus_semseg_forward.8} parent=0 // pred_check
    _
  $region15: #{pointnet_plus_semseg_forward.8} parent=0 // pred_check_branch
    %17 = sbr.rel (0) target = $region17
  $region16: #{pointnet_plus_semseg_forward.8} parent=0 // pred_region
    _
  $region17: #{pointnet_plus_semseg_forward.8} parent=0 // pred_fallthru
    _
  // Predicated region
  $region18: #{pointnet_plus_semseg_forward.8} parent=0 // pred_check
    _
  $region19: #{pointnet_plus_semseg_forward.8} parent=0 // pred_check_branch
    %19 = sbr.rel (0) target = $region21
  $region20: #{pointnet_plus_semseg_forward.8} parent=0 // pred_region
    _
  $region21: #{pointnet_plus_semseg_forward.8} parent=0 // pred_fallthru
    _
  %v21 = vld [vmem:[%s1] sm:$0x7]
  %v22 = vld [vmem:[%s2] sm:$0x1]
  %v23 = vld [vmem:[%s3] sm:$0xf]
  %v24 = vld [vmem:[%s3 + $0x4] sm:$0xf]
  %v25 = vld [vmem:[%s4] sm:$0x1]
  %v26 = vld [vmem:[%s0] sm:$0xff]
  %v27 = vld [vmem:[%s0 + $0x8] sm:$0xff]
  %v28 = vld [vmem:[%s0 + $0x10] sm:$0xff]
  %v29 = vld [vmem:[%s0 + $0x18] sm:$0xff]
  %v30 = vld [vmem:[%s0 + $0x20] sm:$0xff]
  %v31 = vld [vmem:[%s0 + $0x28] sm:$0xff]
  %v32 = vld [vmem:[%s0 + $0x30] sm:$0xff]
  %v33 = vld [vmem:[%s0 + $0x38] sm:$0xff]
  %v34 = vpack.c.bf16 %v27, %v26
  %v35 = vpack.c.bf16 %v29, %v28
  %v36 = vpack.c.bf16 %v31, %v30
  %v37 = vpack.c.bf16 %v33, %v32
  %v39 = vlaneseq
  %v40 = vshrl.u32 %v39, 7
  %v41 = vsub.s32 0, %v40
  %v42 = vrot.slane %v22, %v41
  %vm44 = vcmask 48128
  %v46 = vsel %vm44, %v34, 0
  %v49 = vsel %vm44, %v35, 0
  %v52 = vsel %vm44, %v36, 0
  %v55 = vsel %vm44, %v37, 0
  %vm57 = vcmask 1042432
  %v59 = vsel %vm57, %v21, 0
  %61 = vmatprep.subr.bf16.mxu0 0
  %62 = vmatpush1.bf16.msra.mxu0 %v59
  %63 = vmatprep.subr.bf16.mxu0 0
  %64 = vmatpush1.bf16.msra.mxu0 0
  %65 = vmatprep.subr.bf16.mxu0 0
  %66 = vmatpush1.bf16.msra.mxu0 0
  %67 = vmatprep.subr.bf16.mxu0 0
  %68 = vmatpush1.bf16.msra.mxu0 0
  %69 = vmatprep.subr.bf16.mxu0 0
  %70 = vmatpush1.bf16.msra.mxu0 0
  %71 = vmatprep.subr.bf16.mxu0 0
  %72 = vmatpush1.bf16.msra.mxu0 0
  %73 = vmatprep.subr.bf16.mxu0 0
  %74 = vmatpush1.bf16.msra.mxu0 0
  %75 = vmatprep.subr.bf16.mxu0 0
  %76 = vmatpush1.bf16.msra.mxu0 0
  %77 = vmatprep.subr.bf16.mxu0 0
  %78 = vmatpush1.bf16.msra.mxu0 0
  %79 = vmatprep.subr.bf16.mxu0 0
  %80 = vmatpush1.bf16.msra.mxu0 0
  %81 = vmatprep.subr.bf16.mxu0 0
  %82 = vmatpush1.bf16.msra.mxu0 0
  %83 = vmatprep.subr.bf16.mxu0 0
  %84 = vmatpush1.bf16.msra.mxu0 0
  %85 = vmatprep.subr.bf16.mxu0 0
  %86 = vmatpush1.bf16.msra.mxu0 0
  %87 = vmatprep.subr.bf16.mxu0 0
  %88 = vmatpush1.bf16.msra.mxu0 0
  %89 = vmatprep.subr.bf16.mxu0 0
  %90 = vmatpush1.bf16.msra.mxu0 0
  %91 = vmatprep.subr.bf16.mxu0 0
  %92 = vmatpush1.bf16.msra.mxu0 0
  %93 = vmatprep.mubr.bf16.mxu0 0
  %94 = vmatmul.mubr.bf16.gmra.mrb[0].mxu0 %v46
  %v95 = vpop.f32.mrb[0].mxu0
  %v96 = vadd.f32 %v42, %v95
  %v97 = vpop.f32.mrb[0].mxu0
  %v98 = vpop.f32.mrb[0].mxu0
  %v99 = vadd.f32 %v42, %v98
  %v100 = vpop.f32.mrb[0].mxu0
  %101 = vmatprep.mubr.bf16.mxu0 0
  %102 = vmatmul.mubr.bf16.gmra.mrb[0].mxu0 %v49
  %v103 = vpop.f32.mrb[0].mxu0
  %v104 = vadd.f32 %v42, %v103
  %v105 = vpop.f32.mrb[0].mxu0
  %v106 = vpop.f32.mrb[0].mxu0
  %v107 = vadd.f32 %v42, %v106
  %v108 = vpop.f32.mrb[0].mxu0
  %109 = vmatprep.mubr.bf16.mxu0 0
  %110 = vmatmul.mubr.bf16.gmra.mrb[0].mxu0 %v52
  %v111 = vpop.f32.mrb[0].mxu0
  %v112 = vadd.f32 %v42, %v111
  %v113 = vpop.f32.mrb[0].mxu0
  %v114 = vpop.f32.mrb[0].mxu0
  %v115 = vadd.f32 %v42, %v114
  %v116 = vpop.f32.mrb[0].mxu0
  %117 = vmatprep.mubr.bf16.mxu0 0
  %118 = vmatmul.mubr.bf16.gmra.mrb[0].mxu0 %v55
  %v119 = vpop.f32.mrb[0].mxu0
  %v120 = vadd.f32 %v42, %v119
  %v121 = vpop.f32.mrb[0].mxu0
  %v122 = vpop.f32.mrb[0].mxu0
  %v123 = vadd.f32 %v42, %v122
  %v124 = vpop.f32.mrb[0].mxu0
  %125 = vdwg.mxu0
  %v126 = vmax.f32 %v96, 0.0
  %v127 = vmax.f32 %v99, 0.0
  %v128 = vmax.f32 %v104, 0.0
  %v129 = vmax.f32 %v107, 0.0
  %v130 = vmax.f32 %v112, 0.0
  %v131 = vmax.f32 %v115, 0.0
  %v132 = vmax.f32 %v120, 0.0
  %v133 = vmax.f32 %v123, 0.0
  %v134 = vpack.c.bf16 %v127, %v126
  %v135 = vpack.c.bf16 %v129, %v128
  %v136 = vpack.c.bf16 %v131, %v130
  %v137 = vpack.c.bf16 %v133, %v132
  %v139 = vlaneseq
  %v140 = vshrl.u32 %v139, 7
  %v141 = vsub.s32 0, %v140
  %v142 = vrot.slane %v25, %v141
  %v146 = vunpack.c.l.b16 %v23
  %v147 = vunpack.c.l.b16 %v24
  %v148 = vpack.c.b16 %v147, %v146
  %vm150 = vcmask 130048
  %v152 = vsel %vm150, %v134, 0
  %v155 = vsel %vm150, %v135, 0
  %v158 = vsel %vm150, %v136, 0
  %v161 = vsel %vm150, %v137, 0
  %163 = vmatprep.subr.bf16.mxu0 0
  %164 = vmatpush1.bf16.msra.mxu0 %v148
  %165 = vmatprep.subr.bf16.mxu0 0
  %166 = vmatpush1.bf16.msra.mxu0 0
  %167 = vmatprep.subr.bf16.mxu0 0
  %168 = vmatpush1.bf16.msra.mxu0 0
  %169 = vmatprep.subr.bf16.mxu0 0
  %170 = vmatpush1.bf16.msra.mxu0 0
  %171 = vmatprep.subr.bf16.mxu0 0
  %172 = vmatpush1.bf16.msra.mxu0 0
  %173 = vmatprep.subr.bf16.mxu0 0
  %174 = vmatpush1.bf16.msra.mxu0 0
  %175 = vmatprep.subr.bf16.mxu0 0
  %176 = vmatpush1.bf16.msra.mxu0 0
  %177 = vmatprep.subr.bf16.mxu0 0
  %178 = vmatpush1.bf16.msra.mxu0 0
  %179 = vmatprep.subr.bf16.mxu0 0
  %180 = vmatpush1.bf16.msra.mxu0 0
  %181 = vmatprep.subr.bf16.mxu0 0
  %182 = vmatpush1.bf16.msra.mxu0 0
  %183 = vmatprep.subr.bf16.mxu0 0
  %184 = vmatpush1.bf16.msra.mxu0 0
  %185 = vmatprep.subr.bf16.mxu0 0
  %186 = vmatpush1.bf16.msra.mxu0 0
  %187 = vmatprep.subr.bf16.mxu0 0
  %188 = vmatpush1.bf16.msra.mxu0 0
  %189 = vmatprep.subr.bf16.mxu0 0
  %190 = vmatpush1.bf16.msra.mxu0 0
  %191 = vmatprep.subr.bf16.mxu0 0
  %192 = vmatpush1.bf16.msra.mxu0 0
  %193 = vmatprep.subr.bf16.mxu0 0
  %194 = vmatpush1.bf16.msra.mxu0 0
  %195 = vmatprep.mubr.bf16.mxu0 0
  %196 = vmatmul.mubr.bf16.gmra.mrb[0].mxu0 %v152
  %v197 = vpop.f32.mrb[0].mxu0
  %v198 = vadd.f32 %v142, %v197
  %v199 = vpop.f32.mrb[0].mxu0
  %v200 = vpop.f32.mrb[0].mxu0
  %v201 = vadd.f32 %v142, %v200
  %v202 = vpop.f32.mrb[0].mxu0
  %203 = vmatprep.mubr.bf16.mxu0 0
  %204 = vmatmul.mubr.bf16.gmra.mrb[0].mxu0 %v155
  %v205 = vpop.f32.mrb[0].mxu0
  %v206 = vadd.f32 %v142, %v205
  %v207 = vpop.f32.mrb[0].mxu0
  %v208 = vpop.f32.mrb[0].mxu0
  %v209 = vadd.f32 %v142, %v208
  %v210 = vpop.f32.mrb[0].mxu0
  %211 = vmatprep.mubr.bf16.mxu0 0
  %212 = vmatmul.mubr.bf16.gmra.mrb[0].mxu0 %v158
  %v213 = vpop.f32.mrb[0].mxu0
  %v214 = vadd.f32 %v142, %v213
  %v215 = vpop.f32.mrb[0].mxu0
  %v216 = vpop.f32.mrb[0].mxu0
  %v217 = vadd.f32 %v142, %v216
  %v218 = vpop.f32.mrb[0].mxu0
  %219 = vmatprep.mubr.bf16.mxu0 0
  %220 = vmatmul.mubr.bf16.gmra.mrb[0].mxu0 %v161
  %v221 = vpop.f32.mrb[0].mxu0
  %v222 = vadd.f32 %v142, %v221
  %v223 = vpop.f32.mrb[0].mxu0
  %v224 = vpop.f32.mrb[0].mxu0
  %v225 = vadd.f32 %v142, %v224
  %v226 = vpop.f32.mrb[0].mxu0
  %227 = vdwg.mxu0
  %v228 = vmax.f32 %v198, 0.0
  %v229 = vmax.f32 %v201, 0.0
  %v230 = vmax.f32 %v206, 0.0
  %v231 = vmax.f32 %v209, 0.0
  %v232 = vmax.f32 %v214, 0.0
  %v233 = vmax.f32 %v217, 0.0
  %v234 = vmax.f32 %v222, 0.0
  %v235 = vmax.f32 %v225, 0.0
  %s236 = scalar_lea.vmem %s0, 64
  %v237 = vld [vmem:[%s236] sm:$0xff]
  %v238 = vld [vmem:[%s236 + $0x8] sm:$0xff]
  %v239 = vld [vmem:[%s236 + $0x10] sm:$0xff]
  %v240 = vld [vmem:[%s236 + $0x18] sm:$0xff]
  %v241 = vld [vmem:[%s236 + $0x20] sm:$0xff]
  %v242 = vld [vmem:[%s236 + $0x28] sm:$0xff]
  %v243 = vld [vmem:[%s236 + $0x30] sm:$0xff]
  %v244 = vld [vmem:[%s236 + $0x38] sm:$0xff]
  %v245 = vpack.c.bf16 %v238, %v237
  %v246 = vpack.c.bf16 %v240, %v239
  %v247 = vpack.c.bf16 %v242, %v241
  %v248 = vpack.c.bf16 %v244, %v243
  %v250 = vsel %vm44, %v245, 0
  %v253 = vsel %vm44, %v246, 0
  %v256 = vsel %vm44, %v247, 0
  %v259 = vsel %vm44, %v248, 0
  %261 = vmatprep.subr.bf16.mxu0 0
  %262 = vmatpush1.bf16.msra.mxu0 %v59
  %263 = vmatprep.subr.bf16.mxu0 0
  %264 = vmatpush1.bf16.msra.mxu0 0
  %265 = vmatprep.subr.bf16.mxu0 0
  %266 = vmatpush1.bf16.msra.mxu0 0
  %267 = vmatprep.subr.bf16.mxu0 0
  %268 = vmatpush1.bf16.msra.mxu0 0
  %269 = vmatprep.subr.bf16.mxu0 0
  %270 = vmatpush1.bf16.msra.mxu0 0
  %271 = vmatprep.subr.bf16.mxu0 0
  %272 = vmatpush1.bf16.msra.mxu0 0
  %273 = vmatprep.subr.bf16.mxu0 0
  %274 = vmatpush1.bf16.msra.mxu0 0
  %275 = vmatprep.subr.bf16.mxu0 0
  %276 = vmatpush1.bf16.msra.mxu0 0
  %277 = vmatprep.subr.bf16.mxu0 0
  %278 = vmatpush1.bf16.msra.mxu0 0
  %279 = vmatprep.subr.bf16.mxu0 0
  %280 = vmatpush1.bf16.msra.mxu0 0
  %281 = vmatprep.subr.bf16.mxu0 0
  %282 = vmatpush1.bf16.msra.mxu0 0
  %283 = vmatprep.subr.bf16.mxu0 0
  %284 = vmatpush1.bf16.msra.mxu0 0
  %285 = vmatprep.subr.bf16.mxu0 0
  %286 = vmatpush1.bf16.msra.mxu0 0
  %287 = vmatprep.subr.bf16.mxu0 0
  %288 = vmatpush1.bf16.msra.mxu0 0
  %289 = vmatprep.subr.bf16.mxu0 0
  %290 = vmatpush1.bf16.msra.mxu0 0
  %291 = vmatprep.subr.bf16.mxu0 0
  %292 = vmatpush1.bf16.msra.mxu0 0
  %293 = vmatprep.mubr.bf16.mxu0 0
  %294 = vmatmul.mubr.bf16.gmra.mrb[0].mxu0 %v250
  %v295 = vpop.f32.mrb[0].mxu0
  %v296 = vadd.f32 %v42, %v295
  %v297 = vpop.f32.mrb[0].mxu0
  %v298 = vpop.f32.mrb[0].mxu0
  %v299 = vadd.f32 %v42, %v298
  %v300 = vpop.f32.mrb[0].mxu0
  %301 = vmatprep.mubr.bf16.mxu0 0
  %302 = vmatmul.mubr.bf16.gmra.mrb[0].mxu0 %v253
  %v303 = vpop.f32.mrb[0].mxu0
  %v304 = vadd.f32 %v42, %v303
  %v305 = vpop.f32.mrb[0].mxu0
  %v306 = vpop.f32.mrb[0].mxu0
  %v307 = vadd.f32 %v42, %v306
  %v308 = vpop.f32.mrb[0].mxu0
  %309 = vmatprep.mubr.bf16.mxu0 0
  %310 = vmatmul.mubr.bf16.gmra.mrb[0].mxu0 %v256
  %v311 = vpop.f32.mrb[0].mxu0
  %v312 = vadd.f32 %v42, %v311
  %v313 = vpop.f32.mrb[0].mxu0
  %v314 = vpop.f32.mrb[0].mxu0
  %v315 = vadd.f32 %v42, %v314
  %v316 = vpop.f32.mrb[0].mxu0
  %317 = vmatprep.mubr.bf16.mxu0 0
  %318 = vmatmul.mubr.bf16.gmra.mrb[0].mxu0 %v259
  %v319 = vpop.f32.mrb[0].mxu0
  %v320 = vadd.f32 %v42, %v319
  %v321 = vpop.f32.mrb[0].mxu0
  %v322 = vpop.f32.mrb[0].mxu0
  %v323 = vadd.f32 %v42, %v322
  %v324 = vpop.f32.mrb[0].mxu0
  %325 = vdwg.mxu0
  %v326 = vmax.f32 %v296, 0.0
  %v327 = vmax.f32 %v299, 0.0
  %v328 = vmax.f32 %v304, 0.0
  %v329 = vmax.f32 %v307, 0.0
  %v330 = vmax.f32 %v312, 0.0
  %v331 = vmax.f32 %v315, 0.0
  %v332 = vmax.f32 %v320, 0.0
  %v333 = vmax.f32 %v323, 0.0
  %v334 = vpack.c.bf16 %v327, %v326
  %v335 = vpack.c.bf16 %v329, %v328
  %v336 = vpack.c.bf16 %v331, %v330
  %v337 = vpack.c.bf16 %v333, %v332
  %v339 = vsel %vm150, %v334, 0
  %v342 = vsel %vm150, %v335, 0
  %v345 = vsel %vm150, %v336, 0
  %v348 = vsel %vm150, %v337, 0
  %350 = vmatprep.subr.bf16.mxu0 0
  %351 = vmatpush1.bf16.msra.mxu0 %v148
  %352 = vmatprep.subr.bf16.mxu0 0
  %353 = vmatpush1.bf16.msra.mxu0 0
  %354 = vmatprep.subr.bf16.mxu0 0
  %355 = vmatpush1.bf16.msra.mxu0 0
  %356 = vmatprep.subr.bf16.mxu0 0
  %357 = vmatpush1.bf16.msra.mxu0 0
  %358 = vmatprep.subr.bf16.mxu0 0
  %359 = vmatpush1.bf16.msra.mxu0 0
  %360 = vmatprep.subr.bf16.mxu0 0
  %361 = vmatpush1.bf16.msra.mxu0 0
  %362 = vmatprep.subr.bf16.mxu0 0
  %363 = vmatpush1.bf16.msra.mxu0 0
  %364 = vmatprep.subr.bf16.mxu0 0
  %365 = vmatpush1.bf16.msra.mxu0 0
  %366 = vmatprep.subr.bf16.mxu0 0
  %367 = vmatpush1.bf16.msra.mxu0 0
  %368 = vmatprep.subr.bf16.mxu0 0
  %369 = vmatpush1.bf16.msra.mxu0 0
  %370 = vmatprep.subr.bf16.mxu0 0
  %371 = vmatpush1.bf16.msra.mxu0 0
  %372 = vmatprep.subr.bf16.mxu0 0
  %373 = vmatpush1.bf16.msra.mxu0 0
  %374 = vmatprep.subr.bf16.mxu0 0
  %375 = vmatpush1.bf16.msra.mxu0 0
  %376 = vmatprep.subr.bf16.mxu0 0
  %377 = vmatpush1.bf16.msra.mxu0 0
  %378 = vmatprep.subr.bf16.mxu0 0
  %379 = vmatpush1.bf16.msra.mxu0 0
  %380 = vmatprep.subr.bf16.mxu0 0
  %381 = vmatpush1.bf16.msra.mxu0 0
  %382 = vmatprep.mubr.bf16.mxu0 0
  %383 = vmatmul.mubr.bf16.gmra.mrb[0].mxu0 %v339
  %v384 = vpop.f32.mrb[0].mxu0
  %v385 = vadd.f32 %v142, %v384
  %v386 = vpop.f32.mrb[0].mxu0
  %v387 = vpop.f32.mrb[0].mxu0
  %v388 = vadd.f32 %v142, %v387
  %v389 = vpop.f32.mrb[0].mxu0
  %390 = vmatprep.mubr.bf16.mxu0 0
  %391 = vmatmul.mubr.bf16.gmra.mrb[0].mxu0 %v342
  %v392 = vpop.f32.mrb[0].mxu0
  %v393 = vadd.f32 %v142, %v392
  %v394 = vpop.f32.mrb[0].mxu0
  %v395 = vpop.f32.mrb[0].mxu0
  %v396 = vadd.f32 %v142, %v395
  %v397 = vpop.f32.mrb[0].mxu0
  %398 = vmatprep.mubr.bf16.mxu0 0
  %399 = vmatmul.mubr.bf16.gmra.mrb[0].mxu0 %v345
  %v400 = vpop.f32.mrb[0].mxu0
  %v401 = vadd.f32 %v142, %v400
  %v402 = vpop.f32.mrb[0].mxu0
  %v403 = vpop.f32.mrb[0].mxu0
  %v404 = vadd.f32 %v142, %v403
  %v405 = vpop.f32.mrb[0].mxu0
  %406 = vmatprep.mubr.bf16.mxu0 0
  %407 = vmatmul.mubr.bf16.gmra.mrb[0].mxu0 %v348
  %v408 = vpop.f32.mrb[0].mxu0
  %v409 = vadd.f32 %v142, %v408
  %v410 = vpop.f32.mrb[0].mxu0
  %v411 = vpop.f32.mrb[0].mxu0
  %v412 = vadd.f32 %v142, %v411
  %v413 = vpop.f32.mrb[0].mxu0
  %414 = vdwg.mxu0
  %v415 = vmax.f32 %v385, 0.0
  %v416 = vmax.f32 %v388, 0.0
  %v417 = vmax.f32 %v393, 0.0
  %v418 = vmax.f32 %v396, 0.0
  %v419 = vmax.f32 %v401, 0.0
  %v420 = vmax.f32 %v404, 0.0
  %v421 = vmax.f32 %v409, 0.0
  %v422 = vmax.f32 %v412, 0.0
  %v423 = vmax.f32 %v228, %v415
  %v424 = vmax.f32 %v229, %v416
  %v425 = vmax.f32 %v230, %v417
  %v426 = vmax.f32 %v231, %v418
  %v427 = vmax.f32 %v232, %v419
  %v428 = vmax.f32 %v233, %v420
  %v429 = vmax.f32 %v234, %v421
  %v430 = vmax.f32 %v235, %v422
  %s431 = scalar_lea.vmem %s0, 128
  %v432 = vld [vmem:[%s431] sm:$0xff]
  %v433 = vld [vmem:[%s431 + $0x8] sm:$0xff]
  %v434 = vld [vmem:[%s431 + $0x10] sm:$0xff]
  %v435 = vld [vmem:[%s431 + $0x18] sm:$0xff]
  %v436 = vld [vmem:[%s431 + $0x20] sm:$0xff]
  %v437 = vld [vmem:[%s431 + $0x28] sm:$0xff]
  %v438 = vld [vmem:[%s431 + $0x30] sm:$0xff]
  %v439 = vld [vmem:[%s431 + $0x38] sm:$0xff]
  %v440 = vpack.c.bf16 %v433, %v432
  %v441 = vpack.c.bf16 %v435, %v434
  %v442 = vpack.c.bf16 %v437, %v436
  %v443 = vpack.c.bf16 %v439, %v438
  %v445 = vsel %vm44, %v440, 0
  %v448 = vsel %vm44, %v441, 0
  %v451 = vsel %vm44, %v442, 0
  %v454 = vsel %vm44, %v443, 0
  %456 = vmatprep.subr.bf16.mxu0 0
  %457 = vmatpush1.bf16.msra.mxu0 %v59
  %458 = vmatprep.subr.bf16.mxu0 0
  %459 = vmatpush1.bf16.msra.mxu0 0
  %460 = vmatprep.subr.bf16.mxu0 0
  %461 = vmatpush1.bf16.msra.mxu0 0
  %462 = vmatprep.subr.bf16.mxu0 0
  %463 = vmatpush1.bf16.msra.mxu0 0
  %464 = vmatprep.subr.bf16.mxu0 0
  %465 = vmatpush1.bf16.msra.mxu0 0
  %466 = vmatprep.subr.bf16.mxu0 0
  %467 = vmatpush1.bf16.msra.mxu0 0
  %468 = vmatprep.subr.bf16.mxu0 0
  %469 = vmatpush1.bf16.msra.mxu0 0
  %470 = vmatprep.subr.bf16.mxu0 0
  %471 = vmatpush1.bf16.msra.mxu0 0
  %472 = vmatprep.subr.bf16.mxu0 0
  %473 = vmatpush1.bf16.msra.mxu0 0
  %474 = vmatprep.subr.bf16.mxu0 0
  %475 = vmatpush1.bf16.msra.mxu0 0
  %476 = vmatprep.subr.bf16.mxu0 0
  %477 = vmatpush1.bf16.msra.mxu0 0
  %478 = vmatprep.subr.bf16.mxu0 0
  %479 = vmatpush1.bf16.msra.mxu0 0
  %480 = vmatprep.subr.bf16.mxu0 0
  %481 = vmatpush1.bf16.msra.mxu0 0
  %482 = vmatprep.subr.bf16.mxu0 0
  %483 = vmatpush1.bf16.msra.mxu0 0
  %484 = vmatprep.subr.bf16.mxu0 0
  %485 = vmatpush1.bf16.msra.mxu0 0
  %486 = vmatprep.subr.bf16.mxu0 0
  %487 = vmatpush1.bf16.msra.mxu0 0
  %488 = vmatprep.mubr.bf16.mxu0 0
  %489 = vmatmul.mubr.bf16.gmra.mrb[0].mxu0 %v445
  %v490 = vpop.f32.mrb[0].mxu0
  %v491 = vadd.f32 %v42, %v490
  %v492 = vpop.f32.mrb[0].mxu0
  %v493 = vpop.f32.mrb[0].mxu0
  %v494 = vadd.f32 %v42, %v493
  %v495 = vpop.f32.mrb[0].mxu0
  %496 = vmatprep.mubr.bf16.mxu0 0
  %497 = vmatmul.mubr.bf16.gmra.mrb[0].mxu0 %v448
  %v498 = vpop.f32.mrb[0].mxu0
  %v499 = vadd.f32 %v42, %v498
  %v500 = vpop.f32.mrb[0].mxu0
  %v501 = vpop.f32.mrb[0].mxu0
  %v502 = vadd.f32 %v42, %v501
  %v503 = vpop.f32.mrb[0].mxu0
  %504 = vmatprep.mubr.bf16.mxu0 0
  %505 = vmatmul.mubr.bf16.gmra.mrb[0].mxu0 %v451
  %v506 = vpop.f32.mrb[0].mxu0
  %v507 = vadd.f32 %v42, %v506
  %v508 = vpop.f32.mrb[0].mxu0
  %v509 = vpop.f32.mrb[0].mxu0
  %v510 = vadd.f32 %v42, %v509
  %v511 = vpop.f32.mrb[0].mxu0
  %512 = vmatprep.mubr.bf16.mxu0 0
  %513 = vmatmul.mubr.bf16.gmra.mrb[0].mxu0 %v454
  %v514 = vpop.f32.mrb[0].mxu0
  %v515 = vadd.f32 %v42, %v514
  %v516 = vpop.f32.mrb[0].mxu0
  %v517 = vpop.f32.mrb[0].mxu0
  %v518 = vadd.f32 %v42, %v517
  %v519 = vpop.f32.mrb[0].mxu0
  %520 = vdwg.mxu0
  %v521 = vmax.f32 %v491, 0.0
  %v522 = vmax.f32 %v494, 0.0
  %v523 = vmax.f32 %v499, 0.0
  %v524 = vmax.f32 %v502, 0.0
  %v525 = vmax.f32 %v507, 0.0
  %v526 = vmax.f32 %v510, 0.0
  %v527 = vmax.f32 %v515, 0.0
  %v528 = vmax.f32 %v518, 0.0
  %v529 = vpack.c.bf16 %v522, %v521
  %v530 = vpack.c.bf16 %v524, %v523
  %v531 = vpack.c.bf16 %v526, %v525
  %v532 = vpack.c.bf16 %v528, %v527
  %v534 = vsel %vm150, %v529, 0
  %v537 = vsel %vm150, %v530, 0
  %v540 = vsel %vm150, %v531, 0
  %v543 = vsel %vm150, %v532, 0
  %545 = vmatprep.subr.bf16.mxu0 0
  %546 = vmatpush1.bf16.msra.mxu0 %v148
  %547 = vmatprep.subr.bf16.mxu0 0
  %548 = vmatpush1.bf16.msra.mxu0 0
  %549 = vmatprep.subr.bf16.mxu0 0
  %550 = vmatpush1.bf16.msra.mxu0 0
  %551 = vmatprep.subr.bf16.mxu0 0
  %552 = vmatpush1.bf16.msra.mxu0 0
  %553 = vmatprep.subr.bf16.mxu0 0
  %554 = vmatpush1.bf16.msra.mxu0 0
  %555 = vmatprep.subr.bf16.mxu0 0
  %556 = vmatpush1.bf16.msra.mxu0 0
  %557 = vmatprep.subr.bf16.mxu0 0
  %558 = vmatpush1.bf16.msra.mxu0 0
  %559 = vmatprep.subr.bf16.mxu0 0
  %560 = vmatpush1.bf16.msra.mxu0 0
  %561 = vmatprep.subr.bf16.mxu0 0
  %562 = vmatpush1.bf16.msra.mxu0 0
  %563 = vmatprep.subr.bf16.mxu0 0
  %564 = vmatpush1.bf16.msra.mxu0 0
  %565 = vmatprep.subr.bf16.mxu0 0
  %566 = vmatpush1.bf16.msra.mxu0 0
  %567 = vmatprep.subr.bf16.mxu0 0
  %568 = vmatpush1.bf16.msra.mxu0 0
  %569 = vmatprep.subr.bf16.mxu0 0
  %570 = vmatpush1.bf16.msra.mxu0 0
  %571 = vmatprep.subr.bf16.mxu0 0
  %572 = vmatpush1.bf16.msra.mxu0 0
  %573 = vmatprep.subr.bf16.mxu0 0
  %574 = vmatpush1.bf16.msra.mxu0 0
  %575 = vmatprep.subr.bf16.mxu0 0
  %576 = vmatpush1.bf16.msra.mxu0 0
  %577 = vmatprep.mubr.bf16.mxu0 0
  %578 = vmatmul.mubr.bf16.gmra.mrb[0].mxu0 %v534
  %v579 = vpop.f32.mrb[0].mxu0
  %v580 = vadd.f32 %v142, %v579
  %v581 = vpop.f32.mrb[0].mxu0
  %v582 = vpop.f32.mrb[0].mxu0
  %v583 = vadd.f32 %v142, %v582
  %v584 = vpop.f32.mrb[0].mxu0
  %585 = vmatprep.mubr.bf16.mxu0 0
  %586 = vmatmul.mubr.bf16.gmra.mrb[0].mxu0 %v537
  %v587 = vpop.f32.mrb[0].mxu0
  %v588 = vadd.f32 %v142, %v587
  %v589 = vpop.f32.mrb[0].mxu0
  %v590 = vpop.f32.mrb[0].mxu0
  %v591 = vadd.f32 %v142, %v590
  %v592 = vpop.f32.mrb[0].mxu0
  %593 = vmatprep.mubr.bf16.mxu0 0
  %594 = vmatmul.mubr.bf16.gmra.mrb[0].mxu0 %v540
  %v595 = vpop.f32.mrb[0].mxu0
  %v596 = vadd.f32 %v142, %v595
  %v597 = vpop.f32.mrb[0].mxu0
  %v598 = vpop.f32.mrb[0].mxu0
  %v599 = vadd.f32 %v142, %v598
  %v600 = vpop.f32.mrb[0].mxu0
  %601 = vmatprep.mubr.bf16.mxu0 0
  %602 = vmatmul.mubr.bf16.gmra.mrb[0].mxu0 %v543
  %v603 = vpop.f32.mrb[0].mxu0
  %v604 = vadd.f32 %v142, %v603
  %v605 = vpop.f32.mrb[0].mxu0
  %v606 = vpop.f32.mrb[0].mxu0
  %v607 = vadd.f32 %v142, %v606
  %v608 = vpop.f32.mrb[0].mxu0
  %609 = vdwg.mxu0
  %v610 = vmax.f32 %v580, 0.0
  %v611 = vmax.f32 %v583, 0.0
  %v612 = vmax.f32 %v588, 0.0
  %v613 = vmax.f32 %v591, 0.0
  %v614 = vmax.f32 %v596, 0.0
  %v615 = vmax.f32 %v599, 0.0
  %v616 = vmax.f32 %v604, 0.0
  %v617 = vmax.f32 %v607, 0.0
  %v618 = vmax.f32 %v423, %v610
  %v619 = vmax.f32 %v424, %v611
  %v620 = vmax.f32 %v425, %v612
  %v621 = vmax.f32 %v426, %v613
  %v622 = vmax.f32 %v427, %v614
  %v623 = vmax.f32 %v428, %v615
  %v624 = vmax.f32 %v429, %v616
  %v625 = vmax.f32 %v430, %v617
  %s626 = scalar_lea.vmem %s0, 192
  %v627 = vld [vmem:[%s626] sm:$0xff]
  %v628 = vld [vmem:[%s626 + $0x8] sm:$0xff]
  %v629 = vld [vmem:[%s626 + $0x10] sm:$0xff]
  %v630 = vld [vmem:[%s626 + $0x18] sm:$0xff]
  %v631 = vld [vmem:[%s626 + $0x20] sm:$0xff]
  %v632 = vld [vmem:[%s626 + $0x28] sm:$0xff]
  %v633 = vld [vmem:[%s626 + $0x30] sm:$0xff]
  %v634 = vld [vmem:[%s626 + $0x38] sm:$0xff]
  %v635 = vpack.c.bf16 %v628, %v627
  %v636 = vpack.c.bf16 %v630, %v629
  %v637 = vpack.c.bf16 %v632, %v631
  %v638 = vpack.c.bf16 %v634, %v633
  %v640 = vsel %vm44, %v635, 0
  %v643 = vsel %vm44, %v636, 0
  %v646 = vsel %vm44, %v637, 0
  %v649 = vsel %vm44, %v638, 0
  %651 = vmatprep.subr.bf16.mxu0 0
  %652 = vmatpush1.bf16.msra.mxu0 %v59
  %653 = vmatprep.subr.bf16.mxu0 0
  %654 = vmatpush1.bf16.msra.mxu0 0
  %655 = vmatprep.subr.bf16.mxu0 0
  %656 = vmatpush1.bf16.msra.mxu0 0
  %657 = vmatprep.subr.bf16.mxu0 0
  %658 = vmatpush1.bf16.msra.mxu0 0
  %659 = vmatprep.subr.bf16.mxu0 0
  %660 = vmatpush1.bf16.msra.mxu0 0
  %661 = vmatprep.subr.bf16.mxu0 0
  %662 = vmatpush1.bf16.msra.mxu0 0
  %663 = vmatprep.subr.bf16.mxu0 0
  %664 = vmatpush1.bf16.msra.mxu0 0
  %665 = vmatprep.subr.bf16.mxu0 0
  %666 = vmatpush1.bf16.msra.mxu0 0
  %667 = vmatprep.subr.bf16.mxu0 0
  %668 = vmatpush1.bf16.msra.mxu0 0
  %669 = vmatprep.subr.bf16.mxu0 0
  %670 = vmatpush1.bf16.msra.mxu0 0
  %671 = vmatprep.subr.bf16.mxu0 0
  %672 = vmatpush1.bf16.msra.mxu0 0
  %673 = vmatprep.subr.bf16.mxu0 0
  %674 = vmatpush1.bf16.msra.mxu0 0
  %675 = vmatprep.subr.bf16.mxu0 0
  %676 = vmatpush1.bf16.msra.mxu0 0
  %677 = vmatprep.subr.bf16.mxu0 0
  %678 = vmatpush1.bf16.msra.mxu0 0
  %679 = vmatprep.subr.bf16.mxu0 0
  %680 = vmatpush1.bf16.msra.mxu0 0
  %681 = vmatprep.subr.bf16.mxu0 0
  %682 = vmatpush1.bf16.msra.mxu0 0
  %683 = vmatprep.mubr.bf16.mxu0 0
  %684 = vmatmul.mubr.bf16.gmra.mrb[0].mxu0 %v640
  %v685 = vpop.f32.mrb[0].mxu0
  %v686 = vadd.f32 %v42, %v685
  %v687 = vpop.f32.mrb[0].mxu0
  %v688 = vpop.f32.mrb[0].mxu0
  %v689 = vadd.f32 %v42, %v688
  %v690 = vpop.f32.mrb[0].mxu0
  %691 = vmatprep.mubr.bf16.mxu0 0
  %692 = vmatmul.mubr.bf16.gmra.mrb[0].mxu0 %v643
  %v693 = vpop.f32.mrb[0].mxu0
  %v694 = vadd.f32 %v42, %v693
  %v695 = vpop.f32.mrb[0].mxu0
  %v696 = vpop.f32.mrb[0].mxu0
  %v697 = vadd.f32 %v42, %v696
  %v698 = vpop.f32.mrb[0].mxu0
  %699 = vmatprep.mubr.bf16.mxu0 0
  %700 = vmatmul.mubr.bf16.gmra.mrb[0].mxu0 %v646
  %v701 = vpop.f32.mrb[0].mxu0
  %v702 = vadd.f32 %v42, %v701
  %v703 = vpop.f32.mrb[0].mxu0
  %v704 = vpop.f32.mrb[0].mxu0
  %v705 = vadd.f32 %v42, %v704
  %v706 = vpop.f32.mrb[0].mxu0
  %707 = vmatprep.mubr.bf16.mxu0 0
  %708 = vmatmul.mubr.bf16.gmra.mrb[0].mxu0 %v649
  %v709 = vpop.f32.mrb[0].mxu0
  %v710 = vadd.f32 %v42, %v709
  %v711 = vpop.f32.mrb[0].mxu0
  %v712 = vpop.f32.mrb[0].mxu0
  %v713 = vadd.f32 %v42, %v712
  %v714 = vpop.f32.mrb[0].mxu0
  %715 = vdwg.mxu0
  %v716 = vmax.f32 %v686, 0.0
  %v717 = vmax.f32 %v689, 0.0
  %v718 = vmax.f32 %v694, 0.0
  %v719 = vmax.f32 %v697, 0.0
  %v720 = vmax.f32 %v702, 0.0
  %v721 = vmax.f32 %v705, 0.0
  %v722 = vmax.f32 %v710, 0.0
  %v723 = vmax.f32 %v713, 0.0
  %v724 = vpack.c.bf16 %v717, %v716
  %v725 = vpack.c.bf16 %v719, %v718
  %v726 = vpack.c.bf16 %v721, %v720
  %v727 = vpack.c.bf16 %v723, %v722
  %v729 = vsel %vm150, %v724, 0
  %v732 = vsel %vm150, %v725, 0
  %v735 = vsel %vm150, %v726, 0
  %v738 = vsel %vm150, %v727, 0
  %740 = vmatprep.subr.bf16.mxu0 0
  %741 = vmatpush1.bf16.msra.mxu0 %v148
  %742 = vmatprep.subr.bf16.mxu0 0
  %743 = vmatpush1.bf16.msra.mxu0 0
  %744 = vmatprep.subr.bf16.mxu0 0
  %745 = vmatpush1.bf16.msra.mxu0 0
  %746 = vmatprep.subr.bf16.mxu0 0
  %747 = vmatpush1.bf16.msra.mxu0 0
  %748 = vmatprep.subr.bf16.mxu0 0
  %749 = vmatpush1.bf16.msra.mxu0 0
  %750 = vmatprep.subr.bf16.mxu0 0
  %751 = vmatpush1.bf16.msra.mxu0 0
  %752 = vmatprep.subr.bf16.mxu0 0
  %753 = vmatpush1.bf16.msra.mxu0 0
  %754 = vmatprep.subr.bf16.mxu0 0
  %755 = vmatpush1.bf16.msra.mxu0 0
  %756 = vmatprep.subr.bf16.mxu0 0
  %757 = vmatpush1.bf16.msra.mxu0 0
  %758 = vmatprep.subr.bf16.mxu0 0
  %759 = vmatpush1.bf16.msra.mxu0 0
  %760 = vmatprep.subr.bf16.mxu0 0
  %761 = vmatpush1.bf16.msra.mxu0 0
  %762 = vmatprep.subr.bf16.mxu0 0
  %763 = vmatpush1.bf16.msra.mxu0 0
  %764 = vmatprep.subr.bf16.mxu0 0
  %765 = vmatpush1.bf16.msra.mxu0 0
  %766 = vmatprep.subr.bf16.mxu0 0
  %767 = vmatpush1.bf16.msra.mxu0 0
  %768 = vmatprep.subr.bf16.mxu0 0
  %769 = vmatpush1.bf16.msra.mxu0 0
  %770 = vmatprep.subr.bf16.mxu0 0
  %771 = vmatpush1.bf16.msra.mxu0 0
  %772 = vmatprep.mubr.bf16.mxu0 0
  %773 = vmatmul.mubr.bf16.gmra.mrb[0].mxu0 %v729
  %v774 = vpop.f32.mrb[0].mxu0
  %v775 = vadd.f32 %v142, %v774
  %v776 = vpop.f32.mrb[0].mxu0
  %v777 = vpop.f32.mrb[0].mxu0
  %v778 = vadd.f32 %v142, %v777
  %v779 = vpop.f32.mrb[0].mxu0
  %780 = vmatprep.mubr.bf16.mxu0 0
  %781 = vmatmul.mubr.bf16.gmra.mrb[0].mxu0 %v732
  %v782 = vpop.f32.mrb[0].mxu0
  %v783 = vadd.f32 %v142, %v782
  %v784 = vpop.f32.mrb[0].mxu0
  %v785 = vpop.f32.mrb[0].mxu0
  %v786 = vadd.f32 %v142, %v785
  %v787 = vpop.f32.mrb[0].mxu0
  %788 = vmatprep.mubr.bf16.mxu0 0
  %789 = vmatmul.mubr.bf16.gmra.mrb[0].mxu0 %v735
  %v790 = vpop.f32.mrb[0].mxu0
  %v791 = vadd.f32 %v142, %v790
  %v792 = vpop.f32.mrb[0].mxu0
  %v793 = vpop.f32.mrb[0].mxu0
  %v794 = vadd.f32 %v142, %v793
  %v795 = vpop.f32.mrb[0].mxu0
  %796 = vmatprep.mubr.bf16.mxu0 0
  %797 = vmatmul.mubr.bf16.gmra.mrb[0].mxu0 %v738
  %v798 = vpop.f32.mrb[0].mxu0
  %v799 = vadd.f32 %v142, %v798
  %v800 = vpop.f32.mrb[0].mxu0
  %v801 = vpop.f32.mrb[0].mxu0
  %v802 = vadd.f32 %v142, %v801
  %v803 = vpop.f32.mrb[0].mxu0
  %804 = vdwg.mxu0
  %v805 = vmax.f32 %v775, 0.0
  %v806 = vmax.f32 %v778, 0.0
  %v807 = vmax.f32 %v783, 0.0
  %v808 = vmax.f32 %v786, 0.0
  %v809 = vmax.f32 %v791, 0.0
  %v810 = vmax.f32 %v794, 0.0
  %v811 = vmax.f32 %v799, 0.0
  %v812 = vmax.f32 %v802, 0.0
  %v813 = vmax.f32 %v618, %v805
  %v814 = vmax.f32 %v619, %v806
  %v815 = vmax.f32 %v620, %v807
  %v816 = vmax.f32 %v621, %v808
  %v817 = vmax.f32 %v622, %v809
  %v818 = vmax.f32 %v623, %v810
  %v819 = vmax.f32 %v624, %v811
  %v820 = vmax.f32 %v625, %v812
  %s821 = scalar_lea.vmem %s0, 256
  %v822 = vld [vmem:[%s821] sm:$0xff]
  %v823 = vld [vmem:[%s821 + $0x8] sm:$0xff]
  %v824 = vld [vmem:[%s821 + $0x10] sm:$0xff]
  %v825 = vld [vmem:[%s821 + $0x18] sm:$0xff]
  %v826 = vld [vmem:[%s821 + $0x20] sm:$0xff]
  %v827 = vld [vmem:[%s821 + $0x28] sm:$0xff]
  %v828 = vld [vmem:[%s821 + $0x30] sm:$0xff]
  %v829 = vld [vmem:[%s821 + $0x38] sm:$0xff]
  %v830 = vpack.c.bf16 %v823, %v822
  %v831 = vpack.c.bf16 %v825, %v824
  %v832 = vpack.c.bf16 %v827, %v826
  %v833 = vpack.c.bf16 %v829, %v828
  %v835 = vsel %vm44, %v830, 0
  %v838 = vsel %vm44, %v831, 0
  %v841 = vsel %vm44, %v832, 0
  %v844 = vsel %vm44, %v833, 0
  %846 = vmatprep.subr.bf16.mxu0 0
  %847 = vmatpush1.bf16.msra.mxu0 %v59
  %848 = vmatprep.subr.bf16.mxu0 0
  %849 = vmatpush1.bf16.msra.mxu0 0
  %850 = vmatprep.subr.bf16.mxu0 0
  %851 = vmatpush1.bf16.msra.mxu0 0
  %852 = vmatprep.subr.bf16.mxu0 0
  %853 = vmatpush1.bf16.msra.mxu0 0
  %854 = vmatprep.subr.bf16.mxu0 0
  %855 = vmatpush1.bf16.msra.mxu0 0
  %856 = vmatprep.subr.bf16.mxu0 0
  %857 = vmatpush1.bf16.msra.mxu0 0
  %858 = vmatprep.subr.bf16.mxu0 0
  %859 = vmatpush1.bf16.msra.mxu0 0
  %860 = vmatprep.subr.bf16.mxu0 0
  %861 = vmatpush1.bf16.msra.mxu0 0
  %862 = vmatprep.subr.bf16.mxu0 0
  %863 = vmatpush1.bf16.msra.mxu0 0
  %864 = vmatprep.subr.bf16.mxu0 0
  %865 = vmatpush1.bf16.msra.mxu0 0
  %866 = vmatprep.subr.bf16.mxu0 0
  %867 = vmatpush1.bf16.msra.mxu0 0
  %868 = vmatprep.subr.bf16.mxu0 0
  %869 = vmatpush1.bf16.msra.mxu0 0
  %870 = vmatprep.subr.bf16.mxu0 0
  %871 = vmatpush1.bf16.msra.mxu0 0
  %872 = vmatprep.subr.bf16.mxu0 0
  %873 = vmatpush1.bf16.msra.mxu0 0
  %874 = vmatprep.subr.bf16.mxu0 0
  %875 = vmatpush1.bf16.msra.mxu0 0
  %876 = vmatprep.subr.bf16.mxu0 0
  %877 = vmatpush1.bf16.msra.mxu0 0
  %878 = vmatprep.mubr.bf16.mxu0 0
  %879 = vmatmul.mubr.bf16.gmra.mrb[0].mxu0 %v835
  %v880 = vpop.f32.mrb[0].mxu0
  %v881 = vadd.f32 %v42, %v880
  %v882 = vpop.f32.mrb[0].mxu0
  %v883 = vpop.f32.mrb[0].mxu0
  %v884 = vadd.f32 %v42, %v883
  %v885 = vpop.f32.mrb[0].mxu0
  %886 = vmatprep.mubr.bf16.mxu0 0
  %887 = vmatmul.mubr.bf16.gmra.mrb[0].mxu0 %v838
  %v888 = vpop.f32.mrb[0].mxu0
  %v889 = vadd.f32 %v42, %v888
  %v890 = vpop.f32.mrb[0].mxu0
  %v891 = vpop.f32.mrb[0].mxu0
  %v892 = vadd.f32 %v42, %v891
  %v893 = vpop.f32.mrb[0].mxu0
  %894 = vmatprep.mubr.bf16.mxu0 0
  %895 = vmatmul.mubr.bf16.gmra.mrb[0].mxu0 %v841
  %v896 = vpop.f32.mrb[0].mxu0
  %v897 = vadd.f32 %v42, %v896
  %v898 = vpop.f32.mrb[0].mxu0
  %v899 = vpop.f32.mrb[0].mxu0
  %v900 = vadd.f32 %v42, %v899
  %v901 = vpop.f32.mrb[0].mxu0
  %902 = vmatprep.mubr.bf16.mxu0 0
  %903 = vmatmul.mubr.bf16.gmra.mrb[0].mxu0 %v844
  %v904 = vpop.f32.mrb[0].mxu0
  %v905 = vadd.f32 %v42, %v904
  %v906 = vpop.f32.mrb[0].mxu0
  %v907 = vpop.f32.mrb[0].mxu0
  %v908 = vadd.f32 %v42, %v907
  %v909 = vpop.f32.mrb[0].mxu0
  %910 = vdwg.mxu0
  %v911 = vmax.f32 %v881, 0.0
  %v912 = vmax.f32 %v884, 0.0
  %v913 = vmax.f32 %v889, 0.0
  %v914 = vmax.f32 %v892, 0.0
  %v915 = vmax.f32 %v897, 0.0
  %v916 = vmax.f32 %v900, 0.0
  %v917 = vmax.f32 %v905, 0.0
  %v918 = vmax.f32 %v908, 0.0
  %v919 = vpack.c.bf16 %v912, %v911
  %v920 = vpack.c.bf16 %v914, %v913
  %v921 = vpack.c.bf16 %v916, %v915
  %v922 = vpack.c.bf16 %v918, %v917
  %v924 = vsel %vm150, %v919, 0
  %v927 = vsel %vm150, %v920, 0
  %v930 = vsel %vm150, %v921, 0
  %v933 = vsel %vm150, %v922, 0
  %935 = vmatprep.subr.bf16.mxu0 0
  %936 = vmatpush1.bf16.msra.mxu0 %v148
  %937 = vmatprep.subr.bf16.mxu0 0
  %938 = vmatpush1.bf16.msra.mxu0 0
  %939 = vmatprep.subr.bf16.mxu0 0
  %940 = vmatpush1.bf16.msra.mxu0 0
  %941 = vmatprep.subr.bf16.mxu0 0
  %942 = vmatpush1.bf16.msra.mxu0 0
  %943 = vmatprep.subr.bf16.mxu0 0
  %944 = vmatpush1.bf16.msra.mxu0 0
  %945 = vmatprep.subr.bf16.mxu0 0
  %946 = vmatpush1.bf16.msra.mxu0 0
  %947 = vmatprep.subr.bf16.mxu0 0
  %948 = vmatpush1.bf16.msra.mxu0 0
  %949 = vmatprep.subr.bf16.mxu0 0
  %950 = vmatpush1.bf16.msra.mxu0 0
  %951 = vmatprep.subr.bf16.mxu0 0
  %952 = vmatpush1.bf16.msra.mxu0 0
  %953 = vmatprep.subr.bf16.mxu0 0
  %954 = vmatpush1.bf16.msra.mxu0 0
  %955 = vmatprep.subr.bf16.mxu0 0
  %956 = vmatpush1.bf16.msra.mxu0 0
  %957 = vmatprep.subr.bf16.mxu0 0
  %958 = vmatpush1.bf16.msra.mxu0 0
  %959 = vmatprep.subr.bf16.mxu0 0
  %960 = vmatpush1.bf16.msra.mxu0 0
  %961 = vmatprep.subr.bf16.mxu0 0
  %962 = vmatpush1.bf16.msra.mxu0 0
  %963 = vmatprep.subr.bf16.mxu0 0
  %964 = vmatpush1.bf16.msra.mxu0 0
  %965 = vmatprep.subr.bf16.mxu0 0
  %966 = vmatpush1.bf16.msra.mxu0 0
  %967 = vmatprep.mubr.bf16.mxu0 0
  %968 = vmatmul.mubr.bf16.gmra.mrb[0].mxu0 %v924
  %v969 = vpop.f32.mrb[0].mxu0
  %v970 = vadd.f32 %v142, %v969
  %v971 = vpop.f32.mrb[0].mxu0
  %v972 = vpop.f32.mrb[0].mxu0
  %v973 = vadd.f32 %v142, %v972
  %v974 = vpop.f32.mrb[0].mxu0
  %975 = vmatprep.mubr.bf16.mxu0 0
  %976 = vmatmul.mubr.bf16.gmra.mrb[0].mxu0 %v927
  %v977 = vpop.f32.mrb[0].mxu0
  %v978 = vadd.f32 %v142, %v977
  %v979 = vpop.f32.mrb[0].mxu0
  %v980 = vpop.f32.mrb[0].mxu0
  %v981 = vadd.f32 %v142, %v980
  %v982 = vpop.f32.mrb[0].mxu0
  %983 = vmatprep.mubr.bf16.mxu0 0
  %984 = vmatmul.mubr.bf16.gmra.mrb[0].mxu0 %v930
  %v985 = vpop.f32.mrb[0].mxu0
  %v986 = vadd.f32 %v142, %v985
  %v987 = vpop.f32.mrb[0].mxu0
  %v988 = vpop.f32.mrb[0].mxu0
  %v989 = vadd.f32 %v142, %v988
  %v990 = vpop.f32.mrb[0].mxu0
  %991 = vmatprep.mubr.bf16.mxu0 0
  %992 = vmatmul.mubr.bf16.gmra.mrb[0].mxu0 %v933
  %v993 = vpop.f32.mrb[0].mxu0
  %v994 = vadd.f32 %v142, %v993
  %v995 = vpop.f32.mrb[0].mxu0
  %v996 = vpop.f32.mrb[0].mxu0
  %v997 = vadd.f32 %v142, %v996
  %v998 = vpop.f32.mrb[0].mxu0
  %999 = vdwg.mxu0
  %v1000 = vmax.f32 %v970, 0.0
  %v1001 = vmax.f32 %v973, 0.0
  %v1002 = vmax.f32 %v978, 0.0
  %v1003 = vmax.f32 %v981, 0.0
  %v1004 = vmax.f32 %v986, 0.0
  %v1005 = vmax.f32 %v989, 0.0
  %v1006 = vmax.f32 %v994, 0.0
  %v1007 = vmax.f32 %v997, 0.0
  %v1008 = vmax.f32 %v813, %v1000
  %v1009 = vmax.f32 %v814, %v1001
  %v1010 = vmax.f32 %v815, %v1002
  %v1011 = vmax.f32 %v816, %v1003
  %v1012 = vmax.f32 %v817, %v1004
  %v1013 = vmax.f32 %v818, %v1005
  %v1014 = vmax.f32 %v819, %v1006
  %v1015 = vmax.f32 %v820, %v1007
  %s1016 = scalar_lea.vmem %s0, 320
  %v1017 = vld [vmem:[%s1016] sm:$0xff]
  %v1018 = vld [vmem:[%s1016 + $0x8] sm:$0xff]
  %v1019 = vld [vmem:[%s1016 + $0x10] sm:$0xff]
  %v1020 = vld [vmem:[%s1016 + $0x18] sm:$0xff]
  %v1021 = vld [vmem:[%s1016 + $0x20] sm:$0xff]
  %v1022 = vld [vmem:[%s1016 + $0x28] sm:$0xff]
  %v1023 = vld [vmem:[%s1016 + $0x30] sm:$0xff]
  %v1024 = vld [vmem:[%s1016 + $0x38] sm:$0xff]
  %v1025 = vpack.c.bf16 %v1018, %v1017
  %v1026 = vpack.c.bf16 %v1020, %v1019
  %v1027 = vpack.c.bf16 %v1022, %v1021
  %v1028 = vpack.c.bf16 %v1024, %v1023
  %v1030 = vsel %vm44, %v1025, 0
  %v1033 = vsel %vm44, %v1026, 0
  %v1036 = vsel %vm44, %v1027, 0
  %v1039 = vsel %vm44, %v1028, 0
  %1041 = vmatprep.subr.bf16.mxu0 0
  %1042 = vmatpush1.bf16.msra.mxu0 %v59
  %1043 = vmatprep.subr.bf16.mxu0 0
  %1044 = vmatpush1.bf16.msra.mxu0 0
  %1045 = vmatprep.subr.bf16.mxu0 0
  %1046 = vmatpush1.bf16.msra.mxu0 0
  %1047 = vmatprep.subr.bf16.mxu0 0
  %1048 = vmatpush1.bf16.msra.mxu0 0
  %1049 = vmatprep.subr.bf16.mxu0 0
  %1050 = vmatpush1.bf16.msra.mxu0 0
  %1051 = vmatprep.subr.bf16.mxu0 0
  %1052 = vmatpush1.bf16.msra.mxu0 0
  %1053 = vmatprep.subr.bf16.mxu0 0
  %1054 = vmatpush1.bf16.msra.mxu0 0
  %1055 = vmatprep.subr.bf16.mxu0 0
  %1056 = vmatpush1.bf16.msra.mxu0 0
  %1057 = vmatprep.subr.bf16.mxu0 0
  %1058 = vmatpush1.bf16.msra.mxu0 0
  %1059 = vmatprep.subr.bf16.mxu0 0
  %1060 = vmatpush1.bf16.msra.mxu0 0
  %1061 = vmatprep.subr.bf16.mxu0 0
  %1062 = vmatpush1.bf16.msra.mxu0 0
  %1063 = vmatprep.subr.bf16.mxu0 0
  %1064 = vmatpush1.bf16.msra.mxu0 0
  %1065 = vmatprep.subr.bf16.mxu0 0
  %1066 = vmatpush1.bf16.msra.mxu0 0
  %1067 = vmatprep.subr.bf16.mxu0 0
  %1068 = vmatpush1.bf16.msra.mxu0 0
  %1069 = vmatprep.subr.bf16.mxu0 0
  %1070 = vmatpush1.bf16.msra.mxu0 0
  %1071 = vmatprep.subr.bf16.mxu0 0
  %1072 = vmatpush1.bf16.msra.mxu0 0
  %1073 = vmatprep.mubr.bf16.mxu0 0
  %1074 = vmatmul.mubr.bf16.gmra.mrb[0].mxu0 %v1030
  %v1075 = vpop.f32.mrb[0].mxu0
  %v1076 = vadd.f32 %v42, %v1075
  %v1077 = vpop.f32.mrb[0].mxu0
  %v1078 = vpop.f32.mrb[0].mxu0
  %v1079 = vadd.f32 %v42, %v1078
  %v1080 = vpop.f32.mrb[0].mxu0
  %1081 = vmatprep.mubr.bf16.mxu0 0
  %1082 = vmatmul.mubr.bf16.gmra.mrb[0].mxu0 %v1033
  %v1083 = vpop.f32.mrb[0].mxu0
  %v1084 = vadd.f32 %v42, %v1083
  %v1085 = vpop.f32.mrb[0].mxu0
  %v1086 = vpop.f32.mrb[0].mxu0
  %v1087 = vadd.f32 %v42, %v1086
  %v1088 = vpop.f32.mrb[0].mxu0
  %1089 = vmatprep.mubr.bf16.mxu0 0
  %1090 = vmatmul.mubr.bf16.gmra.mrb[0].mxu0 %v1036
  %v1091 = vpop.f32.mrb[0].mxu0
  %v1092 = vadd.f32 %v42, %v1091
  %v1093 = vpop.f32.mrb[0].mxu0
  %v1094 = vpop.f32.mrb[0].mxu0
  %v1095 = vadd.f32 %v42, %v1094
  %v1096 = vpop.f32.mrb[0].mxu0
  %1097 = vmatprep.mubr.bf16.mxu0 0
  %1098 = vmatmul.mubr.bf16.gmra.mrb[0].mxu0 %v1039
  %v1099 = vpop.f32.mrb[0].mxu0
  %v1100 = vadd.f32 %v42, %v1099
  %v1101 = vpop.f32.mrb[0].mxu0
  %v1102 = vpop.f32.mrb[0].mxu0
  %v1103 = vadd.f32 %v42, %v1102
  %v1104 = vpop.f32.mrb[0].mxu0
  %1105 = vdwg.mxu0
  %v1106 = vmax.f32 %v1076, 0.0
  %v1107 = vmax.f32 %v1079, 0.0
  %v1108 = vmax.f32 %v1084, 0.0
  %v1109 = vmax.f32 %v1087, 0.0
  %v1110 = vmax.f32 %v1092, 0.0
  %v1111 = vmax.f32 %v1095, 0.0
  %v1112 = vmax.f32 %v1100, 0.0
  %v1113 = vmax.f32 %v1103, 0.0
  %v1114 = vpack.c.bf16 %v1107, %v1106
  %v1115 = vpack.c.bf16 %v1109, %v1108
  %v1116 = vpack.c.bf16 %v1111, %v1110
  %v1117 = vpack.c.bf16 %v1113, %v1112
  %v1119 = vsel %vm150, %v1114, 0
  %v1122 = vsel %vm150, %v1115, 0
  %v1125 = vsel %vm150, %v1116, 0
  %v1128 = vsel %vm150, %v1117, 0
  %1130 = vmatprep.subr.bf16.mxu0 0
  %1131 = vmatpush1.bf16.msra.mxu0 %v148
  %1132 = vmatprep.subr.bf16.mxu0 0
  %1133 = vmatpush1.bf16.msra.mxu0 0
  %1134 = vmatprep.subr.bf16.mxu0 0
  %1135 = vmatpush1.bf16.msra.mxu0 0
  %1136 = vmatprep.subr.bf16.mxu0 0
  %1137 = vmatpush1.bf16.msra.mxu0 0
  %1138 = vmatprep.subr.bf16.mxu0 0
  %1139 = vmatpush1.bf16.msra.mxu0 0
  %1140 = vmatprep.subr.bf16.mxu0 0
  %1141 = vmatpush1.bf16.msra.mxu0 0
  %1142 = vmatprep.subr.bf16.mxu0 0
  %1143 = vmatpush1.bf16.msra.mxu0 0
  %1144 = vmatprep.subr.bf16.mxu0 0
  %1145 = vmatpush1.bf16.msra.mxu0 0
  %1146 = vmatprep.subr.bf16.mxu0 0
  %1147 = vmatpush1.bf16.msra.mxu0 0
  %1148 = vmatprep.subr.bf16.mxu0 0
  %1149 = vmatpush1.bf16.msra.mxu0 0
  %1150 = vmatprep.subr.bf16.mxu0 0
  %1151 = vmatpush1.bf16.msra.mxu0 0
  %1152 = vmatprep.subr.bf16.mxu0 0
  %1153 = vmatpush1.bf16.msra.mxu0 0
  %1154 = vmatprep.subr.bf16.mxu0 0
  %1155 = vmatpush1.bf16.msra.mxu0 0
  %1156 = vmatprep.subr.bf16.mxu0 0
  %1157 = vmatpush1.bf16.msra.mxu0 0
  %1158 = vmatprep.subr.bf16.mxu0 0
  %1159 = vmatpush1.bf16.msra.mxu0 0
  %1160 = vmatprep.subr.bf16.mxu0 0
  %1161 = vmatpush1.bf16.msra.mxu0 0
  %1162 = vmatprep.mubr.bf16.mxu0 0
  %1163 = vmatmul.mubr.bf16.gmra.mrb[0].mxu0 %v1119
  %v1164 = vpop.f32.mrb[0].mxu0
  %v1165 = vadd.f32 %v142, %v1164
  %v1166 = vpop.f32.mrb[0].mxu0
  %v1167 = vpop.f32.mrb[0].mxu0
  %v1168 = vadd.f32 %v142, %v1167
  %v1169 = vpop.f32.mrb[0].mxu0
  %1170 = vmatprep.mubr.bf16.mxu0 0
  %1171 = vmatmul.mubr.bf16.gmra.mrb[0].mxu0 %v1122
  %v1172 = vpop.f32.mrb[0].mxu0
  %v1173 = vadd.f32 %v142, %v1172
  %v1174 = vpop.f32.mrb[0].mxu0
  %v1175 = vpop.f32.mrb[0].mxu0
  %v1176 = vadd.f32 %v142, %v1175
  %v1177 = vpop.f32.mrb[0].mxu0
  %1178 = vmatprep.mubr.bf16.mxu0 0
  %1179 = vmatmul.mubr.bf16.gmra.mrb[0].mxu0 %v1125
  %v1180 = vpop.f32.mrb[0].mxu0
  %v1181 = vadd.f32 %v142, %v1180
  %v1182 = vpop.f32.mrb[0].mxu0
  %v1183 = vpop.f32.mrb[0].mxu0
  %v1184 = vadd.f32 %v142, %v1183
  %v1185 = vpop.f32.mrb[0].mxu0
  %1186 = vmatprep.mubr.bf16.mxu0 0
  %1187 = vmatmul.mubr.bf16.gmra.mrb[0].mxu0 %v1128
  %v1188 = vpop.f32.mrb[0].mxu0
  %v1189 = vadd.f32 %v142, %v1188
  %v1190 = vpop.f32.mrb[0].mxu0
  %v1191 = vpop.f32.mrb[0].mxu0
  %v1192 = vadd.f32 %v142, %v1191
  %v1193 = vpop.f32.mrb[0].mxu0
  %1194 = vdwg.mxu0
  %v1195 = vmax.f32 %v1165, 0.0
  %v1196 = vmax.f32 %v1168, 0.0
  %v1197 = vmax.f32 %v1173, 0.0
  %v1198 = vmax.f32 %v1176, 0.0
  %v1199 = vmax.f32 %v1181, 0.0
  %v1200 = vmax.f32 %v1184, 0.0
  %v1201 = vmax.f32 %v1189, 0.0
  %v1202 = vmax.f32 %v1192, 0.0
  %v1203 = vmax.f32 %v1008, %v1195
  %v1204 = vmax.f32 %v1009, %v1196
  %v1205 = vmax.f32 %v1010, %v1197
  %v1206 = vmax.f32 %v1011, %v1198
  %v1207 = vmax.f32 %v1012, %v1199
  %v1208 = vmax.f32 %v1013, %v1200
  %v1209 = vmax.f32 %v1014, %v1201
  %v1210 = vmax.f32 %v1015, %v1202
  %s1211 = scalar_lea.vmem %s0, 384
  %v1212 = vld [vmem:[%s1211] sm:$0xff]
  %v1213 = vld [vmem:[%s1211 + $0x8] sm:$0xff]
  %v1214 = vld [vmem:[%s1211 + $0x10] sm:$0xff]
  %v1215 = vld [vmem:[%s1211 + $0x18] sm:$0xff]
  %v1216 = vld [vmem:[%s1211 + $0x20] sm:$0xff]
  %v1217 = vld [vmem:[%s1211 + $0x28] sm:$0xff]
  %v1218 = vld [vmem:[%s1211 + $0x30] sm:$0xff]
  %v1219 = vld [vmem:[%s1211 + $0x38] sm:$0xff]
  %v1220 = vpack.c.bf16 %v1213, %v1212
  %v1221 = vpack.c.bf16 %v1215, %v1214
  %v1222 = vpack.c.bf16 %v1217, %v1216
  %v1223 = vpack.c.bf16 %v1219, %v1218
  %v1225 = vsel %vm44, %v1220, 0
  %v1228 = vsel %vm44, %v1221, 0
  %v1231 = vsel %vm44, %v1222, 0
  %v1234 = vsel %vm44, %v1223, 0
  %1236 = vmatprep.subr.bf16.mxu0 0
  %1237 = vmatpush1.bf16.msra.mxu0 %v59
  %1238 = vmatprep.subr.bf16.mxu0 0
  %1239 = vmatpush1.bf16.msra.mxu0 0
  %1240 = vmatprep.subr.bf16.mxu0 0
  %1241 = vmatpush1.bf16.msra.mxu0 0
  %1242 = vmatprep.subr.bf16.mxu0 0
  %1243 = vmatpush1.bf16.msra.mxu0 0
  %1244 = vmatprep.subr.bf16.mxu0 0
  %1245 = vmatpush1.bf16.msra.mxu0 0
  %1246 = vmatprep.subr.bf16.mxu0 0
  %1247 = vmatpush1.bf16.msra.mxu0 0
  %1248 = vmatprep.subr.bf16.mxu0 0
  %1249 = vmatpush1.bf16.msra.mxu0 0
  %1250 = vmatprep.subr.bf16.mxu0 0
  %1251 = vmatpush1.bf16.msra.mxu0 0
  %1252 = vmatprep.subr.bf16.mxu0 0
  %1253 = vmatpush1.bf16.msra.mxu0 0
  %1254 = vmatprep.subr.bf16.mxu0 0
  %1255 = vmatpush1.bf16.msra.mxu0 0
  %1256 = vmatprep.subr.bf16.mxu0 0
  %1257 = vmatpush1.bf16.msra.mxu0 0
  %1258 = vmatprep.subr.bf16.mxu0 0
  %1259 = vmatpush1.bf16.msra.mxu0 0
  %1260 = vmatprep.subr.bf16.mxu0 0
  %1261 = vmatpush1.bf16.msra.mxu0 0
  %1262 = vmatprep.subr.bf16.mxu0 0
  %1263 = vmatpush1.bf16.msra.mxu0 0
  %1264 = vmatprep.subr.bf16.mxu0 0
  %1265 = vmatpush1.bf16.msra.mxu0 0
  %1266 = vmatprep.subr.bf16.mxu0 0
  %1267 = vmatpush1.bf16.msra.mxu0 0
  %1268 = vmatprep.mubr.bf16.mxu0 0
  %1269 = vmatmul.mubr.bf16.gmra.mrb[0].mxu0 %v1225
  %v1270 = vpop.f32.mrb[0].mxu0
  %v1271 = vadd.f32 %v42, %v1270
  %v1272 = vpop.f32.mrb[0].mxu0
  %v1273 = vpop.f32.mrb[0].mxu0
  %v1274 = vadd.f32 %v42, %v1273
  %v1275 = vpop.f32.mrb[0].mxu0
  %1276 = vmatprep.mubr.bf16.mxu0 0
  %1277 = vmatmul.mubr.bf16.gmra.mrb[0].mxu0 %v1228
  %v1278 = vpop.f32.mrb[0].mxu0
  %v1279 = vadd.f32 %v42, %v1278
  %v1280 = vpop.f32.mrb[0].mxu0
  %v1281 = vpop.f32.mrb[0].mxu0
  %v1282 = vadd.f32 %v42, %v1281
  %v1283 = vpop.f32.mrb[0].mxu0
  %1284 = vmatprep.mubr.bf16.mxu0 0
  %1285 = vmatmul.mubr.bf16.gmra.mrb[0].mxu0 %v1231
  %v1286 = vpop.f32.mrb[0].mxu0
  %v1287 = vadd.f32 %v42, %v1286
  %v1288 = vpop.f32.mrb[0].mxu0
  %v1289 = vpop.f32.mrb[0].mxu0
  %v1290 = vadd.f32 %v42, %v1289
  %v1291 = vpop.f32.mrb[0].mxu0
  %1292 = vmatprep.mubr.bf16.mxu0 0
  %1293 = vmatmul.mubr.bf16.gmra.mrb[0].mxu0 %v1234
  %v1294 = vpop.f32.mrb[0].mxu0
  %v1295 = vadd.f32 %v42, %v1294
  %v1296 = vpop.f32.mrb[0].mxu0
  %v1297 = vpop.f32.mrb[0].mxu0
  %v1298 = vadd.f32 %v42, %v1297
  %v1299 = vpop.f32.mrb[0].mxu0
  %1300 = vdwg.mxu0
  %v1301 = vmax.f32 %v1271, 0.0
  %v1302 = vmax.f32 %v1274, 0.0
  %v1303 = vmax.f32 %v1279, 0.0
  %v1304 = vmax.f32 %v1282, 0.0
  %v1305 = vmax.f32 %v1287, 0.0
  %v1306 = vmax.f32 %v1290, 0.0
  %v1307 = vmax.f32 %v1295, 0.0
  %v1308 = vmax.f32 %v1298, 0.0
  %v1309 = vpack.c.bf16 %v1302, %v1301
  %v1310 = vpack.c.bf16 %v1304, %v1303
  %v1311 = vpack.c.bf16 %v1306, %v1305
  %v1312 = vpack.c.bf16 %v1308, %v1307
  %v1314 = vsel %vm150, %v1309, 0
  %v1317 = vsel %vm150, %v1310, 0
  %v1320 = vsel %vm150, %v1311, 0
  %v1323 = vsel %vm150, %v1312, 0
  %1325 = vmatprep.subr.bf16.mxu0 0
  %1326 = vmatpush1.bf16.msra.mxu0 %v148
  %1327 = vmatprep.subr.bf16.mxu0 0
  %1328 = vmatpush1.bf16.msra.mxu0 0
  %1329 = vmatprep.subr.bf16.mxu0 0
  %1330 = vmatpush1.bf16.msra.mxu0 0
  %1331 = vmatprep.subr.bf16.mxu0 0
  %1332 = vmatpush1.bf16.msra.mxu0 0
  %1333 = vmatprep.subr.bf16.mxu0 0
  %1334 = vmatpush1.bf16.msra.mxu0 0
  %1335 = vmatprep.subr.bf16.mxu0 0
  %1336 = vmatpush1.bf16.msra.mxu0 0
  %1337 = vmatprep.subr.bf16.mxu0 0
  %1338 = vmatpush1.bf16.msra.mxu0 0
  %1339 = vmatprep.subr.bf16.mxu0 0
  %1340 = vmatpush1.bf16.msra.mxu0 0
  %1341 = vmatprep.subr.bf16.mxu0 0
  %1342 = vmatpush1.bf16.msra.mxu0 0
  %1343 = vmatprep.subr.bf16.mxu0 0
  %1344 = vmatpush1.bf16.msra.mxu0 0
  %1345 = vmatprep.subr.bf16.mxu0 0
  %1346 = vmatpush1.bf16.msra.mxu0 0
  %1347 = vmatprep.subr.bf16.mxu0 0
  %1348 = vmatpush1.bf16.msra.mxu0 0
  %1349 = vmatprep.subr.bf16.mxu0 0
  %1350 = vmatpush1.bf16.msra.mxu0 0
  %1351 = vmatprep.subr.bf16.mxu0 0
  %1352 = vmatpush1.bf16.msra.mxu0 0
  %1353 = vmatprep.subr.bf16.mxu0 0
  %1354 = vmatpush1.bf16.msra.mxu0 0
  %1355 = vmatprep.subr.bf16.mxu0 0
  %1356 = vmatpush1.bf16.msra.mxu0 0
  %1357 = vmatprep.mubr.bf16.mxu0 0
  %1358 = vmatmul.mubr.bf16.gmra.mrb[0].mxu0 %v1314
  %v1359 = vpop.f32.mrb[0].mxu0
  %v1360 = vadd.f32 %v142, %v1359
  %v1361 = vpop.f32.mrb[0].mxu0
  %v1362 = vpop.f32.mrb[0].mxu0
  %v1363 = vadd.f32 %v142, %v1362
  %v1364 = vpop.f32.mrb[0].mxu0
  %1365 = vmatprep.mubr.bf16.mxu0 0
  %1366 = vmatmul.mubr.bf16.gmra.mrb[0].mxu0 %v1317
  %v1367 = vpop.f32.mrb[0].mxu0
  %v1368 = vadd.f32 %v142, %v1367
  %v1369 = vpop.f32.mrb[0].mxu0
  %v1370 = vpop.f32.mrb[0].mxu0
  %v1371 = vadd.f32 %v142, %v1370
  %v1372 = vpop.f32.mrb[0].mxu0
  %1373 = vmatprep.mubr.bf16.mxu0 0
  %1374 = vmatmul.mubr.bf16.gmra.mrb[0].mxu0 %v1320
  %v1375 = vpop.f32.mrb[0].mxu0
  %v1376 = vadd.f32 %v142, %v1375
  %v1377 = vpop.f32.mrb[0].mxu0
  %v1378 = vpop.f32.mrb[0].mxu0
  %v1379 = vadd.f32 %v142, %v1378
  %v1380 = vpop.f32.mrb[0].mxu0
  %1381 = vmatprep.mubr.bf16.mxu0 0
  %1382 = vmatmul.mubr.bf16.gmra.mrb[0].mxu0 %v1323
  %v1383 = vpop.f32.mrb[0].mxu0
  %v1384 = vadd.f32 %v142, %v1383
  %v1385 = vpop.f32.mrb[0].mxu0
  %v1386 = vpop.f32.mrb[0].mxu0
  %v1387 = vadd.f32 %v142, %v1386
  %v1388 = vpop.f32.mrb[0].mxu0
  %1389 = vdwg.mxu0
  %v1390 = vmax.f32 %v1360, 0.0
  %v1391 = vmax.f32 %v1363, 0.0
  %v1392 = vmax.f32 %v1368, 0.0
  %v1393 = vmax.f32 %v1371, 0.0
  %v1394 = vmax.f32 %v1376, 0.0
  %v1395 = vmax.f32 %v1379, 0.0
  %v1396 = vmax.f32 %v1384, 0.0
  %v1397 = vmax.f32 %v1387, 0.0
  %v1398 = vmax.f32 %v1203, %v1390
  %v1399 = vmax.f32 %v1204, %v1391
  %v1400 = vmax.f32 %v1205, %v1392
  %v1401 = vmax.f32 %v1206, %v1393
  %v1402 = vmax.f32 %v1207, %v1394
  %v1403 = vmax.f32 %v1208, %v1395
  %v1404 = vmax.f32 %v1209, %v1396
  %v1405 = vmax.f32 %v1210, %v1397
  %s1406 = scalar_lea.vmem %s0, 448
  %v1407 = vld [vmem:[%s1406] sm:$0xff]
  %v1408 = vld [vmem:[%s1406 + $0x8] sm:$0xff]
  %v1409 = vld [vmem:[%s1406 + $0x10] sm:$0xff]
  %v1410 = vld [vmem:[%s1406 + $0x18] sm:$0xff]
  %v1411 = vld [vmem:[%s1406 + $0x20] sm:$0xff]
  %v1412 = vld [vmem:[%s1406 + $0x28] sm:$0xff]
  %v1413 = vld [vmem:[%s1406 + $0x30] sm:$0xff]
  %v1414 = vld [vmem:[%s1406 + $0x38] sm:$0xff]
  %v1415 = vpack.c.bf16 %v1408, %v1407
  %v1416 = vpack.c.bf16 %v1410, %v1409
  %v1417 = vpack.c.bf16 %v1412, %v1411
  %v1418 = vpack.c.bf16 %v1414, %v1413
  %v1420 = vsel %vm44, %v1415, 0
  %v1423 = vsel %vm44, %v1416, 0
  %v1426 = vsel %vm44, %v1417, 0
  %v1429 = vsel %vm44, %v1418, 0
  %1431 = vmatprep.subr.bf16.mxu0 0
  %1432 = vmatpush1.bf16.msra.mxu0 %v59
  %1433 = vmatprep.subr.bf16.mxu0 0
  %1434 = vmatpush1.bf16.msra.mxu0 0
  %1435 = vmatprep.subr.bf16.mxu0 0
  %1436 = vmatpush1.bf16.msra.mxu0 0
  %1437 = vmatprep.subr.bf16.mxu0 0
  %1438 = vmatpush1.bf16.msra.mxu0 0
  %1439 = vmatprep.subr.bf16.mxu0 0
  %1440 = vmatpush1.bf16.msra.mxu0 0
  %1441 = vmatprep.subr.bf16.mxu0 0
  %1442 = vmatpush1.bf16.msra.mxu0 0
  %1443 = vmatprep.subr.bf16.mxu0 0
  %1444 = vmatpush1.bf16.msra.mxu0 0
  %1445 = vmatprep.subr.bf16.mxu0 0
  %1446 = vmatpush1.bf16.msra.mxu0 0
  %1447 = vmatprep.subr.bf16.mxu0 0
  %1448 = vmatpush1.bf16.msra.mxu0 0
  %1449 = vmatprep.subr.bf16.mxu0 0
  %1450 = vmatpush1.bf16.msra.mxu0 0
  %1451 = vmatprep.subr.bf16.mxu0 0
  %1452 = vmatpush1.bf16.msra.mxu0 0
  %1453 = vmatprep.subr.bf16.mxu0 0
  %1454 = vmatpush1.bf16.msra.mxu0 0
  %1455 = vmatprep.subr.bf16.mxu0 0
  %1456 = vmatpush1.bf16.msra.mxu0 0
  %1457 = vmatprep.subr.bf16.mxu0 0
  %1458 = vmatpush1.bf16.msra.mxu0 0
  %1459 = vmatprep.subr.bf16.mxu0 0
  %1460 = vmatpush1.bf16.msra.mxu0 0
  %1461 = vmatprep.subr.bf16.mxu0 0
  %1462 = vmatpush1.bf16.msra.mxu0 0
  %1463 = vmatprep.mubr.bf16.mxu0 0
  %1464 = vmatmul.mubr.bf16.gmra.mrb[0].mxu0 %v1420
  %v1465 = vpop.f32.mrb[0].mxu0
  %v1466 = vadd.f32 %v42, %v1465
  %v1467 = vpop.f32.mrb[0].mxu0
  %v1468 = vpop.f32.mrb[0].mxu0
  %v1469 = vadd.f32 %v42, %v1468
  %v1470 = vpop.f32.mrb[0].mxu0
  %1471 = vmatprep.mubr.bf16.mxu0 0
  %1472 = vmatmul.mubr.bf16.gmra.mrb[0].mxu0 %v1423
  %v1473 = vpop.f32.mrb[0].mxu0
  %v1474 = vadd.f32 %v42, %v1473
  %v1475 = vpop.f32.mrb[0].mxu0
  %v1476 = vpop.f32.mrb[0].mxu0
  %v1477 = vadd.f32 %v42, %v1476
  %v1478 = vpop.f32.mrb[0].mxu0
  %1479 = vmatprep.mubr.bf16.mxu0 0
  %1480 = vmatmul.mubr.bf16.gmra.mrb[0].mxu0 %v1426
  %v1481 = vpop.f32.mrb[0].mxu0
  %v1482 = vadd.f32 %v42, %v1481
  %v1483 = vpop.f32.mrb[0].mxu0
  %v1484 = vpop.f32.mrb[0].mxu0
  %v1485 = vadd.f32 %v42, %v1484
  %v1486 = vpop.f32.mrb[0].mxu0
  %1487 = vmatprep.mubr.bf16.mxu0 0
  %1488 = vmatmul.mubr.bf16.gmra.mrb[0].mxu0 %v1429
  %v1489 = vpop.f32.mrb[0].mxu0
  %v1490 = vadd.f32 %v42, %v1489
  %v1491 = vpop.f32.mrb[0].mxu0
  %v1492 = vpop.f32.mrb[0].mxu0
  %v1493 = vadd.f32 %v42, %v1492
  %v1494 = vpop.f32.mrb[0].mxu0
  %1495 = vdwg.mxu0
  %v1496 = vmax.f32 %v1466, 0.0
  %v1497 = vmax.f32 %v1469, 0.0
  %v1498 = vmax.f32 %v1474, 0.0
  %v1499 = vmax.f32 %v1477, 0.0
  %v1500 = vmax.f32 %v1482, 0.0
  %v1501 = vmax.f32 %v1485, 0.0
  %v1502 = vmax.f32 %v1490, 0.0
  %v1503 = vmax.f32 %v1493, 0.0
  %v1504 = vpack.c.bf16 %v1497, %v1496
  %v1505 = vpack.c.bf16 %v1499, %v1498
  %v1506 = vpack.c.bf16 %v1501, %v1500
  %v1507 = vpack.c.bf16 %v1503, %v1502
  %v1509 = vsel %vm150, %v1504, 0
  %v1512 = vsel %vm150, %v1505, 0
  %v1515 = vsel %vm150, %v1506, 0
  %v1518 = vsel %vm150, %v1507, 0
  %1520 = vmatprep.subr.bf16.mxu0 0
  %1521 = vmatpush1.bf16.msra.mxu0 %v148
  %1522 = vmatprep.subr.bf16.mxu0 0
  %1523 = vmatpush1.bf16.msra.mxu0 0
  %1524 = vmatprep.subr.bf16.mxu0 0
  %1525 = vmatpush1.bf16.msra.mxu0 0
  %1526 = vmatprep.subr.bf16.mxu0 0
  %1527 = vmatpush1.bf16.msra.mxu0 0
  %1528 = vmatprep.subr.bf16.mxu0 0
  %1529 = vmatpush1.bf16.msra.mxu0 0
  %1530 = vmatprep.subr.bf16.mxu0 0
  %1531 = vmatpush1.bf16.msra.mxu0 0
  %1532 = vmatprep.subr.bf16.mxu0 0
  %1533 = vmatpush1.bf16.msra.mxu0 0
  %1534 = vmatprep.subr.bf16.mxu0 0
  %1535 = vmatpush1.bf16.msra.mxu0 0
  %1536 = vmatprep.subr.bf16.mxu0 0
  %1537 = vmatpush1.bf16.msra.mxu0 0
  %1538 = vmatprep.subr.bf16.mxu0 0
  %1539 = vmatpush1.bf16.msra.mxu0 0
  %1540 = vmatprep.subr.bf16.mxu0 0
  %1541 = vmatpush1.bf16.msra.mxu0 0
  %1542 = vmatprep.subr.bf16.mxu0 0
  %1543 = vmatpush1.bf16.msra.mxu0 0
  %1544 = vmatprep.subr.bf16.mxu0 0
  %1545 = vmatpush1.bf16.msra.mxu0 0
  %1546 = vmatprep.subr.bf16.mxu0 0
  %1547 = vmatpush1.bf16.msra.mxu0 0
  %1548 = vmatprep.subr.bf16.mxu0 0
  %1549 = vmatpush1.bf16.msra.mxu0 0
  %1550 = vmatprep.subr.bf16.mxu0 0
  %1551 = vmatpush1.bf16.msra.mxu0 0
  %1552 = vmatprep.mubr.bf16.mxu0 0
  %1553 = vmatmul.mubr.bf16.gmra.mrb[0].mxu0 %v1509
  %v1554 = vpop.f32.mrb[0].mxu0
  %v1555 = vadd.f32 %v142, %v1554
  %v1556 = vpop.f32.mrb[0].mxu0
  %v1557 = vpop.f32.mrb[0].mxu0
  %v1558 = vadd.f32 %v142, %v1557
  %v1559 = vpop.f32.mrb[0].mxu0
  %1560 = vmatprep.mubr.bf16.mxu0 0
  %1561 = vmatmul.mubr.bf16.gmra.mrb[0].mxu0 %v1512
  %v1562 = vpop.f32.mrb[0].mxu0
  %v1563 = vadd.f32 %v142, %v1562
  %v1564 = vpop.f32.mrb[0].mxu0
  %v1565 = vpop.f32.mrb[0].mxu0
  %v1566 = vadd.f32 %v142, %v1565
  %v1567 = vpop.f32.mrb[0].mxu0
  %1568 = vmatprep.mubr.bf16.mxu0 0
  %1569 = vmatmul.mubr.bf16.gmra.mrb[0].mxu0 %v1515
  %v1570 = vpop.f32.mrb[0].mxu0
  %v1571 = vadd.f32 %v142, %v1570
  %v1572 = vpop.f32.mrb[0].mxu0
  %v1573 = vpop.f32.mrb[0].mxu0
  %v1574 = vadd.f32 %v142, %v1573
  %v1575 = vpop.f32.mrb[0].mxu0
  %1576 = vmatprep.mubr.bf16.mxu0 0
  %1577 = vmatmul.mubr.bf16.gmra.mrb[0].mxu0 %v1518
  %v1578 = vpop.f32.mrb[0].mxu0
  %v1579 = vadd.f32 %v142, %v1578
  %v1580 = vpop.f32.mrb[0].mxu0
  %v1581 = vpop.f32.mrb[0].mxu0
  %v1582 = vadd.f32 %v142, %v1581
  %v1583 = vpop.f32.mrb[0].mxu0
  %1584 = vdwg.mxu0
  %v1585 = vmax.f32 %v1555, 0.0
  %v1586 = vmax.f32 %v1558, 0.0
  %v1587 = vmax.f32 %v1563, 0.0
  %v1588 = vmax.f32 %v1566, 0.0
  %v1589 = vmax.f32 %v1571, 0.0
  %v1590 = vmax.f32 %v1574, 0.0
  %v1591 = vmax.f32 %v1579, 0.0
  %v1592 = vmax.f32 %v1582, 0.0
  %v1593 = vmax.f32 %v1398, %v1585
  %v1594 = vmax.f32 %v1399, %v1586
  %v1595 = vmax.f32 %v1400, %v1587
  %v1596 = vmax.f32 %v1401, %v1588
  %v1597 = vmax.f32 %v1402, %v1589
  %v1598 = vmax.f32 %v1403, %v1590
  %v1599 = vmax.f32 %v1404, %v1591
  %v1600 = vmax.f32 %v1405, %v1592
  %vm1601 = vcmask 261120
  %1602 = vst.msk [vmem:[%s5] sm:$0xff] %vm1601, %v1593
  %1603 = vst.msk [vmem:[%s5 + $0x8] sm:$0xff] %vm1601, %v1594
  %1604 = vst.msk [vmem:[%s5 + $0x10] sm:$0xff] %vm1601, %v1595
  %1605 = vst.msk [vmem:[%s5 + $0x18] sm:$0xff] %vm1601, %v1596
  %1606 = vst.msk [vmem:[%s5 + $0x20] sm:$0xff] %vm1601, %v1597
  %1607 = vst.msk [vmem:[%s5 + $0x28] sm:$0xff] %vm1601, %v1598
  %1608 = vst.msk [vmem:[%s5 + $0x30] sm:$0xff] %vm1601, %v1599
  %1609 = vst.msk [vmem:[%s5 + $0x38] sm:$0xff] %vm1601, %v1600
  // Predicated region
  $region22: #{pointnet_plus_semseg_forward.8} parent=0 // pred_check
    _
  $region23: #{pointnet_plus_semseg_forward.8} parent=0 // pred_check_branch
    %1611 = sbr.rel (0) target = $region25
  $region24: #{pointnet_plus_semseg_forward.8} parent=0 // pred_region
    _
  $region25: #{pointnet_plus_semseg_forward.8} parent=0 // pred_fallthru
    _
  // Predicated region
  $region26: #{pointnet_plus_semseg_forward.8} parent=0 // pred_check
    _
  $region27: #{pointnet_plus_semseg_forward.8} parent=0 // pred_check_branch
    %1613 = sbr.rel (0) target = $region29
  $region28: #{pointnet_plus_semseg_forward.8} parent=0 // pred_region
    _
  $region29: #{pointnet_plus_semseg_forward.8} parent=0 // pred_fallthru
    _

// kernel: custom-call.42
$region0: #{custom-call.42}
  %s0 = inlined_call_operand.vmem [shape: f32[2,16], index: 0, kind: output, shape index: {}]

// kernel: pointnet_plus_semseg_forward.9
$region0: #{pointnet_plus_semseg_forward.9}
  #allocation0 [shape = 'u32[]', space=smem, size = 0x4, offset = 0x4, fixed_abs, tag = 'smem constant byte address 0x4 - core index']
  #allocation1 [shape = 'u32[144,128]{1,0:T(1,128)}', space=vmem, size = 0x12000, scoped, tag = 'internal scratch']
  %s0 = inlined_call_operand.vmem [shape: f32[8,32,35], index: 0, kind: input, shape index: {}]
  %s1 = inlined_call_operand.vmem [shape: bf16[35,32], index: 1, kind: input, shape index: {}]
  %s2 = inlined_call_operand.vmem [shape: f32[1,32], index: 2, kind: input, shape index: {}]
  %s3 = inlined_call_operand.vmem [shape: bf16[32,64], index: 3, kind: input, shape index: {}]
  %s4 = inlined_call_operand.vmem [shape: f32[1,64], index: 4, kind: input, shape index: {}]
  %s5 = inlined_call_operand.vmem [shape: f32[32,64], index: 5, kind: output, shape index: {}]
  %s6 = sld [smem:[#allocation0]]
  $region30: #{pointnet_plus_semseg_forward.9} parent=0
    _
  %s8 = ssub.s32 1, %s6
  %s9 = scalar_select 0, %s8, %s6
  // Predicated region
  $region2: #{pointnet_plus_semseg_forward.9} parent=0 // pred_check
    _
  $region3: #{pointnet_plus_semseg_forward.9} parent=0 // pred_check_branch
    %11 = sbr.rel (0) target = $region5
  $region4: #{pointnet_plus_semseg_forward.9} parent=0 // pred_region
    _
  $region5: #{pointnet_plus_semseg_forward.9} parent=0 // pred_fallthru
    _
  // Predicated region
  $region6: #{pointnet_plus_semseg_forward.9} parent=0 // pred_check
    _
  $region7: #{pointnet_plus_semseg_forward.9} parent=0 // pred_check_branch
    %13 = sbr.rel (0) target = $region9
  $region8: #{pointnet_plus_semseg_forward.9} parent=0 // pred_region
    _
  $region9: #{pointnet_plus_semseg_forward.9} parent=0 // pred_fallthru
    _
  // Predicated region
  $region10: #{pointnet_plus_semseg_forward.9} parent=0 // pred_check
    _
  $region11: #{pointnet_plus_semseg_forward.9} parent=0 // pred_check_branch
    %15 = sbr.rel (0) target = $region13
  $region12: #{pointnet_plus_semseg_forward.9} parent=0 // pred_region
    _
  $region13: #{pointnet_plus_semseg_forward.9} parent=0 // pred_fallthru
    _
  // Predicated region
  $region14: #{pointnet_plus_semseg_forward.9} parent=0 // pred_check
    _
  $region15: #{pointnet_plus_semseg_forward.9} parent=0 // pred_check_branch
    %17 = sbr.rel (0) target = $region17
  $region16: #{pointnet_plus_semseg_forward.9} parent=0 // pred_region
    _
  $region17: #{pointnet_plus_semseg_forward.9} parent=0 // pred_fallthru
    _
  // Predicated region
  $region18: #{pointnet_plus_semseg_forward.9} parent=0 // pred_check
    _
  $region19: #{pointnet_plus_semseg_forward.9} parent=0 // pred_check_branch
    %19 = sbr.rel (0) target = $region21
  $region20: #{pointnet_plus_semseg_forward.9} parent=0 // pred_region
    _
  $region21: #{pointnet_plus_semseg_forward.9} parent=0 // pred_fallthru
    _
  %v21 = vld [vmem:[%s1] sm:$0xf]
  %v22 = vld [vmem:[%s1 + $0x4] sm:$0xf]
  %v23 = vld [vmem:[%s1 + $0x8] sm:$0xf]
  %v24 = vld [vmem:[%s1 + $0xc] sm:$0xf]
  %v25 = vld [vmem:[%s1 + $0x10] sm:$0x3]
  %v26 = vld [vmem:[%s2] sm:$0x1]
  %v27 = vld [vmem:[%s3] sm:$0xf]
  %v28 = vld [vmem:[%s3 + $0x4] sm:$0xf]
  %v29 = vld [vmem:[%s3 + $0x8] sm:$0xf]
  %v30 = vld [vmem:[%s3 + $0xc] sm:$0xf]
  %v31 = vld [vmem:[%s4] sm:$0x1]
  %v32 = vld [vmem:[%s0] sm:$0xff]
  %v33 = vld [vmem:[%s0 + $0x8] sm:$0xff]
  %v34 = vld [vmem:[%s0 + $0x10] sm:$0xff]
  %v35 = vld [vmem:[%s0 + $0x18] sm:$0xff]
  %v36 = vpack.c.bf16 %v33, %v32
  %v37 = vpack.c.bf16 %v35, %v34
  %v39 = vlaneseq
  %v40 = vshrl.u32 %v39, 7
  %v41 = vsub.s32 0, %v40
  %v42 = vrot.slane %v26, %v41
  %v49 = vunpack.c.l.b16 %v21
  %v50 = vunpack.c.l.b16 %v22
  %v51 = vunpack.c.l.b16 %v23
  %v52 = vunpack.c.l.b16 %v24
  %v53 = vunpack.c.l.b16 %v25
  %v54 = vpack.c.b16 %v50, %v49
  %v55 = vpack.c.b16 %v52, %v51
  %v56 = vpack.c.b16 %v53, %v53
  %vm59 = vcmask 285696
  %v61 = vsel %vm59, %v36, 0
  %v64 = vsel %vm59, %v37, 0
  %vm66 = vcmask 1040384
  %vm67 = vcmask 1041408
  %v68 = vsel %vm66, 4294967295, 65535
  %v69 = vsel %vm67, %v68, 0
  %v71 = vand.u32 %v56, %v69
  %73 = vmatprep.subr.bf16.mxu0 0
  %74 = vmatpush1.bf16.msra.mxu0 %v54
  %75 = vmatprep.subr.bf16.mxu0 0
  %76 = vmatpush1.bf16.msra.mxu0 %v55
  %77 = vmatprep.subr.bf16.mxu0 0
  %78 = vmatpush1.bf16.msra.mxu0 %v71
  %79 = vmatprep.subr.bf16.mxu0 0
  %80 = vmatpush1.bf16.msra.mxu0 0
  %81 = vmatprep.subr.bf16.mxu0 0
  %82 = vmatpush1.bf16.msra.mxu0 0
  %83 = vmatprep.subr.bf16.mxu0 0
  %84 = vmatpush1.bf16.msra.mxu0 0
  %85 = vmatprep.subr.bf16.mxu0 0
  %86 = vmatpush1.bf16.msra.mxu0 0
  %87 = vmatprep.subr.bf16.mxu0 0
  %88 = vmatpush1.bf16.msra.mxu0 0
  %89 = vmatprep.subr.bf16.mxu0 0
  %90 = vmatpush1.bf16.msra.mxu0 0
  %91 = vmatprep.subr.bf16.mxu0 0
  %92 = vmatpush1.bf16.msra.mxu0 0
  %93 = vmatprep.subr.bf16.mxu0 0
  %94 = vmatpush1.bf16.msra.mxu0 0
  %95 = vmatprep.subr.bf16.mxu0 0
  %96 = vmatpush1.bf16.msra.mxu0 0
  %97 = vmatprep.subr.bf16.mxu0 0
  %98 = vmatpush1.bf16.msra.mxu0 0
  %99 = vmatprep.subr.bf16.mxu0 0
  %100 = vmatpush1.bf16.msra.mxu0 0
  %101 = vmatprep.subr.bf16.mxu0 0
  %102 = vmatpush1.bf16.msra.mxu0 0
  %103 = vmatprep.subr.bf16.mxu0 0
  %104 = vmatpush1.bf16.msra.mxu0 0
  %105 = vmatprep.mubr.bf16.mxu0 0
  %106 = vmatmul.mubr.bf16.gmra.mrb[0].mxu0 %v61
  %v107 = vpop.f32.mrb[0].mxu0
  %v108 = vadd.f32 %v42, %v107
  %v109 = vpop.f32.mrb[0].mxu0
  %v110 = vpop.f32.mrb[0].mxu0
  %v111 = vadd.f32 %v42, %v110
  %v112 = vpop.f32.mrb[0].mxu0
  %113 = vmatprep.mubr.bf16.mxu0 0
  %114 = vmatmul.mubr.bf16.gmra.mrb[0].mxu0 %v64
  %v115 = vpop.f32.mrb[0].mxu0
  %v116 = vadd.f32 %v42, %v115
  %v117 = vpop.f32.mrb[0].mxu0
  %v118 = vpop.f32.mrb[0].mxu0
  %v119 = vadd.f32 %v42, %v118
  %v120 = vpop.f32.mrb[0].mxu0
  %121 = vdwg.mxu0
  %v122 = vmax.f32 %v108, 0.0
  %v123 = vmax.f32 %v111, 0.0
  %v124 = vmax.f32 %v116, 0.0
  %v125 = vmax.f32 %v119, 0.0
  %v126 = vpack.c.bf16 %v123, %v122
  %v127 = vpack.c.bf16 %v125, %v124
  %v129 = vlaneseq
  %v130 = vshrl.u32 %v129, 7
  %v131 = vsub.s32 0, %v130
  %v132 = vrot.slane %v31, %v131
  %v138 = vunpack.c.l.b16 %v27
  %v139 = vunpack.c.l.b16 %v28
  %v140 = vunpack.c.l.b16 %v29
  %v141 = vunpack.c.l.b16 %v30
  %v142 = vpack.c.b16 %v139, %v138
  %v143 = vpack.c.b16 %v141, %v140
  %vm146 = vcmask 261120
  %v148 = vsel %vm146, %v126, 0
  %v151 = vsel %vm146, %v127, 0
  %153 = vmatprep.subr.bf16.mxu0 0
  %154 = vmatpush1.bf16.msra.mxu0 %v142
  %155 = vmatprep.subr.bf16.mxu0 0
  %156 = vmatpush1.bf16.msra.mxu0 %v143
  %157 = vmatprep.subr.bf16.mxu0 0
  %158 = vmatpush1.bf16.msra.mxu0 0
  %159 = vmatprep.subr.bf16.mxu0 0
  %160 = vmatpush1.bf16.msra.mxu0 0
  %161 = vmatprep.subr.bf16.mxu0 0
  %162 = vmatpush1.bf16.msra.mxu0 0
  %163 = vmatprep.subr.bf16.mxu0 0
  %164 = vmatpush1.bf16.msra.mxu0 0
  %165 = vmatprep.subr.bf16.mxu0 0
  %166 = vmatpush1.bf16.msra.mxu0 0
  %167 = vmatprep.subr.bf16.mxu0 0
  %168 = vmatpush1.bf16.msra.mxu0 0
  %169 = vmatprep.subr.bf16.mxu0 0
  %170 = vmatpush1.bf16.msra.mxu0 0
  %171 = vmatprep.subr.bf16.mxu0 0
  %172 = vmatpush1.bf16.msra.mxu0 0
  %173 = vmatprep.subr.bf16.mxu0 0
  %174 = vmatpush1.bf16.msra.mxu0 0
  %175 = vmatprep.subr.bf16.mxu0 0
  %176 = vmatpush1.bf16.msra.mxu0 0
  %177 = vmatprep.subr.bf16.mxu0 0
  %178 = vmatpush1.bf16.msra.mxu0 0
  %179 = vmatprep.subr.bf16.mxu0 0
  %180 = vmatpush1.bf16.msra.mxu0 0
  %181 = vmatprep.subr.bf16.mxu0 0
  %182 = vmatpush1.bf16.msra.mxu0 0
  %183 = vmatprep.subr.bf16.mxu0 0
  %184 = vmatpush1.bf16.msra.mxu0 0
  %185 = vmatprep.mubr.bf16.mxu0 0
  %186 = vmatmul.mubr.bf16.gmra.mrb[0].mxu0 %v148
  %v187 = vpop.f32.mrb[0].mxu0
  %v188 = vadd.f32 %v132, %v187
  %v189 = vpop.f32.mrb[0].mxu0
  %v190 = vpop.f32.mrb[0].mxu0
  %v191 = vadd.f32 %v132, %v190
  %v192 = vpop.f32.mrb[0].mxu0
  %193 = vmatprep.mubr.bf16.mxu0 0
  %194 = vmatmul.mubr.bf16.gmra.mrb[0].mxu0 %v151
  %v195 = vpop.f32.mrb[0].mxu0
  %v196 = vadd.f32 %v132, %v195
  %v197 = vpop.f32.mrb[0].mxu0
  %v198 = vpop.f32.mrb[0].mxu0
  %v199 = vadd.f32 %v132, %v198
  %v200 = vpop.f32.mrb[0].mxu0
  %201 = vdwg.mxu0
  %v202 = vmax.f32 %v188, 0.0
  %v203 = vmax.f32 %v191, 0.0
  %v204 = vmax.f32 %v196, 0.0
  %v205 = vmax.f32 %v199, 0.0
  %s206 = scalar_lea.vmem %s0, 32
  %v207 = vld [vmem:[%s206] sm:$0xff]
  %v208 = vld [vmem:[%s206 + $0x8] sm:$0xff]
  %v209 = vld [vmem:[%s206 + $0x10] sm:$0xff]
  %v210 = vld [vmem:[%s206 + $0x18] sm:$0xff]
  %v211 = vpack.c.bf16 %v208, %v207
  %v212 = vpack.c.bf16 %v210, %v209
  %v214 = vsel %vm59, %v211, 0
  %v217 = vsel %vm59, %v212, 0
  %219 = vmatprep.subr.bf16.mxu0 0
  %220 = vmatpush1.bf16.msra.mxu0 %v54
  %221 = vmatprep.subr.bf16.mxu0 0
  %222 = vmatpush1.bf16.msra.mxu0 %v55
  %223 = vmatprep.subr.bf16.mxu0 0
  %224 = vmatpush1.bf16.msra.mxu0 %v71
  %225 = vmatprep.subr.bf16.mxu0 0
  %226 = vmatpush1.bf16.msra.mxu0 0
  %227 = vmatprep.subr.bf16.mxu0 0
  %228 = vmatpush1.bf16.msra.mxu0 0
  %229 = vmatprep.subr.bf16.mxu0 0
  %230 = vmatpush1.bf16.msra.mxu0 0
  %231 = vmatprep.subr.bf16.mxu0 0
  %232 = vmatpush1.bf16.msra.mxu0 0
  %233 = vmatprep.subr.bf16.mxu0 0
  %234 = vmatpush1.bf16.msra.mxu0 0
  %235 = vmatprep.subr.bf16.mxu0 0
  %236 = vmatpush1.bf16.msra.mxu0 0
  %237 = vmatprep.subr.bf16.mxu0 0
  %238 = vmatpush1.bf16.msra.mxu0 0
  %239 = vmatprep.subr.bf16.mxu0 0
  %240 = vmatpush1.bf16.msra.mxu0 0
  %241 = vmatprep.subr.bf16.mxu0 0
  %242 = vmatpush1.bf16.msra.mxu0 0
  %243 = vmatprep.subr.bf16.mxu0 0
  %244 = vmatpush1.bf16.msra.mxu0 0
  %245 = vmatprep.subr.bf16.mxu0 0
  %246 = vmatpush1.bf16.msra.mxu0 0
  %247 = vmatprep.subr.bf16.mxu0 0
  %248 = vmatpush1.bf16.msra.mxu0 0
  %249 = vmatprep.subr.bf16.mxu0 0
  %250 = vmatpush1.bf16.msra.mxu0 0
  %251 = vmatprep.mubr.bf16.mxu0 0
  %252 = vmatmul.mubr.bf16.gmra.mrb[0].mxu0 %v214
  %v253 = vpop.f32.mrb[0].mxu0
  %v254 = vadd.f32 %v42, %v253
  %v255 = vpop.f32.mrb[0].mxu0
  %v256 = vpop.f32.mrb[0].mxu0
  %v257 = vadd.f32 %v42, %v256
  %v258 = vpop.f32.mrb[0].mxu0
  %259 = vmatprep.mubr.bf16.mxu0 0
  %260 = vmatmul.mubr.bf16.gmra.mrb[0].mxu0 %v217
  %v261 = vpop.f32.mrb[0].mxu0
  %v262 = vadd.f32 %v42, %v261
  %v263 = vpop.f32.mrb[0].mxu0
  %v264 = vpop.f32.mrb[0].mxu0
  %v265 = vadd.f32 %v42, %v264
  %v266 = vpop.f32.mrb[0].mxu0
  %267 = vdwg.mxu0
  %v268 = vmax.f32 %v254, 0.0
  %v269 = vmax.f32 %v257, 0.0
  %v270 = vmax.f32 %v262, 0.0
  %v271 = vmax.f32 %v265, 0.0
  %v272 = vpack.c.bf16 %v269, %v268
  %v273 = vpack.c.bf16 %v271, %v270
  %v275 = vsel %vm146, %v272, 0
  %v278 = vsel %vm146, %v273, 0
  %280 = vmatprep.subr.bf16.mxu0 0
  %281 = vmatpush1.bf16.msra.mxu0 %v142
  %282 = vmatprep.subr.bf16.mxu0 0
  %283 = vmatpush1.bf16.msra.mxu0 %v143
  %284 = vmatprep.subr.bf16.mxu0 0
  %285 = vmatpush1.bf16.msra.mxu0 0
  %286 = vmatprep.subr.bf16.mxu0 0
  %287 = vmatpush1.bf16.msra.mxu0 0
  %288 = vmatprep.subr.bf16.mxu0 0
  %289 = vmatpush1.bf16.msra.mxu0 0
  %290 = vmatprep.subr.bf16.mxu0 0
  %291 = vmatpush1.bf16.msra.mxu0 0
  %292 = vmatprep.subr.bf16.mxu0 0
  %293 = vmatpush1.bf16.msra.mxu0 0
  %294 = vmatprep.subr.bf16.mxu0 0
  %295 = vmatpush1.bf16.msra.mxu0 0
  %296 = vmatprep.subr.bf16.mxu0 0
  %297 = vmatpush1.bf16.msra.mxu0 0
  %298 = vmatprep.subr.bf16.mxu0 0
  %299 = vmatpush1.bf16.msra.mxu0 0
  %300 = vmatprep.subr.bf16.mxu0 0
  %301 = vmatpush1.bf16.msra.mxu0 0
  %302 = vmatprep.subr.bf16.mxu0 0
  %303 = vmatpush1.bf16.msra.mxu0 0
  %304 = vmatprep.subr.bf16.mxu0 0
  %305 = vmatpush1.bf16.msra.mxu0 0
  %306 = vmatprep.subr.bf16.mxu0 0
  %307 = vmatpush1.bf16.msra.mxu0 0
  %308 = vmatprep.subr.bf16.mxu0 0
  %309 = vmatpush1.bf16.msra.mxu0 0
  %310 = vmatprep.subr.bf16.mxu0 0
  %311 = vmatpush1.bf16.msra.mxu0 0
  %312 = vmatprep.mubr.bf16.mxu0 0
  %313 = vmatmul.mubr.bf16.gmra.mrb[0].mxu0 %v275
  %v314 = vpop.f32.mrb[0].mxu0
  %v315 = vadd.f32 %v132, %v314
  %v316 = vpop.f32.mrb[0].mxu0
  %v317 = vpop.f32.mrb[0].mxu0
  %v318 = vadd.f32 %v132, %v317
  %v319 = vpop.f32.mrb[0].mxu0
  %320 = vmatprep.mubr.bf16.mxu0 0
  %321 = vmatmul.mubr.bf16.gmra.mrb[0].mxu0 %v278
  %v322 = vpop.f32.mrb[0].mxu0
  %v323 = vadd.f32 %v132, %v322
  %v324 = vpop.f32.mrb[0].mxu0
  %v325 = vpop.f32.mrb[0].mxu0
  %v326 = vadd.f32 %v132, %v325
  %v327 = vpop.f32.mrb[0].mxu0
  %328 = vdwg.mxu0
  %v329 = vmax.f32 %v315, 0.0
  %v330 = vmax.f32 %v318, 0.0
  %v331 = vmax.f32 %v323, 0.0
  %v332 = vmax.f32 %v326, 0.0
  %v333 = vmax.f32 %v202, %v329
  %v334 = vmax.f32 %v203, %v330
  %v335 = vmax.f32 %v204, %v331
  %v336 = vmax.f32 %v205, %v332
  %s337 = scalar_lea.vmem %s0, 64
  %v338 = vld [vmem:[%s337] sm:$0xff]
  %v339 = vld [vmem:[%s337 + $0x8] sm:$0xff]
  %v340 = vld [vmem:[%s337 + $0x10] sm:$0xff]
  %v341 = vld [vmem:[%s337 + $0x18] sm:$0xff]
  %v342 = vpack.c.bf16 %v339, %v338
  %v343 = vpack.c.bf16 %v341, %v340
  %v345 = vsel %vm59, %v342, 0
  %v348 = vsel %vm59, %v343, 0
  %350 = vmatprep.subr.bf16.mxu0 0
  %351 = vmatpush1.bf16.msra.mxu0 %v54
  %352 = vmatprep.subr.bf16.mxu0 0
  %353 = vmatpush1.bf16.msra.mxu0 %v55
  %354 = vmatprep.subr.bf16.mxu0 0
  %355 = vmatpush1.bf16.msra.mxu0 %v71
  %356 = vmatprep.subr.bf16.mxu0 0
  %357 = vmatpush1.bf16.msra.mxu0 0
  %358 = vmatprep.subr.bf16.mxu0 0
  %359 = vmatpush1.bf16.msra.mxu0 0
  %360 = vmatprep.subr.bf16.mxu0 0
  %361 = vmatpush1.bf16.msra.mxu0 0
  %362 = vmatprep.subr.bf16.mxu0 0
  %363 = vmatpush1.bf16.msra.mxu0 0
  %364 = vmatprep.subr.bf16.mxu0 0
  %365 = vmatpush1.bf16.msra.mxu0 0
  %366 = vmatprep.subr.bf16.mxu0 0
  %367 = vmatpush1.bf16.msra.mxu0 0
  %368 = vmatprep.subr.bf16.mxu0 0
  %369 = vmatpush1.bf16.msra.mxu0 0
  %370 = vmatprep.subr.bf16.mxu0 0
  %371 = vmatpush1.bf16.msra.mxu0 0
  %372 = vmatprep.subr.bf16.mxu0 0
  %373 = vmatpush1.bf16.msra.mxu0 0
  %374 = vmatprep.subr.bf16.mxu0 0
  %375 = vmatpush1.bf16.msra.mxu0 0
  %376 = vmatprep.subr.bf16.mxu0 0
  %377 = vmatpush1.bf16.msra.mxu0 0
  %378 = vmatprep.subr.bf16.mxu0 0
  %379 = vmatpush1.bf16.msra.mxu0 0
  %380 = vmatprep.subr.bf16.mxu0 0
  %381 = vmatpush1.bf16.msra.mxu0 0
  %382 = vmatprep.mubr.bf16.mxu0 0
  %383 = vmatmul.mubr.bf16.gmra.mrb[0].mxu0 %v345
  %v384 = vpop.f32.mrb[0].mxu0
  %v385 = vadd.f32 %v42, %v384
  %v386 = vpop.f32.mrb[0].mxu0
  %v387 = vpop.f32.mrb[0].mxu0
  %v388 = vadd.f32 %v42, %v387
  %v389 = vpop.f32.mrb[0].mxu0
  %390 = vmatprep.mubr.bf16.mxu0 0
  %391 = vmatmul.mubr.bf16.gmra.mrb[0].mxu0 %v348
  %v392 = vpop.f32.mrb[0].mxu0
  %v393 = vadd.f32 %v42, %v392
  %v394 = vpop.f32.mrb[0].mxu0
  %v395 = vpop.f32.mrb[0].mxu0
  %v396 = vadd.f32 %v42, %v395
  %v397 = vpop.f32.mrb[0].mxu0
  %398 = vdwg.mxu0
  %v399 = vmax.f32 %v385, 0.0
  %v400 = vmax.f32 %v388, 0.0
  %v401 = vmax.f32 %v393, 0.0
  %v402 = vmax.f32 %v396, 0.0
  %v403 = vpack.c.bf16 %v400, %v399
  %v404 = vpack.c.bf16 %v402, %v401
  %v406 = vsel %vm146, %v403, 0
  %v409 = vsel %vm146, %v404, 0
  %411 = vmatprep.subr.bf16.mxu0 0
  %412 = vmatpush1.bf16.msra.mxu0 %v142
  %413 = vmatprep.subr.bf16.mxu0 0
  %414 = vmatpush1.bf16.msra.mxu0 %v143
  %415 = vmatprep.subr.bf16.mxu0 0
  %416 = vmatpush1.bf16.msra.mxu0 0
  %417 = vmatprep.subr.bf16.mxu0 0
  %418 = vmatpush1.bf16.msra.mxu0 0
  %419 = vmatprep.subr.bf16.mxu0 0
  %420 = vmatpush1.bf16.msra.mxu0 0
  %421 = vmatprep.subr.bf16.mxu0 0
  %422 = vmatpush1.bf16.msra.mxu0 0
  %423 = vmatprep.subr.bf16.mxu0 0
  %424 = vmatpush1.bf16.msra.mxu0 0
  %425 = vmatprep.subr.bf16.mxu0 0
  %426 = vmatpush1.bf16.msra.mxu0 0
  %427 = vmatprep.subr.bf16.mxu0 0
  %428 = vmatpush1.bf16.msra.mxu0 0
  %429 = vmatprep.subr.bf16.mxu0 0
  %430 = vmatpush1.bf16.msra.mxu0 0
  %431 = vmatprep.subr.bf16.mxu0 0
  %432 = vmatpush1.bf16.msra.mxu0 0
  %433 = vmatprep.subr.bf16.mxu0 0
  %434 = vmatpush1.bf16.msra.mxu0 0
  %435 = vmatprep.subr.bf16.mxu0 0
  %436 = vmatpush1.bf16.msra.mxu0 0
  %437 = vmatprep.subr.bf16.mxu0 0
  %438 = vmatpush1.bf16.msra.mxu0 0
  %439 = vmatprep.subr.bf16.mxu0 0
  %440 = vmatpush1.bf16.msra.mxu0 0
  %441 = vmatprep.subr.bf16.mxu0 0
  %442 = vmatpush1.bf16.msra.mxu0 0
  %443 = vmatprep.mubr.bf16.mxu0 0
  %444 = vmatmul.mubr.bf16.gmra.mrb[0].mxu0 %v406
  %v445 = vpop.f32.mrb[0].mxu0
  %v446 = vadd.f32 %v132, %v445
  %v447 = vpop.f32.mrb[0].mxu0
  %v448 = vpop.f32.mrb[0].mxu0
  %v449 = vadd.f32 %v132, %v448
  %v450 = vpop.f32.mrb[0].mxu0
  %451 = vmatprep.mubr.bf16.mxu0 0
  %452 = vmatmul.mubr.bf16.gmra.mrb[0].mxu0 %v409
  %v453 = vpop.f32.mrb[0].mxu0
  %v454 = vadd.f32 %v132, %v453
  %v455 = vpop.f32.mrb[0].mxu0
  %v456 = vpop.f32.mrb[0].mxu0
  %v457 = vadd.f32 %v132, %v456
  %v458 = vpop.f32.mrb[0].mxu0
  %459 = vdwg.mxu0
  %v460 = vmax.f32 %v446, 0.0
  %v461 = vmax.f32 %v449, 0.0
  %v462 = vmax.f32 %v454, 0.0
  %v463 = vmax.f32 %v457, 0.0
  %v464 = vmax.f32 %v333, %v460
  %v465 = vmax.f32 %v334, %v461
  %v466 = vmax.f32 %v335, %v462
  %v467 = vmax.f32 %v336, %v463
  %s468 = scalar_lea.vmem %s0, 96
  %v469 = vld [vmem:[%s468] sm:$0xff]
  %v470 = vld [vmem:[%s468 + $0x8] sm:$0xff]
  %v471 = vld [vmem:[%s468 + $0x10] sm:$0xff]
  %v472 = vld [vmem:[%s468 + $0x18] sm:$0xff]
  %v473 = vpack.c.bf16 %v470, %v469
  %v474 = vpack.c.bf16 %v472, %v471
  %v476 = vsel %vm59, %v473, 0
  %v479 = vsel %vm59, %v474, 0
  %481 = vmatprep.subr.bf16.mxu0 0
  %482 = vmatpush1.bf16.msra.mxu0 %v54
  %483 = vmatprep.subr.bf16.mxu0 0
  %484 = vmatpush1.bf16.msra.mxu0 %v55
  %485 = vmatprep.subr.bf16.mxu0 0
  %486 = vmatpush1.bf16.msra.mxu0 %v71
  %487 = vmatprep.subr.bf16.mxu0 0
  %488 = vmatpush1.bf16.msra.mxu0 0
  %489 = vmatprep.subr.bf16.mxu0 0
  %490 = vmatpush1.bf16.msra.mxu0 0
  %491 = vmatprep.subr.bf16.mxu0 0
  %492 = vmatpush1.bf16.msra.mxu0 0
  %493 = vmatprep.subr.bf16.mxu0 0
  %494 = vmatpush1.bf16.msra.mxu0 0
  %495 = vmatprep.subr.bf16.mxu0 0
  %496 = vmatpush1.bf16.msra.mxu0 0
  %497 = vmatprep.subr.bf16.mxu0 0
  %498 = vmatpush1.bf16.msra.mxu0 0
  %499 = vmatprep.subr.bf16.mxu0 0
  %500 = vmatpush1.bf16.msra.mxu0 0
  %501 = vmatprep.subr.bf16.mxu0 0
  %502 = vmatpush1.bf16.msra.mxu0 0
  %503 = vmatprep.subr.bf16.mxu0 0
  %504 = vmatpush1.bf16.msra.mxu0 0
  %505 = vmatprep.subr.bf16.mxu0 0
  %506 = vmatpush1.bf16.msra.mxu0 0
  %507 = vmatprep.subr.bf16.mxu0 0
  %508 = vmatpush1.bf16.msra.mxu0 0
  %509 = vmatprep.subr.bf16.mxu0 0
  %510 = vmatpush1.bf16.msra.mxu0 0
  %511 = vmatprep.subr.bf16.mxu0 0
  %512 = vmatpush1.bf16.msra.mxu0 0
  %513 = vmatprep.mubr.bf16.mxu0 0
  %514 = vmatmul.mubr.bf16.gmra.mrb[0].mxu0 %v476
  %v515 = vpop.f32.mrb[0].mxu0
  %v516 = vadd.f32 %v42, %v515
  %v517 = vpop.f32.mrb[0].mxu0
  %v518 = vpop.f32.mrb[0].mxu0
  %v519 = vadd.f32 %v42, %v518
  %v520 = vpop.f32.mrb[0].mxu0
  %521 = vmatprep.mubr.bf16.mxu0 0
  %522 = vmatmul.mubr.bf16.gmra.mrb[0].mxu0 %v479
  %v523 = vpop.f32.mrb[0].mxu0
  %v524 = vadd.f32 %v42, %v523
  %v525 = vpop.f32.mrb[0].mxu0
  %v526 = vpop.f32.mrb[0].mxu0
  %v527 = vadd.f32 %v42, %v526
  %v528 = vpop.f32.mrb[0].mxu0
  %529 = vdwg.mxu0
  %v530 = vmax.f32 %v516, 0.0
  %v531 = vmax.f32 %v519, 0.0
  %v532 = vmax.f32 %v524, 0.0
  %v533 = vmax.f32 %v527, 0.0
  %v534 = vpack.c.bf16 %v531, %v530
  %v535 = vpack.c.bf16 %v533, %v532
  %v537 = vsel %vm146, %v534, 0
  %v540 = vsel %vm146, %v535, 0
  %542 = vmatprep.subr.bf16.mxu0 0
  %543 = vmatpush1.bf16.msra.mxu0 %v142
  %544 = vmatprep.subr.bf16.mxu0 0
  %545 = vmatpush1.bf16.msra.mxu0 %v143
  %546 = vmatprep.subr.bf16.mxu0 0
  %547 = vmatpush1.bf16.msra.mxu0 0
  %548 = vmatprep.subr.bf16.mxu0 0
  %549 = vmatpush1.bf16.msra.mxu0 0
  %550 = vmatprep.subr.bf16.mxu0 0
  %551 = vmatpush1.bf16.msra.mxu0 0
  %552 = vmatprep.subr.bf16.mxu0 0
  %553 = vmatpush1.bf16.msra.mxu0 0
  %554 = vmatprep.subr.bf16.mxu0 0
  %555 = vmatpush1.bf16.msra.mxu0 0
  %556 = vmatprep.subr.bf16.mxu0 0
  %557 = vmatpush1.bf16.msra.mxu0 0
  %558 = vmatprep.subr.bf16.mxu0 0
  %559 = vmatpush1.bf16.msra.mxu0 0
  %560 = vmatprep.subr.bf16.mxu0 0
  %561 = vmatpush1.bf16.msra.mxu0 0
  %562 = vmatprep.subr.bf16.mxu0 0
  %563 = vmatpush1.bf16.msra.mxu0 0
  %564 = vmatprep.subr.bf16.mxu0 0
  %565 = vmatpush1.bf16.msra.mxu0 0
  %566 = vmatprep.subr.bf16.mxu0 0
  %567 = vmatpush1.bf16.msra.mxu0 0
  %568 = vmatprep.subr.bf16.mxu0 0
  %569 = vmatpush1.bf16.msra.mxu0 0
  %570 = vmatprep.subr.bf16.mxu0 0
  %571 = vmatpush1.bf16.msra.mxu0 0
  %572 = vmatprep.subr.bf16.mxu0 0
  %573 = vmatpush1.bf16.msra.mxu0 0
  %574 = vmatprep.mubr.bf16.mxu0 0
  %575 = vmatmul.mubr.bf16.gmra.mrb[0].mxu0 %v537
  %v576 = vpop.f32.mrb[0].mxu0
  %v577 = vadd.f32 %v132, %v576
  %v578 = vpop.f32.mrb[0].mxu0
  %v579 = vpop.f32.mrb[0].mxu0
  %v580 = vadd.f32 %v132, %v579
  %v581 = vpop.f32.mrb[0].mxu0
  %582 = vmatprep.mubr.bf16.mxu0 0
  %583 = vmatmul.mubr.bf16.gmra.mrb[0].mxu0 %v540
  %v584 = vpop.f32.mrb[0].mxu0
  %v585 = vadd.f32 %v132, %v584
  %v586 = vpop.f32.mrb[0].mxu0
  %v587 = vpop.f32.mrb[0].mxu0
  %v588 = vadd.f32 %v132, %v587
  %v589 = vpop.f32.mrb[0].mxu0
  %590 = vdwg.mxu0
  %v591 = vmax.f32 %v577, 0.0
  %v592 = vmax.f32 %v580, 0.0
  %v593 = vmax.f32 %v585, 0.0
  %v594 = vmax.f32 %v588, 0.0
  %v595 = vmax.f32 %v464, %v591
  %v596 = vmax.f32 %v465, %v592
  %v597 = vmax.f32 %v466, %v593
  %v598 = vmax.f32 %v467, %v594
  %s599 = scalar_lea.vmem %s0, 128
  %v600 = vld [vmem:[%s599] sm:$0xff]
  %v601 = vld [vmem:[%s599 + $0x8] sm:$0xff]
  %v602 = vld [vmem:[%s599 + $0x10] sm:$0xff]
  %v603 = vld [vmem:[%s599 + $0x18] sm:$0xff]
  %v604 = vpack.c.bf16 %v601, %v600
  %v605 = vpack.c.bf16 %v603, %v602
  %v607 = vsel %vm59, %v604, 0
  %v610 = vsel %vm59, %v605, 0
  %612 = vmatprep.subr.bf16.mxu0 0
  %613 = vmatpush1.bf16.msra.mxu0 %v54
  %614 = vmatprep.subr.bf16.mxu0 0
  %615 = vmatpush1.bf16.msra.mxu0 %v55
  %616 = vmatprep.subr.bf16.mxu0 0
  %617 = vmatpush1.bf16.msra.mxu0 %v71
  %618 = vmatprep.subr.bf16.mxu0 0
  %619 = vmatpush1.bf16.msra.mxu0 0
  %620 = vmatprep.subr.bf16.mxu0 0
  %621 = vmatpush1.bf16.msra.mxu0 0
  %622 = vmatprep.subr.bf16.mxu0 0
  %623 = vmatpush1.bf16.msra.mxu0 0
  %624 = vmatprep.subr.bf16.mxu0 0
  %625 = vmatpush1.bf16.msra.mxu0 0
  %626 = vmatprep.subr.bf16.mxu0 0
  %627 = vmatpush1.bf16.msra.mxu0 0
  %628 = vmatprep.subr.bf16.mxu0 0
  %629 = vmatpush1.bf16.msra.mxu0 0
  %630 = vmatprep.subr.bf16.mxu0 0
  %631 = vmatpush1.bf16.msra.mxu0 0
  %632 = vmatprep.subr.bf16.mxu0 0
  %633 = vmatpush1.bf16.msra.mxu0 0
  %634 = vmatprep.subr.bf16.mxu0 0
  %635 = vmatpush1.bf16.msra.mxu0 0
  %636 = vmatprep.subr.bf16.mxu0 0
  %637 = vmatpush1.bf16.msra.mxu0 0
  %638 = vmatprep.subr.bf16.mxu0 0
  %639 = vmatpush1.bf16.msra.mxu0 0
  %640 = vmatprep.subr.bf16.mxu0 0
  %641 = vmatpush1.bf16.msra.mxu0 0
  %642 = vmatprep.subr.bf16.mxu0 0
  %643 = vmatpush1.bf16.msra.mxu0 0
  %644 = vmatprep.mubr.bf16.mxu0 0
  %645 = vmatmul.mubr.bf16.gmra.mrb[0].mxu0 %v607
  %v646 = vpop.f32.mrb[0].mxu0
  %v647 = vadd.f32 %v42, %v646
  %v648 = vpop.f32.mrb[0].mxu0
  %v649 = vpop.f32.mrb[0].mxu0
  %v650 = vadd.f32 %v42, %v649
  %v651 = vpop.f32.mrb[0].mxu0
  %652 = vmatprep.mubr.bf16.mxu0 0
  %653 = vmatmul.mubr.bf16.gmra.mrb[0].mxu0 %v610
  %v654 = vpop.f32.mrb[0].mxu0
  %v655 = vadd.f32 %v42, %v654
  %v656 = vpop.f32.mrb[0].mxu0
  %v657 = vpop.f32.mrb[0].mxu0
  %v658 = vadd.f32 %v42, %v657
  %v659 = vpop.f32.mrb[0].mxu0
  %660 = vdwg.mxu0
  %v661 = vmax.f32 %v647, 0.0
  %v662 = vmax.f32 %v650, 0.0
  %v663 = vmax.f32 %v655, 0.0
  %v664 = vmax.f32 %v658, 0.0
  %v665 = vpack.c.bf16 %v662, %v661
  %v666 = vpack.c.bf16 %v664, %v663
  %v668 = vsel %vm146, %v665, 0
  %v671 = vsel %vm146, %v666, 0
  %673 = vmatprep.subr.bf16.mxu0 0
  %674 = vmatpush1.bf16.msra.mxu0 %v142
  %675 = vmatprep.subr.bf16.mxu0 0
  %676 = vmatpush1.bf16.msra.mxu0 %v143
  %677 = vmatprep.subr.bf16.mxu0 0
  %678 = vmatpush1.bf16.msra.mxu0 0
  %679 = vmatprep.subr.bf16.mxu0 0
  %680 = vmatpush1.bf16.msra.mxu0 0
  %681 = vmatprep.subr.bf16.mxu0 0
  %682 = vmatpush1.bf16.msra.mxu0 0
  %683 = vmatprep.subr.bf16.mxu0 0
  %684 = vmatpush1.bf16.msra.mxu0 0
  %685 = vmatprep.subr.bf16.mxu0 0
  %686 = vmatpush1.bf16.msra.mxu0 0
  %687 = vmatprep.subr.bf16.mxu0 0
  %688 = vmatpush1.bf16.msra.mxu0 0
  %689 = vmatprep.subr.bf16.mxu0 0
  %690 = vmatpush1.bf16.msra.mxu0 0
  %691 = vmatprep.subr.bf16.mxu0 0
  %692 = vmatpush1.bf16.msra.mxu0 0
  %693 = vmatprep.subr.bf16.mxu0 0
  %694 = vmatpush1.bf16.msra.mxu0 0
  %695 = vmatprep.subr.bf16.mxu0 0
  %696 = vmatpush1.bf16.msra.mxu0 0
  %697 = vmatprep.subr.bf16.mxu0 0
  %698 = vmatpush1.bf16.msra.mxu0 0
  %699 = vmatprep.subr.bf16.mxu0 0
  %700 = vmatpush1.bf16.msra.mxu0 0
  %701 = vmatprep.subr.bf16.mxu0 0
  %702 = vmatpush1.bf16.msra.mxu0 0
  %703 = vmatprep.subr.bf16.mxu0 0
  %704 = vmatpush1.bf16.msra.mxu0 0
  %705 = vmatprep.mubr.bf16.mxu0 0
  %706 = vmatmul.mubr.bf16.gmra.mrb[0].mxu0 %v668
  %v707 = vpop.f32.mrb[0].mxu0
  %v708 = vadd.f32 %v132, %v707
  %v709 = vpop.f32.mrb[0].mxu0
  %v710 = vpop.f32.mrb[0].mxu0
  %v711 = vadd.f32 %v132, %v710
  %v712 = vpop.f32.mrb[0].mxu0
  %713 = vmatprep.mubr.bf16.mxu0 0
  %714 = vmatmul.mubr.bf16.gmra.mrb[0].mxu0 %v671
  %v715 = vpop.f32.mrb[0].mxu0
  %v716 = vadd.f32 %v132, %v715
  %v717 = vpop.f32.mrb[0].mxu0
  %v718 = vpop.f32.mrb[0].mxu0
  %v719 = vadd.f32 %v132, %v718
  %v720 = vpop.f32.mrb[0].mxu0
  %721 = vdwg.mxu0
  %v722 = vmax.f32 %v708, 0.0
  %v723 = vmax.f32 %v711, 0.0
  %v724 = vmax.f32 %v716, 0.0
  %v725 = vmax.f32 %v719, 0.0
  %v726 = vmax.f32 %v595, %v722
  %v727 = vmax.f32 %v596, %v723
  %v728 = vmax.f32 %v597, %v724
  %v729 = vmax.f32 %v598, %v725
  %s730 = scalar_lea.vmem %s0, 160
  %v731 = vld [vmem:[%s730] sm:$0xff]
  %v732 = vld [vmem:[%s730 + $0x8] sm:$0xff]
  %v733 = vld [vmem:[%s730 + $0x10] sm:$0xff]
  %v734 = vld [vmem:[%s730 + $0x18] sm:$0xff]
  %v735 = vpack.c.bf16 %v732, %v731
  %v736 = vpack.c.bf16 %v734, %v733
  %v738 = vsel %vm59, %v735, 0
  %v741 = vsel %vm59, %v736, 0
  %743 = vmatprep.subr.bf16.mxu0 0
  %744 = vmatpush1.bf16.msra.mxu0 %v54
  %745 = vmatprep.subr.bf16.mxu0 0
  %746 = vmatpush1.bf16.msra.mxu0 %v55
  %747 = vmatprep.subr.bf16.mxu0 0
  %748 = vmatpush1.bf16.msra.mxu0 %v71
  %749 = vmatprep.subr.bf16.mxu0 0
  %750 = vmatpush1.bf16.msra.mxu0 0
  %751 = vmatprep.subr.bf16.mxu0 0
  %752 = vmatpush1.bf16.msra.mxu0 0
  %753 = vmatprep.subr.bf16.mxu0 0
  %754 = vmatpush1.bf16.msra.mxu0 0
  %755 = vmatprep.subr.bf16.mxu0 0
  %756 = vmatpush1.bf16.msra.mxu0 0
  %757 = vmatprep.subr.bf16.mxu0 0
  %758 = vmatpush1.bf16.msra.mxu0 0
  %759 = vmatprep.subr.bf16.mxu0 0
  %760 = vmatpush1.bf16.msra.mxu0 0
  %761 = vmatprep.subr.bf16.mxu0 0
  %762 = vmatpush1.bf16.msra.mxu0 0
  %763 = vmatprep.subr.bf16.mxu0 0
  %764 = vmatpush1.bf16.msra.mxu0 0
  %765 = vmatprep.subr.bf16.mxu0 0
  %766 = vmatpush1.bf16.msra.mxu0 0
  %767 = vmatprep.subr.bf16.mxu0 0
  %768 = vmatpush1.bf16.msra.mxu0 0
  %769 = vmatprep.subr.bf16.mxu0 0
  %770 = vmatpush1.bf16.msra.mxu0 0
  %771 = vmatprep.subr.bf16.mxu0 0
  %772 = vmatpush1.bf16.msra.mxu0 0
  %773 = vmatprep.subr.bf16.mxu0 0
  %774 = vmatpush1.bf16.msra.mxu0 0
  %775 = vmatprep.mubr.bf16.mxu0 0
  %776 = vmatmul.mubr.bf16.gmra.mrb[0].mxu0 %v738
  %v777 = vpop.f32.mrb[0].mxu0
  %v778 = vadd.f32 %v42, %v777
  %v779 = vpop.f32.mrb[0].mxu0
  %v780 = vpop.f32.mrb[0].mxu0
  %v781 = vadd.f32 %v42, %v780
  %v782 = vpop.f32.mrb[0].mxu0
  %783 = vmatprep.mubr.bf16.mxu0 0
  %784 = vmatmul.mubr.bf16.gmra.mrb[0].mxu0 %v741
  %v785 = vpop.f32.mrb[0].mxu0
  %v786 = vadd.f32 %v42, %v785
  %v787 = vpop.f32.mrb[0].mxu0
  %v788 = vpop.f32.mrb[0].mxu0
  %v789 = vadd.f32 %v42, %v788
  %v790 = vpop.f32.mrb[0].mxu0
  %791 = vdwg.mxu0
  %v792 = vmax.f32 %v778, 0.0
  %v793 = vmax.f32 %v781, 0.0
  %v794 = vmax.f32 %v786, 0.0
  %v795 = vmax.f32 %v789, 0.0
  %v796 = vpack.c.bf16 %v793, %v792
  %v797 = vpack.c.bf16 %v795, %v794
  %v799 = vsel %vm146, %v796, 0
  %v802 = vsel %vm146, %v797, 0
  %804 = vmatprep.subr.bf16.mxu0 0
  %805 = vmatpush1.bf16.msra.mxu0 %v142
  %806 = vmatprep.subr.bf16.mxu0 0
  %807 = vmatpush1.bf16.msra.mxu0 %v143
  %808 = vmatprep.subr.bf16.mxu0 0
  %809 = vmatpush1.bf16.msra.mxu0 0
  %810 = vmatprep.subr.bf16.mxu0 0
  %811 = vmatpush1.bf16.msra.mxu0 0
  %812 = vmatprep.subr.bf16.mxu0 0
  %813 = vmatpush1.bf16.msra.mxu0 0
  %814 = vmatprep.subr.bf16.mxu0 0
  %815 = vmatpush1.bf16.msra.mxu0 0
  %816 = vmatprep.subr.bf16.mxu0 0
  %817 = vmatpush1.bf16.msra.mxu0 0
  %818 = vmatprep.subr.bf16.mxu0 0
  %819 = vmatpush1.bf16.msra.mxu0 0
  %820 = vmatprep.subr.bf16.mxu0 0
  %821 = vmatpush1.bf16.msra.mxu0 0
  %822 = vmatprep.subr.bf16.mxu0 0
  %823 = vmatpush1.bf16.msra.mxu0 0
  %824 = vmatprep.subr.bf16.mxu0 0
  %825 = vmatpush1.bf16.msra.mxu0 0
  %826 = vmatprep.subr.bf16.mxu0 0
  %827 = vmatpush1.bf16.msra.mxu0 0
  %828 = vmatprep.subr.bf16.mxu0 0
  %829 = vmatpush1.bf16.msra.mxu0 0
  %830 = vmatprep.subr.bf16.mxu0 0
  %831 = vmatpush1.bf16.msra.mxu0 0
  %832 = vmatprep.subr.bf16.mxu0 0
  %833 = vmatpush1.bf16.msra.mxu0 0
  %834 = vmatprep.subr.bf16.mxu0 0
  %835 = vmatpush1.bf16.msra.mxu0 0
  %836 = vmatprep.mubr.bf16.mxu0 0
  %837 = vmatmul.mubr.bf16.gmra.mrb[0].mxu0 %v799
  %v838 = vpop.f32.mrb[0].mxu0
  %v839 = vadd.f32 %v132, %v838
  %v840 = vpop.f32.mrb[0].mxu0
  %v841 = vpop.f32.mrb[0].mxu0
  %v842 = vadd.f32 %v132, %v841
  %v843 = vpop.f32.mrb[0].mxu0
  %844 = vmatprep.mubr.bf16.mxu0 0
  %845 = vmatmul.mubr.bf16.gmra.mrb[0].mxu0 %v802
  %v846 = vpop.f32.mrb[0].mxu0
  %v847 = vadd.f32 %v132, %v846
  %v848 = vpop.f32.mrb[0].mxu0
  %v849 = vpop.f32.mrb[0].mxu0
  %v850 = vadd.f32 %v132, %v849
  %v851 = vpop.f32.mrb[0].mxu0
  %852 = vdwg.mxu0
  %v853 = vmax.f32 %v839, 0.0
  %v854 = vmax.f32 %v842, 0.0
  %v855 = vmax.f32 %v847, 0.0
  %v856 = vmax.f32 %v850, 0.0
  %v857 = vmax.f32 %v726, %v853
  %v858 = vmax.f32 %v727, %v854
  %v859 = vmax.f32 %v728, %v855
  %v860 = vmax.f32 %v729, %v856
  %s861 = scalar_lea.vmem %s0, 192
  %v862 = vld [vmem:[%s861] sm:$0xff]
  %v863 = vld [vmem:[%s861 + $0x8] sm:$0xff]
  %v864 = vld [vmem:[%s861 + $0x10] sm:$0xff]
  %v865 = vld [vmem:[%s861 + $0x18] sm:$0xff]
  %v866 = vpack.c.bf16 %v863, %v862
  %v867 = vpack.c.bf16 %v865, %v864
  %v869 = vsel %vm59, %v866, 0
  %v872 = vsel %vm59, %v867, 0
  %874 = vmatprep.subr.bf16.mxu0 0
  %875 = vmatpush1.bf16.msra.mxu0 %v54
  %876 = vmatprep.subr.bf16.mxu0 0
  %877 = vmatpush1.bf16.msra.mxu0 %v55
  %878 = vmatprep.subr.bf16.mxu0 0
  %879 = vmatpush1.bf16.msra.mxu0 %v71
  %880 = vmatprep.subr.bf16.mxu0 0
  %881 = vmatpush1.bf16.msra.mxu0 0
  %882 = vmatprep.subr.bf16.mxu0 0
  %883 = vmatpush1.bf16.msra.mxu0 0
  %884 = vmatprep.subr.bf16.mxu0 0
  %885 = vmatpush1.bf16.msra.mxu0 0
  %886 = vmatprep.subr.bf16.mxu0 0
  %887 = vmatpush1.bf16.msra.mxu0 0
  %888 = vmatprep.subr.bf16.mxu0 0
  %889 = vmatpush1.bf16.msra.mxu0 0
  %890 = vmatprep.subr.bf16.mxu0 0
  %891 = vmatpush1.bf16.msra.mxu0 0
  %892 = vmatprep.subr.bf16.mxu0 0
  %893 = vmatpush1.bf16.msra.mxu0 0
  %894 = vmatprep.subr.bf16.mxu0 0
  %895 = vmatpush1.bf16.msra.mxu0 0
  %896 = vmatprep.subr.bf16.mxu0 0
  %897 = vmatpush1.bf16.msra.mxu0 0
  %898 = vmatprep.subr.bf16.mxu0 0
  %899 = vmatpush1.bf16.msra.mxu0 0
  %900 = vmatprep.subr.bf16.mxu0 0
  %901 = vmatpush1.bf16.msra.mxu0 0
  %902 = vmatprep.subr.bf16.mxu0 0
  %903 = vmatpush1.bf16.msra.mxu0 0
  %904 = vmatprep.subr.bf16.mxu0 0
  %905 = vmatpush1.bf16.msra.mxu0 0
  %906 = vmatprep.mubr.bf16.mxu0 0
  %907 = vmatmul.mubr.bf16.gmra.mrb[0].mxu0 %v869
  %v908 = vpop.f32.mrb[0].mxu0
  %v909 = vadd.f32 %v42, %v908
  %v910 = vpop.f32.mrb[0].mxu0
  %v911 = vpop.f32.mrb[0].mxu0
  %v912 = vadd.f32 %v42, %v911
  %v913 = vpop.f32.mrb[0].mxu0
  %914 = vmatprep.mubr.bf16.mxu0 0
  %915 = vmatmul.mubr.bf16.gmra.mrb[0].mxu0 %v872
  %v916 = vpop.f32.mrb[0].mxu0
  %v917 = vadd.f32 %v42, %v916
  %v918 = vpop.f32.mrb[0].mxu0
  %v919 = vpop.f32.mrb[0].mxu0
  %v920 = vadd.f32 %v42, %v919
  %v921 = vpop.f32.mrb[0].mxu0
  %922 = vdwg.mxu0
  %v923 = vmax.f32 %v909, 0.0
  %v924 = vmax.f32 %v912, 0.0
  %v925 = vmax.f32 %v917, 0.0
  %v926 = vmax.f32 %v920, 0.0
  %v927 = vpack.c.bf16 %v924, %v923
  %v928 = vpack.c.bf16 %v926, %v925
  %v930 = vsel %vm146, %v927, 0
  %v933 = vsel %vm146, %v928, 0
  %935 = vmatprep.subr.bf16.mxu0 0
  %936 = vmatpush1.bf16.msra.mxu0 %v142
  %937 = vmatprep.subr.bf16.mxu0 0
  %938 = vmatpush1.bf16.msra.mxu0 %v143
  %939 = vmatprep.subr.bf16.mxu0 0
  %940 = vmatpush1.bf16.msra.mxu0 0
  %941 = vmatprep.subr.bf16.mxu0 0
  %942 = vmatpush1.bf16.msra.mxu0 0
  %943 = vmatprep.subr.bf16.mxu0 0
  %944 = vmatpush1.bf16.msra.mxu0 0
  %945 = vmatprep.subr.bf16.mxu0 0
  %946 = vmatpush1.bf16.msra.mxu0 0
  %947 = vmatprep.subr.bf16.mxu0 0
  %948 = vmatpush1.bf16.msra.mxu0 0
  %949 = vmatprep.subr.bf16.mxu0 0
  %950 = vmatpush1.bf16.msra.mxu0 0
  %951 = vmatprep.subr.bf16.mxu0 0
  %952 = vmatpush1.bf16.msra.mxu0 0
  %953 = vmatprep.subr.bf16.mxu0 0
  %954 = vmatpush1.bf16.msra.mxu0 0
  %955 = vmatprep.subr.bf16.mxu0 0
  %956 = vmatpush1.bf16.msra.mxu0 0
  %957 = vmatprep.subr.bf16.mxu0 0
  %958 = vmatpush1.bf16.msra.mxu0 0
  %959 = vmatprep.subr.bf16.mxu0 0
  %960 = vmatpush1.bf16.msra.mxu0 0
  %961 = vmatprep.subr.bf16.mxu0 0
  %962 = vmatpush1.bf16.msra.mxu0 0
  %963 = vmatprep.subr.bf16.mxu0 0
  %964 = vmatpush1.bf16.msra.mxu0 0
  %965 = vmatprep.subr.bf16.mxu0 0
  %966 = vmatpush1.bf16.msra.mxu0 0
  %967 = vmatprep.mubr.bf16.mxu0 0
  %968 = vmatmul.mubr.bf16.gmra.mrb[0].mxu0 %v930
  %v969 = vpop.f32.mrb[0].mxu0
  %v970 = vadd.f32 %v132, %v969
  %v971 = vpop.f32.mrb[0].mxu0
  %v972 = vpop.f32.mrb[0].mxu0
  %v973 = vadd.f32 %v132, %v972
  %v974 = vpop.f32.mrb[0].mxu0
  %975 = vmatprep.mubr.bf16.mxu0 0
  %976 = vmatmul.mubr.bf16.gmra.mrb[0].mxu0 %v933
  %v977 = vpop.f32.mrb[0].mxu0
  %v978 = vadd.f32 %v132, %v977
  %v979 = vpop.f32.mrb[0].mxu0
  %v980 = vpop.f32.mrb[0].mxu0
  %v981 = vadd.f32 %v132, %v980
  %v982 = vpop.f32.mrb[0].mxu0
  %983 = vdwg.mxu0
  %v984 = vmax.f32 %v970, 0.0
  %v985 = vmax.f32 %v973, 0.0
  %v986 = vmax.f32 %v978, 0.0
  %v987 = vmax.f32 %v981, 0.0
  %v988 = vmax.f32 %v857, %v984
  %v989 = vmax.f32 %v858, %v985
  %v990 = vmax.f32 %v859, %v986
  %v991 = vmax.f32 %v860, %v987
  %s992 = scalar_lea.vmem %s0, 224
  %v993 = vld [vmem:[%s992] sm:$0xff]
  %v994 = vld [vmem:[%s992 + $0x8] sm:$0xff]
  %v995 = vld [vmem:[%s992 + $0x10] sm:$0xff]
  %v996 = vld [vmem:[%s992 + $0x18] sm:$0xff]
  %v997 = vpack.c.bf16 %v994, %v993
  %v998 = vpack.c.bf16 %v996, %v995
  %v1000 = vsel %vm59, %v997, 0
  %v1003 = vsel %vm59, %v998, 0
  %1005 = vmatprep.subr.bf16.mxu0 0
  %1006 = vmatpush1.bf16.msra.mxu0 %v54
  %1007 = vmatprep.subr.bf16.mxu0 0
  %1008 = vmatpush1.bf16.msra.mxu0 %v55
  %1009 = vmatprep.subr.bf16.mxu0 0
  %1010 = vmatpush1.bf16.msra.mxu0 %v71
  %1011 = vmatprep.subr.bf16.mxu0 0
  %1012 = vmatpush1.bf16.msra.mxu0 0
  %1013 = vmatprep.subr.bf16.mxu0 0
  %1014 = vmatpush1.bf16.msra.mxu0 0
  %1015 = vmatprep.subr.bf16.mxu0 0
  %1016 = vmatpush1.bf16.msra.mxu0 0
  %1017 = vmatprep.subr.bf16.mxu0 0
  %1018 = vmatpush1.bf16.msra.mxu0 0
  %1019 = vmatprep.subr.bf16.mxu0 0
  %1020 = vmatpush1.bf16.msra.mxu0 0
  %1021 = vmatprep.subr.bf16.mxu0 0
  %1022 = vmatpush1.bf16.msra.mxu0 0
  %1023 = vmatprep.subr.bf16.mxu0 0
  %1024 = vmatpush1.bf16.msra.mxu0 0
  %1025 = vmatprep.subr.bf16.mxu0 0
  %1026 = vmatpush1.bf16.msra.mxu0 0
  %1027 = vmatprep.subr.bf16.mxu0 0
  %1028 = vmatpush1.bf16.msra.mxu0 0
  %1029 = vmatprep.subr.bf16.mxu0 0
  %1030 = vmatpush1.bf16.msra.mxu0 0
  %1031 = vmatprep.subr.bf16.mxu0 0
  %1032 = vmatpush1.bf16.msra.mxu0 0
  %1033 = vmatprep.subr.bf16.mxu0 0
  %1034 = vmatpush1.bf16.msra.mxu0 0
  %1035 = vmatprep.subr.bf16.mxu0 0
  %1036 = vmatpush1.bf16.msra.mxu0 0
  %1037 = vmatprep.mubr.bf16.mxu0 0
  %1038 = vmatmul.mubr.bf16.gmra.mrb[0].mxu0 %v1000
  %v1039 = vpop.f32.mrb[0].mxu0
  %v1040 = vadd.f32 %v42, %v1039
  %v1041 = vpop.f32.mrb[0].mxu0
  %v1042 = vpop.f32.mrb[0].mxu0
  %v1043 = vadd.f32 %v42, %v1042
  %v1044 = vpop.f32.mrb[0].mxu0
  %1045 = vmatprep.mubr.bf16.mxu0 0
  %1046 = vmatmul.mubr.bf16.gmra.mrb[0].mxu0 %v1003
  %v1047 = vpop.f32.mrb[0].mxu0
  %v1048 = vadd.f32 %v42, %v1047
  %v1049 = vpop.f32.mrb[0].mxu0
  %v1050 = vpop.f32.mrb[0].mxu0
  %v1051 = vadd.f32 %v42, %v1050
  %v1052 = vpop.f32.mrb[0].mxu0
  %1053 = vdwg.mxu0
  %v1054 = vmax.f32 %v1040, 0.0
  %v1055 = vmax.f32 %v1043, 0.0
  %v1056 = vmax.f32 %v1048, 0.0
  %v1057 = vmax.f32 %v1051, 0.0
  %v1058 = vpack.c.bf16 %v1055, %v1054
  %v1059 = vpack.c.bf16 %v1057, %v1056
  %v1061 = vsel %vm146, %v1058, 0
  %v1064 = vsel %vm146, %v1059, 0
  %1066 = vmatprep.subr.bf16.mxu0 0
  %1067 = vmatpush1.bf16.msra.mxu0 %v142
  %1068 = vmatprep.subr.bf16.mxu0 0
  %1069 = vmatpush1.bf16.msra.mxu0 %v143
  %1070 = vmatprep.subr.bf16.mxu0 0
  %1071 = vmatpush1.bf16.msra.mxu0 0
  %1072 = vmatprep.subr.bf16.mxu0 0
  %1073 = vmatpush1.bf16.msra.mxu0 0
  %1074 = vmatprep.subr.bf16.mxu0 0
  %1075 = vmatpush1.bf16.msra.mxu0 0
  %1076 = vmatprep.subr.bf16.mxu0 0
  %1077 = vmatpush1.bf16.msra.mxu0 0
  %1078 = vmatprep.subr.bf16.mxu0 0
  %1079 = vmatpush1.bf16.msra.mxu0 0
  %1080 = vmatprep.subr.bf16.mxu0 0
  %1081 = vmatpush1.bf16.msra.mxu0 0
  %1082 = vmatprep.subr.bf16.mxu0 0
  %1083 = vmatpush1.bf16.msra.mxu0 0
  %1084 = vmatprep.subr.bf16.mxu0 0
  %1085 = vmatpush1.bf16.msra.mxu0 0
  %1086 = vmatprep.subr.bf16.mxu0 0
  %1087 = vmatpush1.bf16.msra.mxu0 0
  %1088 = vmatprep.subr.bf16.mxu0 0
  %1089 = vmatpush1.bf16.msra.mxu0 0
  %1090 = vmatprep.subr.bf16.mxu0 0
  %1091 = vmatpush1.bf16.msra.mxu0 0
  %1092 = vmatprep.subr.bf16.mxu0 0
  %1093 = vmatpush1.bf16.msra.mxu0 0
  %1094 = vmatprep.subr.bf16.mxu0 0
  %1095 = vmatpush1.bf16.msra.mxu0 0
  %1096 = vmatprep.subr.bf16.mxu0 0
  %1097 = vmatpush1.bf16.msra.mxu0 0
  %1098 = vmatprep.mubr.bf16.mxu0 0
  %1099 = vmatmul.mubr.bf16.gmra.mrb[0].mxu0 %v1061
  %v1100 = vpop.f32.mrb[0].mxu0
  %v1101 = vadd.f32 %v132, %v1100
  %v1102 = vpop.f32.mrb[0].mxu0
  %v1103 = vpop.f32.mrb[0].mxu0
  %v1104 = vadd.f32 %v132, %v1103
  %v1105 = vpop.f32.mrb[0].mxu0
  %1106 = vmatprep.mubr.bf16.mxu0 0
  %1107 = vmatmul.mubr.bf16.gmra.mrb[0].mxu0 %v1064
  %v1108 = vpop.f32.mrb[0].mxu0
  %v1109 = vadd.f32 %v132, %v1108
  %v1110 = vpop.f32.mrb[0].mxu0
  %v1111 = vpop.f32.mrb[0].mxu0
  %v1112 = vadd.f32 %v132, %v1111
  %v1113 = vpop.f32.mrb[0].mxu0
  %1114 = vdwg.mxu0
  %v1115 = vmax.f32 %v1101, 0.0
  %v1116 = vmax.f32 %v1104, 0.0
  %v1117 = vmax.f32 %v1109, 0.0
  %v1118 = vmax.f32 %v1112, 0.0
  %v1119 = vmax.f32 %v988, %v1115
  %v1120 = vmax.f32 %v989, %v1116
  %v1121 = vmax.f32 %v990, %v1117
  %v1122 = vmax.f32 %v991, %v1118
  %vm1123 = vcmask 523264
  %1124 = vst.msk [vmem:[%s5] sm:$0xff] %vm1123, %v1119
  %1125 = vst.msk [vmem:[%s5 + $0x8] sm:$0xff] %vm1123, %v1120
  %1126 = vst.msk [vmem:[%s5 + $0x10] sm:$0xff] %vm1123, %v1121
  %1127 = vst.msk [vmem:[%s5 + $0x18] sm:$0xff] %vm1123, %v1122
  // Predicated region
  $region22: #{pointnet_plus_semseg_forward.9} parent=0 // pred_check
    _
  $region23: #{pointnet_plus_semseg_forward.9} parent=0 // pred_check_branch
    %1129 = sbr.rel (0) target = $region25
  $region24: #{pointnet_plus_semseg_forward.9} parent=0 // pred_region
    _
  $region25: #{pointnet_plus_semseg_forward.9} parent=0 // pred_fallthru
    _
  // Predicated region
  $region26: #{pointnet_plus_semseg_forward.9} parent=0 // pred_check
    _
  $region27: #{pointnet_plus_semseg_forward.9} parent=0 // pred_check_branch
    %1131 = sbr.rel (0) target = $region29
  $region28: #{pointnet_plus_semseg_forward.9} parent=0 // pred_region
    _
  $region29: #{pointnet_plus_semseg_forward.9} parent=0 // pred_fallthru
    _

// kernel: custom-call.43
$region0: #{custom-call.43}
  %s0 = inlined_call_operand.vmem [shape: f32[2,8], index: 0, kind: output, shape index: {}]

// kernel: pointnet_plus_semseg_forward.10
$region0: #{pointnet_plus_semseg_forward.10}
  #allocation0 [shape = 'u32[]', space=smem, size = 0x4, offset = 0x4, fixed_abs, tag = 'smem constant byte address 0x4 - core index']
  #allocation1 [shape = 'u32[144,128]{1,0:T(1,128)}', space=vmem, size = 0x12000, scoped, tag = 'internal scratch']
  %s0 = inlined_call_operand.vmem [shape: f32[8,16,67], index: 0, kind: input, shape index: {}]
  %s1 = inlined_call_operand.vmem [shape: bf16[67,64], index: 1, kind: input, shape index: {}]
  %s2 = inlined_call_operand.vmem [shape: f32[1,64], index: 2, kind: input, shape index: {}]
  %s3 = inlined_call_operand.vmem [shape: bf16[64,128], index: 3, kind: input, shape index: {}]
  %s4 = inlined_call_operand.vmem [shape: f32[1,128], index: 4, kind: input, shape index: {}]
  %s5 = inlined_call_operand.vmem [shape: f32[16,128], index: 5, kind: output, shape index: {}]
  %s6 = sld [smem:[#allocation0]]
  $region30: #{pointnet_plus_semseg_forward.10} parent=0
    _
  %s8 = ssub.s32 1, %s6
  %s9 = scalar_select 0, %s8, %s6
  // Predicated region
  $region2: #{pointnet_plus_semseg_forward.10} parent=0 // pred_check
    _
  $region3: #{pointnet_plus_semseg_forward.10} parent=0 // pred_check_branch
    %11 = sbr.rel (0) target = $region5
  $region4: #{pointnet_plus_semseg_forward.10} parent=0 // pred_region
    _
  $region5: #{pointnet_plus_semseg_forward.10} parent=0 // pred_fallthru
    _
  // Predicated region
  $region6: #{pointnet_plus_semseg_forward.10} parent=0 // pred_check
    _
  $region7: #{pointnet_plus_semseg_forward.10} parent=0 // pred_check_branch
    %13 = sbr.rel (0) target = $region9
  $region8: #{pointnet_plus_semseg_forward.10} parent=0 // pred_region
    _
  $region9: #{pointnet_plus_semseg_forward.10} parent=0 // pred_fallthru
    _
  // Predicated region
  $region10: #{pointnet_plus_semseg_forward.10} parent=0 // pred_check
    _
  $region11: #{pointnet_plus_semseg_forward.10} parent=0 // pred_check_branch
    %15 = sbr.rel (0) target = $region13
  $region12: #{pointnet_plus_semseg_forward.10} parent=0 // pred_region
    _
  $region13: #{pointnet_plus_semseg_forward.10} parent=0 // pred_fallthru
    _
  // Predicated region
  $region14: #{pointnet_plus_semseg_forward.10} parent=0 // pred_check
    _
  $region15: #{pointnet_plus_semseg_forward.10} parent=0 // pred_check_branch
    %17 = sbr.rel (0) target = $region17
  $region16: #{pointnet_plus_semseg_forward.10} parent=0 // pred_region
    _
  $region17: #{pointnet_plus_semseg_forward.10} parent=0 // pred_fallthru
    _
  // Predicated region
  $region18: #{pointnet_plus_semseg_forward.10} parent=0 // pred_check
    _
  $region19: #{pointnet_plus_semseg_forward.10} parent=0 // pred_check_branch
    %19 = sbr.rel (0) target = $region21
  $region20: #{pointnet_plus_semseg_forward.10} parent=0 // pred_region
    _
  $region21: #{pointnet_plus_semseg_forward.10} parent=0 // pred_fallthru
    _
  %v21 = vld [vmem:[%s1] sm:$0xf]
  %v22 = vld [vmem:[%s1 + $0x4] sm:$0xf]
  %v23 = vld [vmem:[%s1 + $0x8] sm:$0xf]
  %v24 = vld [vmem:[%s1 + $0xc] sm:$0xf]
  %v25 = vld [vmem:[%s1 + $0x10] sm:$0xf]
  %v26 = vld [vmem:[%s1 + $0x14] sm:$0xf]
  %v27 = vld [vmem:[%s1 + $0x18] sm:$0xf]
  %v28 = vld [vmem:[%s1 + $0x1c] sm:$0xf]
  %v29 = vld [vmem:[%s1 + $0x20] sm:$0x3]
  %v30 = vld [vmem:[%s2] sm:$0x1]
  %v31 = vld [vmem:[%s3] sm:$0xf]
  %v32 = vld [vmem:[%s3 + $0x4] sm:$0xf]
  %v33 = vld [vmem:[%s3 + $0x8] sm:$0xf]
  %v34 = vld [vmem:[%s3 + $0xc] sm:$0xf]
  %v35 = vld [vmem:[%s3 + $0x10] sm:$0xf]
  %v36 = vld [vmem:[%s3 + $0x14] sm:$0xf]
  %v37 = vld [vmem:[%s3 + $0x18] sm:$0xf]
  %v38 = vld [vmem:[%s3 + $0x1c] sm:$0xf]
  %v39 = vld [vmem:[%s4] sm:$0x1]
  %v40 = vld [vmem:[%s0] sm:$0xff]
  %v41 = vld [vmem:[%s0 + $0x8] sm:$0xff]
  %v42 = vpack.c.bf16 %v41, %v40
  %v44 = vlaneseq
  %v45 = vshrl.u32 %v44, 7
  %v46 = vsub.s32 0, %v45
  %v47 = vrot.slane %v30, %v46
  %v58 = vunpack.c.l.b16 %v21
  %v59 = vunpack.c.l.b16 %v22
  %v60 = vunpack.c.l.b16 %v23
  %v61 = vunpack.c.l.b16 %v24
  %v62 = vunpack.c.l.b16 %v25
  %v63 = vunpack.c.l.b16 %v26
  %v64 = vunpack.c.l.b16 %v27
  %v65 = vunpack.c.l.b16 %v28
  %v66 = vunpack.c.l.b16 %v29
  %v67 = vpack.c.b16 %v59, %v58
  %v68 = vpack.c.b16 %v61, %v60
  %v69 = vpack.c.b16 %v63, %v62
  %v70 = vpack.c.b16 %v65, %v64
  %v71 = vpack.c.b16 %v66, %v66
  %vm76 = vcmask 547840
  %v78 = vsel %vm76, %v42, 0
  %vm80 = vcmask 1040384
  %vm81 = vcmask 1041408
  %v82 = vsel %vm80, 4294967295, 65535
  %v83 = vsel %vm81, %v82, 0
  %v85 = vand.u32 %v71, %v83
  %87 = vmatprep.subr.bf16.mxu0 0
  %88 = vmatpush1.bf16.msra.mxu0 %v67
  %89 = vmatprep.subr.bf16.mxu0 0
  %90 = vmatpush1.bf16.msra.mxu0 %v68
  %91 = vmatprep.subr.bf16.mxu0 0
  %92 = vmatpush1.bf16.msra.mxu0 %v69
  %93 = vmatprep.subr.bf16.mxu0 0
  %94 = vmatpush1.bf16.msra.mxu0 %v70
  %95 = vmatprep.subr.bf16.mxu0 0
  %96 = vmatpush1.bf16.msra.mxu0 %v85
  %97 = vmatprep.subr.bf16.mxu0 0
  %98 = vmatpush1.bf16.msra.mxu0 0
  %99 = vmatprep.subr.bf16.mxu0 0
  %100 = vmatpush1.bf16.msra.mxu0 0
  %101 = vmatprep.subr.bf16.mxu0 0
  %102 = vmatpush1.bf16.msra.mxu0 0
  %103 = vmatprep.subr.bf16.mxu0 0
  %104 = vmatpush1.bf16.msra.mxu0 0
  %105 = vmatprep.subr.bf16.mxu0 0
  %106 = vmatpush1.bf16.msra.mxu0 0
  %107 = vmatprep.subr.bf16.mxu0 0
  %108 = vmatpush1.bf16.msra.mxu0 0
  %109 = vmatprep.subr.bf16.mxu0 0
  %110 = vmatpush1.bf16.msra.mxu0 0
  %111 = vmatprep.subr.bf16.mxu0 0
  %112 = vmatpush1.bf16.msra.mxu0 0
  %113 = vmatprep.subr.bf16.mxu0 0
  %114 = vmatpush1.bf16.msra.mxu0 0
  %115 = vmatprep.subr.bf16.mxu0 0
  %116 = vmatpush1.bf16.msra.mxu0 0
  %117 = vmatprep.subr.bf16.mxu0 0
  %118 = vmatpush1.bf16.msra.mxu0 0
  %119 = vmatprep.mubr.bf16.mxu0 0
  %120 = vmatmul.mubr.bf16.gmra.mrb[0].mxu0 %v78
  %v121 = vpop.f32.mrb[0].mxu0
  %v122 = vadd.f32 %v47, %v121
  %v123 = vpop.f32.mrb[0].mxu0
  %v124 = vpop.f32.mrb[0].mxu0
  %v125 = vadd.f32 %v47, %v124
  %v126 = vpop.f32.mrb[0].mxu0
  %127 = vdwg.mxu0
  %v128 = vmax.f32 %v122, 0.0
  %v129 = vmax.f32 %v125, 0.0
  %v130 = vpack.c.bf16 %v129, %v128
  %v132 = vlaneseq
  %v133 = vshrl.u32 %v132, 7
  %v134 = vsub.s32 0, %v133
  %v135 = vrot.slane %v39, %v134
  %v145 = vunpack.c.l.b16 %v31
  %v146 = vunpack.c.l.b16 %v32
  %v147 = vunpack.c.l.b16 %v33
  %v148 = vunpack.c.l.b16 %v34
  %v149 = vunpack.c.l.b16 %v35
  %v150 = vunpack.c.l.b16 %v36
  %v151 = vunpack.c.l.b16 %v37
  %v152 = vunpack.c.l.b16 %v38
  %v153 = vpack.c.b16 %v146, %v145
  %v154 = vpack.c.b16 %v148, %v147
  %v155 = vpack.c.b16 %v150, %v149
  %v156 = vpack.c.b16 %v152, %v151
  %vm161 = vcmask 523264
  %v163 = vsel %vm161, %v130, 0
  %165 = vmatprep.subr.bf16.mxu0 0
  %166 = vmatpush1.bf16.msra.mxu0 %v153
  %167 = vmatprep.subr.bf16.mxu0 0
  %168 = vmatpush1.bf16.msra.mxu0 %v154
  %169 = vmatprep.subr.bf16.mxu0 0
  %170 = vmatpush1.bf16.msra.mxu0 %v155
  %171 = vmatprep.subr.bf16.mxu0 0
  %172 = vmatpush1.bf16.msra.mxu0 %v156
  %173 = vmatprep.subr.bf16.mxu0 0
  %174 = vmatpush1.bf16.msra.mxu0 0
  %175 = vmatprep.subr.bf16.mxu0 0
  %176 = vmatpush1.bf16.msra.mxu0 0
  %177 = vmatprep.subr.bf16.mxu0 0
  %178 = vmatpush1.bf16.msra.mxu0 0
  %179 = vmatprep.subr.bf16.mxu0 0
  %180 = vmatpush1.bf16.msra.mxu0 0
  %181 = vmatprep.subr.bf16.mxu0 0
  %182 = vmatpush1.bf16.msra.mxu0 0
  %183 = vmatprep.subr.bf16.mxu0 0
  %184 = vmatpush1.bf16.msra.mxu0 0
  %185 = vmatprep.subr.bf16.mxu0 0
  %186 = vmatpush1.bf16.msra.mxu0 0
  %187 = vmatprep.subr.bf16.mxu0 0
  %188 = vmatpush1.bf16.msra.mxu0 0
  %189 = vmatprep.subr.bf16.mxu0 0
  %190 = vmatpush1.bf16.msra.mxu0 0
  %191 = vmatprep.subr.bf16.mxu0 0
  %192 = vmatpush1.bf16.msra.mxu0 0
  %193 = vmatprep.subr.bf16.mxu0 0
  %194 = vmatpush1.bf16.msra.mxu0 0
  %195 = vmatprep.subr.bf16.mxu0 0
  %196 = vmatpush1.bf16.msra.mxu0 0
  %197 = vmatprep.mubr.bf16.mxu0 0
  %198 = vmatmul.mubr.bf16.gmra.mrb[0].mxu0 %v163
  %v199 = vpop.f32.mrb[0].mxu0
  %v200 = vadd.f32 %v135, %v199
  %v201 = vpop.f32.mrb[0].mxu0
  %v202 = vpop.f32.mrb[0].mxu0
  %v203 = vadd.f32 %v135, %v202
  %v204 = vpop.f32.mrb[0].mxu0
  %205 = vdwg.mxu0
  %v206 = vmax.f32 %v200, 0.0
  %v207 = vmax.f32 %v203, 0.0
  %s208 = scalar_lea.vmem %s0, 16
  %v209 = vld [vmem:[%s208] sm:$0xff]
  %v210 = vld [vmem:[%s208 + $0x8] sm:$0xff]
  %v211 = vpack.c.bf16 %v210, %v209
  %v213 = vsel %vm76, %v211, 0
  %215 = vmatprep.subr.bf16.mxu0 0
  %216 = vmatpush1.bf16.msra.mxu0 %v67
  %217 = vmatprep.subr.bf16.mxu0 0
  %218 = vmatpush1.bf16.msra.mxu0 %v68
  %219 = vmatprep.subr.bf16.mxu0 0
  %220 = vmatpush1.bf16.msra.mxu0 %v69
  %221 = vmatprep.subr.bf16.mxu0 0
  %222 = vmatpush1.bf16.msra.mxu0 %v70
  %223 = vmatprep.subr.bf16.mxu0 0
  %224 = vmatpush1.bf16.msra.mxu0 %v85
  %225 = vmatprep.subr.bf16.mxu0 0
  %226 = vmatpush1.bf16.msra.mxu0 0
  %227 = vmatprep.subr.bf16.mxu0 0
  %228 = vmatpush1.bf16.msra.mxu0 0
  %229 = vmatprep.subr.bf16.mxu0 0
  %230 = vmatpush1.bf16.msra.mxu0 0
  %231 = vmatprep.subr.bf16.mxu0 0
  %232 = vmatpush1.bf16.msra.mxu0 0
  %233 = vmatprep.subr.bf16.mxu0 0
  %234 = vmatpush1.bf16.msra.mxu0 0
  %235 = vmatprep.subr.bf16.mxu0 0
  %236 = vmatpush1.bf16.msra.mxu0 0
  %237 = vmatprep.subr.bf16.mxu0 0
  %238 = vmatpush1.bf16.msra.mxu0 0
  %239 = vmatprep.subr.bf16.mxu0 0
  %240 = vmatpush1.bf16.msra.mxu0 0
  %241 = vmatprep.subr.bf16.mxu0 0
  %242 = vmatpush1.bf16.msra.mxu0 0
  %243 = vmatprep.subr.bf16.mxu0 0
  %244 = vmatpush1.bf16.msra.mxu0 0
  %245 = vmatprep.subr.bf16.mxu0 0
  %246 = vmatpush1.bf16.msra.mxu0 0
  %247 = vmatprep.mubr.bf16.mxu0 0
  %248 = vmatmul.mubr.bf16.gmra.mrb[0].mxu0 %v213
  %v249 = vpop.f32.mrb[0].mxu0
  %v250 = vadd.f32 %v47, %v249
  %v251 = vpop.f32.mrb[0].mxu0
  %v252 = vpop.f32.mrb[0].mxu0
  %v253 = vadd.f32 %v47, %v252
  %v254 = vpop.f32.mrb[0].mxu0
  %255 = vdwg.mxu0
  %v256 = vmax.f32 %v250, 0.0
  %v257 = vmax.f32 %v253, 0.0
  %v258 = vpack.c.bf16 %v257, %v256
  %v260 = vsel %vm161, %v258, 0
  %262 = vmatprep.subr.bf16.mxu0 0
  %263 = vmatpush1.bf16.msra.mxu0 %v153
  %264 = vmatprep.subr.bf16.mxu0 0
  %265 = vmatpush1.bf16.msra.mxu0 %v154
  %266 = vmatprep.subr.bf16.mxu0 0
  %267 = vmatpush1.bf16.msra.mxu0 %v155
  %268 = vmatprep.subr.bf16.mxu0 0
  %269 = vmatpush1.bf16.msra.mxu0 %v156
  %270 = vmatprep.subr.bf16.mxu0 0
  %271 = vmatpush1.bf16.msra.mxu0 0
  %272 = vmatprep.subr.bf16.mxu0 0
  %273 = vmatpush1.bf16.msra.mxu0 0
  %274 = vmatprep.subr.bf16.mxu0 0
  %275 = vmatpush1.bf16.msra.mxu0 0
  %276 = vmatprep.subr.bf16.mxu0 0
  %277 = vmatpush1.bf16.msra.mxu0 0
  %278 = vmatprep.subr.bf16.mxu0 0
  %279 = vmatpush1.bf16.msra.mxu0 0
  %280 = vmatprep.subr.bf16.mxu0 0
  %281 = vmatpush1.bf16.msra.mxu0 0
  %282 = vmatprep.subr.bf16.mxu0 0
  %283 = vmatpush1.bf16.msra.mxu0 0
  %284 = vmatprep.subr.bf16.mxu0 0
  %285 = vmatpush1.bf16.msra.mxu0 0
  %286 = vmatprep.subr.bf16.mxu0 0
  %287 = vmatpush1.bf16.msra.mxu0 0
  %288 = vmatprep.subr.bf16.mxu0 0
  %289 = vmatpush1.bf16.msra.mxu0 0
  %290 = vmatprep.subr.bf16.mxu0 0
  %291 = vmatpush1.bf16.msra.mxu0 0
  %292 = vmatprep.subr.bf16.mxu0 0
  %293 = vmatpush1.bf16.msra.mxu0 0
  %294 = vmatprep.mubr.bf16.mxu0 0
  %295 = vmatmul.mubr.bf16.gmra.mrb[0].mxu0 %v260
  %v296 = vpop.f32.mrb[0].mxu0
  %v297 = vadd.f32 %v135, %v296
  %v298 = vpop.f32.mrb[0].mxu0
  %v299 = vpop.f32.mrb[0].mxu0
  %v300 = vadd.f32 %v135, %v299
  %v301 = vpop.f32.mrb[0].mxu0
  %302 = vdwg.mxu0
  %v303 = vmax.f32 %v297, 0.0
  %v304 = vmax.f32 %v300, 0.0
  %v305 = vmax.f32 %v206, %v303
  %v306 = vmax.f32 %v207, %v304
  %s307 = scalar_lea.vmem %s0, 32
  %v308 = vld [vmem:[%s307] sm:$0xff]
  %v309 = vld [vmem:[%s307 + $0x8] sm:$0xff]
  %v310 = vpack.c.bf16 %v309, %v308
  %v312 = vsel %vm76, %v310, 0
  %314 = vmatprep.subr.bf16.mxu0 0
  %315 = vmatpush1.bf16.msra.mxu0 %v67
  %316 = vmatprep.subr.bf16.mxu0 0
  %317 = vmatpush1.bf16.msra.mxu0 %v68
  %318 = vmatprep.subr.bf16.mxu0 0
  %319 = vmatpush1.bf16.msra.mxu0 %v69
  %320 = vmatprep.subr.bf16.mxu0 0
  %321 = vmatpush1.bf16.msra.mxu0 %v70
  %322 = vmatprep.subr.bf16.mxu0 0
  %323 = vmatpush1.bf16.msra.mxu0 %v85
  %324 = vmatprep.subr.bf16.mxu0 0
  %325 = vmatpush1.bf16.msra.mxu0 0
  %326 = vmatprep.subr.bf16.mxu0 0
  %327 = vmatpush1.bf16.msra.mxu0 0
  %328 = vmatprep.subr.bf16.mxu0 0
  %329 = vmatpush1.bf16.msra.mxu0 0
  %330 = vmatprep.subr.bf16.mxu0 0
  %331 = vmatpush1.bf16.msra.mxu0 0
  %332 = vmatprep.subr.bf16.mxu0 0
  %333 = vmatpush1.bf16.msra.mxu0 0
  %334 = vmatprep.subr.bf16.mxu0 0
  %335 = vmatpush1.bf16.msra.mxu0 0
  %336 = vmatprep.subr.bf16.mxu0 0
  %337 = vmatpush1.bf16.msra.mxu0 0
  %338 = vmatprep.subr.bf16.mxu0 0
  %339 = vmatpush1.bf16.msra.mxu0 0
  %340 = vmatprep.subr.bf16.mxu0 0
  %341 = vmatpush1.bf16.msra.mxu0 0
  %342 = vmatprep.subr.bf16.mxu0 0
  %343 = vmatpush1.bf16.msra.mxu0 0
  %344 = vmatprep.subr.bf16.mxu0 0
  %345 = vmatpush1.bf16.msra.mxu0 0
  %346 = vmatprep.mubr.bf16.mxu0 0
  %347 = vmatmul.mubr.bf16.gmra.mrb[0].mxu0 %v312
  %v348 = vpop.f32.mrb[0].mxu0
  %v349 = vadd.f32 %v47, %v348
  %v350 = vpop.f32.mrb[0].mxu0
  %v351 = vpop.f32.mrb[0].mxu0
  %v352 = vadd.f32 %v47, %v351
  %v353 = vpop.f32.mrb[0].mxu0
  %354 = vdwg.mxu0
  %v355 = vmax.f32 %v349, 0.0
  %v356 = vmax.f32 %v352, 0.0
  %v357 = vpack.c.bf16 %v356, %v355
  %v359 = vsel %vm161, %v357, 0
  %361 = vmatprep.subr.bf16.mxu0 0
  %362 = vmatpush1.bf16.msra.mxu0 %v153
  %363 = vmatprep.subr.bf16.mxu0 0
  %364 = vmatpush1.bf16.msra.mxu0 %v154
  %365 = vmatprep.subr.bf16.mxu0 0
  %366 = vmatpush1.bf16.msra.mxu0 %v155
  %367 = vmatprep.subr.bf16.mxu0 0
  %368 = vmatpush1.bf16.msra.mxu0 %v156
  %369 = vmatprep.subr.bf16.mxu0 0
  %370 = vmatpush1.bf16.msra.mxu0 0
  %371 = vmatprep.subr.bf16.mxu0 0
  %372 = vmatpush1.bf16.msra.mxu0 0
  %373 = vmatprep.subr.bf16.mxu0 0
  %374 = vmatpush1.bf16.msra.mxu0 0
  %375 = vmatprep.subr.bf16.mxu0 0
  %376 = vmatpush1.bf16.msra.mxu0 0
  %377 = vmatprep.subr.bf16.mxu0 0
  %378 = vmatpush1.bf16.msra.mxu0 0
  %379 = vmatprep.subr.bf16.mxu0 0
  %380 = vmatpush1.bf16.msra.mxu0 0
  %381 = vmatprep.subr.bf16.mxu0 0
  %382 = vmatpush1.bf16.msra.mxu0 0
  %383 = vmatprep.subr.bf16.mxu0 0
  %384 = vmatpush1.bf16.msra.mxu0 0
  %385 = vmatprep.subr.bf16.mxu0 0
  %386 = vmatpush1.bf16.msra.mxu0 0
  %387 = vmatprep.subr.bf16.mxu0 0
  %388 = vmatpush1.bf16.msra.mxu0 0
  %389 = vmatprep.subr.bf16.mxu0 0
  %390 = vmatpush1.bf16.msra.mxu0 0
  %391 = vmatprep.subr.bf16.mxu0 0
  %392 = vmatpush1.bf16.msra.mxu0 0
  %393 = vmatprep.mubr.bf16.mxu0 0
  %394 = vmatmul.mubr.bf16.gmra.mrb[0].mxu0 %v359
  %v395 = vpop.f32.mrb[0].mxu0
  %v396 = vadd.f32 %v135, %v395
  %v397 = vpop.f32.mrb[0].mxu0
  %v398 = vpop.f32.mrb[0].mxu0
  %v399 = vadd.f32 %v135, %v398
  %v400 = vpop.f32.mrb[0].mxu0
  %401 = vdwg.mxu0
  %v402 = vmax.f32 %v396, 0.0
  %v403 = vmax.f32 %v399, 0.0
  %v404 = vmax.f32 %v305, %v402
  %v405 = vmax.f32 %v306, %v403
  %s406 = scalar_lea.vmem %s0, 48
  %v407 = vld [vmem:[%s406] sm:$0xff]
  %v408 = vld [vmem:[%s406 + $0x8] sm:$0xff]
  %v409 = vpack.c.bf16 %v408, %v407
  %v411 = vsel %vm76, %v409, 0
  %413 = vmatprep.subr.bf16.mxu0 0
  %414 = vmatpush1.bf16.msra.mxu0 %v67
  %415 = vmatprep.subr.bf16.mxu0 0
  %416 = vmatpush1.bf16.msra.mxu0 %v68
  %417 = vmatprep.subr.bf16.mxu0 0
  %418 = vmatpush1.bf16.msra.mxu0 %v69
  %419 = vmatprep.subr.bf16.mxu0 0
  %420 = vmatpush1.bf16.msra.mxu0 %v70
  %421 = vmatprep.subr.bf16.mxu0 0
  %422 = vmatpush1.bf16.msra.mxu0 %v85
  %423 = vmatprep.subr.bf16.mxu0 0
  %424 = vmatpush1.bf16.msra.mxu0 0
  %425 = vmatprep.subr.bf16.mxu0 0
  %426 = vmatpush1.bf16.msra.mxu0 0
  %427 = vmatprep.subr.bf16.mxu0 0
  %428 = vmatpush1.bf16.msra.mxu0 0
  %429 = vmatprep.subr.bf16.mxu0 0
  %430 = vmatpush1.bf16.msra.mxu0 0
  %431 = vmatprep.subr.bf16.mxu0 0
  %432 = vmatpush1.bf16.msra.mxu0 0
  %433 = vmatprep.subr.bf16.mxu0 0
  %434 = vmatpush1.bf16.msra.mxu0 0
  %435 = vmatprep.subr.bf16.mxu0 0
  %436 = vmatpush1.bf16.msra.mxu0 0
  %437 = vmatprep.subr.bf16.mxu0 0
  %438 = vmatpush1.bf16.msra.mxu0 0
  %439 = vmatprep.subr.bf16.mxu0 0
  %440 = vmatpush1.bf16.msra.mxu0 0
  %441 = vmatprep.subr.bf16.mxu0 0
  %442 = vmatpush1.bf16.msra.mxu0 0
  %443 = vmatprep.subr.bf16.mxu0 0
  %444 = vmatpush1.bf16.msra.mxu0 0
  %445 = vmatprep.mubr.bf16.mxu0 0
  %446 = vmatmul.mubr.bf16.gmra.mrb[0].mxu0 %v411
  %v447 = vpop.f32.mrb[0].mxu0
  %v448 = vadd.f32 %v47, %v447
  %v449 = vpop.f32.mrb[0].mxu0
  %v450 = vpop.f32.mrb[0].mxu0
  %v451 = vadd.f32 %v47, %v450
  %v452 = vpop.f32.mrb[0].mxu0
  %453 = vdwg.mxu0
  %v454 = vmax.f32 %v448, 0.0
  %v455 = vmax.f32 %v451, 0.0
  %v456 = vpack.c.bf16 %v455, %v454
  %v458 = vsel %vm161, %v456, 0
  %460 = vmatprep.subr.bf16.mxu0 0
  %461 = vmatpush1.bf16.msra.mxu0 %v153
  %462 = vmatprep.subr.bf16.mxu0 0
  %463 = vmatpush1.bf16.msra.mxu0 %v154
  %464 = vmatprep.subr.bf16.mxu0 0
  %465 = vmatpush1.bf16.msra.mxu0 %v155
  %466 = vmatprep.subr.bf16.mxu0 0
  %467 = vmatpush1.bf16.msra.mxu0 %v156
  %468 = vmatprep.subr.bf16.mxu0 0
  %469 = vmatpush1.bf16.msra.mxu0 0
  %470 = vmatprep.subr.bf16.mxu0 0
  %471 = vmatpush1.bf16.msra.mxu0 0
  %472 = vmatprep.subr.bf16.mxu0 0
  %473 = vmatpush1.bf16.msra.mxu0 0
  %474 = vmatprep.subr.bf16.mxu0 0
  %475 = vmatpush1.bf16.msra.mxu0 0
  %476 = vmatprep.subr.bf16.mxu0 0
  %477 = vmatpush1.bf16.msra.mxu0 0
  %478 = vmatprep.subr.bf16.mxu0 0
  %479 = vmatpush1.bf16.msra.mxu0 0
  %480 = vmatprep.subr.bf16.mxu0 0
  %481 = vmatpush1.bf16.msra.mxu0 0
  %482 = vmatprep.subr.bf16.mxu0 0
  %483 = vmatpush1.bf16.msra.mxu0 0
  %484 = vmatprep.subr.bf16.mxu0 0
  %485 = vmatpush1.bf16.msra.mxu0 0
  %486 = vmatprep.subr.bf16.mxu0 0
  %487 = vmatpush1.bf16.msra.mxu0 0
  %488 = vmatprep.subr.bf16.mxu0 0
  %489 = vmatpush1.bf16.msra.mxu0 0
  %490 = vmatprep.subr.bf16.mxu0 0
  %491 = vmatpush1.bf16.msra.mxu0 0
  %492 = vmatprep.mubr.bf16.mxu0 0
  %493 = vmatmul.mubr.bf16.gmra.mrb[0].mxu0 %v458
  %v494 = vpop.f32.mrb[0].mxu0
  %v495 = vadd.f32 %v135, %v494
  %v496 = vpop.f32.mrb[0].mxu0
  %v497 = vpop.f32.mrb[0].mxu0
  %v498 = vadd.f32 %v135, %v497
  %v499 = vpop.f32.mrb[0].mxu0
  %500 = vdwg.mxu0
  %v501 = vmax.f32 %v495, 0.0
  %v502 = vmax.f32 %v498, 0.0
  %v503 = vmax.f32 %v404, %v501
  %v504 = vmax.f32 %v405, %v502
  %s505 = scalar_lea.vmem %s0, 64
  %v506 = vld [vmem:[%s505] sm:$0xff]
  %v507 = vld [vmem:[%s505 + $0x8] sm:$0xff]
  %v508 = vpack.c.bf16 %v507, %v506
  %v510 = vsel %vm76, %v508, 0
  %512 = vmatprep.subr.bf16.mxu0 0
  %513 = vmatpush1.bf16.msra.mxu0 %v67
  %514 = vmatprep.subr.bf16.mxu0 0
  %515 = vmatpush1.bf16.msra.mxu0 %v68
  %516 = vmatprep.subr.bf16.mxu0 0
  %517 = vmatpush1.bf16.msra.mxu0 %v69
  %518 = vmatprep.subr.bf16.mxu0 0
  %519 = vmatpush1.bf16.msra.mxu0 %v70
  %520 = vmatprep.subr.bf16.mxu0 0
  %521 = vmatpush1.bf16.msra.mxu0 %v85
  %522 = vmatprep.subr.bf16.mxu0 0
  %523 = vmatpush1.bf16.msra.mxu0 0
  %524 = vmatprep.subr.bf16.mxu0 0
  %525 = vmatpush1.bf16.msra.mxu0 0
  %526 = vmatprep.subr.bf16.mxu0 0
  %527 = vmatpush1.bf16.msra.mxu0 0
  %528 = vmatprep.subr.bf16.mxu0 0
  %529 = vmatpush1.bf16.msra.mxu0 0
  %530 = vmatprep.subr.bf16.mxu0 0
  %531 = vmatpush1.bf16.msra.mxu0 0
  %532 = vmatprep.subr.bf16.mxu0 0
  %533 = vmatpush1.bf16.msra.mxu0 0
  %534 = vmatprep.subr.bf16.mxu0 0
  %535 = vmatpush1.bf16.msra.mxu0 0
  %536 = vmatprep.subr.bf16.mxu0 0
  %537 = vmatpush1.bf16.msra.mxu0 0
  %538 = vmatprep.subr.bf16.mxu0 0
  %539 = vmatpush1.bf16.msra.mxu0 0
  %540 = vmatprep.subr.bf16.mxu0 0
  %541 = vmatpush1.bf16.msra.mxu0 0
  %542 = vmatprep.subr.bf16.mxu0 0
  %543 = vmatpush1.bf16.msra.mxu0 0
  %544 = vmatprep.mubr.bf16.mxu0 0
  %545 = vmatmul.mubr.bf16.gmra.mrb[0].mxu0 %v510
  %v546 = vpop.f32.mrb[0].mxu0
  %v547 = vadd.f32 %v47, %v546
  %v548 = vpop.f32.mrb[0].mxu0
  %v549 = vpop.f32.mrb[0].mxu0
  %v550 = vadd.f32 %v47, %v549
  %v551 = vpop.f32.mrb[0].mxu0
  %552 = vdwg.mxu0
  %v553 = vmax.f32 %v547, 0.0
  %v554 = vmax.f32 %v550, 0.0
  %v555 = vpack.c.bf16 %v554, %v553
  %v557 = vsel %vm161, %v555, 0
  %559 = vmatprep.subr.bf16.mxu0 0
  %560 = vmatpush1.bf16.msra.mxu0 %v153
  %561 = vmatprep.subr.bf16.mxu0 0
  %562 = vmatpush1.bf16.msra.mxu0 %v154
  %563 = vmatprep.subr.bf16.mxu0 0
  %564 = vmatpush1.bf16.msra.mxu0 %v155
  %565 = vmatprep.subr.bf16.mxu0 0
  %566 = vmatpush1.bf16.msra.mxu0 %v156
  %567 = vmatprep.subr.bf16.mxu0 0
  %568 = vmatpush1.bf16.msra.mxu0 0
  %569 = vmatprep.subr.bf16.mxu0 0
  %570 = vmatpush1.bf16.msra.mxu0 0
  %571 = vmatprep.subr.bf16.mxu0 0
  %572 = vmatpush1.bf16.msra.mxu0 0
  %573 = vmatprep.subr.bf16.mxu0 0
  %574 = vmatpush1.bf16.msra.mxu0 0
  %575 = vmatprep.subr.bf16.mxu0 0
  %576 = vmatpush1.bf16.msra.mxu0 0
  %577 = vmatprep.subr.bf16.mxu0 0
  %578 = vmatpush1.bf16.msra.mxu0 0
  %579 = vmatprep.subr.bf16.mxu0 0
  %580 = vmatpush1.bf16.msra.mxu0 0
  %581 = vmatprep.subr.bf16.mxu0 0
  %582 = vmatpush1.bf16.msra.mxu0 0
  %583 = vmatprep.subr.bf16.mxu0 0
  %584 = vmatpush1.bf16.msra.mxu0 0
  %585 = vmatprep.subr.bf16.mxu0 0
  %586 = vmatpush1.bf16.msra.mxu0 0
  %587 = vmatprep.subr.bf16.mxu0 0
  %588 = vmatpush1.bf16.msra.mxu0 0
  %589 = vmatprep.subr.bf16.mxu0 0
  %590 = vmatpush1.bf16.msra.mxu0 0
  %591 = vmatprep.mubr.bf16.mxu0 0
  %592 = vmatmul.mubr.bf16.gmra.mrb[0].mxu0 %v557
  %v593 = vpop.f32.mrb[0].mxu0
  %v594 = vadd.f32 %v135, %v593
  %v595 = vpop.f32.mrb[0].mxu0
  %v596 = vpop.f32.mrb[0].mxu0
  %v597 = vadd.f32 %v135, %v596
  %v598 = vpop.f32.mrb[0].mxu0
  %599 = vdwg.mxu0
  %v600 = vmax.f32 %v594, 0.0
  %v601 = vmax.f32 %v597, 0.0
  %v602 = vmax.f32 %v503, %v600
  %v603 = vmax.f32 %v504, %v601
  %s604 = scalar_lea.vmem %s0, 80
  %v605 = vld [vmem:[%s604] sm:$0xff]
  %v606 = vld [vmem:[%s604 + $0x8] sm:$0xff]
  %v607 = vpack.c.bf16 %v606, %v605
  %v609 = vsel %vm76, %v607, 0
  %611 = vmatprep.subr.bf16.mxu0 0
  %612 = vmatpush1.bf16.msra.mxu0 %v67
  %613 = vmatprep.subr.bf16.mxu0 0
  %614 = vmatpush1.bf16.msra.mxu0 %v68
  %615 = vmatprep.subr.bf16.mxu0 0
  %616 = vmatpush1.bf16.msra.mxu0 %v69
  %617 = vmatprep.subr.bf16.mxu0 0
  %618 = vmatpush1.bf16.msra.mxu0 %v70
  %619 = vmatprep.subr.bf16.mxu0 0
  %620 = vmatpush1.bf16.msra.mxu0 %v85
  %621 = vmatprep.subr.bf16.mxu0 0
  %622 = vmatpush1.bf16.msra.mxu0 0
  %623 = vmatprep.subr.bf16.mxu0 0
  %624 = vmatpush1.bf16.msra.mxu0 0
  %625 = vmatprep.subr.bf16.mxu0 0
  %626 = vmatpush1.bf16.msra.mxu0 0
  %627 = vmatprep.subr.bf16.mxu0 0
  %628 = vmatpush1.bf16.msra.mxu0 0
  %629 = vmatprep.subr.bf16.mxu0 0
  %630 = vmatpush1.bf16.msra.mxu0 0
  %631 = vmatprep.subr.bf16.mxu0 0
  %632 = vmatpush1.bf16.msra.mxu0 0
  %633 = vmatprep.subr.bf16.mxu0 0
  %634 = vmatpush1.bf16.msra.mxu0 0
  %635 = vmatprep.subr.bf16.mxu0 0
  %636 = vmatpush1.bf16.msra.mxu0 0
  %637 = vmatprep.subr.bf16.mxu0 0
  %638 = vmatpush1.bf16.msra.mxu0 0
  %639 = vmatprep.subr.bf16.mxu0 0
  %640 = vmatpush1.bf16.msra.mxu0 0
  %641 = vmatprep.subr.bf16.mxu0 0
  %642 = vmatpush1.bf16.msra.mxu0 0
  %643 = vmatprep.mubr.bf16.mxu0 0
  %644 = vmatmul.mubr.bf16.gmra.mrb[0].mxu0 %v609
  %v645 = vpop.f32.mrb[0].mxu0
  %v646 = vadd.f32 %v47, %v645
  %v647 = vpop.f32.mrb[0].mxu0
  %v648 = vpop.f32.mrb[0].mxu0
  %v649 = vadd.f32 %v47, %v648
  %v650 = vpop.f32.mrb[0].mxu0
  %651 = vdwg.mxu0
  %v652 = vmax.f32 %v646, 0.0
  %v653 = vmax.f32 %v649, 0.0
  %v654 = vpack.c.bf16 %v653, %v652
  %v656 = vsel %vm161, %v654, 0
  %658 = vmatprep.subr.bf16.mxu0 0
  %659 = vmatpush1.bf16.msra.mxu0 %v153
  %660 = vmatprep.subr.bf16.mxu0 0
  %661 = vmatpush1.bf16.msra.mxu0 %v154
  %662 = vmatprep.subr.bf16.mxu0 0
  %663 = vmatpush1.bf16.msra.mxu0 %v155
  %664 = vmatprep.subr.bf16.mxu0 0
  %665 = vmatpush1.bf16.msra.mxu0 %v156
  %666 = vmatprep.subr.bf16.mxu0 0
  %667 = vmatpush1.bf16.msra.mxu0 0
  %668 = vmatprep.subr.bf16.mxu0 0
  %669 = vmatpush1.bf16.msra.mxu0 0
  %670 = vmatprep.subr.bf16.mxu0 0
  %671 = vmatpush1.bf16.msra.mxu0 0
  %672 = vmatprep.subr.bf16.mxu0 0
  %673 = vmatpush1.bf16.msra.mxu0 0
  %674 = vmatprep.subr.bf16.mxu0 0
  %675 = vmatpush1.bf16.msra.mxu0 0
  %676 = vmatprep.subr.bf16.mxu0 0
  %677 = vmatpush1.bf16.msra.mxu0 0
  %678 = vmatprep.subr.bf16.mxu0 0
  %679 = vmatpush1.bf16.msra.mxu0 0
  %680 = vmatprep.subr.bf16.mxu0 0
  %681 = vmatpush1.bf16.msra.mxu0 0
  %682 = vmatprep.subr.bf16.mxu0 0
  %683 = vmatpush1.bf16.msra.mxu0 0
  %684 = vmatprep.subr.bf16.mxu0 0
  %685 = vmatpush1.bf16.msra.mxu0 0
  %686 = vmatprep.subr.bf16.mxu0 0
  %687 = vmatpush1.bf16.msra.mxu0 0
  %688 = vmatprep.subr.bf16.mxu0 0
  %689 = vmatpush1.bf16.msra.mxu0 0
  %690 = vmatprep.mubr.bf16.mxu0 0
  %691 = vmatmul.mubr.bf16.gmra.mrb[0].mxu0 %v656
  %v692 = vpop.f32.mrb[0].mxu0
  %v693 = vadd.f32 %v135, %v692
  %v694 = vpop.f32.mrb[0].mxu0
  %v695 = vpop.f32.mrb[0].mxu0
  %v696 = vadd.f32 %v135, %v695
  %v697 = vpop.f32.mrb[0].mxu0
  %698 = vdwg.mxu0
  %v699 = vmax.f32 %v693, 0.0
  %v700 = vmax.f32 %v696, 0.0
  %v701 = vmax.f32 %v602, %v699
  %v702 = vmax.f32 %v603, %v700
  %s703 = scalar_lea.vmem %s0, 96
  %v704 = vld [vmem:[%s703] sm:$0xff]
  %v705 = vld [vmem:[%s703 + $0x8] sm:$0xff]
  %v706 = vpack.c.bf16 %v705, %v704
  %v708 = vsel %vm76, %v706, 0
  %710 = vmatprep.subr.bf16.mxu0 0
  %711 = vmatpush1.bf16.msra.mxu0 %v67
  %712 = vmatprep.subr.bf16.mxu0 0
  %713 = vmatpush1.bf16.msra.mxu0 %v68
  %714 = vmatprep.subr.bf16.mxu0 0
  %715 = vmatpush1.bf16.msra.mxu0 %v69
  %716 = vmatprep.subr.bf16.mxu0 0
  %717 = vmatpush1.bf16.msra.mxu0 %v70
  %718 = vmatprep.subr.bf16.mxu0 0
  %719 = vmatpush1.bf16.msra.mxu0 %v85
  %720 = vmatprep.subr.bf16.mxu0 0
  %721 = vmatpush1.bf16.msra.mxu0 0
  %722 = vmatprep.subr.bf16.mxu0 0
  %723 = vmatpush1.bf16.msra.mxu0 0
  %724 = vmatprep.subr.bf16.mxu0 0
  %725 = vmatpush1.bf16.msra.mxu0 0
  %726 = vmatprep.subr.bf16.mxu0 0
  %727 = vmatpush1.bf16.msra.mxu0 0
  %728 = vmatprep.subr.bf16.mxu0 0
  %729 = vmatpush1.bf16.msra.mxu0 0
  %730 = vmatprep.subr.bf16.mxu0 0
  %731 = vmatpush1.bf16.msra.mxu0 0
  %732 = vmatprep.subr.bf16.mxu0 0
  %733 = vmatpush1.bf16.msra.mxu0 0
  %734 = vmatprep.subr.bf16.mxu0 0
  %735 = vmatpush1.bf16.msra.mxu0 0
  %736 = vmatprep.subr.bf16.mxu0 0
  %737 = vmatpush1.bf16.msra.mxu0 0
  %738 = vmatprep.subr.bf16.mxu0 0
  %739 = vmatpush1.bf16.msra.mxu0 0
  %740 = vmatprep.subr.bf16.mxu0 0
  %741 = vmatpush1.bf16.msra.mxu0 0
  %742 = vmatprep.mubr.bf16.mxu0 0
  %743 = vmatmul.mubr.bf16.gmra.mrb[0].mxu0 %v708
  %v744 = vpop.f32.mrb[0].mxu0
  %v745 = vadd.f32 %v47, %v744
  %v746 = vpop.f32.mrb[0].mxu0
  %v747 = vpop.f32.mrb[0].mxu0
  %v748 = vadd.f32 %v47, %v747
  %v749 = vpop.f32.mrb[0].mxu0
  %750 = vdwg.mxu0
  %v751 = vmax.f32 %v745, 0.0
  %v752 = vmax.f32 %v748, 0.0
  %v753 = vpack.c.bf16 %v752, %v751
  %v755 = vsel %vm161, %v753, 0
  %757 = vmatprep.subr.bf16.mxu0 0
  %758 = vmatpush1.bf16.msra.mxu0 %v153
  %759 = vmatprep.subr.bf16.mxu0 0
  %760 = vmatpush1.bf16.msra.mxu0 %v154
  %761 = vmatprep.subr.bf16.mxu0 0
  %762 = vmatpush1.bf16.msra.mxu0 %v155
  %763 = vmatprep.subr.bf16.mxu0 0
  %764 = vmatpush1.bf16.msra.mxu0 %v156
  %765 = vmatprep.subr.bf16.mxu0 0
  %766 = vmatpush1.bf16.msra.mxu0 0
  %767 = vmatprep.subr.bf16.mxu0 0
  %768 = vmatpush1.bf16.msra.mxu0 0
  %769 = vmatprep.subr.bf16.mxu0 0
  %770 = vmatpush1.bf16.msra.mxu0 0
  %771 = vmatprep.subr.bf16.mxu0 0
  %772 = vmatpush1.bf16.msra.mxu0 0
  %773 = vmatprep.subr.bf16.mxu0 0
  %774 = vmatpush1.bf16.msra.mxu0 0
  %775 = vmatprep.subr.bf16.mxu0 0
  %776 = vmatpush1.bf16.msra.mxu0 0
  %777 = vmatprep.subr.bf16.mxu0 0
  %778 = vmatpush1.bf16.msra.mxu0 0
  %779 = vmatprep.subr.bf16.mxu0 0
  %780 = vmatpush1.bf16.msra.mxu0 0
  %781 = vmatprep.subr.bf16.mxu0 0
  %782 = vmatpush1.bf16.msra.mxu0 0
  %783 = vmatprep.subr.bf16.mxu0 0
  %784 = vmatpush1.bf16.msra.mxu0 0
  %785 = vmatprep.subr.bf16.mxu0 0
  %786 = vmatpush1.bf16.msra.mxu0 0
  %787 = vmatprep.subr.bf16.mxu0 0
  %788 = vmatpush1.bf16.msra.mxu0 0
  %789 = vmatprep.mubr.bf16.mxu0 0
  %790 = vmatmul.mubr.bf16.gmra.mrb[0].mxu0 %v755
  %v791 = vpop.f32.mrb[0].mxu0
  %v792 = vadd.f32 %v135, %v791
  %v793 = vpop.f32.mrb[0].mxu0
  %v794 = vpop.f32.mrb[0].mxu0
  %v795 = vadd.f32 %v135, %v794
  %v796 = vpop.f32.mrb[0].mxu0
  %797 = vdwg.mxu0
  %v798 = vmax.f32 %v792, 0.0
  %v799 = vmax.f32 %v795, 0.0
  %v800 = vmax.f32 %v701, %v798
  %v801 = vmax.f32 %v702, %v799
  %s802 = scalar_lea.vmem %s0, 112
  %v803 = vld [vmem:[%s802] sm:$0xff]
  %v804 = vld [vmem:[%s802 + $0x8] sm:$0xff]
  %v805 = vpack.c.bf16 %v804, %v803
  %v807 = vsel %vm76, %v805, 0
  %809 = vmatprep.subr.bf16.mxu0 0
  %810 = vmatpush1.bf16.msra.mxu0 %v67
  %811 = vmatprep.subr.bf16.mxu0 0
  %812 = vmatpush1.bf16.msra.mxu0 %v68
  %813 = vmatprep.subr.bf16.mxu0 0
  %814 = vmatpush1.bf16.msra.mxu0 %v69
  %815 = vmatprep.subr.bf16.mxu0 0
  %816 = vmatpush1.bf16.msra.mxu0 %v70
  %817 = vmatprep.subr.bf16.mxu0 0
  %818 = vmatpush1.bf16.msra.mxu0 %v85
  %819 = vmatprep.subr.bf16.mxu0 0
  %820 = vmatpush1.bf16.msra.mxu0 0
  %821 = vmatprep.subr.bf16.mxu0 0
  %822 = vmatpush1.bf16.msra.mxu0 0
  %823 = vmatprep.subr.bf16.mxu0 0
  %824 = vmatpush1.bf16.msra.mxu0 0
  %825 = vmatprep.subr.bf16.mxu0 0
  %826 = vmatpush1.bf16.msra.mxu0 0
  %827 = vmatprep.subr.bf16.mxu0 0
  %828 = vmatpush1.bf16.msra.mxu0 0
  %829 = vmatprep.subr.bf16.mxu0 0
  %830 = vmatpush1.bf16.msra.mxu0 0
  %831 = vmatprep.subr.bf16.mxu0 0
  %832 = vmatpush1.bf16.msra.mxu0 0
  %833 = vmatprep.subr.bf16.mxu0 0
  %834 = vmatpush1.bf16.msra.mxu0 0
  %835 = vmatprep.subr.bf16.mxu0 0
  %836 = vmatpush1.bf16.msra.mxu0 0
  %837 = vmatprep.subr.bf16.mxu0 0
  %838 = vmatpush1.bf16.msra.mxu0 0
  %839 = vmatprep.subr.bf16.mxu0 0
  %840 = vmatpush1.bf16.msra.mxu0 0
  %841 = vmatprep.mubr.bf16.mxu0 0
  %842 = vmatmul.mubr.bf16.gmra.mrb[0].mxu0 %v807
  %v843 = vpop.f32.mrb[0].mxu0
  %v844 = vadd.f32 %v47, %v843
  %v845 = vpop.f32.mrb[0].mxu0
  %v846 = vpop.f32.mrb[0].mxu0
  %v847 = vadd.f32 %v47, %v846
  %v848 = vpop.f32.mrb[0].mxu0
  %849 = vdwg.mxu0
  %v850 = vmax.f32 %v844, 0.0
  %v851 = vmax.f32 %v847, 0.0
  %v852 = vpack.c.bf16 %v851, %v850
  %v854 = vsel %vm161, %v852, 0
  %856 = vmatprep.subr.bf16.mxu0 0
  %857 = vmatpush1.bf16.msra.mxu0 %v153
  %858 = vmatprep.subr.bf16.mxu0 0
  %859 = vmatpush1.bf16.msra.mxu0 %v154
  %860 = vmatprep.subr.bf16.mxu0 0
  %861 = vmatpush1.bf16.msra.mxu0 %v155
  %862 = vmatprep.subr.bf16.mxu0 0
  %863 = vmatpush1.bf16.msra.mxu0 %v156
  %864 = vmatprep.subr.bf16.mxu0 0
  %865 = vmatpush1.bf16.msra.mxu0 0
  %866 = vmatprep.subr.bf16.mxu0 0
  %867 = vmatpush1.bf16.msra.mxu0 0
  %868 = vmatprep.subr.bf16.mxu0 0
  %869 = vmatpush1.bf16.msra.mxu0 0
  %870 = vmatprep.subr.bf16.mxu0 0
  %871 = vmatpush1.bf16.msra.mxu0 0
  %872 = vmatprep.subr.bf16.mxu0 0
  %873 = vmatpush1.bf16.msra.mxu0 0
  %874 = vmatprep.subr.bf16.mxu0 0
  %875 = vmatpush1.bf16.msra.mxu0 0
  %876 = vmatprep.subr.bf16.mxu0 0
  %877 = vmatpush1.bf16.msra.mxu0 0
  %878 = vmatprep.subr.bf16.mxu0 0
  %879 = vmatpush1.bf16.msra.mxu0 0
  %880 = vmatprep.subr.bf16.mxu0 0
  %881 = vmatpush1.bf16.msra.mxu0 0
  %882 = vmatprep.subr.bf16.mxu0 0
  %883 = vmatpush1.bf16.msra.mxu0 0
  %884 = vmatprep.subr.bf16.mxu0 0
  %885 = vmatpush1.bf16.msra.mxu0 0
  %886 = vmatprep.subr.bf16.mxu0 0
  %887 = vmatpush1.bf16.msra.mxu0 0
  %888 = vmatprep.mubr.bf16.mxu0 0
  %889 = vmatmul.mubr.bf16.gmra.mrb[0].mxu0 %v854
  %v890 = vpop.f32.mrb[0].mxu0
  %v891 = vadd.f32 %v135, %v890
  %v892 = vpop.f32.mrb[0].mxu0
  %v893 = vpop.f32.mrb[0].mxu0
  %v894 = vadd.f32 %v135, %v893
  %v895 = vpop.f32.mrb[0].mxu0
  %896 = vdwg.mxu0
  %v897 = vmax.f32 %v891, 0.0
  %v898 = vmax.f32 %v894, 0.0
  %v899 = vmax.f32 %v800, %v897
  %v900 = vmax.f32 %v801, %v898
  %901 = vst [vmem:[%s5] sm:$0xff] %v899
  %902 = vst [vmem:[%s5 + $0x8] sm:$0xff] %v900
  // Predicated region
  $region22: #{pointnet_plus_semseg_forward.10} parent=0 // pred_check
    _
  $region23: #{pointnet_plus_semseg_forward.10} parent=0 // pred_check_branch
    %904 = sbr.rel (0) target = $region25
  $region24: #{pointnet_plus_semseg_forward.10} parent=0 // pred_region
    _
  $region25: #{pointnet_plus_semseg_forward.10} parent=0 // pred_fallthru
    _
  // Predicated region
  $region26: #{pointnet_plus_semseg_forward.10} parent=0 // pred_check
    _
  $region27: #{pointnet_plus_semseg_forward.10} parent=0 // pred_check_branch
    %906 = sbr.rel (0) target = $region29
  $region28: #{pointnet_plus_semseg_forward.10} parent=0 // pred_region
    _
  $region29: #{pointnet_plus_semseg_forward.10} parent=0 // pred_fallthru
    _

// kernel: neg.23
$region0: #{neg.23}
  #allocation0 [shape = 's32[1]{0}', space=sflag, size = 0x4, scoped, tag = 'scoped memory for neg.23']
  %s0 = inlined_call_operand.vmem [shape: s32[2,4,8], index: 0, kind: input, shape index: {}]
  %s1 = inlined_call_operand.vmem [shape: s32[2,4,8], index: 1, kind: output, shape index: {}]
  %v2 = vld [vmem:[%s0] sm:$0xf]
  %3 = xla_tuple %v2
  %4 = xla_tuple %3
  %v5 = vsub.s32 0, %v2
  %6 = xla_tuple %v5
  %7 = vst [vmem:[%s1] sm:$0xf] %v5
  %s8 = scalar_lea.vmem %s0, 4
  %v9 = vld [vmem:[%s8] sm:$0xf]
  %10 = xla_tuple %v9
  %11 = xla_tuple %10
  %v12 = vsub.s32 0, %v9
  %13 = xla_tuple %v12
  %s14 = scalar_lea.vmem %s1, 4
  %15 = vst [vmem:[%s14] sm:$0xf] %v12

// kernel: pointnet_plus_semseg_forward.11
$region0: #{pointnet_plus_semseg_forward.11}
  #allocation0 [shape = 'u32[]', space=smem, size = 0x4, offset = 0x4, fixed_abs, tag = 'smem constant byte address 0x4 - core index']
  #allocation1 [shape = 'u32[144,128]{1,0:T(1,128)}', space=vmem, size = 0x12000, scoped, tag = 'internal scratch']
  %s0 = inlined_call_operand.vmem [shape: f32[8,8,131], index: 0, kind: input, shape index: {}]
  %s1 = inlined_call_operand.vmem [shape: bf16[131,128], index: 1, kind: input, shape index: {}]
  %s2 = inlined_call_operand.vmem [shape: f32[1,128], index: 2, kind: input, shape index: {}]
  %s3 = inlined_call_operand.vmem [shape: bf16[128,128], index: 3, kind: input, shape index: {}]
  %s4 = inlined_call_operand.vmem [shape: f32[1,128], index: 4, kind: input, shape index: {}]
  %s5 = inlined_call_operand.vmem [shape: f32[8,128], index: 5, kind: output, shape index: {}]
  %s6 = sld [smem:[#allocation0]]
  $region30: #{pointnet_plus_semseg_forward.11} parent=0
    _
  %s8 = ssub.s32 1, %s6
  %s9 = scalar_select 0, %s8, %s6
  // Predicated region
  $region2: #{pointnet_plus_semseg_forward.11} parent=0 // pred_check
    _
  $region3: #{pointnet_plus_semseg_forward.11} parent=0 // pred_check_branch
    %11 = sbr.rel (0) target = $region5
  $region4: #{pointnet_plus_semseg_forward.11} parent=0 // pred_region
    _
  $region5: #{pointnet_plus_semseg_forward.11} parent=0 // pred_fallthru
    _
  // Predicated region
  $region6: #{pointnet_plus_semseg_forward.11} parent=0 // pred_check
    _
  $region7: #{pointnet_plus_semseg_forward.11} parent=0 // pred_check_branch
    %13 = sbr.rel (0) target = $region9
  $region8: #{pointnet_plus_semseg_forward.11} parent=0 // pred_region
    _
  $region9: #{pointnet_plus_semseg_forward.11} parent=0 // pred_fallthru
    _
  // Predicated region
  $region10: #{pointnet_plus_semseg_forward.11} parent=0 // pred_check
    _
  $region11: #{pointnet_plus_semseg_forward.11} parent=0 // pred_check_branch
    %15 = sbr.rel (0) target = $region13
  $region12: #{pointnet_plus_semseg_forward.11} parent=0 // pred_region
    _
  $region13: #{pointnet_plus_semseg_forward.11} parent=0 // pred_fallthru
    _
  // Predicated region
  $region14: #{pointnet_plus_semseg_forward.11} parent=0 // pred_check
    _
  $region15: #{pointnet_plus_semseg_forward.11} parent=0 // pred_check_branch
    %17 = sbr.rel (0) target = $region17
  $region16: #{pointnet_plus_semseg_forward.11} parent=0 // pred_region
    _
  $region17: #{pointnet_plus_semseg_forward.11} parent=0 // pred_fallthru
    _
  // Predicated region
  $region18: #{pointnet_plus_semseg_forward.11} parent=0 // pred_check
    _
  $region19: #{pointnet_plus_semseg_forward.11} parent=0 // pred_check_branch
    %19 = sbr.rel (0) target = $region21
  $region20: #{pointnet_plus_semseg_forward.11} parent=0 // pred_region
    _
  $region21: #{pointnet_plus_semseg_forward.11} parent=0 // pred_fallthru
    _
  %v21 = vld [vmem:[%s1] sm:$0xf]
  %v22 = vld [vmem:[%s1 + $0x4] sm:$0xf]
  %v23 = vld [vmem:[%s1 + $0x8] sm:$0xf]
  %v24 = vld [vmem:[%s1 + $0xc] sm:$0xf]
  %v25 = vld [vmem:[%s1 + $0x10] sm:$0xf]
  %v26 = vld [vmem:[%s1 + $0x14] sm:$0xf]
  %v27 = vld [vmem:[%s1 + $0x18] sm:$0xf]
  %v28 = vld [vmem:[%s1 + $0x1c] sm:$0xf]
  %v29 = vld [vmem:[%s1 + $0x20] sm:$0xf]
  %v30 = vld [vmem:[%s1 + $0x24] sm:$0xf]
  %v31 = vld [vmem:[%s1 + $0x28] sm:$0xf]
  %v32 = vld [vmem:[%s1 + $0x2c] sm:$0xf]
  %v33 = vld [vmem:[%s1 + $0x30] sm:$0xf]
  %v34 = vld [vmem:[%s1 + $0x34] sm:$0xf]
  %v35 = vld [vmem:[%s1 + $0x38] sm:$0xf]
  %v36 = vld [vmem:[%s1 + $0x3c] sm:$0xf]
  %v37 = vld [vmem:[%s1 + $0x40] sm:$0x3]
  %v38 = vld [vmem:[%s2] sm:$0x1]
  %v39 = vld [vmem:[%s3] sm:$0xf]
  %v40 = vld [vmem:[%s3 + $0x4] sm:$0xf]
  %v41 = vld [vmem:[%s3 + $0x8] sm:$0xf]
  %v42 = vld [vmem:[%s3 + $0xc] sm:$0xf]
  %v43 = vld [vmem:[%s3 + $0x10] sm:$0xf]
  %v44 = vld [vmem:[%s3 + $0x14] sm:$0xf]
  %v45 = vld [vmem:[%s3 + $0x18] sm:$0xf]
  %v46 = vld [vmem:[%s3 + $0x1c] sm:$0xf]
  %v47 = vld [vmem:[%s3 + $0x20] sm:$0xf]
  %v48 = vld [vmem:[%s3 + $0x24] sm:$0xf]
  %v49 = vld [vmem:[%s3 + $0x28] sm:$0xf]
  %v50 = vld [vmem:[%s3 + $0x2c] sm:$0xf]
  %v51 = vld [vmem:[%s3 + $0x30] sm:$0xf]
  %v52 = vld [vmem:[%s3 + $0x34] sm:$0xf]
  %v53 = vld [vmem:[%s3 + $0x38] sm:$0xf]
  %v54 = vld [vmem:[%s3 + $0x3c] sm:$0xf]
  %v55 = vld [vmem:[%s4] sm:$0x1]
  %v56 = vld [vmem:[%s0] sm:$0xff]
  %v57 = vld [vmem:[%s0 + $0x8] sm:$0xff]
  %v58 = vpack.c.bf16 %v56, %v56
  %v59 = vpack.c.bf16 %v57, %v57
  %v61 = vlaneseq
  %v62 = vshrl.u32 %v61, 7
  %v63 = vsub.s32 0, %v62
  %v64 = vrot.slane %v38, %v63
  %v83 = vunpack.c.l.b16 %v21
  %v84 = vunpack.c.l.b16 %v22
  %v85 = vunpack.c.l.b16 %v23
  %v86 = vunpack.c.l.b16 %v24
  %v87 = vunpack.c.l.b16 %v25
  %v88 = vunpack.c.l.b16 %v26
  %v89 = vunpack.c.l.b16 %v27
  %v90 = vunpack.c.l.b16 %v28
  %v91 = vunpack.c.l.b16 %v29
  %v92 = vunpack.c.l.b16 %v30
  %v93 = vunpack.c.l.b16 %v31
  %v94 = vunpack.c.l.b16 %v32
  %v95 = vunpack.c.l.b16 %v33
  %v96 = vunpack.c.l.b16 %v34
  %v97 = vunpack.c.l.b16 %v35
  %v98 = vunpack.c.l.b16 %v36
  %v99 = vunpack.c.l.b16 %v37
  %v100 = vpack.c.b16 %v84, %v83
  %v101 = vpack.c.b16 %v86, %v85
  %v102 = vpack.c.b16 %v88, %v87
  %v103 = vpack.c.b16 %v90, %v89
  %v104 = vpack.c.b16 %v92, %v91
  %v105 = vpack.c.b16 %v94, %v93
  %v106 = vpack.c.b16 %v96, %v95
  %v107 = vpack.c.b16 %v98, %v97
  %v108 = vpack.c.b16 %v99, %v99
  %vm117 = vcmask 23552
  %v119 = vsel %vm117, %v59, 0
  %vm121 = vcmask 1040384
  %vm122 = vcmask 1041408
  %v123 = vsel %vm121, 4294967295, 65535
  %v124 = vsel %vm122, %v123, 0
  %v126 = vand.u32 %v108, %v124
  %128 = vmatprep.subr.bf16.mxu0 0
  %129 = vmatpush1.bf16.msra.mxu0 %v100
  %130 = vmatprep.subr.bf16.mxu0 0
  %131 = vmatpush1.bf16.msra.mxu0 %v101
  %132 = vmatprep.subr.bf16.mxu0 0
  %133 = vmatpush1.bf16.msra.mxu0 %v102
  %134 = vmatprep.subr.bf16.mxu0 0
  %135 = vmatpush1.bf16.msra.mxu0 %v103
  %136 = vmatprep.subr.bf16.mxu0 0
  %137 = vmatpush1.bf16.msra.mxu0 %v104
  %138 = vmatprep.subr.bf16.mxu0 0
  %139 = vmatpush1.bf16.msra.mxu0 %v105
  %140 = vmatprep.subr.bf16.mxu0 0
  %141 = vmatpush1.bf16.msra.mxu0 %v106
  %142 = vmatprep.subr.bf16.mxu0 0
  %143 = vmatpush1.bf16.msra.mxu0 %v107
  %144 = vmatprep.subr.bf16.mxu0 0
  %145 = vmatpush1.bf16.msra.mxu0 %v126
  %146 = vmatprep.subr.bf16.mxu0 0
  %147 = vmatpush1.bf16.msra.mxu0 0
  %148 = vmatprep.subr.bf16.mxu0 0
  %149 = vmatpush1.bf16.msra.mxu0 0
  %150 = vmatprep.subr.bf16.mxu0 0
  %151 = vmatpush1.bf16.msra.mxu0 0
  %152 = vmatprep.subr.bf16.mxu0 0
  %153 = vmatpush1.bf16.msra.mxu0 0
  %154 = vmatprep.subr.bf16.mxu0 0
  %155 = vmatpush1.bf16.msra.mxu0 0
  %156 = vmatprep.subr.bf16.mxu0 0
  %157 = vmatpush1.bf16.msra.mxu0 0
  %158 = vmatprep.subr.bf16.mxu0 0
  %159 = vmatpush1.bf16.msra.mxu0 0
  %160 = vmatprep.mubr.bf16.mxu0 %v119
  %161 = vmatmul.mubr.bf16.gmra.mrb[0].mxu0 %v58
  %v162 = vpop.f32.mrb[0].mxu0
  %v163 = vadd.f32 %v64, %v162
  %v164 = vpop.f32.mrb[0].mxu0
  %v165 = vpop.f32.mrb[0].mxu0
  %v166 = vpop.f32.mrb[0].mxu0
  %167 = vdwg.mxu0
  %v168 = vmax.f32 %v163, 0.0
  %v169 = vpack.c.bf16 %v168, %v168
  %v171 = vlaneseq
  %v172 = vshrl.u32 %v171, 7
  %v173 = vsub.s32 0, %v172
  %v174 = vrot.slane %v55, %v173
  %v192 = vunpack.c.l.b16 %v39
  %v193 = vunpack.c.l.b16 %v40
  %v194 = vunpack.c.l.b16 %v41
  %v195 = vunpack.c.l.b16 %v42
  %v196 = vunpack.c.l.b16 %v43
  %v197 = vunpack.c.l.b16 %v44
  %v198 = vunpack.c.l.b16 %v45
  %v199 = vunpack.c.l.b16 %v46
  %v200 = vunpack.c.l.b16 %v47
  %v201 = vunpack.c.l.b16 %v48
  %v202 = vunpack.c.l.b16 %v49
  %v203 = vunpack.c.l.b16 %v50
  %v204 = vunpack.c.l.b16 %v51
  %v205 = vunpack.c.l.b16 %v52
  %v206 = vunpack.c.l.b16 %v53
  %v207 = vunpack.c.l.b16 %v54
  %v208 = vpack.c.b16 %v193, %v192
  %v209 = vpack.c.b16 %v195, %v194
  %v210 = vpack.c.b16 %v197, %v196
  %v211 = vpack.c.b16 %v199, %v198
  %v212 = vpack.c.b16 %v201, %v200
  %v213 = vpack.c.b16 %v203, %v202
  %v214 = vpack.c.b16 %v205, %v204
  %v215 = vpack.c.b16 %v207, %v206
  %224 = vmatprep.subr.bf16.mxu0 0
  %225 = vmatpush1.bf16.msra.mxu0 %v208
  %226 = vmatprep.subr.bf16.mxu0 0
  %227 = vmatpush1.bf16.msra.mxu0 %v209
  %228 = vmatprep.subr.bf16.mxu0 0
  %229 = vmatpush1.bf16.msra.mxu0 %v210
  %230 = vmatprep.subr.bf16.mxu0 0
  %231 = vmatpush1.bf16.msra.mxu0 %v211
  %232 = vmatprep.subr.bf16.mxu0 0
  %233 = vmatpush1.bf16.msra.mxu0 %v212
  %234 = vmatprep.subr.bf16.mxu0 0
  %235 = vmatpush1.bf16.msra.mxu0 %v213
  %236 = vmatprep.subr.bf16.mxu0 0
  %237 = vmatpush1.bf16.msra.mxu0 %v214
  %238 = vmatprep.subr.bf16.mxu0 0
  %239 = vmatpush1.bf16.msra.mxu0 %v215
  %240 = vmatprep.subr.bf16.mxu0 0
  %241 = vmatpush1.bf16.msra.mxu0 0
  %242 = vmatprep.subr.bf16.mxu0 0
  %243 = vmatpush1.bf16.msra.mxu0 0
  %244 = vmatprep.subr.bf16.mxu0 0
  %245 = vmatpush1.bf16.msra.mxu0 0
  %246 = vmatprep.subr.bf16.mxu0 0
  %247 = vmatpush1.bf16.msra.mxu0 0
  %248 = vmatprep.subr.bf16.mxu0 0
  %249 = vmatpush1.bf16.msra.mxu0 0
  %250 = vmatprep.subr.bf16.mxu0 0
  %251 = vmatpush1.bf16.msra.mxu0 0
  %252 = vmatprep.subr.bf16.mxu0 0
  %253 = vmatpush1.bf16.msra.mxu0 0
  %254 = vmatprep.subr.bf16.mxu0 0
  %255 = vmatpush1.bf16.msra.mxu0 0
  %256 = vmatprep.mubr.bf16.mxu0 0
  %257 = vmatmul.mubr.bf16.gmra.mrb[0].mxu0 %v169
  %v258 = vpop.f32.mrb[0].mxu0
  %v259 = vadd.f32 %v174, %v258
  %v260 = vpop.f32.mrb[0].mxu0
  %v261 = vpop.f32.mrb[0].mxu0
  %v262 = vpop.f32.mrb[0].mxu0
  %263 = vdwg.mxu0
  %v264 = vmax.f32 %v259, 0.0
  %s265 = scalar_lea.vmem %s0, 16
  %v266 = vld [vmem:[%s265] sm:$0xff]
  %v267 = vld [vmem:[%s265 + $0x8] sm:$0xff]
  %v268 = vpack.c.bf16 %v266, %v266
  %v269 = vpack.c.bf16 %v267, %v267
  %v271 = vsel %vm117, %v269, 0
  %273 = vmatprep.subr.bf16.mxu0 0
  %274 = vmatpush1.bf16.msra.mxu0 %v100
  %275 = vmatprep.subr.bf16.mxu0 0
  %276 = vmatpush1.bf16.msra.mxu0 %v101
  %277 = vmatprep.subr.bf16.mxu0 0
  %278 = vmatpush1.bf16.msra.mxu0 %v102
  %279 = vmatprep.subr.bf16.mxu0 0
  %280 = vmatpush1.bf16.msra.mxu0 %v103
  %281 = vmatprep.subr.bf16.mxu0 0
  %282 = vmatpush1.bf16.msra.mxu0 %v104
  %283 = vmatprep.subr.bf16.mxu0 0
  %284 = vmatpush1.bf16.msra.mxu0 %v105
  %285 = vmatprep.subr.bf16.mxu0 0
  %286 = vmatpush1.bf16.msra.mxu0 %v106
  %287 = vmatprep.subr.bf16.mxu0 0
  %288 = vmatpush1.bf16.msra.mxu0 %v107
  %289 = vmatprep.subr.bf16.mxu0 0
  %290 = vmatpush1.bf16.msra.mxu0 %v126
  %291 = vmatprep.subr.bf16.mxu0 0
  %292 = vmatpush1.bf16.msra.mxu0 0
  %293 = vmatprep.subr.bf16.mxu0 0
  %294 = vmatpush1.bf16.msra.mxu0 0
  %295 = vmatprep.subr.bf16.mxu0 0
  %296 = vmatpush1.bf16.msra.mxu0 0
  %297 = vmatprep.subr.bf16.mxu0 0
  %298 = vmatpush1.bf16.msra.mxu0 0
  %299 = vmatprep.subr.bf16.mxu0 0
  %300 = vmatpush1.bf16.msra.mxu0 0
  %301 = vmatprep.subr.bf16.mxu0 0
  %302 = vmatpush1.bf16.msra.mxu0 0
  %303 = vmatprep.subr.bf16.mxu0 0
  %304 = vmatpush1.bf16.msra.mxu0 0
  %305 = vmatprep.mubr.bf16.mxu0 %v271
  %306 = vmatmul.mubr.bf16.gmra.mrb[0].mxu0 %v268
  %v307 = vpop.f32.mrb[0].mxu0
  %v308 = vadd.f32 %v64, %v307
  %v309 = vpop.f32.mrb[0].mxu0
  %v310 = vpop.f32.mrb[0].mxu0
  %v311 = vpop.f32.mrb[0].mxu0
  %312 = vdwg.mxu0
  %v313 = vmax.f32 %v308, 0.0
  %v314 = vpack.c.bf16 %v313, %v313
  %315 = vmatprep.subr.bf16.mxu0 0
  %316 = vmatpush1.bf16.msra.mxu0 %v208
  %317 = vmatprep.subr.bf16.mxu0 0
  %318 = vmatpush1.bf16.msra.mxu0 %v209
  %319 = vmatprep.subr.bf16.mxu0 0
  %320 = vmatpush1.bf16.msra.mxu0 %v210
  %321 = vmatprep.subr.bf16.mxu0 0
  %322 = vmatpush1.bf16.msra.mxu0 %v211
  %323 = vmatprep.subr.bf16.mxu0 0
  %324 = vmatpush1.bf16.msra.mxu0 %v212
  %325 = vmatprep.subr.bf16.mxu0 0
  %326 = vmatpush1.bf16.msra.mxu0 %v213
  %327 = vmatprep.subr.bf16.mxu0 0
  %328 = vmatpush1.bf16.msra.mxu0 %v214
  %329 = vmatprep.subr.bf16.mxu0 0
  %330 = vmatpush1.bf16.msra.mxu0 %v215
  %331 = vmatprep.subr.bf16.mxu0 0
  %332 = vmatpush1.bf16.msra.mxu0 0
  %333 = vmatprep.subr.bf16.mxu0 0
  %334 = vmatpush1.bf16.msra.mxu0 0
  %335 = vmatprep.subr.bf16.mxu0 0
  %336 = vmatpush1.bf16.msra.mxu0 0
  %337 = vmatprep.subr.bf16.mxu0 0
  %338 = vmatpush1.bf16.msra.mxu0 0
  %339 = vmatprep.subr.bf16.mxu0 0
  %340 = vmatpush1.bf16.msra.mxu0 0
  %341 = vmatprep.subr.bf16.mxu0 0
  %342 = vmatpush1.bf16.msra.mxu0 0
  %343 = vmatprep.subr.bf16.mxu0 0
  %344 = vmatpush1.bf16.msra.mxu0 0
  %345 = vmatprep.subr.bf16.mxu0 0
  %346 = vmatpush1.bf16.msra.mxu0 0
  %347 = vmatprep.mubr.bf16.mxu0 0
  %348 = vmatmul.mubr.bf16.gmra.mrb[0].mxu0 %v314
  %v349 = vpop.f32.mrb[0].mxu0
  %v350 = vadd.f32 %v174, %v349
  %v351 = vpop.f32.mrb[0].mxu0
  %v352 = vpop.f32.mrb[0].mxu0
  %v353 = vpop.f32.mrb[0].mxu0
  %354 = vdwg.mxu0
  %v355 = vmax.f32 %v350, 0.0
  %v356 = vmax.f32 %v264, %v355
  %s357 = scalar_lea.vmem %s0, 32
  %v358 = vld [vmem:[%s357] sm:$0xff]
  %v359 = vld [vmem:[%s357 + $0x8] sm:$0xff]
  %v360 = vpack.c.bf16 %v358, %v358
  %v361 = vpack.c.bf16 %v359, %v359
  %v363 = vsel %vm117, %v361, 0
  %365 = vmatprep.subr.bf16.mxu0 0
  %366 = vmatpush1.bf16.msra.mxu0 %v100
  %367 = vmatprep.subr.bf16.mxu0 0
  %368 = vmatpush1.bf16.msra.mxu0 %v101
  %369 = vmatprep.subr.bf16.mxu0 0
  %370 = vmatpush1.bf16.msra.mxu0 %v102
  %371 = vmatprep.subr.bf16.mxu0 0
  %372 = vmatpush1.bf16.msra.mxu0 %v103
  %373 = vmatprep.subr.bf16.mxu0 0
  %374 = vmatpush1.bf16.msra.mxu0 %v104
  %375 = vmatprep.subr.bf16.mxu0 0
  %376 = vmatpush1.bf16.msra.mxu0 %v105
  %377 = vmatprep.subr.bf16.mxu0 0
  %378 = vmatpush1.bf16.msra.mxu0 %v106
  %379 = vmatprep.subr.bf16.mxu0 0
  %380 = vmatpush1.bf16.msra.mxu0 %v107
  %381 = vmatprep.subr.bf16.mxu0 0
  %382 = vmatpush1.bf16.msra.mxu0 %v126
  %383 = vmatprep.subr.bf16.mxu0 0
  %384 = vmatpush1.bf16.msra.mxu0 0
  %385 = vmatprep.subr.bf16.mxu0 0
  %386 = vmatpush1.bf16.msra.mxu0 0
  %387 = vmatprep.subr.bf16.mxu0 0
  %388 = vmatpush1.bf16.msra.mxu0 0
  %389 = vmatprep.subr.bf16.mxu0 0
  %390 = vmatpush1.bf16.msra.mxu0 0
  %391 = vmatprep.subr.bf16.mxu0 0
  %392 = vmatpush1.bf16.msra.mxu0 0
  %393 = vmatprep.subr.bf16.mxu0 0
  %394 = vmatpush1.bf16.msra.mxu0 0
  %395 = vmatprep.subr.bf16.mxu0 0
  %396 = vmatpush1.bf16.msra.mxu0 0
  %397 = vmatprep.mubr.bf16.mxu0 %v363
  %398 = vmatmul.mubr.bf16.gmra.mrb[0].mxu0 %v360
  %v399 = vpop.f32.mrb[0].mxu0
  %v400 = vadd.f32 %v64, %v399
  %v401 = vpop.f32.mrb[0].mxu0
  %v402 = vpop.f32.mrb[0].mxu0
  %v403 = vpop.f32.mrb[0].mxu0
  %404 = vdwg.mxu0
  %v405 = vmax.f32 %v400, 0.0
  %v406 = vpack.c.bf16 %v405, %v405
  %407 = vmatprep.subr.bf16.mxu0 0
  %408 = vmatpush1.bf16.msra.mxu0 %v208
  %409 = vmatprep.subr.bf16.mxu0 0
  %410 = vmatpush1.bf16.msra.mxu0 %v209
  %411 = vmatprep.subr.bf16.mxu0 0
  %412 = vmatpush1.bf16.msra.mxu0 %v210
  %413 = vmatprep.subr.bf16.mxu0 0
  %414 = vmatpush1.bf16.msra.mxu0 %v211
  %415 = vmatprep.subr.bf16.mxu0 0
  %416 = vmatpush1.bf16.msra.mxu0 %v212
  %417 = vmatprep.subr.bf16.mxu0 0
  %418 = vmatpush1.bf16.msra.mxu0 %v213
  %419 = vmatprep.subr.bf16.mxu0 0
  %420 = vmatpush1.bf16.msra.mxu0 %v214
  %421 = vmatprep.subr.bf16.mxu0 0
  %422 = vmatpush1.bf16.msra.mxu0 %v215
  %423 = vmatprep.subr.bf16.mxu0 0
  %424 = vmatpush1.bf16.msra.mxu0 0
  %425 = vmatprep.subr.bf16.mxu0 0
  %426 = vmatpush1.bf16.msra.mxu0 0
  %427 = vmatprep.subr.bf16.mxu0 0
  %428 = vmatpush1.bf16.msra.mxu0 0
  %429 = vmatprep.subr.bf16.mxu0 0
  %430 = vmatpush1.bf16.msra.mxu0 0
  %431 = vmatprep.subr.bf16.mxu0 0
  %432 = vmatpush1.bf16.msra.mxu0 0
  %433 = vmatprep.subr.bf16.mxu0 0
  %434 = vmatpush1.bf16.msra.mxu0 0
  %435 = vmatprep.subr.bf16.mxu0 0
  %436 = vmatpush1.bf16.msra.mxu0 0
  %437 = vmatprep.subr.bf16.mxu0 0
  %438 = vmatpush1.bf16.msra.mxu0 0
  %439 = vmatprep.mubr.bf16.mxu0 0
  %440 = vmatmul.mubr.bf16.gmra.mrb[0].mxu0 %v406
  %v441 = vpop.f32.mrb[0].mxu0
  %v442 = vadd.f32 %v174, %v441
  %v443 = vpop.f32.mrb[0].mxu0
  %v444 = vpop.f32.mrb[0].mxu0
  %v445 = vpop.f32.mrb[0].mxu0
  %446 = vdwg.mxu0
  %v447 = vmax.f32 %v442, 0.0
  %v448 = vmax.f32 %v356, %v447
  %s449 = scalar_lea.vmem %s0, 48
  %v450 = vld [vmem:[%s449] sm:$0xff]
  %v451 = vld [vmem:[%s449 + $0x8] sm:$0xff]
  %v452 = vpack.c.bf16 %v450, %v450
  %v453 = vpack.c.bf16 %v451, %v451
  %v455 = vsel %vm117, %v453, 0
  %457 = vmatprep.subr.bf16.mxu0 0
  %458 = vmatpush1.bf16.msra.mxu0 %v100
  %459 = vmatprep.subr.bf16.mxu0 0
  %460 = vmatpush1.bf16.msra.mxu0 %v101
  %461 = vmatprep.subr.bf16.mxu0 0
  %462 = vmatpush1.bf16.msra.mxu0 %v102
  %463 = vmatprep.subr.bf16.mxu0 0
  %464 = vmatpush1.bf16.msra.mxu0 %v103
  %465 = vmatprep.subr.bf16.mxu0 0
  %466 = vmatpush1.bf16.msra.mxu0 %v104
  %467 = vmatprep.subr.bf16.mxu0 0
  %468 = vmatpush1.bf16.msra.mxu0 %v105
  %469 = vmatprep.subr.bf16.mxu0 0
  %470 = vmatpush1.bf16.msra.mxu0 %v106
  %471 = vmatprep.subr.bf16.mxu0 0
  %472 = vmatpush1.bf16.msra.mxu0 %v107
  %473 = vmatprep.subr.bf16.mxu0 0
  %474 = vmatpush1.bf16.msra.mxu0 %v126
  %475 = vmatprep.subr.bf16.mxu0 0
  %476 = vmatpush1.bf16.msra.mxu0 0
  %477 = vmatprep.subr.bf16.mxu0 0
  %478 = vmatpush1.bf16.msra.mxu0 0
  %479 = vmatprep.subr.bf16.mxu0 0
  %480 = vmatpush1.bf16.msra.mxu0 0
  %481 = vmatprep.subr.bf16.mxu0 0
  %482 = vmatpush1.bf16.msra.mxu0 0
  %483 = vmatprep.subr.bf16.mxu0 0
  %484 = vmatpush1.bf16.msra.mxu0 0
  %485 = vmatprep.subr.bf16.mxu0 0
  %486 = vmatpush1.bf16.msra.mxu0 0
  %487 = vmatprep.subr.bf16.mxu0 0
  %488 = vmatpush1.bf16.msra.mxu0 0
  %489 = vmatprep.mubr.bf16.mxu0 %v455
  %490 = vmatmul.mubr.bf16.gmra.mrb[0].mxu0 %v452
  %v491 = vpop.f32.mrb[0].mxu0
  %v492 = vadd.f32 %v64, %v491
  %v493 = vpop.f32.mrb[0].mxu0
  %v494 = vpop.f32.mrb[0].mxu0
  %v495 = vpop.f32.mrb[0].mxu0
  %496 = vdwg.mxu0
  %v497 = vmax.f32 %v492, 0.0
  %v498 = vpack.c.bf16 %v497, %v497
  %499 = vmatprep.subr.bf16.mxu0 0
  %500 = vmatpush1.bf16.msra.mxu0 %v208
  %501 = vmatprep.subr.bf16.mxu0 0
  %502 = vmatpush1.bf16.msra.mxu0 %v209
  %503 = vmatprep.subr.bf16.mxu0 0
  %504 = vmatpush1.bf16.msra.mxu0 %v210
  %505 = vmatprep.subr.bf16.mxu0 0
  %506 = vmatpush1.bf16.msra.mxu0 %v211
  %507 = vmatprep.subr.bf16.mxu0 0
  %508 = vmatpush1.bf16.msra.mxu0 %v212
  %509 = vmatprep.subr.bf16.mxu0 0
  %510 = vmatpush1.bf16.msra.mxu0 %v213
  %511 = vmatprep.subr.bf16.mxu0 0
  %512 = vmatpush1.bf16.msra.mxu0 %v214
  %513 = vmatprep.subr.bf16.mxu0 0
  %514 = vmatpush1.bf16.msra.mxu0 %v215
  %515 = vmatprep.subr.bf16.mxu0 0
  %516 = vmatpush1.bf16.msra.mxu0 0
  %517 = vmatprep.subr.bf16.mxu0 0
  %518 = vmatpush1.bf16.msra.mxu0 0
  %519 = vmatprep.subr.bf16.mxu0 0
  %520 = vmatpush1.bf16.msra.mxu0 0
  %521 = vmatprep.subr.bf16.mxu0 0
  %522 = vmatpush1.bf16.msra.mxu0 0
  %523 = vmatprep.subr.bf16.mxu0 0
  %524 = vmatpush1.bf16.msra.mxu0 0
  %525 = vmatprep.subr.bf16.mxu0 0
  %526 = vmatpush1.bf16.msra.mxu0 0
  %527 = vmatprep.subr.bf16.mxu0 0
  %528 = vmatpush1.bf16.msra.mxu0 0
  %529 = vmatprep.subr.bf16.mxu0 0
  %530 = vmatpush1.bf16.msra.mxu0 0
  %531 = vmatprep.mubr.bf16.mxu0 0
  %532 = vmatmul.mubr.bf16.gmra.mrb[0].mxu0 %v498
  %v533 = vpop.f32.mrb[0].mxu0
  %v534 = vadd.f32 %v174, %v533
  %v535 = vpop.f32.mrb[0].mxu0
  %v536 = vpop.f32.mrb[0].mxu0
  %v537 = vpop.f32.mrb[0].mxu0
  %538 = vdwg.mxu0
  %v539 = vmax.f32 %v534, 0.0
  %v540 = vmax.f32 %v448, %v539
  %s541 = scalar_lea.vmem %s0, 64
  %v542 = vld [vmem:[%s541] sm:$0xff]
  %v543 = vld [vmem:[%s541 + $0x8] sm:$0xff]
  %v544 = vpack.c.bf16 %v542, %v542
  %v545 = vpack.c.bf16 %v543, %v543
  %v547 = vsel %vm117, %v545, 0
  %549 = vmatprep.subr.bf16.mxu0 0
  %550 = vmatpush1.bf16.msra.mxu0 %v100
  %551 = vmatprep.subr.bf16.mxu0 0
  %552 = vmatpush1.bf16.msra.mxu0 %v101
  %553 = vmatprep.subr.bf16.mxu0 0
  %554 = vmatpush1.bf16.msra.mxu0 %v102
  %555 = vmatprep.subr.bf16.mxu0 0
  %556 = vmatpush1.bf16.msra.mxu0 %v103
  %557 = vmatprep.subr.bf16.mxu0 0
  %558 = vmatpush1.bf16.msra.mxu0 %v104
  %559 = vmatprep.subr.bf16.mxu0 0
  %560 = vmatpush1.bf16.msra.mxu0 %v105
  %561 = vmatprep.subr.bf16.mxu0 0
  %562 = vmatpush1.bf16.msra.mxu0 %v106
  %563 = vmatprep.subr.bf16.mxu0 0
  %564 = vmatpush1.bf16.msra.mxu0 %v107
  %565 = vmatprep.subr.bf16.mxu0 0
  %566 = vmatpush1.bf16.msra.mxu0 %v126
  %567 = vmatprep.subr.bf16.mxu0 0
  %568 = vmatpush1.bf16.msra.mxu0 0
  %569 = vmatprep.subr.bf16.mxu0 0
  %570 = vmatpush1.bf16.msra.mxu0 0
  %571 = vmatprep.subr.bf16.mxu0 0
  %572 = vmatpush1.bf16.msra.mxu0 0
  %573 = vmatprep.subr.bf16.mxu0 0
  %574 = vmatpush1.bf16.msra.mxu0 0
  %575 = vmatprep.subr.bf16.mxu0 0
  %576 = vmatpush1.bf16.msra.mxu0 0
  %577 = vmatprep.subr.bf16.mxu0 0
  %578 = vmatpush1.bf16.msra.mxu0 0
  %579 = vmatprep.subr.bf16.mxu0 0
  %580 = vmatpush1.bf16.msra.mxu0 0
  %581 = vmatprep.mubr.bf16.mxu0 %v547
  %582 = vmatmul.mubr.bf16.gmra.mrb[0].mxu0 %v544
  %v583 = vpop.f32.mrb[0].mxu0
  %v584 = vadd.f32 %v64, %v583
  %v585 = vpop.f32.mrb[0].mxu0
  %v586 = vpop.f32.mrb[0].mxu0
  %v587 = vpop.f32.mrb[0].mxu0
  %588 = vdwg.mxu0
  %v589 = vmax.f32 %v584, 0.0
  %v590 = vpack.c.bf16 %v589, %v589
  %591 = vmatprep.subr.bf16.mxu0 0
  %592 = vmatpush1.bf16.msra.mxu0 %v208
  %593 = vmatprep.subr.bf16.mxu0 0
  %594 = vmatpush1.bf16.msra.mxu0 %v209
  %595 = vmatprep.subr.bf16.mxu0 0
  %596 = vmatpush1.bf16.msra.mxu0 %v210
  %597 = vmatprep.subr.bf16.mxu0 0
  %598 = vmatpush1.bf16.msra.mxu0 %v211
  %599 = vmatprep.subr.bf16.mxu0 0
  %600 = vmatpush1.bf16.msra.mxu0 %v212
  %601 = vmatprep.subr.bf16.mxu0 0
  %602 = vmatpush1.bf16.msra.mxu0 %v213
  %603 = vmatprep.subr.bf16.mxu0 0
  %604 = vmatpush1.bf16.msra.mxu0 %v214
  %605 = vmatprep.subr.bf16.mxu0 0
  %606 = vmatpush1.bf16.msra.mxu0 %v215
  %607 = vmatprep.subr.bf16.mxu0 0
  %608 = vmatpush1.bf16.msra.mxu0 0
  %609 = vmatprep.subr.bf16.mxu0 0
  %610 = vmatpush1.bf16.msra.mxu0 0
  %611 = vmatprep.subr.bf16.mxu0 0
  %612 = vmatpush1.bf16.msra.mxu0 0
  %613 = vmatprep.subr.bf16.mxu0 0
  %614 = vmatpush1.bf16.msra.mxu0 0
  %615 = vmatprep.subr.bf16.mxu0 0
  %616 = vmatpush1.bf16.msra.mxu0 0
  %617 = vmatprep.subr.bf16.mxu0 0
  %618 = vmatpush1.bf16.msra.mxu0 0
  %619 = vmatprep.subr.bf16.mxu0 0
  %620 = vmatpush1.bf16.msra.mxu0 0
  %621 = vmatprep.subr.bf16.mxu0 0
  %622 = vmatpush1.bf16.msra.mxu0 0
  %623 = vmatprep.mubr.bf16.mxu0 0
  %624 = vmatmul.mubr.bf16.gmra.mrb[0].mxu0 %v590
  %v625 = vpop.f32.mrb[0].mxu0
  %v626 = vadd.f32 %v174, %v625
  %v627 = vpop.f32.mrb[0].mxu0
  %v628 = vpop.f32.mrb[0].mxu0
  %v629 = vpop.f32.mrb[0].mxu0
  %630 = vdwg.mxu0
  %v631 = vmax.f32 %v626, 0.0
  %v632 = vmax.f32 %v540, %v631
  %s633 = scalar_lea.vmem %s0, 80
  %v634 = vld [vmem:[%s633] sm:$0xff]
  %v635 = vld [vmem:[%s633 + $0x8] sm:$0xff]
  %v636 = vpack.c.bf16 %v634, %v634
  %v637 = vpack.c.bf16 %v635, %v635
  %v639 = vsel %vm117, %v637, 0
  %641 = vmatprep.subr.bf16.mxu0 0
  %642 = vmatpush1.bf16.msra.mxu0 %v100
  %643 = vmatprep.subr.bf16.mxu0 0
  %644 = vmatpush1.bf16.msra.mxu0 %v101
  %645 = vmatprep.subr.bf16.mxu0 0
  %646 = vmatpush1.bf16.msra.mxu0 %v102
  %647 = vmatprep.subr.bf16.mxu0 0
  %648 = vmatpush1.bf16.msra.mxu0 %v103
  %649 = vmatprep.subr.bf16.mxu0 0
  %650 = vmatpush1.bf16.msra.mxu0 %v104
  %651 = vmatprep.subr.bf16.mxu0 0
  %652 = vmatpush1.bf16.msra.mxu0 %v105
  %653 = vmatprep.subr.bf16.mxu0 0
  %654 = vmatpush1.bf16.msra.mxu0 %v106
  %655 = vmatprep.subr.bf16.mxu0 0
  %656 = vmatpush1.bf16.msra.mxu0 %v107
  %657 = vmatprep.subr.bf16.mxu0 0
  %658 = vmatpush1.bf16.msra.mxu0 %v126
  %659 = vmatprep.subr.bf16.mxu0 0
  %660 = vmatpush1.bf16.msra.mxu0 0
  %661 = vmatprep.subr.bf16.mxu0 0
  %662 = vmatpush1.bf16.msra.mxu0 0
  %663 = vmatprep.subr.bf16.mxu0 0
  %664 = vmatpush1.bf16.msra.mxu0 0
  %665 = vmatprep.subr.bf16.mxu0 0
  %666 = vmatpush1.bf16.msra.mxu0 0
  %667 = vmatprep.subr.bf16.mxu0 0
  %668 = vmatpush1.bf16.msra.mxu0 0
  %669 = vmatprep.subr.bf16.mxu0 0
  %670 = vmatpush1.bf16.msra.mxu0 0
  %671 = vmatprep.subr.bf16.mxu0 0
  %672 = vmatpush1.bf16.msra.mxu0 0
  %673 = vmatprep.mubr.bf16.mxu0 %v639
  %674 = vmatmul.mubr.bf16.gmra.mrb[0].mxu0 %v636
  %v675 = vpop.f32.mrb[0].mxu0
  %v676 = vadd.f32 %v64, %v675
  %v677 = vpop.f32.mrb[0].mxu0
  %v678 = vpop.f32.mrb[0].mxu0
  %v679 = vpop.f32.mrb[0].mxu0
  %680 = vdwg.mxu0
  %v681 = vmax.f32 %v676, 0.0
  %v682 = vpack.c.bf16 %v681, %v681
  %683 = vmatprep.subr.bf16.mxu0 0
  %684 = vmatpush1.bf16.msra.mxu0 %v208
  %685 = vmatprep.subr.bf16.mxu0 0
  %686 = vmatpush1.bf16.msra.mxu0 %v209
  %687 = vmatprep.subr.bf16.mxu0 0
  %688 = vmatpush1.bf16.msra.mxu0 %v210
  %689 = vmatprep.subr.bf16.mxu0 0
  %690 = vmatpush1.bf16.msra.mxu0 %v211
  %691 = vmatprep.subr.bf16.mxu0 0
  %692 = vmatpush1.bf16.msra.mxu0 %v212
  %693 = vmatprep.subr.bf16.mxu0 0
  %694 = vmatpush1.bf16.msra.mxu0 %v213
  %695 = vmatprep.subr.bf16.mxu0 0
  %696 = vmatpush1.bf16.msra.mxu0 %v214
  %697 = vmatprep.subr.bf16.mxu0 0
  %698 = vmatpush1.bf16.msra.mxu0 %v215
  %699 = vmatprep.subr.bf16.mxu0 0
  %700 = vmatpush1.bf16.msra.mxu0 0
  %701 = vmatprep.subr.bf16.mxu0 0
  %702 = vmatpush1.bf16.msra.mxu0 0
  %703 = vmatprep.subr.bf16.mxu0 0
  %704 = vmatpush1.bf16.msra.mxu0 0
  %705 = vmatprep.subr.bf16.mxu0 0
  %706 = vmatpush1.bf16.msra.mxu0 0
  %707 = vmatprep.subr.bf16.mxu0 0
  %708 = vmatpush1.bf16.msra.mxu0 0
  %709 = vmatprep.subr.bf16.mxu0 0
  %710 = vmatpush1.bf16.msra.mxu0 0
  %711 = vmatprep.subr.bf16.mxu0 0
  %712 = vmatpush1.bf16.msra.mxu0 0
  %713 = vmatprep.subr.bf16.mxu0 0
  %714 = vmatpush1.bf16.msra.mxu0 0
  %715 = vmatprep.mubr.bf16.mxu0 0
  %716 = vmatmul.mubr.bf16.gmra.mrb[0].mxu0 %v682
  %v717 = vpop.f32.mrb[0].mxu0
  %v718 = vadd.f32 %v174, %v717
  %v719 = vpop.f32.mrb[0].mxu0
  %v720 = vpop.f32.mrb[0].mxu0
  %v721 = vpop.f32.mrb[0].mxu0
  %722 = vdwg.mxu0
  %v723 = vmax.f32 %v718, 0.0
  %v724 = vmax.f32 %v632, %v723
  %s725 = scalar_lea.vmem %s0, 96
  %v726 = vld [vmem:[%s725] sm:$0xff]
  %v727 = vld [vmem:[%s725 + $0x8] sm:$0xff]
  %v728 = vpack.c.bf16 %v726, %v726
  %v729 = vpack.c.bf16 %v727, %v727
  %v731 = vsel %vm117, %v729, 0
  %733 = vmatprep.subr.bf16.mxu0 0
  %734 = vmatpush1.bf16.msra.mxu0 %v100
  %735 = vmatprep.subr.bf16.mxu0 0
  %736 = vmatpush1.bf16.msra.mxu0 %v101
  %737 = vmatprep.subr.bf16.mxu0 0
  %738 = vmatpush1.bf16.msra.mxu0 %v102
  %739 = vmatprep.subr.bf16.mxu0 0
  %740 = vmatpush1.bf16.msra.mxu0 %v103
  %741 = vmatprep.subr.bf16.mxu0 0
  %742 = vmatpush1.bf16.msra.mxu0 %v104
  %743 = vmatprep.subr.bf16.mxu0 0
  %744 = vmatpush1.bf16.msra.mxu0 %v105
  %745 = vmatprep.subr.bf16.mxu0 0
  %746 = vmatpush1.bf16.msra.mxu0 %v106
  %747 = vmatprep.subr.bf16.mxu0 0
  %748 = vmatpush1.bf16.msra.mxu0 %v107
  %749 = vmatprep.subr.bf16.mxu0 0
  %750 = vmatpush1.bf16.msra.mxu0 %v126
  %751 = vmatprep.subr.bf16.mxu0 0
  %752 = vmatpush1.bf16.msra.mxu0 0
  %753 = vmatprep.subr.bf16.mxu0 0
  %754 = vmatpush1.bf16.msra.mxu0 0
  %755 = vmatprep.subr.bf16.mxu0 0
  %756 = vmatpush1.bf16.msra.mxu0 0
  %757 = vmatprep.subr.bf16.mxu0 0
  %758 = vmatpush1.bf16.msra.mxu0 0
  %759 = vmatprep.subr.bf16.mxu0 0
  %760 = vmatpush1.bf16.msra.mxu0 0
  %761 = vmatprep.subr.bf16.mxu0 0
  %762 = vmatpush1.bf16.msra.mxu0 0
  %763 = vmatprep.subr.bf16.mxu0 0
  %764 = vmatpush1.bf16.msra.mxu0 0
  %765 = vmatprep.mubr.bf16.mxu0 %v731
  %766 = vmatmul.mubr.bf16.gmra.mrb[0].mxu0 %v728
  %v767 = vpop.f32.mrb[0].mxu0
  %v768 = vadd.f32 %v64, %v767
  %v769 = vpop.f32.mrb[0].mxu0
  %v770 = vpop.f32.mrb[0].mxu0
  %v771 = vpop.f32.mrb[0].mxu0
  %772 = vdwg.mxu0
  %v773 = vmax.f32 %v768, 0.0
  %v774 = vpack.c.bf16 %v773, %v773
  %775 = vmatprep.subr.bf16.mxu0 0
  %776 = vmatpush1.bf16.msra.mxu0 %v208
  %777 = vmatprep.subr.bf16.mxu0 0
  %778 = vmatpush1.bf16.msra.mxu0 %v209
  %779 = vmatprep.subr.bf16.mxu0 0
  %780 = vmatpush1.bf16.msra.mxu0 %v210
  %781 = vmatprep.subr.bf16.mxu0 0
  %782 = vmatpush1.bf16.msra.mxu0 %v211
  %783 = vmatprep.subr.bf16.mxu0 0
  %784 = vmatpush1.bf16.msra.mxu0 %v212
  %785 = vmatprep.subr.bf16.mxu0 0
  %786 = vmatpush1.bf16.msra.mxu0 %v213
  %787 = vmatprep.subr.bf16.mxu0 0
  %788 = vmatpush1.bf16.msra.mxu0 %v214
  %789 = vmatprep.subr.bf16.mxu0 0
  %790 = vmatpush1.bf16.msra.mxu0 %v215
  %791 = vmatprep.subr.bf16.mxu0 0
  %792 = vmatpush1.bf16.msra.mxu0 0
  %793 = vmatprep.subr.bf16.mxu0 0
  %794 = vmatpush1.bf16.msra.mxu0 0
  %795 = vmatprep.subr.bf16.mxu0 0
  %796 = vmatpush1.bf16.msra.mxu0 0
  %797 = vmatprep.subr.bf16.mxu0 0
  %798 = vmatpush1.bf16.msra.mxu0 0
  %799 = vmatprep.subr.bf16.mxu0 0
  %800 = vmatpush1.bf16.msra.mxu0 0
  %801 = vmatprep.subr.bf16.mxu0 0
  %802 = vmatpush1.bf16.msra.mxu0 0
  %803 = vmatprep.subr.bf16.mxu0 0
  %804 = vmatpush1.bf16.msra.mxu0 0
  %805 = vmatprep.subr.bf16.mxu0 0
  %806 = vmatpush1.bf16.msra.mxu0 0
  %807 = vmatprep.mubr.bf16.mxu0 0
  %808 = vmatmul.mubr.bf16.gmra.mrb[0].mxu0 %v774
  %v809 = vpop.f32.mrb[0].mxu0
  %v810 = vadd.f32 %v174, %v809
  %v811 = vpop.f32.mrb[0].mxu0
  %v812 = vpop.f32.mrb[0].mxu0
  %v813 = vpop.f32.mrb[0].mxu0
  %814 = vdwg.mxu0
  %v815 = vmax.f32 %v810, 0.0
  %v816 = vmax.f32 %v724, %v815
  %s817 = scalar_lea.vmem %s0, 112
  %v818 = vld [vmem:[%s817] sm:$0xff]
  %v819 = vld [vmem:[%s817 + $0x8] sm:$0xff]
  %v820 = vpack.c.bf16 %v818, %v818
  %v821 = vpack.c.bf16 %v819, %v819
  %v823 = vsel %vm117, %v821, 0
  %825 = vmatprep.subr.bf16.mxu0 0
  %826 = vmatpush1.bf16.msra.mxu0 %v100
  %827 = vmatprep.subr.bf16.mxu0 0
  %828 = vmatpush1.bf16.msra.mxu0 %v101
  %829 = vmatprep.subr.bf16.mxu0 0
  %830 = vmatpush1.bf16.msra.mxu0 %v102
  %831 = vmatprep.subr.bf16.mxu0 0
  %832 = vmatpush1.bf16.msra.mxu0 %v103
  %833 = vmatprep.subr.bf16.mxu0 0
  %834 = vmatpush1.bf16.msra.mxu0 %v104
  %835 = vmatprep.subr.bf16.mxu0 0
  %836 = vmatpush1.bf16.msra.mxu0 %v105
  %837 = vmatprep.subr.bf16.mxu0 0
  %838 = vmatpush1.bf16.msra.mxu0 %v106
  %839 = vmatprep.subr.bf16.mxu0 0
  %840 = vmatpush1.bf16.msra.mxu0 %v107
  %841 = vmatprep.subr.bf16.mxu0 0
  %842 = vmatpush1.bf16.msra.mxu0 %v126
  %843 = vmatprep.subr.bf16.mxu0 0
  %844 = vmatpush1.bf16.msra.mxu0 0
  %845 = vmatprep.subr.bf16.mxu0 0
  %846 = vmatpush1.bf16.msra.mxu0 0
  %847 = vmatprep.subr.bf16.mxu0 0
  %848 = vmatpush1.bf16.msra.mxu0 0
  %849 = vmatprep.subr.bf16.mxu0 0
  %850 = vmatpush1.bf16.msra.mxu0 0
  %851 = vmatprep.subr.bf16.mxu0 0
  %852 = vmatpush1.bf16.msra.mxu0 0
  %853 = vmatprep.subr.bf16.mxu0 0
  %854 = vmatpush1.bf16.msra.mxu0 0
  %855 = vmatprep.subr.bf16.mxu0 0
  %856 = vmatpush1.bf16.msra.mxu0 0
  %857 = vmatprep.mubr.bf16.mxu0 %v823
  %858 = vmatmul.mubr.bf16.gmra.mrb[0].mxu0 %v820
  %v859 = vpop.f32.mrb[0].mxu0
  %v860 = vadd.f32 %v64, %v859
  %v861 = vpop.f32.mrb[0].mxu0
  %v862 = vpop.f32.mrb[0].mxu0
  %v863 = vpop.f32.mrb[0].mxu0
  %864 = vdwg.mxu0
  %v865 = vmax.f32 %v860, 0.0
  %v866 = vpack.c.bf16 %v865, %v865
  %867 = vmatprep.subr.bf16.mxu0 0
  %868 = vmatpush1.bf16.msra.mxu0 %v208
  %869 = vmatprep.subr.bf16.mxu0 0
  %870 = vmatpush1.bf16.msra.mxu0 %v209
  %871 = vmatprep.subr.bf16.mxu0 0
  %872 = vmatpush1.bf16.msra.mxu0 %v210
  %873 = vmatprep.subr.bf16.mxu0 0
  %874 = vmatpush1.bf16.msra.mxu0 %v211
  %875 = vmatprep.subr.bf16.mxu0 0
  %876 = vmatpush1.bf16.msra.mxu0 %v212
  %877 = vmatprep.subr.bf16.mxu0 0
  %878 = vmatpush1.bf16.msra.mxu0 %v213
  %879 = vmatprep.subr.bf16.mxu0 0
  %880 = vmatpush1.bf16.msra.mxu0 %v214
  %881 = vmatprep.subr.bf16.mxu0 0
  %882 = vmatpush1.bf16.msra.mxu0 %v215
  %883 = vmatprep.subr.bf16.mxu0 0
  %884 = vmatpush1.bf16.msra.mxu0 0
  %885 = vmatprep.subr.bf16.mxu0 0
  %886 = vmatpush1.bf16.msra.mxu0 0
  %887 = vmatprep.subr.bf16.mxu0 0
  %888 = vmatpush1.bf16.msra.mxu0 0
  %889 = vmatprep.subr.bf16.mxu0 0
  %890 = vmatpush1.bf16.msra.mxu0 0
  %891 = vmatprep.subr.bf16.mxu0 0
  %892 = vmatpush1.bf16.msra.mxu0 0
  %893 = vmatprep.subr.bf16.mxu0 0
  %894 = vmatpush1.bf16.msra.mxu0 0
  %895 = vmatprep.subr.bf16.mxu0 0
  %896 = vmatpush1.bf16.msra.mxu0 0
  %897 = vmatprep.subr.bf16.mxu0 0
  %898 = vmatpush1.bf16.msra.mxu0 0
  %899 = vmatprep.mubr.bf16.mxu0 0
  %900 = vmatmul.mubr.bf16.gmra.mrb[0].mxu0 %v866
  %v901 = vpop.f32.mrb[0].mxu0
  %v902 = vadd.f32 %v174, %v901
  %v903 = vpop.f32.mrb[0].mxu0
  %v904 = vpop.f32.mrb[0].mxu0
  %v905 = vpop.f32.mrb[0].mxu0
  %906 = vdwg.mxu0
  %v907 = vmax.f32 %v902, 0.0
  %v908 = vmax.f32 %v816, %v907
  %909 = vst [vmem:[%s5] sm:$0xff] %v908
  // Predicated region
  $region22: #{pointnet_plus_semseg_forward.11} parent=0 // pred_check
    _
  $region23: #{pointnet_plus_semseg_forward.11} parent=0 // pred_check_branch
    %911 = sbr.rel (0) target = $region25
  $region24: #{pointnet_plus_semseg_forward.11} parent=0 // pred_region
    _
  $region25: #{pointnet_plus_semseg_forward.11} parent=0 // pred_fallthru
    _
  // Predicated region
  $region26: #{pointnet_plus_semseg_forward.11} parent=0 // pred_check
    _
  $region27: #{pointnet_plus_semseg_forward.11} parent=0 // pred_check_branch
    %913 = sbr.rel (0) target = $region29
  $region28: #{pointnet_plus_semseg_forward.11} parent=0 // pred_region
    _
  $region29: #{pointnet_plus_semseg_forward.11} parent=0 // pred_fallthru
    _

// kernel: pointnet_plus_semseg_forward.12
$region0: #{pointnet_plus_semseg_forward.12}
  #allocation0 [shape = 'u32[]', space=smem, size = 0x4, offset = 0x4, fixed_abs, tag = 'smem constant byte address 0x4 - core index']
  #allocation1 [shape = 'u32[144,128]{1,0:T(1,128)}', space=vmem, size = 0x12000, scoped, tag = 'internal scratch']
  %s0 = inlined_call_operand.vmem [shape: f32[16,256], index: 0, kind: input, shape index: {}]
  %s1 = inlined_call_operand.vmem [shape: bf16[256,128], index: 1, kind: input, shape index: {}]
  %s2 = inlined_call_operand.vmem [shape: f32[1,128], index: 2, kind: input, shape index: {}]
  %s3 = inlined_call_operand.vmem [shape: bf16[128,64], index: 3, kind: input, shape index: {}]
  %s4 = inlined_call_operand.vmem [shape: f32[1,64], index: 4, kind: input, shape index: {}]
  %s5 = inlined_call_operand.vmem [shape: f32[16,64], index: 5, kind: output, shape index: {}]
  %s6 = sld [smem:[#allocation0]]
  $region30: #{pointnet_plus_semseg_forward.12} parent=0
    _
  %s8 = ssub.s32 1, %s6
  %s9 = scalar_select 0, %s8, %s6
  // Predicated region
  $region2: #{pointnet_plus_semseg_forward.12} parent=0 // pred_check
    _
  $region3: #{pointnet_plus_semseg_forward.12} parent=0 // pred_check_branch
    %11 = sbr.rel (0) target = $region5
  $region4: #{pointnet_plus_semseg_forward.12} parent=0 // pred_region
    _
  $region5: #{pointnet_plus_semseg_forward.12} parent=0 // pred_fallthru
    _
  // Predicated region
  $region6: #{pointnet_plus_semseg_forward.12} parent=0 // pred_check
    _
  $region7: #{pointnet_plus_semseg_forward.12} parent=0 // pred_check_branch
    %13 = sbr.rel (0) target = $region9
  $region8: #{pointnet_plus_semseg_forward.12} parent=0 // pred_region
    _
  $region9: #{pointnet_plus_semseg_forward.12} parent=0 // pred_fallthru
    _
  // Predicated region
  $region10: #{pointnet_plus_semseg_forward.12} parent=0 // pred_check
    _
  $region11: #{pointnet_plus_semseg_forward.12} parent=0 // pred_check_branch
    %15 = sbr.rel (0) target = $region13
  $region12: #{pointnet_plus_semseg_forward.12} parent=0 // pred_region
    _
  $region13: #{pointnet_plus_semseg_forward.12} parent=0 // pred_fallthru
    _
  // Predicated region
  $region14: #{pointnet_plus_semseg_forward.12} parent=0 // pred_check
    _
  $region15: #{pointnet_plus_semseg_forward.12} parent=0 // pred_check_branch
    %17 = sbr.rel (0) target = $region17
  $region16: #{pointnet_plus_semseg_forward.12} parent=0 // pred_region
    _
  $region17: #{pointnet_plus_semseg_forward.12} parent=0 // pred_fallthru
    _
  // Predicated region
  $region18: #{pointnet_plus_semseg_forward.12} parent=0 // pred_check
    _
  $region19: #{pointnet_plus_semseg_forward.12} parent=0 // pred_check_branch
    %19 = sbr.rel (0) target = $region21
  $region20: #{pointnet_plus_semseg_forward.12} parent=0 // pred_region
    _
  $region21: #{pointnet_plus_semseg_forward.12} parent=0 // pred_fallthru
    _
  %v21 = vld [vmem:[%s0] sm:$0xff]
  %v22 = vld [vmem:[%s0 + $0x8] sm:$0xff]
  %v23 = vld [vmem:[%s0 + $0x10] sm:$0xff]
  %v24 = vld [vmem:[%s0 + $0x18] sm:$0xff]
  %v25 = vld [vmem:[%s1] sm:$0xf]
  %v26 = vld [vmem:[%s1 + $0x4] sm:$0xf]
  %v27 = vld [vmem:[%s1 + $0x8] sm:$0xf]
  %v28 = vld [vmem:[%s1 + $0xc] sm:$0xf]
  %v29 = vld [vmem:[%s1 + $0x10] sm:$0xf]
  %v30 = vld [vmem:[%s1 + $0x14] sm:$0xf]
  %v31 = vld [vmem:[%s1 + $0x18] sm:$0xf]
  %v32 = vld [vmem:[%s1 + $0x1c] sm:$0xf]
  %v33 = vld [vmem:[%s1 + $0x20] sm:$0xf]
  %v34 = vld [vmem:[%s1 + $0x24] sm:$0xf]
  %v35 = vld [vmem:[%s1 + $0x28] sm:$0xf]
  %v36 = vld [vmem:[%s1 + $0x2c] sm:$0xf]
  %v37 = vld [vmem:[%s1 + $0x30] sm:$0xf]
  %v38 = vld [vmem:[%s1 + $0x34] sm:$0xf]
  %v39 = vld [vmem:[%s1 + $0x38] sm:$0xf]
  %v40 = vld [vmem:[%s1 + $0x3c] sm:$0xf]
  %v41 = vld [vmem:[%s1 + $0x40] sm:$0xf]
  %v42 = vld [vmem:[%s1 + $0x44] sm:$0xf]
  %v43 = vld [vmem:[%s1 + $0x48] sm:$0xf]
  %v44 = vld [vmem:[%s1 + $0x4c] sm:$0xf]
  %v45 = vld [vmem:[%s1 + $0x50] sm:$0xf]
  %v46 = vld [vmem:[%s1 + $0x54] sm:$0xf]
  %v47 = vld [vmem:[%s1 + $0x58] sm:$0xf]
  %v48 = vld [vmem:[%s1 + $0x5c] sm:$0xf]
  %v49 = vld [vmem:[%s1 + $0x60] sm:$0xf]
  %v50 = vld [vmem:[%s1 + $0x64] sm:$0xf]
  %v51 = vld [vmem:[%s1 + $0x68] sm:$0xf]
  %v52 = vld [vmem:[%s1 + $0x6c] sm:$0xf]
  %v53 = vld [vmem:[%s1 + $0x70] sm:$0xf]
  %v54 = vld [vmem:[%s1 + $0x74] sm:$0xf]
  %v55 = vld [vmem:[%s1 + $0x78] sm:$0xf]
  %v56 = vld [vmem:[%s1 + $0x7c] sm:$0xf]
  %v57 = vld [vmem:[%s2] sm:$0x1]
  %v58 = vpack.c.bf16 %v23, %v21
  %v59 = vpack.c.bf16 %v24, %v22
  %v61 = vlaneseq
  %v62 = vshrl.u32 %v61, 7
  %v63 = vsub.s32 0, %v62
  %v64 = vrot.slane %v57, %v63
  %v98 = vunpack.c.l.b16 %v25
  %v99 = vunpack.c.l.b16 %v26
  %v100 = vunpack.c.l.b16 %v27
  %v101 = vunpack.c.l.b16 %v28
  %v102 = vunpack.c.l.b16 %v29
  %v103 = vunpack.c.l.b16 %v30
  %v104 = vunpack.c.l.b16 %v31
  %v105 = vunpack.c.l.b16 %v32
  %v106 = vunpack.c.l.b16 %v33
  %v107 = vunpack.c.l.b16 %v34
  %v108 = vunpack.c.l.b16 %v35
  %v109 = vunpack.c.l.b16 %v36
  %v110 = vunpack.c.l.b16 %v37
  %v111 = vunpack.c.l.b16 %v38
  %v112 = vunpack.c.l.b16 %v39
  %v113 = vunpack.c.l.b16 %v40
  %v114 = vunpack.c.l.b16 %v41
  %v115 = vunpack.c.l.b16 %v42
  %v116 = vunpack.c.l.b16 %v43
  %v117 = vunpack.c.l.b16 %v44
  %v118 = vunpack.c.l.b16 %v45
  %v119 = vunpack.c.l.b16 %v46
  %v120 = vunpack.c.l.b16 %v47
  %v121 = vunpack.c.l.b16 %v48
  %v122 = vunpack.c.l.b16 %v49
  %v123 = vunpack.c.l.b16 %v50
  %v124 = vunpack.c.l.b16 %v51
  %v125 = vunpack.c.l.b16 %v52
  %v126 = vunpack.c.l.b16 %v53
  %v127 = vunpack.c.l.b16 %v54
  %v128 = vunpack.c.l.b16 %v55
  %v129 = vunpack.c.l.b16 %v56
  %v130 = vpack.c.b16 %v99, %v98
  %v131 = vpack.c.b16 %v101, %v100
  %v132 = vpack.c.b16 %v103, %v102
  %v133 = vpack.c.b16 %v105, %v104
  %v134 = vpack.c.b16 %v107, %v106
  %v135 = vpack.c.b16 %v109, %v108
  %v136 = vpack.c.b16 %v111, %v110
  %v137 = vpack.c.b16 %v113, %v112
  %v138 = vpack.c.b16 %v115, %v114
  %v139 = vpack.c.b16 %v117, %v116
  %v140 = vpack.c.b16 %v119, %v118
  %v141 = vpack.c.b16 %v121, %v120
  %v142 = vpack.c.b16 %v123, %v122
  %v143 = vpack.c.b16 %v125, %v124
  %v144 = vpack.c.b16 %v127, %v126
  %v145 = vpack.c.b16 %v129, %v128
  %162 = vmatprep.subr.bf16.mxu0 0
  %163 = vmatpush1.bf16.msra.mxu0 %v130
  %164 = vmatprep.subr.bf16.mxu0 0
  %165 = vmatpush1.bf16.msra.mxu0 %v131
  %166 = vmatprep.subr.bf16.mxu0 0
  %167 = vmatpush1.bf16.msra.mxu0 %v132
  %168 = vmatprep.subr.bf16.mxu0 0
  %169 = vmatpush1.bf16.msra.mxu0 %v133
  %170 = vmatprep.subr.bf16.mxu0 0
  %171 = vmatpush1.bf16.msra.mxu0 %v134
  %172 = vmatprep.subr.bf16.mxu0 0
  %173 = vmatpush1.bf16.msra.mxu0 %v135
  %174 = vmatprep.subr.bf16.mxu0 0
  %175 = vmatpush1.bf16.msra.mxu0 %v136
  %176 = vmatprep.subr.bf16.mxu0 0
  %177 = vmatpush1.bf16.msra.mxu0 %v137
  %178 = vmatprep.subr.bf16.mxu0 0
  %179 = vmatpush1.bf16.msra.mxu0 %v138
  %180 = vmatprep.subr.bf16.mxu0 0
  %181 = vmatpush1.bf16.msra.mxu0 %v139
  %182 = vmatprep.subr.bf16.mxu0 0
  %183 = vmatpush1.bf16.msra.mxu0 %v140
  %184 = vmatprep.subr.bf16.mxu0 0
  %185 = vmatpush1.bf16.msra.mxu0 %v141
  %186 = vmatprep.subr.bf16.mxu0 0
  %187 = vmatpush1.bf16.msra.mxu0 %v142
  %188 = vmatprep.subr.bf16.mxu0 0
  %189 = vmatpush1.bf16.msra.mxu0 %v143
  %190 = vmatprep.subr.bf16.mxu0 0
  %191 = vmatpush1.bf16.msra.mxu0 %v144
  %192 = vmatprep.subr.bf16.mxu0 0
  %193 = vmatpush1.bf16.msra.mxu0 %v145
  %194 = vmatprep.mubr.bf16.mxu0 %v59
  %195 = vmatmul.mubr.bf16.gmra.mrb[0].mxu0 %v58
  %v196 = vpop.f32.mrb[0].mxu0
  %v197 = vadd.f32 %v64, %v196
  %v198 = vpop.f32.mrb[0].mxu0
  %v199 = vpop.f32.mrb[0].mxu0
  %v200 = vadd.f32 %v64, %v199
  %v201 = vpop.f32.mrb[0].mxu0
  %202 = vdwg.mxu0
  %v203 = vmax.f32 %v197, 0.0
  %v204 = vmax.f32 %v200, 0.0
  %v205 = vld [vmem:[%s3] sm:$0xf]
  %v206 = vld [vmem:[%s3 + $0x4] sm:$0xf]
  %v207 = vld [vmem:[%s3 + $0x8] sm:$0xf]
  %v208 = vld [vmem:[%s3 + $0xc] sm:$0xf]
  %v209 = vld [vmem:[%s3 + $0x10] sm:$0xf]
  %v210 = vld [vmem:[%s3 + $0x14] sm:$0xf]
  %v211 = vld [vmem:[%s3 + $0x18] sm:$0xf]
  %v212 = vld [vmem:[%s3 + $0x1c] sm:$0xf]
  %v213 = vld [vmem:[%s3 + $0x20] sm:$0xf]
  %v214 = vld [vmem:[%s3 + $0x24] sm:$0xf]
  %v215 = vld [vmem:[%s3 + $0x28] sm:$0xf]
  %v216 = vld [vmem:[%s3 + $0x2c] sm:$0xf]
  %v217 = vld [vmem:[%s3 + $0x30] sm:$0xf]
  %v218 = vld [vmem:[%s3 + $0x34] sm:$0xf]
  %v219 = vld [vmem:[%s3 + $0x38] sm:$0xf]
  %v220 = vld [vmem:[%s3 + $0x3c] sm:$0xf]
  %v221 = vld [vmem:[%s4] sm:$0x1]
  %v222 = vpack.c.bf16 %v204, %v203
  %v224 = vlaneseq
  %v225 = vshrl.u32 %v224, 7
  %v226 = vsub.s32 0, %v225
  %v227 = vrot.slane %v221, %v226
  %v245 = vunpack.c.l.b16 %v205
  %v246 = vunpack.c.l.b16 %v206
  %v247 = vunpack.c.l.b16 %v207
  %v248 = vunpack.c.l.b16 %v208
  %v249 = vunpack.c.l.b16 %v209
  %v250 = vunpack.c.l.b16 %v210
  %v251 = vunpack.c.l.b16 %v211
  %v252 = vunpack.c.l.b16 %v212
  %v253 = vunpack.c.l.b16 %v213
  %v254 = vunpack.c.l.b16 %v214
  %v255 = vunpack.c.l.b16 %v215
  %v256 = vunpack.c.l.b16 %v216
  %v257 = vunpack.c.l.b16 %v217
  %v258 = vunpack.c.l.b16 %v218
  %v259 = vunpack.c.l.b16 %v219
  %v260 = vunpack.c.l.b16 %v220
  %v261 = vpack.c.b16 %v246, %v245
  %v262 = vpack.c.b16 %v248, %v247
  %v263 = vpack.c.b16 %v250, %v249
  %v264 = vpack.c.b16 %v252, %v251
  %v265 = vpack.c.b16 %v254, %v253
  %v266 = vpack.c.b16 %v256, %v255
  %v267 = vpack.c.b16 %v258, %v257
  %v268 = vpack.c.b16 %v260, %v259
  %277 = vmatprep.subr.bf16.mxu0 0
  %278 = vmatpush1.bf16.msra.mxu0 %v261
  %279 = vmatprep.subr.bf16.mxu0 0
  %280 = vmatpush1.bf16.msra.mxu0 %v262
  %281 = vmatprep.subr.bf16.mxu0 0
  %282 = vmatpush1.bf16.msra.mxu0 %v263
  %283 = vmatprep.subr.bf16.mxu0 0
  %284 = vmatpush1.bf16.msra.mxu0 %v264
  %285 = vmatprep.subr.bf16.mxu0 0
  %286 = vmatpush1.bf16.msra.mxu0 %v265
  %287 = vmatprep.subr.bf16.mxu0 0
  %288 = vmatpush1.bf16.msra.mxu0 %v266
  %289 = vmatprep.subr.bf16.mxu0 0
  %290 = vmatpush1.bf16.msra.mxu0 %v267
  %291 = vmatprep.subr.bf16.mxu0 0
  %292 = vmatpush1.bf16.msra.mxu0 %v268
  %293 = vmatprep.subr.bf16.mxu0 0
  %294 = vmatpush1.bf16.msra.mxu0 0
  %295 = vmatprep.subr.bf16.mxu0 0
  %296 = vmatpush1.bf16.msra.mxu0 0
  %297 = vmatprep.subr.bf16.mxu0 0
  %298 = vmatpush1.bf16.msra.mxu0 0
  %299 = vmatprep.subr.bf16.mxu0 0
  %300 = vmatpush1.bf16.msra.mxu0 0
  %301 = vmatprep.subr.bf16.mxu0 0
  %302 = vmatpush1.bf16.msra.mxu0 0
  %303 = vmatprep.subr.bf16.mxu0 0
  %304 = vmatpush1.bf16.msra.mxu0 0
  %305 = vmatprep.subr.bf16.mxu0 0
  %306 = vmatpush1.bf16.msra.mxu0 0
  %307 = vmatprep.subr.bf16.mxu0 0
  %308 = vmatpush1.bf16.msra.mxu0 0
  %309 = vmatprep.mubr.bf16.mxu0 0
  %310 = vmatmul.mubr.bf16.gmra.mrb[0].mxu0 %v222
  %v311 = vpop.f32.mrb[0].mxu0
  %v312 = vadd.f32 %v227, %v311
  %v313 = vpop.f32.mrb[0].mxu0
  %v314 = vpop.f32.mrb[0].mxu0
  %v315 = vadd.f32 %v227, %v314
  %v316 = vpop.f32.mrb[0].mxu0
  %317 = vdwg.mxu0
  %v318 = vmax.f32 %v312, 0.0
  %v319 = vmax.f32 %v315, 0.0
  %vm320 = vcmask 523264
  %321 = vst.msk [vmem:[%s5] sm:$0xff] %vm320, %v318
  %322 = vst.msk [vmem:[%s5 + $0x8] sm:$0xff] %vm320, %v319
  // Predicated region
  $region22: #{pointnet_plus_semseg_forward.12} parent=0 // pred_check
    _
  $region23: #{pointnet_plus_semseg_forward.12} parent=0 // pred_check_branch
    %324 = sbr.rel (0) target = $region25
  $region24: #{pointnet_plus_semseg_forward.12} parent=0 // pred_region
    _
  $region25: #{pointnet_plus_semseg_forward.12} parent=0 // pred_fallthru
    _
  // Predicated region
  $region26: #{pointnet_plus_semseg_forward.12} parent=0 // pred_check
    _
  $region27: #{pointnet_plus_semseg_forward.12} parent=0 // pred_check_branch
    %326 = sbr.rel (0) target = $region29
  $region28: #{pointnet_plus_semseg_forward.12} parent=0 // pred_region
    _
  $region29: #{pointnet_plus_semseg_forward.12} parent=0 // pred_fallthru
    _

// kernel: pointnet_plus_semseg_forward.13
$region0: #{pointnet_plus_semseg_forward.13}
  #allocation0 [shape = 'u32[]', space=smem, size = 0x4, offset = 0x4, fixed_abs, tag = 'smem constant byte address 0x4 - core index']
  #allocation1 [shape = 'u32[144,128]{1,0:T(1,128)}', space=vmem, size = 0x12000, scoped, tag = 'internal scratch']
  %s0 = inlined_call_operand.vmem [shape: f32[32,128], index: 0, kind: input, shape index: {}]
  %s1 = inlined_call_operand.vmem [shape: bf16[128,64], index: 1, kind: input, shape index: {}]
  %s2 = inlined_call_operand.vmem [shape: f32[1,64], index: 2, kind: input, shape index: {}]
  %s3 = inlined_call_operand.vmem [shape: bf16[64,64], index: 3, kind: input, shape index: {}]
  %s4 = inlined_call_operand.vmem [shape: f32[1,64], index: 4, kind: input, shape index: {}]
  %s5 = inlined_call_operand.vmem [shape: f32[32,64], index: 5, kind: output, shape index: {}]
  %s6 = sld [smem:[#allocation0]]
  $region30: #{pointnet_plus_semseg_forward.13} parent=0
    _
  %s8 = ssub.s32 1, %s6
  %s9 = scalar_select 0, %s8, %s6
  // Predicated region
  $region2: #{pointnet_plus_semseg_forward.13} parent=0 // pred_check
    _
  $region3: #{pointnet_plus_semseg_forward.13} parent=0 // pred_check_branch
    %11 = sbr.rel (0) target = $region5
  $region4: #{pointnet_plus_semseg_forward.13} parent=0 // pred_region
    _
  $region5: #{pointnet_plus_semseg_forward.13} parent=0 // pred_fallthru
    _
  // Predicated region
  $region6: #{pointnet_plus_semseg_forward.13} parent=0 // pred_check
    _
  $region7: #{pointnet_plus_semseg_forward.13} parent=0 // pred_check_branch
    %13 = sbr.rel (0) target = $region9
  $region8: #{pointnet_plus_semseg_forward.13} parent=0 // pred_region
    _
  $region9: #{pointnet_plus_semseg_forward.13} parent=0 // pred_fallthru
    _
  // Predicated region
  $region10: #{pointnet_plus_semseg_forward.13} parent=0 // pred_check
    _
  $region11: #{pointnet_plus_semseg_forward.13} parent=0 // pred_check_branch
    %15 = sbr.rel (0) target = $region13
  $region12: #{pointnet_plus_semseg_forward.13} parent=0 // pred_region
    _
  $region13: #{pointnet_plus_semseg_forward.13} parent=0 // pred_fallthru
    _
  // Predicated region
  $region14: #{pointnet_plus_semseg_forward.13} parent=0 // pred_check
    _
  $region15: #{pointnet_plus_semseg_forward.13} parent=0 // pred_check_branch
    %17 = sbr.rel (0) target = $region17
  $region16: #{pointnet_plus_semseg_forward.13} parent=0 // pred_region
    _
  $region17: #{pointnet_plus_semseg_forward.13} parent=0 // pred_fallthru
    _
  // Predicated region
  $region18: #{pointnet_plus_semseg_forward.13} parent=0 // pred_check
    _
  $region19: #{pointnet_plus_semseg_forward.13} parent=0 // pred_check_branch
    %19 = sbr.rel (0) target = $region21
  $region20: #{pointnet_plus_semseg_forward.13} parent=0 // pred_region
    _
  $region21: #{pointnet_plus_semseg_forward.13} parent=0 // pred_fallthru
    _
  %v21 = vld [vmem:[%s0] sm:$0xff]
  %v22 = vld [vmem:[%s0 + $0x8] sm:$0xff]
  %v23 = vld [vmem:[%s0 + $0x10] sm:$0xff]
  %v24 = vld [vmem:[%s0 + $0x18] sm:$0xff]
  %v25 = vld [vmem:[%s1] sm:$0xf]
  %v26 = vld [vmem:[%s1 + $0x4] sm:$0xf]
  %v27 = vld [vmem:[%s1 + $0x8] sm:$0xf]
  %v28 = vld [vmem:[%s1 + $0xc] sm:$0xf]
  %v29 = vld [vmem:[%s1 + $0x10] sm:$0xf]
  %v30 = vld [vmem:[%s1 + $0x14] sm:$0xf]
  %v31 = vld [vmem:[%s1 + $0x18] sm:$0xf]
  %v32 = vld [vmem:[%s1 + $0x1c] sm:$0xf]
  %v33 = vld [vmem:[%s1 + $0x20] sm:$0xf]
  %v34 = vld [vmem:[%s1 + $0x24] sm:$0xf]
  %v35 = vld [vmem:[%s1 + $0x28] sm:$0xf]
  %v36 = vld [vmem:[%s1 + $0x2c] sm:$0xf]
  %v37 = vld [vmem:[%s1 + $0x30] sm:$0xf]
  %v38 = vld [vmem:[%s1 + $0x34] sm:$0xf]
  %v39 = vld [vmem:[%s1 + $0x38] sm:$0xf]
  %v40 = vld [vmem:[%s1 + $0x3c] sm:$0xf]
  %v41 = vld [vmem:[%s2] sm:$0x1]
  %v42 = vpack.c.bf16 %v22, %v21
  %v43 = vpack.c.bf16 %v24, %v23
  %v45 = vlaneseq
  %v46 = vshrl.u32 %v45, 7
  %v47 = vsub.s32 0, %v46
  %v48 = vrot.slane %v41, %v47
  %v66 = vunpack.c.l.b16 %v25
  %v67 = vunpack.c.l.b16 %v26
  %v68 = vunpack.c.l.b16 %v27
  %v69 = vunpack.c.l.b16 %v28
  %v70 = vunpack.c.l.b16 %v29
  %v71 = vunpack.c.l.b16 %v30
  %v72 = vunpack.c.l.b16 %v31
  %v73 = vunpack.c.l.b16 %v32
  %v74 = vunpack.c.l.b16 %v33
  %v75 = vunpack.c.l.b16 %v34
  %v76 = vunpack.c.l.b16 %v35
  %v77 = vunpack.c.l.b16 %v36
  %v78 = vunpack.c.l.b16 %v37
  %v79 = vunpack.c.l.b16 %v38
  %v80 = vunpack.c.l.b16 %v39
  %v81 = vunpack.c.l.b16 %v40
  %v82 = vpack.c.b16 %v67, %v66
  %v83 = vpack.c.b16 %v69, %v68
  %v84 = vpack.c.b16 %v71, %v70
  %v85 = vpack.c.b16 %v73, %v72
  %v86 = vpack.c.b16 %v75, %v74
  %v87 = vpack.c.b16 %v77, %v76
  %v88 = vpack.c.b16 %v79, %v78
  %v89 = vpack.c.b16 %v81, %v80
  %98 = vmatprep.subr.bf16.mxu0 0
  %99 = vmatpush1.bf16.msra.mxu0 %v82
  %100 = vmatprep.subr.bf16.mxu0 0
  %101 = vmatpush1.bf16.msra.mxu0 %v83
  %102 = vmatprep.subr.bf16.mxu0 0
  %103 = vmatpush1.bf16.msra.mxu0 %v84
  %104 = vmatprep.subr.bf16.mxu0 0
  %105 = vmatpush1.bf16.msra.mxu0 %v85
  %106 = vmatprep.subr.bf16.mxu0 0
  %107 = vmatpush1.bf16.msra.mxu0 %v86
  %108 = vmatprep.subr.bf16.mxu0 0
  %109 = vmatpush1.bf16.msra.mxu0 %v87
  %110 = vmatprep.subr.bf16.mxu0 0
  %111 = vmatpush1.bf16.msra.mxu0 %v88
  %112 = vmatprep.subr.bf16.mxu0 0
  %113 = vmatpush1.bf16.msra.mxu0 %v89
  %114 = vmatprep.subr.bf16.mxu0 0
  %115 = vmatpush1.bf16.msra.mxu0 0
  %116 = vmatprep.subr.bf16.mxu0 0
  %117 = vmatpush1.bf16.msra.mxu0 0
  %118 = vmatprep.subr.bf16.mxu0 0
  %119 = vmatpush1.bf16.msra.mxu0 0
  %120 = vmatprep.subr.bf16.mxu0 0
  %121 = vmatpush1.bf16.msra.mxu0 0
  %122 = vmatprep.subr.bf16.mxu0 0
  %123 = vmatpush1.bf16.msra.mxu0 0
  %124 = vmatprep.subr.bf16.mxu0 0
  %125 = vmatpush1.bf16.msra.mxu0 0
  %126 = vmatprep.subr.bf16.mxu0 0
  %127 = vmatpush1.bf16.msra.mxu0 0
  %128 = vmatprep.subr.bf16.mxu0 0
  %129 = vmatpush1.bf16.msra.mxu0 0
  %130 = vmatprep.mubr.bf16.mxu0 0
  %131 = vmatmul.mubr.bf16.gmra.mrb[0].mxu0 %v42
  %v132 = vpop.f32.mrb[0].mxu0
  %v133 = vadd.f32 %v48, %v132
  %v134 = vpop.f32.mrb[0].mxu0
  %v135 = vpop.f32.mrb[0].mxu0
  %v136 = vadd.f32 %v48, %v135
  %v137 = vpop.f32.mrb[0].mxu0
  %138 = vmatprep.mubr.bf16.mxu0 0
  %139 = vmatmul.mubr.bf16.gmra.mrb[0].mxu0 %v43
  %v140 = vpop.f32.mrb[0].mxu0
  %v141 = vadd.f32 %v48, %v140
  %v142 = vpop.f32.mrb[0].mxu0
  %v143 = vpop.f32.mrb[0].mxu0
  %v144 = vadd.f32 %v48, %v143
  %v145 = vpop.f32.mrb[0].mxu0
  %146 = vdwg.mxu0
  %v147 = vmax.f32 %v133, 0.0
  %v148 = vmax.f32 %v136, 0.0
  %v149 = vmax.f32 %v141, 0.0
  %v150 = vmax.f32 %v144, 0.0
  %v151 = vld [vmem:[%s3] sm:$0xf]
  %v152 = vld [vmem:[%s3 + $0x4] sm:$0xf]
  %v153 = vld [vmem:[%s3 + $0x8] sm:$0xf]
  %v154 = vld [vmem:[%s3 + $0xc] sm:$0xf]
  %v155 = vld [vmem:[%s3 + $0x10] sm:$0xf]
  %v156 = vld [vmem:[%s3 + $0x14] sm:$0xf]
  %v157 = vld [vmem:[%s3 + $0x18] sm:$0xf]
  %v158 = vld [vmem:[%s3 + $0x1c] sm:$0xf]
  %v159 = vld [vmem:[%s4] sm:$0x1]
  %v160 = vpack.c.bf16 %v148, %v147
  %v161 = vpack.c.bf16 %v150, %v149
  %v163 = vlaneseq
  %v164 = vshrl.u32 %v163, 7
  %v165 = vsub.s32 0, %v164
  %v166 = vrot.slane %v159, %v165
  %v176 = vunpack.c.l.b16 %v151
  %v177 = vunpack.c.l.b16 %v152
  %v178 = vunpack.c.l.b16 %v153
  %v179 = vunpack.c.l.b16 %v154
  %v180 = vunpack.c.l.b16 %v155
  %v181 = vunpack.c.l.b16 %v156
  %v182 = vunpack.c.l.b16 %v157
  %v183 = vunpack.c.l.b16 %v158
  %v184 = vpack.c.b16 %v177, %v176
  %v185 = vpack.c.b16 %v179, %v178
  %v186 = vpack.c.b16 %v181, %v180
  %v187 = vpack.c.b16 %v183, %v182
  %vm192 = vcmask 523264
  %v194 = vsel %vm192, %v160, 0
  %v197 = vsel %vm192, %v161, 0
  %199 = vmatprep.subr.bf16.mxu0 0
  %200 = vmatpush1.bf16.msra.mxu0 %v184
  %201 = vmatprep.subr.bf16.mxu0 0
  %202 = vmatpush1.bf16.msra.mxu0 %v185
  %203 = vmatprep.subr.bf16.mxu0 0
  %204 = vmatpush1.bf16.msra.mxu0 %v186
  %205 = vmatprep.subr.bf16.mxu0 0
  %206 = vmatpush1.bf16.msra.mxu0 %v187
  %207 = vmatprep.subr.bf16.mxu0 0
  %208 = vmatpush1.bf16.msra.mxu0 0
  %209 = vmatprep.subr.bf16.mxu0 0
  %210 = vmatpush1.bf16.msra.mxu0 0
  %211 = vmatprep.subr.bf16.mxu0 0
  %212 = vmatpush1.bf16.msra.mxu0 0
  %213 = vmatprep.subr.bf16.mxu0 0
  %214 = vmatpush1.bf16.msra.mxu0 0
  %215 = vmatprep.subr.bf16.mxu0 0
  %216 = vmatpush1.bf16.msra.mxu0 0
  %217 = vmatprep.subr.bf16.mxu0 0
  %218 = vmatpush1.bf16.msra.mxu0 0
  %219 = vmatprep.subr.bf16.mxu0 0
  %220 = vmatpush1.bf16.msra.mxu0 0
  %221 = vmatprep.subr.bf16.mxu0 0
  %222 = vmatpush1.bf16.msra.mxu0 0
  %223 = vmatprep.subr.bf16.mxu0 0
  %224 = vmatpush1.bf16.msra.mxu0 0
  %225 = vmatprep.subr.bf16.mxu0 0
  %226 = vmatpush1.bf16.msra.mxu0 0
  %227 = vmatprep.subr.bf16.mxu0 0
  %228 = vmatpush1.bf16.msra.mxu0 0
  %229 = vmatprep.subr.bf16.mxu0 0
  %230 = vmatpush1.bf16.msra.mxu0 0
  %231 = vmatprep.mubr.bf16.mxu0 0
  %232 = vmatmul.mubr.bf16.gmra.mrb[0].mxu0 %v194
  %v233 = vpop.f32.mrb[0].mxu0
  %v234 = vadd.f32 %v166, %v233
  %v235 = vpop.f32.mrb[0].mxu0
  %v236 = vpop.f32.mrb[0].mxu0
  %v237 = vadd.f32 %v166, %v236
  %v238 = vpop.f32.mrb[0].mxu0
  %239 = vmatprep.mubr.bf16.mxu0 0
  %240 = vmatmul.mubr.bf16.gmra.mrb[0].mxu0 %v197
  %v241 = vpop.f32.mrb[0].mxu0
  %v242 = vadd.f32 %v166, %v241
  %v243 = vpop.f32.mrb[0].mxu0
  %v244 = vpop.f32.mrb[0].mxu0
  %v245 = vadd.f32 %v166, %v244
  %v246 = vpop.f32.mrb[0].mxu0
  %247 = vdwg.mxu0
  %v248 = vmax.f32 %v234, 0.0
  %v249 = vmax.f32 %v237, 0.0
  %v250 = vmax.f32 %v242, 0.0
  %v251 = vmax.f32 %v245, 0.0
  %252 = vst.msk [vmem:[%s5] sm:$0xff] %vm192, %v248
  %253 = vst.msk [vmem:[%s5 + $0x8] sm:$0xff] %vm192, %v249
  %254 = vst.msk [vmem:[%s5 + $0x10] sm:$0xff] %vm192, %v250
  %255 = vst.msk [vmem:[%s5 + $0x18] sm:$0xff] %vm192, %v251
  // Predicated region
  $region22: #{pointnet_plus_semseg_forward.13} parent=0 // pred_check
    _
  $region23: #{pointnet_plus_semseg_forward.13} parent=0 // pred_check_branch
    %257 = sbr.rel (0) target = $region25
  $region24: #{pointnet_plus_semseg_forward.13} parent=0 // pred_region
    _
  $region25: #{pointnet_plus_semseg_forward.13} parent=0 // pred_fallthru
    _
  // Predicated region
  $region26: #{pointnet_plus_semseg_forward.13} parent=0 // pred_check
    _
  $region27: #{pointnet_plus_semseg_forward.13} parent=0 // pred_check_branch
    %259 = sbr.rel (0) target = $region29
  $region28: #{pointnet_plus_semseg_forward.13} parent=0 // pred_region
    _
  $region29: #{pointnet_plus_semseg_forward.13} parent=0 // pred_fallthru
    _

// kernel: pointnet_plus_semseg_forward.14
$region0: #{pointnet_plus_semseg_forward.14}
  #allocation0 [shape = 'u32[]', space=smem, size = 0x4, offset = 0x4, fixed_abs, tag = 'smem constant byte address 0x4 - core index']
  #allocation1 [shape = 'u32[144,128]{1,0:T(1,128)}', space=vmem, size = 0x12000, scoped, tag = 'internal scratch']
  %s0 = inlined_call_operand.vmem [shape: f32[64,96], index: 0, kind: input, shape index: {}]
  %s1 = inlined_call_operand.vmem [shape: bf16[96,64], index: 1, kind: input, shape index: {}]
  %s2 = inlined_call_operand.vmem [shape: f32[1,64], index: 2, kind: input, shape index: {}]
  %s3 = inlined_call_operand.vmem [shape: bf16[64,32], index: 3, kind: input, shape index: {}]
  %s4 = inlined_call_operand.vmem [shape: f32[1,32], index: 4, kind: input, shape index: {}]
  %s5 = inlined_call_operand.vmem [shape: f32[64,32], index: 5, kind: output, shape index: {}]
  %s6 = sld [smem:[#allocation0]]
  $region30: #{pointnet_plus_semseg_forward.14} parent=0
    _
  %s8 = ssub.s32 1, %s6
  %s9 = scalar_select 0, %s8, %s6
  // Predicated region
  $region2: #{pointnet_plus_semseg_forward.14} parent=0 // pred_check
    _
  $region3: #{pointnet_plus_semseg_forward.14} parent=0 // pred_check_branch
    %11 = sbr.rel (0) target = $region5
  $region4: #{pointnet_plus_semseg_forward.14} parent=0 // pred_region
    _
  $region5: #{pointnet_plus_semseg_forward.14} parent=0 // pred_fallthru
    _
  // Predicated region
  $region6: #{pointnet_plus_semseg_forward.14} parent=0 // pred_check
    _
  $region7: #{pointnet_plus_semseg_forward.14} parent=0 // pred_check_branch
    %13 = sbr.rel (0) target = $region9
  $region8: #{pointnet_plus_semseg_forward.14} parent=0 // pred_region
    _
  $region9: #{pointnet_plus_semseg_forward.14} parent=0 // pred_fallthru
    _
  // Predicated region
  $region10: #{pointnet_plus_semseg_forward.14} parent=0 // pred_check
    _
  $region11: #{pointnet_plus_semseg_forward.14} parent=0 // pred_check_branch
    %15 = sbr.rel (0) target = $region13
  $region12: #{pointnet_plus_semseg_forward.14} parent=0 // pred_region
    _
  $region13: #{pointnet_plus_semseg_forward.14} parent=0 // pred_fallthru
    _
  // Predicated region
  $region14: #{pointnet_plus_semseg_forward.14} parent=0 // pred_check
    _
  $region15: #{pointnet_plus_semseg_forward.14} parent=0 // pred_check_branch
    %17 = sbr.rel (0) target = $region17
  $region16: #{pointnet_plus_semseg_forward.14} parent=0 // pred_region
    _
  $region17: #{pointnet_plus_semseg_forward.14} parent=0 // pred_fallthru
    _
  // Predicated region
  $region18: #{pointnet_plus_semseg_forward.14} parent=0 // pred_check
    _
  $region19: #{pointnet_plus_semseg_forward.14} parent=0 // pred_check_branch
    %19 = sbr.rel (0) target = $region21
  $region20: #{pointnet_plus_semseg_forward.14} parent=0 // pred_region
    _
  $region21: #{pointnet_plus_semseg_forward.14} parent=0 // pred_fallthru
    _
  %v21 = vld [vmem:[%s0] sm:$0xff]
  %v22 = vld [vmem:[%s0 + $0x8] sm:$0xff]
  %v23 = vld [vmem:[%s0 + $0x10] sm:$0xff]
  %v24 = vld [vmem:[%s0 + $0x18] sm:$0xff]
  %v25 = vld [vmem:[%s0 + $0x20] sm:$0xff]
  %v26 = vld [vmem:[%s0 + $0x28] sm:$0xff]
  %v27 = vld [vmem:[%s0 + $0x30] sm:$0xff]
  %v28 = vld [vmem:[%s0 + $0x38] sm:$0xff]
  %v29 = vld [vmem:[%s1] sm:$0xf]
  %v30 = vld [vmem:[%s1 + $0x4] sm:$0xf]
  %v31 = vld [vmem:[%s1 + $0x8] sm:$0xf]
  %v32 = vld [vmem:[%s1 + $0xc] sm:$0xf]
  %v33 = vld [vmem:[%s1 + $0x10] sm:$0xf]
  %v34 = vld [vmem:[%s1 + $0x14] sm:$0xf]
  %v35 = vld [vmem:[%s1 + $0x18] sm:$0xf]
  %v36 = vld [vmem:[%s1 + $0x1c] sm:$0xf]
  %v37 = vld [vmem:[%s1 + $0x20] sm:$0xf]
  %v38 = vld [vmem:[%s1 + $0x24] sm:$0xf]
  %v39 = vld [vmem:[%s1 + $0x28] sm:$0xf]
  %v40 = vld [vmem:[%s1 + $0x2c] sm:$0xf]
  %v41 = vld [vmem:[%s2] sm:$0x1]
  %v42 = vpack.c.bf16 %v22, %v21
  %v43 = vpack.c.bf16 %v24, %v23
  %v44 = vpack.c.bf16 %v26, %v25
  %v45 = vpack.c.bf16 %v28, %v27
  %v47 = vlaneseq
  %v48 = vshrl.u32 %v47, 7
  %v49 = vsub.s32 0, %v48
  %v50 = vrot.slane %v41, %v49
  %v64 = vunpack.c.l.b16 %v29
  %v65 = vunpack.c.l.b16 %v30
  %v66 = vunpack.c.l.b16 %v31
  %v67 = vunpack.c.l.b16 %v32
  %v68 = vunpack.c.l.b16 %v33
  %v69 = vunpack.c.l.b16 %v34
  %v70 = vunpack.c.l.b16 %v35
  %v71 = vunpack.c.l.b16 %v36
  %v72 = vunpack.c.l.b16 %v37
  %v73 = vunpack.c.l.b16 %v38
  %v74 = vunpack.c.l.b16 %v39
  %v75 = vunpack.c.l.b16 %v40
  %v76 = vpack.c.b16 %v65, %v64
  %v77 = vpack.c.b16 %v67, %v66
  %v78 = vpack.c.b16 %v69, %v68
  %v79 = vpack.c.b16 %v71, %v70
  %v80 = vpack.c.b16 %v73, %v72
  %v81 = vpack.c.b16 %v75, %v74
  %vm88 = vcmask 785408
  %v90 = vsel %vm88, %v42, 0
  %v93 = vsel %vm88, %v43, 0
  %v96 = vsel %vm88, %v44, 0
  %v99 = vsel %vm88, %v45, 0
  %101 = vmatprep.subr.bf16.mxu0 0
  %102 = vmatpush1.bf16.msra.mxu0 %v76
  %103 = vmatprep.subr.bf16.mxu0 0
  %104 = vmatpush1.bf16.msra.mxu0 %v77
  %105 = vmatprep.subr.bf16.mxu0 0
  %106 = vmatpush1.bf16.msra.mxu0 %v78
  %107 = vmatprep.subr.bf16.mxu0 0
  %108 = vmatpush1.bf16.msra.mxu0 %v79
  %109 = vmatprep.subr.bf16.mxu0 0
  %110 = vmatpush1.bf16.msra.mxu0 %v80
  %111 = vmatprep.subr.bf16.mxu0 0
  %112 = vmatpush1.bf16.msra.mxu0 %v81
  %113 = vmatprep.subr.bf16.mxu0 0
  %114 = vmatpush1.bf16.msra.mxu0 0
  %115 = vmatprep.subr.bf16.mxu0 0
  %116 = vmatpush1.bf16.msra.mxu0 0
  %117 = vmatprep.subr.bf16.mxu0 0
  %118 = vmatpush1.bf16.msra.mxu0 0
  %119 = vmatprep.subr.bf16.mxu0 0
  %120 = vmatpush1.bf16.msra.mxu0 0
  %121 = vmatprep.subr.bf16.mxu0 0
  %122 = vmatpush1.bf16.msra.mxu0 0
  %123 = vmatprep.subr.bf16.mxu0 0
  %124 = vmatpush1.bf16.msra.mxu0 0
  %125 = vmatprep.subr.bf16.mxu0 0
  %126 = vmatpush1.bf16.msra.mxu0 0
  %127 = vmatprep.subr.bf16.mxu0 0
  %128 = vmatpush1.bf16.msra.mxu0 0
  %129 = vmatprep.subr.bf16.mxu0 0
  %130 = vmatpush1.bf16.msra.mxu0 0
  %131 = vmatprep.subr.bf16.mxu0 0
  %132 = vmatpush1.bf16.msra.mxu0 0
  %133 = vmatprep.mubr.bf16.mxu0 0
  %134 = vmatmul.mubr.bf16.gmra.mrb[0].mxu0 %v90
  %v135 = vpop.f32.mrb[0].mxu0
  %v136 = vadd.f32 %v50, %v135
  %v137 = vpop.f32.mrb[0].mxu0
  %v138 = vpop.f32.mrb[0].mxu0
  %v139 = vadd.f32 %v50, %v138
  %v140 = vpop.f32.mrb[0].mxu0
  %141 = vmatprep.mubr.bf16.mxu0 0
  %142 = vmatmul.mubr.bf16.gmra.mrb[0].mxu0 %v93
  %v143 = vpop.f32.mrb[0].mxu0
  %v144 = vadd.f32 %v50, %v143
  %v145 = vpop.f32.mrb[0].mxu0
  %v146 = vpop.f32.mrb[0].mxu0
  %v147 = vadd.f32 %v50, %v146
  %v148 = vpop.f32.mrb[0].mxu0
  %149 = vmatprep.mubr.bf16.mxu0 0
  %150 = vmatmul.mubr.bf16.gmra.mrb[0].mxu0 %v96
  %v151 = vpop.f32.mrb[0].mxu0
  %v152 = vadd.f32 %v50, %v151
  %v153 = vpop.f32.mrb[0].mxu0
  %v154 = vpop.f32.mrb[0].mxu0
  %v155 = vadd.f32 %v50, %v154
  %v156 = vpop.f32.mrb[0].mxu0
  %157 = vmatprep.mubr.bf16.mxu0 0
  %158 = vmatmul.mubr.bf16.gmra.mrb[0].mxu0 %v99
  %v159 = vpop.f32.mrb[0].mxu0
  %v160 = vadd.f32 %v50, %v159
  %v161 = vpop.f32.mrb[0].mxu0
  %v162 = vpop.f32.mrb[0].mxu0
  %v163 = vadd.f32 %v50, %v162
  %v164 = vpop.f32.mrb[0].mxu0
  %165 = vdwg.mxu0
  %v166 = vmax.f32 %v136, 0.0
  %v167 = vmax.f32 %v139, 0.0
  %v168 = vmax.f32 %v144, 0.0
  %v169 = vmax.f32 %v147, 0.0
  %v170 = vmax.f32 %v152, 0.0
  %v171 = vmax.f32 %v155, 0.0
  %v172 = vmax.f32 %v160, 0.0
  %v173 = vmax.f32 %v163, 0.0
  %v174 = vld [vmem:[%s3] sm:$0xf]
  %v175 = vld [vmem:[%s3 + $0x4] sm:$0xf]
  %v176 = vld [vmem:[%s3 + $0x8] sm:$0xf]
  %v177 = vld [vmem:[%s3 + $0xc] sm:$0xf]
  %v178 = vld [vmem:[%s3 + $0x10] sm:$0xf]
  %v179 = vld [vmem:[%s3 + $0x14] sm:$0xf]
  %v180 = vld [vmem:[%s3 + $0x18] sm:$0xf]
  %v181 = vld [vmem:[%s3 + $0x1c] sm:$0xf]
  %v182 = vld [vmem:[%s4] sm:$0x1]
  %v183 = vpack.c.bf16 %v167, %v166
  %v184 = vpack.c.bf16 %v169, %v168
  %v185 = vpack.c.bf16 %v171, %v170
  %v186 = vpack.c.bf16 %v173, %v172
  %v188 = vlaneseq
  %v189 = vshrl.u32 %v188, 7
  %v190 = vsub.s32 0, %v189
  %v191 = vrot.slane %v182, %v190
  %v201 = vunpack.c.l.b16 %v174
  %v202 = vunpack.c.l.b16 %v175
  %v203 = vunpack.c.l.b16 %v176
  %v204 = vunpack.c.l.b16 %v177
  %v205 = vunpack.c.l.b16 %v178
  %v206 = vunpack.c.l.b16 %v179
  %v207 = vunpack.c.l.b16 %v180
  %v208 = vunpack.c.l.b16 %v181
  %v209 = vpack.c.b16 %v202, %v201
  %v210 = vpack.c.b16 %v204, %v203
  %v211 = vpack.c.b16 %v206, %v205
  %v212 = vpack.c.b16 %v208, %v207
  %vm217 = vcmask 523264
  %v219 = vsel %vm217, %v183, 0
  %v222 = vsel %vm217, %v184, 0
  %v225 = vsel %vm217, %v185, 0
  %v228 = vsel %vm217, %v186, 0
  %230 = vmatprep.subr.bf16.mxu0 0
  %231 = vmatpush1.bf16.msra.mxu0 %v209
  %232 = vmatprep.subr.bf16.mxu0 0
  %233 = vmatpush1.bf16.msra.mxu0 %v210
  %234 = vmatprep.subr.bf16.mxu0 0
  %235 = vmatpush1.bf16.msra.mxu0 %v211
  %236 = vmatprep.subr.bf16.mxu0 0
  %237 = vmatpush1.bf16.msra.mxu0 %v212
  %238 = vmatprep.subr.bf16.mxu0 0
  %239 = vmatpush1.bf16.msra.mxu0 0
  %240 = vmatprep.subr.bf16.mxu0 0
  %241 = vmatpush1.bf16.msra.mxu0 0
  %242 = vmatprep.subr.bf16.mxu0 0
  %243 = vmatpush1.bf16.msra.mxu0 0
  %244 = vmatprep.subr.bf16.mxu0 0
  %245 = vmatpush1.bf16.msra.mxu0 0
  %246 = vmatprep.subr.bf16.mxu0 0
  %247 = vmatpush1.bf16.msra.mxu0 0
  %248 = vmatprep.subr.bf16.mxu0 0
  %249 = vmatpush1.bf16.msra.mxu0 0
  %250 = vmatprep.subr.bf16.mxu0 0
  %251 = vmatpush1.bf16.msra.mxu0 0
  %252 = vmatprep.subr.bf16.mxu0 0
  %253 = vmatpush1.bf16.msra.mxu0 0
  %254 = vmatprep.subr.bf16.mxu0 0
  %255 = vmatpush1.bf16.msra.mxu0 0
  %256 = vmatprep.subr.bf16.mxu0 0
  %257 = vmatpush1.bf16.msra.mxu0 0
  %258 = vmatprep.subr.bf16.mxu0 0
  %259 = vmatpush1.bf16.msra.mxu0 0
  %260 = vmatprep.subr.bf16.mxu0 0
  %261 = vmatpush1.bf16.msra.mxu0 0
  %262 = vmatprep.mubr.bf16.mxu0 0
  %263 = vmatmul.mubr.bf16.gmra.mrb[0].mxu0 %v219
  %v264 = vpop.f32.mrb[0].mxu0
  %v265 = vadd.f32 %v191, %v264
  %v266 = vpop.f32.mrb[0].mxu0
  %v267 = vpop.f32.mrb[0].mxu0
  %v268 = vadd.f32 %v191, %v267
  %v269 = vpop.f32.mrb[0].mxu0
  %270 = vmatprep.mubr.bf16.mxu0 0
  %271 = vmatmul.mubr.bf16.gmra.mrb[0].mxu0 %v222
  %v272 = vpop.f32.mrb[0].mxu0
  %v273 = vadd.f32 %v191, %v272
  %v274 = vpop.f32.mrb[0].mxu0
  %v275 = vpop.f32.mrb[0].mxu0
  %v276 = vadd.f32 %v191, %v275
  %v277 = vpop.f32.mrb[0].mxu0
  %278 = vmatprep.mubr.bf16.mxu0 0
  %279 = vmatmul.mubr.bf16.gmra.mrb[0].mxu0 %v225
  %v280 = vpop.f32.mrb[0].mxu0
  %v281 = vadd.f32 %v191, %v280
  %v282 = vpop.f32.mrb[0].mxu0
  %v283 = vpop.f32.mrb[0].mxu0
  %v284 = vadd.f32 %v191, %v283
  %v285 = vpop.f32.mrb[0].mxu0
  %286 = vmatprep.mubr.bf16.mxu0 0
  %287 = vmatmul.mubr.bf16.gmra.mrb[0].mxu0 %v228
  %v288 = vpop.f32.mrb[0].mxu0
  %v289 = vadd.f32 %v191, %v288
  %v290 = vpop.f32.mrb[0].mxu0
  %v291 = vpop.f32.mrb[0].mxu0
  %v292 = vadd.f32 %v191, %v291
  %v293 = vpop.f32.mrb[0].mxu0
  %294 = vdwg.mxu0
  %v295 = vmax.f32 %v265, 0.0
  %v296 = vmax.f32 %v268, 0.0
  %v297 = vmax.f32 %v273, 0.0
  %v298 = vmax.f32 %v276, 0.0
  %v299 = vmax.f32 %v281, 0.0
  %v300 = vmax.f32 %v284, 0.0
  %v301 = vmax.f32 %v289, 0.0
  %v302 = vmax.f32 %v292, 0.0
  %vm303 = vcmask 261120
  %304 = vst.msk [vmem:[%s5] sm:$0xff] %vm303, %v295
  %305 = vst.msk [vmem:[%s5 + $0x8] sm:$0xff] %vm303, %v296
  %306 = vst.msk [vmem:[%s5 + $0x10] sm:$0xff] %vm303, %v297
  %307 = vst.msk [vmem:[%s5 + $0x18] sm:$0xff] %vm303, %v298
  %308 = vst.msk [vmem:[%s5 + $0x20] sm:$0xff] %vm303, %v299
  %309 = vst.msk [vmem:[%s5 + $0x28] sm:$0xff] %vm303, %v300
  %310 = vst.msk [vmem:[%s5 + $0x30] sm:$0xff] %vm303, %v301
  %311 = vst.msk [vmem:[%s5 + $0x38] sm:$0xff] %vm303, %v302
  // Predicated region
  $region22: #{pointnet_plus_semseg_forward.14} parent=0 // pred_check
    _
  $region23: #{pointnet_plus_semseg_forward.14} parent=0 // pred_check_branch
    %313 = sbr.rel (0) target = $region25
  $region24: #{pointnet_plus_semseg_forward.14} parent=0 // pred_region
    _
  $region25: #{pointnet_plus_semseg_forward.14} parent=0 // pred_fallthru
    _
  // Predicated region
  $region26: #{pointnet_plus_semseg_forward.14} parent=0 // pred_check
    _
  $region27: #{pointnet_plus_semseg_forward.14} parent=0 // pred_check_branch
    %315 = sbr.rel (0) target = $region29
  $region28: #{pointnet_plus_semseg_forward.14} parent=0 // pred_region
    _
  $region29: #{pointnet_plus_semseg_forward.14} parent=0 // pred_fallthru
    _

// kernel: pointnet_plus_semseg_forward.15
$region0: #{pointnet_plus_semseg_forward.15}
  #allocation0 [shape = 'u32[]', space=smem, size = 0x4, offset = 0x4, fixed_abs, tag = 'smem constant byte address 0x4 - core index']
  #allocation1 [shape = 'u32[144,128]{1,0:T(1,128)}', space=vmem, size = 0x12000, scoped, tag = 'internal scratch']
  %s0 = inlined_call_operand.vmem [shape: f32[128,35], index: 0, kind: input, shape index: {}]
  %s1 = inlined_call_operand.vmem [shape: bf16[35,32], index: 1, kind: input, shape index: {}]
  %s2 = inlined_call_operand.vmem [shape: f32[1,32], index: 2, kind: input, shape index: {}]
  %s3 = inlined_call_operand.vmem [shape: bf16[32,32], index: 3, kind: input, shape index: {}]
  %s4 = inlined_call_operand.vmem [shape: f32[1,32], index: 4, kind: input, shape index: {}]
  %s5 = inlined_call_operand.vmem [shape: bf16[32,128], index: 5, kind: input, shape index: {}]
  %s6 = inlined_call_operand.vmem [shape: f32[1,128], index: 6, kind: input, shape index: {}]
  %s7 = inlined_call_operand.vmem [shape: f32[128,128], index: 7, kind: output, shape index: {}]
  %s8 = sld [smem:[#allocation0]]
  $region38: #{pointnet_plus_semseg_forward.15} parent=0
    _
  %s10 = ssub.s32 1, %s8
  %s11 = scalar_select 0, %s10, %s8
  // Predicated region
  $region2: #{pointnet_plus_semseg_forward.15} parent=0 // pred_check
    _
  $region3: #{pointnet_plus_semseg_forward.15} parent=0 // pred_check_branch
    %13 = sbr.rel (0) target = $region5
  $region4: #{pointnet_plus_semseg_forward.15} parent=0 // pred_region
    _
  $region5: #{pointnet_plus_semseg_forward.15} parent=0 // pred_fallthru
    _
  // Predicated region
  $region6: #{pointnet_plus_semseg_forward.15} parent=0 // pred_check
    _
  $region7: #{pointnet_plus_semseg_forward.15} parent=0 // pred_check_branch
    %15 = sbr.rel (0) target = $region9
  $region8: #{pointnet_plus_semseg_forward.15} parent=0 // pred_region
    _
  $region9: #{pointnet_plus_semseg_forward.15} parent=0 // pred_fallthru
    _
  // Predicated region
  $region10: #{pointnet_plus_semseg_forward.15} parent=0 // pred_check
    _
  $region11: #{pointnet_plus_semseg_forward.15} parent=0 // pred_check_branch
    %17 = sbr.rel (0) target = $region13
  $region12: #{pointnet_plus_semseg_forward.15} parent=0 // pred_region
    _
  $region13: #{pointnet_plus_semseg_forward.15} parent=0 // pred_fallthru
    _
  // Predicated region
  $region14: #{pointnet_plus_semseg_forward.15} parent=0 // pred_check
    _
  $region15: #{pointnet_plus_semseg_forward.15} parent=0 // pred_check_branch
    %19 = sbr.rel (0) target = $region17
  $region16: #{pointnet_plus_semseg_forward.15} parent=0 // pred_region
    _
  $region17: #{pointnet_plus_semseg_forward.15} parent=0 // pred_fallthru
    _
  // Predicated region
  $region18: #{pointnet_plus_semseg_forward.15} parent=0 // pred_check
    _
  $region19: #{pointnet_plus_semseg_forward.15} parent=0 // pred_check_branch
    %21 = sbr.rel (0) target = $region21
  $region20: #{pointnet_plus_semseg_forward.15} parent=0 // pred_region
    _
  $region21: #{pointnet_plus_semseg_forward.15} parent=0 // pred_fallthru
    _
  // Predicated region
  $region22: #{pointnet_plus_semseg_forward.15} parent=0 // pred_check
    _
  $region23: #{pointnet_plus_semseg_forward.15} parent=0 // pred_check_branch
    %23 = sbr.rel (0) target = $region25
  $region24: #{pointnet_plus_semseg_forward.15} parent=0 // pred_region
    _
  $region25: #{pointnet_plus_semseg_forward.15} parent=0 // pred_fallthru
    _
  // Predicated region
  $region26: #{pointnet_plus_semseg_forward.15} parent=0 // pred_check
    _
  $region27: #{pointnet_plus_semseg_forward.15} parent=0 // pred_check_branch
    %25 = sbr.rel (0) target = $region29
  $region28: #{pointnet_plus_semseg_forward.15} parent=0 // pred_region
    _
  $region29: #{pointnet_plus_semseg_forward.15} parent=0 // pred_fallthru
    _
  %v27 = vld [vmem:[%s0] sm:$0xff]
  %v28 = vld [vmem:[%s0 + $0x8] sm:$0xff]
  %v29 = vld [vmem:[%s0 + $0x10] sm:$0xff]
  %v30 = vld [vmem:[%s0 + $0x18] sm:$0xff]
  %v31 = vld [vmem:[%s0 + $0x20] sm:$0xff]
  %v32 = vld [vmem:[%s0 + $0x28] sm:$0xff]
  %v33 = vld [vmem:[%s0 + $0x30] sm:$0xff]
  %v34 = vld [vmem:[%s0 + $0x38] sm:$0xff]
  %v35 = vld [vmem:[%s0 + $0x40] sm:$0xff]
  %v36 = vld [vmem:[%s0 + $0x48] sm:$0xff]
  %v37 = vld [vmem:[%s0 + $0x50] sm:$0xff]
  %v38 = vld [vmem:[%s0 + $0x58] sm:$0xff]
  %v39 = vld [vmem:[%s0 + $0x60] sm:$0xff]
  %v40 = vld [vmem:[%s0 + $0x68] sm:$0xff]
  %v41 = vld [vmem:[%s0 + $0x70] sm:$0xff]
  %v42 = vld [vmem:[%s0 + $0x78] sm:$0xff]
  %v43 = vld [vmem:[%s1] sm:$0xf]
  %v44 = vld [vmem:[%s1 + $0x4] sm:$0xf]
  %v45 = vld [vmem:[%s1 + $0x8] sm:$0xf]
  %v46 = vld [vmem:[%s1 + $0xc] sm:$0xf]
  %v47 = vld [vmem:[%s1 + $0x10] sm:$0x3]
  %v48 = vld [vmem:[%s2] sm:$0x1]
  %v49 = vpack.c.bf16 %v28, %v27
  %v50 = vpack.c.bf16 %v30, %v29
  %v51 = vpack.c.bf16 %v32, %v31
  %v52 = vpack.c.bf16 %v34, %v33
  %v53 = vpack.c.bf16 %v36, %v35
  %v54 = vpack.c.bf16 %v38, %v37
  %v55 = vpack.c.bf16 %v40, %v39
  %v56 = vpack.c.bf16 %v42, %v41
  %v58 = vlaneseq
  %v59 = vshrl.u32 %v58, 7
  %v60 = vsub.s32 0, %v59
  %v61 = vrot.slane %v48, %v60
  %v68 = vunpack.c.l.b16 %v43
  %v69 = vunpack.c.l.b16 %v44
  %v70 = vunpack.c.l.b16 %v45
  %v71 = vunpack.c.l.b16 %v46
  %v72 = vunpack.c.l.b16 %v47
  %v73 = vpack.c.b16 %v69, %v68
  %v74 = vpack.c.b16 %v71, %v70
  %v75 = vpack.c.b16 %v72, %v72
  %vm78 = vcmask 285696
  %v80 = vsel %vm78, %v49, 0
  %v83 = vsel %vm78, %v50, 0
  %v86 = vsel %vm78, %v51, 0
  %v89 = vsel %vm78, %v52, 0
  %v92 = vsel %vm78, %v53, 0
  %v95 = vsel %vm78, %v54, 0
  %v98 = vsel %vm78, %v55, 0
  %v101 = vsel %vm78, %v56, 0
  %vm103 = vcmask 1040384
  %vm104 = vcmask 1041408
  %v105 = vsel %vm103, 4294967295, 65535
  %v106 = vsel %vm104, %v105, 0
  %v108 = vand.u32 %v75, %v106
  %110 = vmatprep.subr.bf16.mxu0 0
  %111 = vmatpush1.bf16.msra.mxu0 %v73
  %112 = vmatprep.subr.bf16.mxu0 0
  %113 = vmatpush1.bf16.msra.mxu0 %v74
  %114 = vmatprep.subr.bf16.mxu0 0
  %115 = vmatpush1.bf16.msra.mxu0 %v108
  %116 = vmatprep.subr.bf16.mxu0 0
  %117 = vmatpush1.bf16.msra.mxu0 0
  %118 = vmatprep.subr.bf16.mxu0 0
  %119 = vmatpush1.bf16.msra.mxu0 0
  %120 = vmatprep.subr.bf16.mxu0 0
  %121 = vmatpush1.bf16.msra.mxu0 0
  %122 = vmatprep.subr.bf16.mxu0 0
  %123 = vmatpush1.bf16.msra.mxu0 0
  %124 = vmatprep.subr.bf16.mxu0 0
  %125 = vmatpush1.bf16.msra.mxu0 0
  %126 = vmatprep.subr.bf16.mxu0 0
  %127 = vmatpush1.bf16.msra.mxu0 0
  %128 = vmatprep.subr.bf16.mxu0 0
  %129 = vmatpush1.bf16.msra.mxu0 0
  %130 = vmatprep.subr.bf16.mxu0 0
  %131 = vmatpush1.bf16.msra.mxu0 0
  %132 = vmatprep.subr.bf16.mxu0 0
  %133 = vmatpush1.bf16.msra.mxu0 0
  %134 = vmatprep.subr.bf16.mxu0 0
  %135 = vmatpush1.bf16.msra.mxu0 0
  %136 = vmatprep.subr.bf16.mxu0 0
  %137 = vmatpush1.bf16.msra.mxu0 0
  %138 = vmatprep.subr.bf16.mxu0 0
  %139 = vmatpush1.bf16.msra.mxu0 0
  %140 = vmatprep.subr.bf16.mxu0 0
  %141 = vmatpush1.bf16.msra.mxu0 0
  %142 = vmatprep.mubr.bf16.mxu0 0
  %143 = vmatmul.mubr.bf16.gmra.mrb[0].mxu0 %v80
  %v144 = vpop.f32.mrb[0].mxu0
  %v145 = vadd.f32 %v61, %v144
  %v146 = vpop.f32.mrb[0].mxu0
  %v147 = vpop.f32.mrb[0].mxu0
  %v148 = vadd.f32 %v61, %v147
  %v149 = vpop.f32.mrb[0].mxu0
  %150 = vmatprep.mubr.bf16.mxu0 0
  %151 = vmatmul.mubr.bf16.gmra.mrb[0].mxu0 %v83
  %v152 = vpop.f32.mrb[0].mxu0
  %v153 = vadd.f32 %v61, %v152
  %v154 = vpop.f32.mrb[0].mxu0
  %v155 = vpop.f32.mrb[0].mxu0
  %v156 = vadd.f32 %v61, %v155
  %v157 = vpop.f32.mrb[0].mxu0
  %158 = vmatprep.mubr.bf16.mxu0 0
  %159 = vmatmul.mubr.bf16.gmra.mrb[0].mxu0 %v86
  %v160 = vpop.f32.mrb[0].mxu0
  %v161 = vadd.f32 %v61, %v160
  %v162 = vpop.f32.mrb[0].mxu0
  %v163 = vpop.f32.mrb[0].mxu0
  %v164 = vadd.f32 %v61, %v163
  %v165 = vpop.f32.mrb[0].mxu0
  %166 = vmatprep.mubr.bf16.mxu0 0
  %167 = vmatmul.mubr.bf16.gmra.mrb[0].mxu0 %v89
  %v168 = vpop.f32.mrb[0].mxu0
  %v169 = vadd.f32 %v61, %v168
  %v170 = vpop.f32.mrb[0].mxu0
  %v171 = vpop.f32.mrb[0].mxu0
  %v172 = vadd.f32 %v61, %v171
  %v173 = vpop.f32.mrb[0].mxu0
  %174 = vmatprep.mubr.bf16.mxu0 0
  %175 = vmatmul.mubr.bf16.gmra.mrb[0].mxu0 %v92
  %v176 = vpop.f32.mrb[0].mxu0
  %v177 = vadd.f32 %v61, %v176
  %v178 = vpop.f32.mrb[0].mxu0
  %v179 = vpop.f32.mrb[0].mxu0
  %v180 = vadd.f32 %v61, %v179
  %v181 = vpop.f32.mrb[0].mxu0
  %182 = vmatprep.mubr.bf16.mxu0 0
  %183 = vmatmul.mubr.bf16.gmra.mrb[0].mxu0 %v95
  %v184 = vpop.f32.mrb[0].mxu0
  %v185 = vadd.f32 %v61, %v184
  %v186 = vpop.f32.mrb[0].mxu0
  %v187 = vpop.f32.mrb[0].mxu0
  %v188 = vadd.f32 %v61, %v187
  %v189 = vpop.f32.mrb[0].mxu0
  %190 = vmatprep.mubr.bf16.mxu0 0
  %191 = vmatmul.mubr.bf16.gmra.mrb[0].mxu0 %v98
  %v192 = vpop.f32.mrb[0].mxu0
  %v193 = vadd.f32 %v61, %v192
  %v194 = vpop.f32.mrb[0].mxu0
  %v195 = vpop.f32.mrb[0].mxu0
  %v196 = vadd.f32 %v61, %v195
  %v197 = vpop.f32.mrb[0].mxu0
  %198 = vmatprep.mubr.bf16.mxu0 0
  %199 = vmatmul.mubr.bf16.gmra.mrb[0].mxu0 %v101
  %v200 = vpop.f32.mrb[0].mxu0
  %v201 = vadd.f32 %v61, %v200
  %v202 = vpop.f32.mrb[0].mxu0
  %v203 = vpop.f32.mrb[0].mxu0
  %v204 = vadd.f32 %v61, %v203
  %v205 = vpop.f32.mrb[0].mxu0
  %206 = vdwg.mxu0
  %v207 = vmax.f32 %v145, 0.0
  %v208 = vmax.f32 %v148, 0.0
  %v209 = vmax.f32 %v153, 0.0
  %v210 = vmax.f32 %v156, 0.0
  %v211 = vmax.f32 %v161, 0.0
  %v212 = vmax.f32 %v164, 0.0
  %v213 = vmax.f32 %v169, 0.0
  %v214 = vmax.f32 %v172, 0.0
  %v215 = vmax.f32 %v177, 0.0
  %v216 = vmax.f32 %v180, 0.0
  %v217 = vmax.f32 %v185, 0.0
  %v218 = vmax.f32 %v188, 0.0
  %v219 = vmax.f32 %v193, 0.0
  %v220 = vmax.f32 %v196, 0.0
  %v221 = vmax.f32 %v201, 0.0
  %v222 = vmax.f32 %v204, 0.0
  %v223 = vld [vmem:[%s3] sm:$0xf]
  %v224 = vld [vmem:[%s3 + $0x4] sm:$0xf]
  %v225 = vld [vmem:[%s3 + $0x8] sm:$0xf]
  %v226 = vld [vmem:[%s3 + $0xc] sm:$0xf]
  %v227 = vld [vmem:[%s4] sm:$0x1]
  %v228 = vpack.c.bf16 %v208, %v207
  %v229 = vpack.c.bf16 %v210, %v209
  %v230 = vpack.c.bf16 %v212, %v211
  %v231 = vpack.c.bf16 %v214, %v213
  %v232 = vpack.c.bf16 %v216, %v215
  %v233 = vpack.c.bf16 %v218, %v217
  %v234 = vpack.c.bf16 %v220, %v219
  %v235 = vpack.c.bf16 %v222, %v221
  %v237 = vlaneseq
  %v238 = vshrl.u32 %v237, 7
  %v239 = vsub.s32 0, %v238
  %v240 = vrot.slane %v227, %v239
  %v246 = vunpack.c.l.b16 %v223
  %v247 = vunpack.c.l.b16 %v224
  %v248 = vunpack.c.l.b16 %v225
  %v249 = vunpack.c.l.b16 %v226
  %v250 = vpack.c.b16 %v247, %v246
  %v251 = vpack.c.b16 %v249, %v248
  %vm254 = vcmask 261120
  %v256 = vsel %vm254, %v228, 0
  %v259 = vsel %vm254, %v229, 0
  %v262 = vsel %vm254, %v230, 0
  %v265 = vsel %vm254, %v231, 0
  %v268 = vsel %vm254, %v232, 0
  %v271 = vsel %vm254, %v233, 0
  %v274 = vsel %vm254, %v234, 0
  %v277 = vsel %vm254, %v235, 0
  %279 = vmatprep.subr.bf16.mxu0 0
  %280 = vmatpush1.bf16.msra.mxu0 %v250
  %281 = vmatprep.subr.bf16.mxu0 0
  %282 = vmatpush1.bf16.msra.mxu0 %v251
  %283 = vmatprep.subr.bf16.mxu0 0
  %284 = vmatpush1.bf16.msra.mxu0 0
  %285 = vmatprep.subr.bf16.mxu0 0
  %286 = vmatpush1.bf16.msra.mxu0 0
  %287 = vmatprep.subr.bf16.mxu0 0
  %288 = vmatpush1.bf16.msra.mxu0 0
  %289 = vmatprep.subr.bf16.mxu0 0
  %290 = vmatpush1.bf16.msra.mxu0 0
  %291 = vmatprep.subr.bf16.mxu0 0
  %292 = vmatpush1.bf16.msra.mxu0 0
  %293 = vmatprep.subr.bf16.mxu0 0
  %294 = vmatpush1.bf16.msra.mxu0 0
  %295 = vmatprep.subr.bf16.mxu0 0
  %296 = vmatpush1.bf16.msra.mxu0 0
  %297 = vmatprep.subr.bf16.mxu0 0
  %298 = vmatpush1.bf16.msra.mxu0 0
  %299 = vmatprep.subr.bf16.mxu0 0
  %300 = vmatpush1.bf16.msra.mxu0 0
  %301 = vmatprep.subr.bf16.mxu0 0
  %302 = vmatpush1.bf16.msra.mxu0 0
  %303 = vmatprep.subr.bf16.mxu0 0
  %304 = vmatpush1.bf16.msra.mxu0 0
  %305 = vmatprep.subr.bf16.mxu0 0
  %306 = vmatpush1.bf16.msra.mxu0 0
  %307 = vmatprep.subr.bf16.mxu0 0
  %308 = vmatpush1.bf16.msra.mxu0 0
  %309 = vmatprep.subr.bf16.mxu0 0
  %310 = vmatpush1.bf16.msra.mxu0 0
  %311 = vmatprep.mubr.bf16.mxu0 0
  %312 = vmatmul.mubr.bf16.gmra.mrb[0].mxu0 %v256
  %v313 = vpop.f32.mrb[0].mxu0
  %v314 = vadd.f32 %v240, %v313
  %v315 = vpop.f32.mrb[0].mxu0
  %v316 = vpop.f32.mrb[0].mxu0
  %v317 = vadd.f32 %v240, %v316
  %v318 = vpop.f32.mrb[0].mxu0
  %319 = vmatprep.mubr.bf16.mxu0 0
  %320 = vmatmul.mubr.bf16.gmra.mrb[0].mxu0 %v259
  %v321 = vpop.f32.mrb[0].mxu0
  %v322 = vadd.f32 %v240, %v321
  %v323 = vpop.f32.mrb[0].mxu0
  %v324 = vpop.f32.mrb[0].mxu0
  %v325 = vadd.f32 %v240, %v324
  %v326 = vpop.f32.mrb[0].mxu0
  %327 = vmatprep.mubr.bf16.mxu0 0
  %328 = vmatmul.mubr.bf16.gmra.mrb[0].mxu0 %v262
  %v329 = vpop.f32.mrb[0].mxu0
  %v330 = vadd.f32 %v240, %v329
  %v331 = vpop.f32.mrb[0].mxu0
  %v332 = vpop.f32.mrb[0].mxu0
  %v333 = vadd.f32 %v240, %v332
  %v334 = vpop.f32.mrb[0].mxu0
  %335 = vmatprep.mubr.bf16.mxu0 0
  %336 = vmatmul.mubr.bf16.gmra.mrb[0].mxu0 %v265
  %v337 = vpop.f32.mrb[0].mxu0
  %v338 = vadd.f32 %v240, %v337
  %v339 = vpop.f32.mrb[0].mxu0
  %v340 = vpop.f32.mrb[0].mxu0
  %v341 = vadd.f32 %v240, %v340
  %v342 = vpop.f32.mrb[0].mxu0
  %343 = vmatprep.mubr.bf16.mxu0 0
  %344 = vmatmul.mubr.bf16.gmra.mrb[0].mxu0 %v268
  %v345 = vpop.f32.mrb[0].mxu0
  %v346 = vadd.f32 %v240, %v345
  %v347 = vpop.f32.mrb[0].mxu0
  %v348 = vpop.f32.mrb[0].mxu0
  %v349 = vadd.f32 %v240, %v348
  %v350 = vpop.f32.mrb[0].mxu0
  %351 = vmatprep.mubr.bf16.mxu0 0
  %352 = vmatmul.mubr.bf16.gmra.mrb[0].mxu0 %v271
  %v353 = vpop.f32.mrb[0].mxu0
  %v354 = vadd.f32 %v240, %v353
  %v355 = vpop.f32.mrb[0].mxu0
  %v356 = vpop.f32.mrb[0].mxu0
  %v357 = vadd.f32 %v240, %v356
  %v358 = vpop.f32.mrb[0].mxu0
  %359 = vmatprep.mubr.bf16.mxu0 0
  %360 = vmatmul.mubr.bf16.gmra.mrb[0].mxu0 %v274
  %v361 = vpop.f32.mrb[0].mxu0
  %v362 = vadd.f32 %v240, %v361
  %v363 = vpop.f32.mrb[0].mxu0
  %v364 = vpop.f32.mrb[0].mxu0
  %v365 = vadd.f32 %v240, %v364
  %v366 = vpop.f32.mrb[0].mxu0
  %367 = vmatprep.mubr.bf16.mxu0 0
  %368 = vmatmul.mubr.bf16.gmra.mrb[0].mxu0 %v277
  %v369 = vpop.f32.mrb[0].mxu0
  %v370 = vadd.f32 %v240, %v369
  %v371 = vpop.f32.mrb[0].mxu0
  %v372 = vpop.f32.mrb[0].mxu0
  %v373 = vadd.f32 %v240, %v372
  %v374 = vpop.f32.mrb[0].mxu0
  %375 = vdwg.mxu0
  %v376 = vmax.f32 %v314, 0.0
  %v377 = vmax.f32 %v317, 0.0
  %v378 = vmax.f32 %v322, 0.0
  %v379 = vmax.f32 %v325, 0.0
  %v380 = vmax.f32 %v330, 0.0
  %v381 = vmax.f32 %v333, 0.0
  %v382 = vmax.f32 %v338, 0.0
  %v383 = vmax.f32 %v341, 0.0
  %v384 = vmax.f32 %v346, 0.0
  %v385 = vmax.f32 %v349, 0.0
  %v386 = vmax.f32 %v354, 0.0
  %v387 = vmax.f32 %v357, 0.0
  %v388 = vmax.f32 %v362, 0.0
  %v389 = vmax.f32 %v365, 0.0
  %v390 = vmax.f32 %v370, 0.0
  %v391 = vmax.f32 %v373, 0.0
  %v392 = vld [vmem:[%s5] sm:$0xf]
  %v393 = vld [vmem:[%s5 + $0x4] sm:$0xf]
  %v394 = vld [vmem:[%s5 + $0x8] sm:$0xf]
  %v395 = vld [vmem:[%s5 + $0xc] sm:$0xf]
  %v396 = vld [vmem:[%s6] sm:$0x1]
  %v397 = vpack.c.bf16 %v377, %v376
  %v398 = vpack.c.bf16 %v379, %v378
  %v399 = vpack.c.bf16 %v381, %v380
  %v400 = vpack.c.bf16 %v383, %v382
  %v401 = vpack.c.bf16 %v385, %v384
  %v402 = vpack.c.bf16 %v387, %v386
  %v403 = vpack.c.bf16 %v389, %v388
  %v404 = vpack.c.bf16 %v391, %v390
  %v406 = vlaneseq
  %v407 = vshrl.u32 %v406, 7
  %v408 = vsub.s32 0, %v407
  %v409 = vrot.slane %v396, %v408
  %v415 = vunpack.c.l.b16 %v392
  %v416 = vunpack.c.l.b16 %v393
  %v417 = vunpack.c.l.b16 %v394
  %v418 = vunpack.c.l.b16 %v395
  %v419 = vpack.c.b16 %v416, %v415
  %v420 = vpack.c.b16 %v418, %v417
  %v424 = vsel %vm254, %v397, 0
  %v427 = vsel %vm254, %v398, 0
  %v430 = vsel %vm254, %v399, 0
  %v433 = vsel %vm254, %v400, 0
  %v436 = vsel %vm254, %v401, 0
  %v439 = vsel %vm254, %v402, 0
  %v442 = vsel %vm254, %v403, 0
  %v445 = vsel %vm254, %v404, 0
  %447 = vmatprep.subr.bf16.mxu0 0
  %448 = vmatpush1.bf16.msra.mxu0 %v419
  %449 = vmatprep.subr.bf16.mxu0 0
  %450 = vmatpush1.bf16.msra.mxu0 %v420
  %451 = vmatprep.subr.bf16.mxu0 0
  %452 = vmatpush1.bf16.msra.mxu0 0
  %453 = vmatprep.subr.bf16.mxu0 0
  %454 = vmatpush1.bf16.msra.mxu0 0
  %455 = vmatprep.subr.bf16.mxu0 0
  %456 = vmatpush1.bf16.msra.mxu0 0
  %457 = vmatprep.subr.bf16.mxu0 0
  %458 = vmatpush1.bf16.msra.mxu0 0
  %459 = vmatprep.subr.bf16.mxu0 0
  %460 = vmatpush1.bf16.msra.mxu0 0
  %461 = vmatprep.subr.bf16.mxu0 0
  %462 = vmatpush1.bf16.msra.mxu0 0
  %463 = vmatprep.subr.bf16.mxu0 0
  %464 = vmatpush1.bf16.msra.mxu0 0
  %465 = vmatprep.subr.bf16.mxu0 0
  %466 = vmatpush1.bf16.msra.mxu0 0
  %467 = vmatprep.subr.bf16.mxu0 0
  %468 = vmatpush1.bf16.msra.mxu0 0
  %469 = vmatprep.subr.bf16.mxu0 0
  %470 = vmatpush1.bf16.msra.mxu0 0
  %471 = vmatprep.subr.bf16.mxu0 0
  %472 = vmatpush1.bf16.msra.mxu0 0
  %473 = vmatprep.subr.bf16.mxu0 0
  %474 = vmatpush1.bf16.msra.mxu0 0
  %475 = vmatprep.subr.bf16.mxu0 0
  %476 = vmatpush1.bf16.msra.mxu0 0
  %477 = vmatprep.subr.bf16.mxu0 0
  %478 = vmatpush1.bf16.msra.mxu0 0
  %479 = vmatprep.mubr.bf16.mxu0 0
  %480 = vmatmul.mubr.bf16.gmra.mrb[0].mxu0 %v424
  %v481 = vpop.f32.mrb[0].mxu0
  %v482 = vadd.f32 %v409, %v481
  %v483 = vpop.f32.mrb[0].mxu0
  %v484 = vpop.f32.mrb[0].mxu0
  %v485 = vadd.f32 %v409, %v484
  %v486 = vpop.f32.mrb[0].mxu0
  %487 = vmatprep.mubr.bf16.mxu0 0
  %488 = vmatmul.mubr.bf16.gmra.mrb[0].mxu0 %v427
  %v489 = vpop.f32.mrb[0].mxu0
  %v490 = vadd.f32 %v409, %v489
  %v491 = vpop.f32.mrb[0].mxu0
  %v492 = vpop.f32.mrb[0].mxu0
  %v493 = vadd.f32 %v409, %v492
  %v494 = vpop.f32.mrb[0].mxu0
  %495 = vmatprep.mubr.bf16.mxu0 0
  %496 = vmatmul.mubr.bf16.gmra.mrb[0].mxu0 %v430
  %v497 = vpop.f32.mrb[0].mxu0
  %v498 = vadd.f32 %v409, %v497
  %v499 = vpop.f32.mrb[0].mxu0
  %v500 = vpop.f32.mrb[0].mxu0
  %v501 = vadd.f32 %v409, %v500
  %v502 = vpop.f32.mrb[0].mxu0
  %503 = vmatprep.mubr.bf16.mxu0 0
  %504 = vmatmul.mubr.bf16.gmra.mrb[0].mxu0 %v433
  %v505 = vpop.f32.mrb[0].mxu0
  %v506 = vadd.f32 %v409, %v505
  %v507 = vpop.f32.mrb[0].mxu0
  %v508 = vpop.f32.mrb[0].mxu0
  %v509 = vadd.f32 %v409, %v508
  %v510 = vpop.f32.mrb[0].mxu0
  %511 = vmatprep.mubr.bf16.mxu0 0
  %512 = vmatmul.mubr.bf16.gmra.mrb[0].mxu0 %v436
  %v513 = vpop.f32.mrb[0].mxu0
  %v514 = vadd.f32 %v409, %v513
  %v515 = vpop.f32.mrb[0].mxu0
  %v516 = vpop.f32.mrb[0].mxu0
  %v517 = vadd.f32 %v409, %v516
  %v518 = vpop.f32.mrb[0].mxu0
  %519 = vmatprep.mubr.bf16.mxu0 0
  %520 = vmatmul.mubr.bf16.gmra.mrb[0].mxu0 %v439
  %v521 = vpop.f32.mrb[0].mxu0
  %v522 = vadd.f32 %v409, %v521
  %v523 = vpop.f32.mrb[0].mxu0
  %v524 = vpop.f32.mrb[0].mxu0
  %v525 = vadd.f32 %v409, %v524
  %v526 = vpop.f32.mrb[0].mxu0
  %527 = vmatprep.mubr.bf16.mxu0 0
  %528 = vmatmul.mubr.bf16.gmra.mrb[0].mxu0 %v442
  %v529 = vpop.f32.mrb[0].mxu0
  %v530 = vadd.f32 %v409, %v529
  %v531 = vpop.f32.mrb[0].mxu0
  %v532 = vpop.f32.mrb[0].mxu0
  %v533 = vadd.f32 %v409, %v532
  %v534 = vpop.f32.mrb[0].mxu0
  %535 = vmatprep.mubr.bf16.mxu0 0
  %536 = vmatmul.mubr.bf16.gmra.mrb[0].mxu0 %v445
  %v537 = vpop.f32.mrb[0].mxu0
  %v538 = vadd.f32 %v409, %v537
  %v539 = vpop.f32.mrb[0].mxu0
  %v540 = vpop.f32.mrb[0].mxu0
  %v541 = vadd.f32 %v409, %v540
  %v542 = vpop.f32.mrb[0].mxu0
  %543 = vdwg.mxu0
  %544 = vst [vmem:[%s7] sm:$0xff] %v482
  %545 = vst [vmem:[%s7 + $0x8] sm:$0xff] %v485
  %546 = vst [vmem:[%s7 + $0x10] sm:$0xff] %v490
  %547 = vst [vmem:[%s7 + $0x18] sm:$0xff] %v493
  %548 = vst [vmem:[%s7 + $0x20] sm:$0xff] %v498
  %549 = vst [vmem:[%s7 + $0x28] sm:$0xff] %v501
  %550 = vst [vmem:[%s7 + $0x30] sm:$0xff] %v506
  %551 = vst [vmem:[%s7 + $0x38] sm:$0xff] %v509
  %552 = vst [vmem:[%s7 + $0x40] sm:$0xff] %v514
  %553 = vst [vmem:[%s7 + $0x48] sm:$0xff] %v517
  %554 = vst [vmem:[%s7 + $0x50] sm:$0xff] %v522
  %555 = vst [vmem:[%s7 + $0x58] sm:$0xff] %v525
  %556 = vst [vmem:[%s7 + $0x60] sm:$0xff] %v530
  %557 = vst [vmem:[%s7 + $0x68] sm:$0xff] %v533
  %558 = vst [vmem:[%s7 + $0x70] sm:$0xff] %v538
  %559 = vst [vmem:[%s7 + $0x78] sm:$0xff] %v541
  // Predicated region
  $region30: #{pointnet_plus_semseg_forward.15} parent=0 // pred_check
    _
  $region31: #{pointnet_plus_semseg_forward.15} parent=0 // pred_check_branch
    %561 = sbr.rel (0) target = $region33
  $region32: #{pointnet_plus_semseg_forward.15} parent=0 // pred_region
    _
  $region33: #{pointnet_plus_semseg_forward.15} parent=0 // pred_fallthru
    _
  // Predicated region
  $region34: #{pointnet_plus_semseg_forward.15} parent=0 // pred_check
    _
  $region35: #{pointnet_plus_semseg_forward.15} parent=0 // pred_check_branch
    %563 = sbr.rel (0) target = $region37
  $region36: #{pointnet_plus_semseg_forward.15} parent=0 // pred_region
    _
  $region37: #{pointnet_plus_semseg_forward.15} parent=0 // pred_fallthru
    _

</llo_original>
